<compile_context>
chip_gen: v7x
topology: tpu7x:2x2x1
jax: 0.10.0
libtpu: 0.0.40
codegen_flags: <defaults>
</compile_context>

<pallas_src>
import math

import jax
import jax.numpy as jnp
from jax.experimental import pallas as pl
from jax.experimental.pallas import tpu as pltpu


D_IN, H1, H2, H3, D_OUT = 512, 256, 128, 128, 1
LANES = 128            # lane-dense width for the padded classifier output
BN_EPS = 1e-5
NEG_SLOPE = 0.01
NUM_PHASES = 4


def _leaky(x):
    # one VPU op cheaper than jnp.where for 0 < slope < 1
    return jnp.maximum(x, NEG_SLOPE * x)


def _make_kernel(batch):
    inv_b = 1.0 / batch

    def kernel(left_ref, right_ref,
               w1_ref, b1_ref, w2_ref, b2_ref, w3_ref, b3_ref, w4_ref, b4_ref,
               out_ref,
               a1c_ref, s1_ref, s2_ref, s3_ref, st1_ref, st2_ref, st3_ref):
        p = pl.program_id(0)   # phase
        i = pl.program_id(1)   # batch tile

        def mm(x, w_ref, b_ref):
            # bf16 MXU operands, f32 accumulation, f32 bias add.
            y = jnp.dot(x.astype(jnp.bfloat16), w_ref[...],
                        preferred_element_type=jnp.float32)
            return y + b_ref[...]

        def accumulate(s_ref, a):
            @pl.when(i == 0)
            def _():
                s_ref[...] = jnp.zeros_like(s_ref)
            s_ref[0:1, :] += jnp.sum(a, axis=0, keepdims=True)
            s_ref[1:2, :] += jnp.sum(a * a, axis=0, keepdims=True)

        def finalize(s_ref, st_ref):
            # NOTE: E[x^2] - mean^2 in f32; fine at current tolerances.
            mean = s_ref[0:1, :] * inv_b
            var = s_ref[1:2, :] * inv_b - mean * mean      # biased batch variance
            st_ref[0:1, :] = mean
            st_ref[1:2, :] = jax.lax.rsqrt(var + BN_EPS)

        def normalize(a, st_ref):
            return (a - st_ref[0:1, :]) * st_ref[1:2, :]

        def layer2(a1):
            return _leaky(mm(normalize(a1, st1_ref), w2_ref, b2_ref))

        def layer3(a2):
            return _leaky(mm(normalize(a2, st2_ref), w3_ref, b3_ref))

        # ---- phase 0: |r - l| -> layer 1, cache pre-BN acts (bf16), BN1 sums
        @pl.when(p == 0)
        def _():
            d = jnp.abs(right_ref[...] - left_ref[...])
            a1 = _leaky(mm(d, w1_ref, b1_ref))          # f32
            accumulate(s1_ref, a1)                       # f32 statistics
            a1c_ref[i] = a1.astype(jnp.bfloat16)         # bf16 cache (0.5 KB/row)

        # ---- phase 1: finalize BN1, layer 2, BN2 sums ------------------------
        @pl.when(p == 1)
        def _():
            @pl.when(i == 0)
            def _():
                finalize(s1_ref, st1_ref)
            a2 = layer2(a1c_ref[i])
            accumulate(s2_ref, a2)

        # ---- phase 2: finalize BN2, layer 3, BN3 sums ------------------------
        @pl.when(p == 2)
        def _():
            @pl.when(i == 0)
            def _():
                finalize(s2_ref, st2_ref)
            a3 = layer3(layer2(a1c_ref[i]))
            accumulate(s3_ref, a3)

        # ---- phase 3: finalize BN3, classifier + sigmoid ---------------------
        # (only phase that touches out_ref; its BlockSpec index is pinned to
        #  block (0,0) during phases 0-2, so no stale data is ever written back)
        @pl.when(p == NUM_PHASES - 1)
        def _():
            @pl.when(i == 0)
            def _():
                finalize(s3_ref, st3_ref)
            a3 = layer3(layer2(a1c_ref[i]))
            logits = mm(normalize(a3, st3_ref), w4_ref, b4_ref)
            out_ref[...] = jax.nn.sigmoid(logits)

    return kernel


def siamese_forward(left, right, params, *, block_m=512):
    """Fused forward pass.

    block_m guidance: 512 on v6e/v7x, 256 on v5e (never shrink to 128 just to
    match the MXU — the kernel is HBM-bound).  left/right may be f32 or bf16.
    """
    batch = left.shape[0]
    assert left.shape == right.shape == (batch, D_IN)
    bm = min(block_m, batch)
    if batch % bm or bm % 8:
        raise ValueError(f"batch={batch} must be a multiple of block_m={bm} "
                         "and of 8 (sublane alignment)")
    nbt = batch // bm

    w1, b1, w2, b2, w3, b3, w4, b4 = params
    # bf16 MXU operands (halves weight VMEM/HBM traffic); biases stay f32.
    w1b, w2b, w3b = (w.astype(jnp.bfloat16) for w in (w1, w2, w3))
    # Pad the 1-wide classifier to 128 lanes -> lane-dense output stores.
    w4p = jnp.zeros((H3, LANES), jnp.float32).at[:, :D_OUT].set(w4).astype(jnp.bfloat16)
    b4p = jnp.zeros((1, LANES), jnp.float32).at[:, :D_OUT].set(b4)

    # Inputs are only consumed in phase 0; afterwards pin block (0, 0) so the
    # pipeline stops re-fetching them from HBM (same index => copy skipped).
    def in_map(p, i):
        return (jnp.where(p == 0, i, 0), 0)

    # Output is only produced in phase 3; pin block (0, 0) in phases 0-2 so the
    # deferred writeback happens exactly once per tile, after the real store.
    def out_map(p, i):
        return (jnp.where(p == NUM_PHASES - 1, i, 0), 0)

    resident = lambda shape: pl.BlockSpec(shape, lambda p, i: (0, 0))

    # VMEM budget: double-buffered input/output tiles + (double-buffered)
    # resident weights + bf16 layer-1 cache + BN scratch.  Raise the scoped
    # limit accordingly (default 16/32 MiB would cap the batch-scaled cache).
    in_item = jnp.dtype(left.dtype).itemsize
    vmem_needed = (
        2 * 2 * bm * D_IN * in_item                                  # L/R tiles
        + 2 * bm * LANES * 4                                         # output tile
        + 2 * (2 * (D_IN * H1 + H1 * H2 + H2 * H3 + H3 * LANES)      # bf16 weights
               + 4 * (H1 + H2 + H3 + LANES))                         # f32 biases
        + batch * H1 * 2                                             # bf16 a1 cache
        + 6 * 8 * max(H1, LANES) * 4                                 # BN sums/stats (padded)
    )
    vmem_limit = min(max(int(vmem_needed * 1.3) + (2 << 20), 32 << 20), 100 << 20)

    out = pl.pallas_call(
        _make_kernel(batch),
        out_shape=jax.ShapeDtypeStruct((batch, LANES), jnp.float32),
        grid=(NUM_PHASES, nbt),
        in_specs=[
            pl.BlockSpec((bm, D_IN), in_map),
            pl.BlockSpec((bm, D_IN), in_map),
            resident((D_IN, H1)), resident((1, H1)),
            resident((H1, H2)), resident((1, H2)),
            resident((H2, H3)), resident((1, H3)),
            resident((H3, LANES)), resident((1, LANES)),
        ],
        out_specs=pl.BlockSpec((bm, LANES), out_map),
        scratch_shapes=[
            pltpu.VMEM((nbt, bm, H1), jnp.bfloat16),  # cached layer-1 pre-BN acts
            pltpu.VMEM((2, H1), jnp.float32),         # BN1 sum / sum-of-squares
            pltpu.VMEM((2, H2), jnp.float32),         # BN2 sum / sum-of-squares
            pltpu.VMEM((2, H3), jnp.float32),         # BN3 sum / sum-of-squares
            pltpu.VMEM((2, H1), jnp.float32),         # BN1 mean / inv_std
            pltpu.VMEM((2, H2), jnp.float32),         # BN2 mean / inv_std
            pltpu.VMEM((2, H3), jnp.float32),         # BN3 mean / inv_std
        ],
        compiler_params=pltpu.CompilerParams(
            # Both axes MUST be sequential: BN sums accumulate into shared VMEM
            # scratch and phases 0-2 rely on deferred output writeback.
            dimension_semantics=("arbitrary", "arbitrary"),
            vmem_limit_bytes=vmem_limit),
    )(left, right, w1b, b1, w2b, b2, w3b, b3, w4p, b4p)
    return out[:, :D_OUT]


# ----------------------------- init & reference ------------------------------

def _xavier_uniform(key, fan_in, fan_out):
    # PyTorch xavier_uniform_: U(-a, a), a = sqrt(6 / (fan_in + fan_out)).
    a = math.sqrt(6.0 / (fan_in + fan_out))
    # stored as (in, out): transpose of PyTorch's (out, in) weight
    return jax.random.uniform(key, (fan_in, fan_out), jnp.float32, -a, a)


def _linear_bias(key, fan_in, fan_out):
    # PyTorch Linear default bias init: U(-1/sqrt(fan_in), 1/sqrt(fan_in)).
    bound = 1.0 / math.sqrt(fan_in)
    return jax.random.uniform(key, (1, fan_out), jnp.float32, -bound, bound)


def init_params(key):
    ks = jax.random.split(key, 8)
    return (_xavier_uniform(ks[0], D_IN, H1), _linear_bias(ks[1], D_IN, H1),
            _xavier_uniform(ks[2], H1, H2), _linear_bias(ks[3], H1, H2),
            _xavier_uniform(ks[4], H2, H3), _linear_bias(ks[5], H2, H3),
            _xavier_uniform(ks[6], H3, D_OUT), _linear_bias(ks[7], H3, D_OUT))


def _batchnorm_train(x):
    mean = jnp.mean(x, axis=0, keepdims=True)
    var = jnp.mean(jnp.square(x - mean), axis=0, keepdims=True)
    return (x - mean) * jax.lax.rsqrt(var + BN_EPS)


def reference_forward(left, right, params, *, mxu_dtype=jnp.float32):
    w1, b1, w2, b2, w3, b3, w4, b4 = params

    def lin(x, w, b):
        return jnp.dot(x.astype(mxu_dtype), w.astype(mxu_dtype),
                       preferred_element_type=jnp.float32) + b

    x = jnp.abs(right - left)
    h = _batchnorm_train(_leaky(lin(x, w1, b1)))
    h = _batchnorm_train(_leaky(lin(h, w2, b2)))
    h = _batchnorm_train(_leaky(lin(h, w3, b3)))
    return jax.nn.sigmoid(lin(h, w4, b4))


if __name__ == "__main__":
    key = jax.random.PRNGKey(0)
    k_params, k_left, k_right = jax.random.split(key, 3)

    B = 512      # two 256-row tiles -> exercises cross-tile BatchNorm statistics
    params = init_params(k_params)
    left = jax.random.normal(k_left, (B, D_IN), jnp.float32)
    right = jax.random.normal(k_right, (B, D_IN), jnp.float32)

    out = siamese_forward(left, right, params, block_m=256)
    out = jax.block_until_ready(out)
    assert out.shape == (B, D_OUT)

    # Check vs a reference using the same bf16 MXU operands (kernel additionally
    # rounds the cached layer-1 activations to bf16, hence the 1e-2 bound).
    ref_bf16 = reference_forward(left, right, params, mxu_dtype=jnp.bfloat16)
    assert jnp.allclose(out, ref_bf16, atol=1e-2, rtol=0), \
        float(jnp.max(jnp.abs(out - ref_bf16)))

    # Loose sanity bound vs the full-f32 (PyTorch-semantics) reference.
    ref_f32 = reference_forward(left, right, params, mxu_dtype=jnp.float32)
    assert jnp.allclose(out, ref_f32, atol=5e-2, rtol=0), \
        float(jnp.max(jnp.abs(out - ref_f32)))

    print("KERNEL_OK")
</pallas_src>

<mosaic_0001>
module attributes {stable_mosaic.version = 11 : i64} {
  func.func @kernel(%arg0: i32, %arg1: i32, %arg2: memref<256x512xf32, #tpu.memory_space<vmem>>, %arg3: memref<256x512xf32, #tpu.memory_space<vmem>>, %arg4: memref<512x256xbf16, #tpu.memory_space<vmem>>, %arg5: memref<1x256xf32, #tpu.memory_space<vmem>>, %arg6: memref<256x128xbf16, #tpu.memory_space<vmem>>, %arg7: memref<1x128xf32, #tpu.memory_space<vmem>>, %arg8: memref<128x128xbf16, #tpu.memory_space<vmem>>, %arg9: memref<1x128xf32, #tpu.memory_space<vmem>>, %arg10: memref<128x128xbf16, #tpu.memory_space<vmem>>, %arg11: memref<1x128xf32, #tpu.memory_space<vmem>>, %arg12: memref<256x128xf32, #tpu.memory_space<vmem>>, %arg13: memref<2x256x256xbf16, #tpu.memory_space<vmem>>, %arg14: memref<2x256xf32, #tpu.memory_space<vmem>>, %arg15: memref<2x128xf32, #tpu.memory_space<vmem>>, %arg16: memref<2x128xf32, #tpu.memory_space<vmem>>, %arg17: memref<2x256xf32, #tpu.memory_space<vmem>>, %arg18: memref<2x128xf32, #tpu.memory_space<vmem>>, %arg19: memref<2x128xf32, #tpu.memory_space<vmem>>) attributes {dimension_semantics = [#tpu.dimension_semantics<arbitrary>, #tpu.dimension_semantics<arbitrary>], iteration_bounds = array<i64: 4, 2>, scalar_prefetch = 0 : i64, scratch_operands = 7 : i64, tpu.core_type = #tpu.core_type<tc>, window_params = [{transform_indices = @transform_0, window_bounds = array<i64: 256, 512>}, {transform_indices = @transform_1, window_bounds = array<i64: 256, 512>}, {pipeline_mode = #tpu.pipeline_mode<synchronous>, transform_indices = @transform_2, window_bounds = array<i64: 512, 256>}, {pipeline_mode = #tpu.pipeline_mode<synchronous>, transform_indices = @transform_3, window_bounds = array<i64: 1, 256>}, {pipeline_mode = #tpu.pipeline_mode<synchronous>, transform_indices = @transform_4, window_bounds = array<i64: 256, 128>}, {pipeline_mode = #tpu.pipeline_mode<synchronous>, transform_indices = @transform_5, window_bounds = array<i64: 1, 128>}, {pipeline_mode = #tpu.pipeline_mode<synchronous>, transform_indices = @transform_6, window_bounds = array<i64: 128, 128>}, {pipeline_mode = #tpu.pipeline_mode<synchronous>, transform_indices = @transform_7, window_bounds = array<i64: 1, 128>}, {pipeline_mode = #tpu.pipeline_mode<synchronous>, transform_indices = @transform_8, window_bounds = array<i64: 128, 128>}, {pipeline_mode = #tpu.pipeline_mode<synchronous>, transform_indices = @transform_9, window_bounds = array<i64: 1, 128>}, {transform_indices = @transform_10, window_bounds = array<i64: 256, 128>}]} {
    %c0_i32 = arith.constant 0 : i32
    %0 = arith.cmpi eq, %arg0, %c0_i32 : i32
    %1 = arith.extui %0 : i1 to i32
    %c0_i32_0 = arith.constant 0 : i32
    %2 = arith.cmpi ne, %1, %c0_i32_0 : i32
    scf.if %2 {
      %c0 = arith.constant 0 : index
      %c0_4 = arith.constant 0 : index
      %12 = vector.load %arg3[%c0, %c0_4] : memref<256x512xf32, #tpu.memory_space<vmem>>, vector<256x512xf32>
      %c0_5 = arith.constant 0 : index
      %c0_6 = arith.constant 0 : index
      %13 = vector.load %arg2[%c0_5, %c0_6] : memref<256x512xf32, #tpu.memory_space<vmem>>, vector<256x512xf32>
      %14 = arith.subf %12, %13 : vector<256x512xf32>
      %15 = math.absf %14 : vector<256x512xf32>
      %16 = arith.truncf %15 : vector<256x512xf32> to vector<256x512xbf16>
      %c0_7 = arith.constant 0 : index
      %c0_8 = arith.constant 0 : index
      %17 = vector.load %arg4[%c0_7, %c0_8] : memref<512x256xbf16, #tpu.memory_space<vmem>>, vector<512x256xbf16>
      %cst = arith.constant dense<0.000000e+00> : vector<256x256xf32>
      %18 = tpu.matmul %16, %17, %cst {dimension_numbers = #tpu.dot_dimension_numbers<[1], [0], [0], [1], [0, 0, 1, 1], [], []>} : vector<256x512xbf16>, vector<512x256xbf16>, vector<256x256xf32> -> vector<256x256xf32>
      %c0_9 = arith.constant 0 : index
      %c0_10 = arith.constant 0 : index
      %19 = vector.load %arg5[%c0_9, %c0_10] : memref<1x256xf32, #tpu.memory_space<vmem>>, vector<1x256xf32>
      %20 = vector.broadcast %19 : vector<1x256xf32> to vector<256x256xf32>
      %21 = arith.addf %18, %20 : vector<256x256xf32>
      %cst_11 = arith.constant 0.00999999977 : f32
      %22 = vector.broadcast %cst_11 : f32 to vector<256x256xf32>
      %23 = arith.mulf %22, %21 : vector<256x256xf32>
      %24 = arith.maximumf %21, %23 : vector<256x256xf32>
      %c0_i32_12 = arith.constant 0 : i32
      %25 = arith.cmpi eq, %arg1, %c0_i32_12 : i32
      %26 = arith.extui %25 : i1 to i32
      %c0_i32_13 = arith.constant 0 : i32
      %27 = arith.cmpi ne, %26, %c0_i32_13 : i32
      scf.if %27 {
        %cst_25 = arith.constant 0.000000e+00 : f32
        %44 = vector.broadcast %cst_25 : f32 to vector<2x256xf32>
        %c0_26 = arith.constant 0 : index
        %c0_27 = arith.constant 0 : index
        %45 = vector.load %arg14[%c0_26, %c0_27] : memref<2x256xf32, #tpu.memory_space<vmem>>, vector<2x256xf32>
        tpu.vector_store %arg14[%c0_26, %c0_27], %44 {strides = array<i32>} : memref<2x256xf32, #tpu.memory_space<vmem>>, vector<2x256xf32>,
      } else {
      }
      %c0_14 = arith.constant 0 : index
      %c0_15 = arith.constant 0 : index
      %28 = vector.load %arg14[%c0_14, %c0_15] : memref<2x256xf32, #tpu.memory_space<vmem>>, vector<1x256xf32>
      %cst_16 = arith.constant dense<0.000000e+00> : vector<256xf32>
      %29 = vector.multi_reduction <add>, %24, %cst_16 [0] : vector<256x256xf32> to vector<256xf32>
      %30 = vector.shape_cast %29 : vector<256xf32> to vector<1x256xf32>
      %31 = arith.addf %28, %30 : vector<1x256xf32>
      %c0_17 = arith.constant 0 : index
      %c0_18 = arith.constant 0 : index
      %32 = vector.load %arg14[%c0_17, %c0_18] : memref<2x256xf32, #tpu.memory_space<vmem>>, vector<1x256xf32>
      tpu.vector_store %arg14[%c0_17, %c0_18], %31 {strides = array<i32>} : memref<2x256xf32, #tpu.memory_space<vmem>>, vector<1x256xf32>,
      %c1 = arith.constant 1 : index
      %c0_19 = arith.constant 0 : index
      %33 = vector.load %arg14[%c1, %c0_19] : memref<2x256xf32, #tpu.memory_space<vmem>>, vector<1x256xf32>
      %34 = arith.mulf %24, %24 : vector<256x256xf32>
      %cst_20 = arith.constant dense<0.000000e+00> : vector<256xf32>
      %35 = vector.multi_reduction <add>, %34, %cst_20 [0] : vector<256x256xf32> to vector<256xf32>
      %36 = vector.shape_cast %35 : vector<256xf32> to vector<1x256xf32>
      %37 = arith.addf %33, %36 : vector<1x256xf32>
      %c1_21 = arith.constant 1 : index
      %c0_22 = arith.constant 0 : index
      %38 = vector.load %arg14[%c1_21, %c0_22] : memref<2x256xf32, #tpu.memory_space<vmem>>, vector<1x256xf32>
      tpu.vector_store %arg14[%c1_21, %c0_22], %37 {strides = array<i32>} : memref<2x256xf32, #tpu.memory_space<vmem>>, vector<1x256xf32>,
      %39 = arith.truncf %24 : vector<256x256xf32> to vector<256x256xbf16>
      %40 = arith.index_cast %arg1 : i32 to index
      %c0_23 = arith.constant 0 : index
      %c0_24 = arith.constant 0 : index
      %41 = vector.load %arg13[%40, %c0_23, %c0_24] : memref<2x256x256xbf16, #tpu.memory_space<vmem>>, vector<1x256x256xbf16>
      %42 = vector.shape_cast %41 : vector<1x256x256xbf16> to vector<256x256xbf16>
      %43 = vector.shape_cast %39 : vector<256x256xbf16> to vector<1x256x256xbf16>
      tpu.vector_store %arg13[%40, %c0_23, %c0_24], %43 {strides = array<i32>} : memref<2x256x256xbf16, #tpu.memory_space<vmem>>, vector<1x256x256xbf16>,
    } else {
    }
    %c1_i32 = arith.constant 1 : i32
    %3 = arith.cmpi eq, %arg0, %c1_i32 : i32
    %4 = arith.extui %3 : i1 to i32
    %c0_i32_1 = arith.constant 0 : i32
    %5 = arith.cmpi ne, %4, %c0_i32_1 : i32
    scf.if %5 {
      %c0_i32_4 = arith.constant 0 : i32
      %12 = arith.cmpi eq, %arg1, %c0_i32_4 : i32
      %13 = arith.extui %12 : i1 to i32
      %c0_i32_5 = arith.constant 0 : i32
      %14 = arith.cmpi ne, %13, %c0_i32_5 : i32
      scf.if %14 {
        %c0_27 = arith.constant 0 : index
        %c0_28 = arith.constant 0 : index
        %48 = vector.load %arg14[%c0_27, %c0_28] : memref<2x256xf32, #tpu.memory_space<vmem>>, vector<1x256xf32>
        %cst_29 = arith.constant 0.001953125 : f32
        %49 = vector.broadcast %cst_29 : f32 to vector<1x256xf32>
        %50 = arith.mulf %48, %49 : vector<1x256xf32>
        %c1_30 = arith.constant 1 : index
        %c0_31 = arith.constant 0 : index
        %51 = vector.load %arg14[%c1_30, %c0_31] : memref<2x256xf32, #tpu.memory_space<vmem>>, vector<1x256xf32>
        %cst_32 = arith.constant 0.001953125 : f32
        %52 = vector.broadcast %cst_32 : f32 to vector<1x256xf32>
        %53 = arith.mulf %51, %52 : vector<1x256xf32>
        %54 = arith.mulf %50, %50 : vector<1x256xf32>
        %55 = arith.subf %53, %54 : vector<1x256xf32>
        %c0_33 = arith.constant 0 : index
        %c0_34 = arith.constant 0 : index
        %56 = vector.load %arg17[%c0_33, %c0_34] : memref<2x256xf32, #tpu.memory_space<vmem>>, vector<1x256xf32>
        tpu.vector_store %arg17[%c0_33, %c0_34], %50 {strides = array<i32>} : memref<2x256xf32, #tpu.memory_space<vmem>>, vector<1x256xf32>,
        %cst_35 = arith.constant 9.99999974E-6 : f32
        %57 = vector.broadcast %cst_35 : f32 to vector<1x256xf32>
        %58 = arith.addf %55, %57 : vector<1x256xf32>
        %59 = math.rsqrt %58 : vector<1x256xf32>
        %c1_36 = arith.constant 1 : index
        %c0_37 = arith.constant 0 : index
        %60 = vector.load %arg17[%c1_36, %c0_37] : memref<2x256xf32, #tpu.memory_space<vmem>>, vector<1x256xf32>
        tpu.vector_store %arg17[%c1_36, %c0_37], %59 {strides = array<i32>} : memref<2x256xf32, #tpu.memory_space<vmem>>, vector<1x256xf32>,
      } else {
      }
      %15 = arith.index_cast %arg1 : i32 to index
      %c0 = arith.constant 0 : index
      %c0_6 = arith.constant 0 : index
      %16 = vector.load %arg13[%15, %c0, %c0_6] : memref<2x256x256xbf16, #tpu.memory_space<vmem>>, vector<1x256x256xbf16>
      %17 = vector.shape_cast %16 : vector<1x256x256xbf16> to vector<256x256xbf16>
      %c0_7 = arith.constant 0 : index
      %c0_8 = arith.constant 0 : index
      %18 = vector.load %arg17[%c0_7, %c0_8] : memref<2x256xf32, #tpu.memory_space<vmem>>, vector<1x256xf32>
      %19 = arith.extf %17 : vector<256x256xbf16> to vector<256x256xf32>
      %20 = vector.broadcast %18 : vector<1x256xf32> to vector<256x256xf32>
      %21 = arith.subf %19, %20 : vector<256x256xf32>
      %c1 = arith.constant 1 : index
      %c0_9 = arith.constant 0 : index
      %22 = vector.load %arg17[%c1, %c0_9] : memref<2x256xf32, #tpu.memory_space<vmem>>, vector<1x256xf32>
      %23 = vector.broadcast %22 : vector<1x256xf32> to vector<256x256xf32>
      %24 = arith.mulf %21, %23 : vector<256x256xf32>
      %25 = arith.truncf %24 : vector<256x256xf32> to vector<256x256xbf16>
      %c0_10 = arith.constant 0 : index
      %c0_11 = arith.constant 0 : index
      %26 = vector.load %arg6[%c0_10, %c0_11] : memref<256x128xbf16, #tpu.memory_space<vmem>>, vector<256x128xbf16>
      %cst = arith.constant dense<0.000000e+00> : vector<256x128xf32>
      %27 = tpu.matmul %25, %26, %cst {dimension_numbers = #tpu.dot_dimension_numbers<[1], [0], [0], [1], [0, 0, 1, 1], [], []>} : vector<256x256xbf16>, vector<256x128xbf16>, vector<256x128xf32> -> vector<256x128xf32>
      %c0_12 = arith.constant 0 : index
      %c0_13 = arith.constant 0 : index
      %28 = vector.load %arg7[%c0_12, %c0_13] : memref<1x128xf32, #tpu.memory_space<vmem>>, vector<1x128xf32>
      %29 = vector.broadcast %28 : vector<1x128xf32> to vector<256x128xf32>
      %30 = arith.addf %27, %29 : vector<256x128xf32>
      %cst_14 = arith.constant 0.00999999977 : f32
      %31 = vector.broadcast %cst_14 : f32 to vector<256x128xf32>
      %32 = arith.mulf %31, %30 : vector<256x128xf32>
      %33 = arith.maximumf %30, %32 : vector<256x128xf32>
      %c0_i32_15 = arith.constant 0 : i32
      %34 = arith.cmpi eq, %arg1, %c0_i32_15 : i32
      %35 = arith.extui %34 : i1 to i32
      %c0_i32_16 = arith.constant 0 : i32
      %36 = arith.cmpi ne, %35, %c0_i32_16 : i32
      scf.if %36 {
        %cst_27 = arith.constant 0.000000e+00 : f32
        %48 = vector.broadcast %cst_27 : f32 to vector<2x128xf32>
        %c0_28 = arith.constant 0 : index
        %c0_29 = arith.constant 0 : index
        %49 = vector.load %arg15[%c0_28, %c0_29] : memref<2x128xf32, #tpu.memory_space<vmem>>, vector<2x128xf32>
        tpu.vector_store %arg15[%c0_28, %c0_29], %48 {strides = array<i32>} : memref<2x128xf32, #tpu.memory_space<vmem>>, vector<2x128xf32>,
      } else {
      }
      %c0_17 = arith.constant 0 : index
      %c0_18 = arith.constant 0 : index
      %37 = vector.load %arg15[%c0_17, %c0_18] : memref<2x128xf32, #tpu.memory_space<vmem>>, vector<1x128xf32>
      %cst_19 = arith.constant dense<0.000000e+00> : vector<128xf32>
      %38 = vector.multi_reduction <add>, %33, %cst_19 [0] : vector<256x128xf32> to vector<128xf32>
      %39 = vector.shape_cast %38 : vector<128xf32> to vector<1x128xf32>
      %40 = arith.addf %37, %39 : vector<1x128xf32>
      %c0_20 = arith.constant 0 : index
      %c0_21 = arith.constant 0 : index
      %41 = vector.load %arg15[%c0_20, %c0_21] : memref<2x128xf32, #tpu.memory_space<vmem>>, vector<1x128xf32>
      tpu.vector_store %arg15[%c0_20, %c0_21], %40 {strides = array<i32>} : memref<2x128xf32, #tpu.memory_space<vmem>>, vector<1x128xf32>,
      %c1_22 = arith.constant 1 : index
      %c0_23 = arith.constant 0 : index
      %42 = vector.load %arg15[%c1_22, %c0_23] : memref<2x128xf32, #tpu.memory_space<vmem>>, vector<1x128xf32>
      %43 = arith.mulf %33, %33 : vector<256x128xf32>
      %cst_24 = arith.constant dense<0.000000e+00> : vector<128xf32>
      %44 = vector.multi_reduction <add>, %43, %cst_24 [0] : vector<256x128xf32> to vector<128xf32>
      %45 = vector.shape_cast %44 : vector<128xf32> to vector<1x128xf32>
      %46 = arith.addf %42, %45 : vector<1x128xf32>
      %c1_25 = arith.constant 1 : index
      %c0_26 = arith.constant 0 : index
      %47 = vector.load %arg15[%c1_25, %c0_26] : memref<2x128xf32, #tpu.memory_space<vmem>>, vector<1x128xf32>
      tpu.vector_store %arg15[%c1_25, %c0_26], %46 {strides = array<i32>} : memref<2x128xf32, #tpu.memory_space<vmem>>, vector<1x128xf32>,
    } else {
    }
    %c2_i32 = arith.constant 2 : i32
    %6 = arith.cmpi eq, %arg0, %c2_i32 : i32
    %7 = arith.extui %6 : i1 to i32
    %c0_i32_2 = arith.constant 0 : i32
    %8 = arith.cmpi ne, %7, %c0_i32_2 : i32
    scf.if %8 {
      %c0_i32_4 = arith.constant 0 : i32
      %12 = arith.cmpi eq, %arg1, %c0_i32_4 : i32
      %13 = arith.extui %12 : i1 to i32
      %c0_i32_5 = arith.constant 0 : i32
      %14 = arith.cmpi ne, %13, %c0_i32_5 : i32
      scf.if %14 {
        %c0_37 = arith.constant 0 : index
        %c0_38 = arith.constant 0 : index
        %63 = vector.load %arg15[%c0_37, %c0_38] : memref<2x128xf32, #tpu.memory_space<vmem>>, vector<1x128xf32>
        %cst_39 = arith.constant 0.001953125 : f32
        %64 = vector.broadcast %cst_39 : f32 to vector<1x128xf32>
        %65 = arith.mulf %63, %64 : vector<1x128xf32>
        %c1_40 = arith.constant 1 : index
        %c0_41 = arith.constant 0 : index
        %66 = vector.load %arg15[%c1_40, %c0_41] : memref<2x128xf32, #tpu.memory_space<vmem>>, vector<1x128xf32>
        %cst_42 = arith.constant 0.001953125 : f32
        %67 = vector.broadcast %cst_42 : f32 to vector<1x128xf32>
        %68 = arith.mulf %66, %67 : vector<1x128xf32>
        %69 = arith.mulf %65, %65 : vector<1x128xf32>
        %70 = arith.subf %68, %69 : vector<1x128xf32>
        %c0_43 = arith.constant 0 : index
        %c0_44 = arith.constant 0 : index
        %71 = vector.load %arg18[%c0_43, %c0_44] : memref<2x128xf32, #tpu.memory_space<vmem>>, vector<1x128xf32>
        tpu.vector_store %arg18[%c0_43, %c0_44], %65 {strides = array<i32>} : memref<2x128xf32, #tpu.memory_space<vmem>>, vector<1x128xf32>,
        %cst_45 = arith.constant 9.99999974E-6 : f32
        %72 = vector.broadcast %cst_45 : f32 to vector<1x128xf32>
        %73 = arith.addf %70, %72 : vector<1x128xf32>
        %74 = math.rsqrt %73 : vector<1x128xf32>
        %c1_46 = arith.constant 1 : index
        %c0_47 = arith.constant 0 : index
        %75 = vector.load %arg18[%c1_46, %c0_47] : memref<2x128xf32, #tpu.memory_space<vmem>>, vector<1x128xf32>
        tpu.vector_store %arg18[%c1_46, %c0_47], %74 {strides = array<i32>} : memref<2x128xf32, #tpu.memory_space<vmem>>, vector<1x128xf32>,
      } else {
      }
      %15 = arith.index_cast %arg1 : i32 to index
      %c0 = arith.constant 0 : index
      %c0_6 = arith.constant 0 : index
      %16 = vector.load %arg13[%15, %c0, %c0_6] : memref<2x256x256xbf16, #tpu.memory_space<vmem>>, vector<1x256x256xbf16>
      %17 = vector.shape_cast %16 : vector<1x256x256xbf16> to vector<256x256xbf16>
      %c0_7 = arith.constant 0 : index
      %c0_8 = arith.constant 0 : index
      %18 = vector.load %arg17[%c0_7, %c0_8] : memref<2x256xf32, #tpu.memory_space<vmem>>, vector<1x256xf32>
      %19 = arith.extf %17 : vector<256x256xbf16> to vector<256x256xf32>
      %20 = vector.broadcast %18 : vector<1x256xf32> to vector<256x256xf32>
      %21 = arith.subf %19, %20 : vector<256x256xf32>
      %c1 = arith.constant 1 : index
      %c0_9 = arith.constant 0 : index
      %22 = vector.load %arg17[%c1, %c0_9] : memref<2x256xf32, #tpu.memory_space<vmem>>, vector<1x256xf32>
      %23 = vector.broadcast %22 : vector<1x256xf32> to vector<256x256xf32>
      %24 = arith.mulf %21, %23 : vector<256x256xf32>
      %25 = arith.truncf %24 : vector<256x256xf32> to vector<256x256xbf16>
      %c0_10 = arith.constant 0 : index
      %c0_11 = arith.constant 0 : index
      %26 = vector.load %arg6[%c0_10, %c0_11] : memref<256x128xbf16, #tpu.memory_space<vmem>>, vector<256x128xbf16>
      %cst = arith.constant dense<0.000000e+00> : vector<256x128xf32>
      %27 = tpu.matmul %25, %26, %cst {dimension_numbers = #tpu.dot_dimension_numbers<[1], [0], [0], [1], [0, 0, 1, 1], [], []>} : vector<256x256xbf16>, vector<256x128xbf16>, vector<256x128xf32> -> vector<256x128xf32>
      %c0_12 = arith.constant 0 : index
      %c0_13 = arith.constant 0 : index
      %28 = vector.load %arg7[%c0_12, %c0_13] : memref<1x128xf32, #tpu.memory_space<vmem>>, vector<1x128xf32>
      %29 = vector.broadcast %28 : vector<1x128xf32> to vector<256x128xf32>
      %30 = arith.addf %27, %29 : vector<256x128xf32>
      %cst_14 = arith.constant 0.00999999977 : f32
      %31 = vector.broadcast %cst_14 : f32 to vector<256x128xf32>
      %32 = arith.mulf %31, %30 : vector<256x128xf32>
      %33 = arith.maximumf %30, %32 : vector<256x128xf32>
      %c0_15 = arith.constant 0 : index
      %c0_16 = arith.constant 0 : index
      %34 = vector.load %arg18[%c0_15, %c0_16] : memref<2x128xf32, #tpu.memory_space<vmem>>, vector<1x128xf32>
      %35 = vector.broadcast %34 : vector<1x128xf32> to vector<256x128xf32>
      %36 = arith.subf %33, %35 : vector<256x128xf32>
      %c1_17 = arith.constant 1 : index
      %c0_18 = arith.constant 0 : index
      %37 = vector.load %arg18[%c1_17, %c0_18] : memref<2x128xf32, #tpu.memory_space<vmem>>, vector<1x128xf32>
      %38 = vector.broadcast %37 : vector<1x128xf32> to vector<256x128xf32>
      %39 = arith.mulf %36, %38 : vector<256x128xf32>
      %40 = arith.truncf %39 : vector<256x128xf32> to vector<256x128xbf16>
      %c0_19 = arith.constant 0 : index
      %c0_20 = arith.constant 0 : index
      %41 = vector.load %arg8[%c0_19, %c0_20] : memref<128x128xbf16, #tpu.memory_space<vmem>>, vector<128x128xbf16>
      %cst_21 = arith.constant dense<0.000000e+00> : vector<256x128xf32>
      %42 = tpu.matmul %40, %41, %cst_21 {dimension_numbers = #tpu.dot_dimension_numbers<[1], [0], [0], [1], [0, 0, 1, 1], [], []>} : vector<256x128xbf16>, vector<128x128xbf16>, vector<256x128xf32> -> vector<256x128xf32>
      %c0_22 = arith.constant 0 : index
      %c0_23 = arith.constant 0 : index
      %43 = vector.load %arg9[%c0_22, %c0_23] : memref<1x128xf32, #tpu.memory_space<vmem>>, vector<1x128xf32>
      %44 = vector.broadcast %43 : vector<1x128xf32> to vector<256x128xf32>
      %45 = arith.addf %42, %44 : vector<256x128xf32>
      %cst_24 = arith.constant 0.00999999977 : f32
      %46 = vector.broadcast %cst_24 : f32 to vector<256x128xf32>
      %47 = arith.mulf %46, %45 : vector<256x128xf32>
      %48 = arith.maximumf %45, %47 : vector<256x128xf32>
      %c0_i32_25 = arith.constant 0 : i32
      %49 = arith.cmpi eq, %arg1, %c0_i32_25 : i32
      %50 = arith.extui %49 : i1 to i32
      %c0_i32_26 = arith.constant 0 : i32
      %51 = arith.cmpi ne, %50, %c0_i32_26 : i32
      scf.if %51 {
        %cst_37 = arith.constant 0.000000e+00 : f32
        %63 = vector.broadcast %cst_37 : f32 to vector<2x128xf32>
        %c0_38 = arith.constant 0 : index
        %c0_39 = arith.constant 0 : index
        %64 = vector.load %arg16[%c0_38, %c0_39] : memref<2x128xf32, #tpu.memory_space<vmem>>, vector<2x128xf32>
        tpu.vector_store %arg16[%c0_38, %c0_39], %63 {strides = array<i32>} : memref<2x128xf32, #tpu.memory_space<vmem>>, vector<2x128xf32>,
      } else {
      }
      %c0_27 = arith.constant 0 : index
      %c0_28 = arith.constant 0 : index
      %52 = vector.load %arg16[%c0_27, %c0_28] : memref<2x128xf32, #tpu.memory_space<vmem>>, vector<1x128xf32>
      %cst_29 = arith.constant dense<0.000000e+00> : vector<128xf32>
      %53 = vector.multi_reduction <add>, %48, %cst_29 [0] : vector<256x128xf32> to vector<128xf32>
      %54 = vector.shape_cast %53 : vector<128xf32> to vector<1x128xf32>
      %55 = arith.addf %52, %54 : vector<1x128xf32>
      %c0_30 = arith.constant 0 : index
      %c0_31 = arith.constant 0 : index
      %56 = vector.load %arg16[%c0_30, %c0_31] : memref<2x128xf32, #tpu.memory_space<vmem>>, vector<1x128xf32>
      tpu.vector_store %arg16[%c0_30, %c0_31], %55 {strides = array<i32>} : memref<2x128xf32, #tpu.memory_space<vmem>>, vector<1x128xf32>,
      %c1_32 = arith.constant 1 : index
      %c0_33 = arith.constant 0 : index
      %57 = vector.load %arg16[%c1_32, %c0_33] : memref<2x128xf32, #tpu.memory_space<vmem>>, vector<1x128xf32>
      %58 = arith.mulf %48, %48 : vector<256x128xf32>
      %cst_34 = arith.constant dense<0.000000e+00> : vector<128xf32>
      %59 = vector.multi_reduction <add>, %58, %cst_34 [0] : vector<256x128xf32> to vector<128xf32>
      %60 = vector.shape_cast %59 : vector<128xf32> to vector<1x128xf32>
      %61 = arith.addf %57, %60 : vector<1x128xf32>
      %c1_35 = arith.constant 1 : index
      %c0_36 = arith.constant 0 : index
      %62 = vector.load %arg16[%c1_35, %c0_36] : memref<2x128xf32, #tpu.memory_space<vmem>>, vector<1x128xf32>
      tpu.vector_store %arg16[%c1_35, %c0_36], %61 {strides = array<i32>} : memref<2x128xf32, #tpu.memory_space<vmem>>, vector<1x128xf32>,
    } else {
    }
    %c3_i32 = arith.constant 3 : i32
    %9 = arith.cmpi eq, %arg0, %c3_i32 : i32
    %10 = arith.extui %9 : i1 to i32
    %c0_i32_3 = arith.constant 0 : i32
    %11 = arith.cmpi ne, %10, %c0_i32_3 : i32
    scf.if %11 {
      %c0_i32_4 = arith.constant 0 : i32
      %12 = arith.cmpi eq, %arg1, %c0_i32_4 : i32
      %13 = arith.extui %12 : i1 to i32
      %c0_i32_5 = arith.constant 0 : i32
      %14 = arith.cmpi ne, %13, %c0_i32_5 : i32
      scf.if %14 {
        %c0_37 = arith.constant 0 : index
        %c0_38 = arith.constant 0 : index
        %67 = vector.load %arg16[%c0_37, %c0_38] : memref<2x128xf32, #tpu.memory_space<vmem>>, vector<1x128xf32>
        %cst_39 = arith.constant 0.001953125 : f32
        %68 = vector.broadcast %cst_39 : f32 to vector<1x128xf32>
        %69 = arith.mulf %67, %68 : vector<1x128xf32>
        %c1_40 = arith.constant 1 : index
        %c0_41 = arith.constant 0 : index
        %70 = vector.load %arg16[%c1_40, %c0_41] : memref<2x128xf32, #tpu.memory_space<vmem>>, vector<1x128xf32>
        %cst_42 = arith.constant 0.001953125 : f32
        %71 = vector.broadcast %cst_42 : f32 to vector<1x128xf32>
        %72 = arith.mulf %70, %71 : vector<1x128xf32>
        %73 = arith.mulf %69, %69 : vector<1x128xf32>
        %74 = arith.subf %72, %73 : vector<1x128xf32>
        %c0_43 = arith.constant 0 : index
        %c0_44 = arith.constant 0 : index
        %75 = vector.load %arg19[%c0_43, %c0_44] : memref<2x128xf32, #tpu.memory_space<vmem>>, vector<1x128xf32>
        tpu.vector_store %arg19[%c0_43, %c0_44], %69 {strides = array<i32>} : memref<2x128xf32, #tpu.memory_space<vmem>>, vector<1x128xf32>,
        %cst_45 = arith.constant 9.99999974E-6 : f32
        %76 = vector.broadcast %cst_45 : f32 to vector<1x128xf32>
        %77 = arith.addf %74, %76 : vector<1x128xf32>
        %78 = math.rsqrt %77 : vector<1x128xf32>
        %c1_46 = arith.constant 1 : index
        %c0_47 = arith.constant 0 : index
        %79 = vector.load %arg19[%c1_46, %c0_47] : memref<2x128xf32, #tpu.memory_space<vmem>>, vector<1x128xf32>
        tpu.vector_store %arg19[%c1_46, %c0_47], %78 {strides = array<i32>} : memref<2x128xf32, #tpu.memory_space<vmem>>, vector<1x128xf32>,
      } else {
      }
      %15 = arith.index_cast %arg1 : i32 to index
      %c0 = arith.constant 0 : index
      %c0_6 = arith.constant 0 : index
      %16 = vector.load %arg13[%15, %c0, %c0_6] : memref<2x256x256xbf16, #tpu.memory_space<vmem>>, vector<1x256x256xbf16>
      %17 = vector.shape_cast %16 : vector<1x256x256xbf16> to vector<256x256xbf16>
      %c0_7 = arith.constant 0 : index
      %c0_8 = arith.constant 0 : index
      %18 = vector.load %arg17[%c0_7, %c0_8] : memref<2x256xf32, #tpu.memory_space<vmem>>, vector<1x256xf32>
      %19 = arith.extf %17 : vector<256x256xbf16> to vector<256x256xf32>
      %20 = vector.broadcast %18 : vector<1x256xf32> to vector<256x256xf32>
      %21 = arith.subf %19, %20 : vector<256x256xf32>
      %c1 = arith.constant 1 : index
      %c0_9 = arith.constant 0 : index
      %22 = vector.load %arg17[%c1, %c0_9] : memref<2x256xf32, #tpu.memory_space<vmem>>, vector<1x256xf32>
      %23 = vector.broadcast %22 : vector<1x256xf32> to vector<256x256xf32>
      %24 = arith.mulf %21, %23 : vector<256x256xf32>
      %25 = arith.truncf %24 : vector<256x256xf32> to vector<256x256xbf16>
      %c0_10 = arith.constant 0 : index
      %c0_11 = arith.constant 0 : index
      %26 = vector.load %arg6[%c0_10, %c0_11] : memref<256x128xbf16, #tpu.memory_space<vmem>>, vector<256x128xbf16>
      %cst = arith.constant dense<0.000000e+00> : vector<256x128xf32>
      %27 = tpu.matmul %25, %26, %cst {dimension_numbers = #tpu.dot_dimension_numbers<[1], [0], [0], [1], [0, 0, 1, 1], [], []>} : vector<256x256xbf16>, vector<256x128xbf16>, vector<256x128xf32> -> vector<256x128xf32>
      %c0_12 = arith.constant 0 : index
      %c0_13 = arith.constant 0 : index
      %28 = vector.load %arg7[%c0_12, %c0_13] : memref<1x128xf32, #tpu.memory_space<vmem>>, vector<1x128xf32>
      %29 = vector.broadcast %28 : vector<1x128xf32> to vector<256x128xf32>
      %30 = arith.addf %27, %29 : vector<256x128xf32>
      %cst_14 = arith.constant 0.00999999977 : f32
      %31 = vector.broadcast %cst_14 : f32 to vector<256x128xf32>
      %32 = arith.mulf %31, %30 : vector<256x128xf32>
      %33 = arith.maximumf %30, %32 : vector<256x128xf32>
      %c0_15 = arith.constant 0 : index
      %c0_16 = arith.constant 0 : index
      %34 = vector.load %arg18[%c0_15, %c0_16] : memref<2x128xf32, #tpu.memory_space<vmem>>, vector<1x128xf32>
      %35 = vector.broadcast %34 : vector<1x128xf32> to vector<256x128xf32>
      %36 = arith.subf %33, %35 : vector<256x128xf32>
      %c1_17 = arith.constant 1 : index
      %c0_18 = arith.constant 0 : index
      %37 = vector.load %arg18[%c1_17, %c0_18] : memref<2x128xf32, #tpu.memory_space<vmem>>, vector<1x128xf32>
      %38 = vector.broadcast %37 : vector<1x128xf32> to vector<256x128xf32>
      %39 = arith.mulf %36, %38 : vector<256x128xf32>
      %40 = arith.truncf %39 : vector<256x128xf32> to vector<256x128xbf16>
      %c0_19 = arith.constant 0 : index
      %c0_20 = arith.constant 0 : index
      %41 = vector.load %arg8[%c0_19, %c0_20] : memref<128x128xbf16, #tpu.memory_space<vmem>>, vector<128x128xbf16>
      %cst_21 = arith.constant dense<0.000000e+00> : vector<256x128xf32>
      %42 = tpu.matmul %40, %41, %cst_21 {dimension_numbers = #tpu.dot_dimension_numbers<[1], [0], [0], [1], [0, 0, 1, 1], [], []>} : vector<256x128xbf16>, vector<128x128xbf16>, vector<256x128xf32> -> vector<256x128xf32>
      %c0_22 = arith.constant 0 : index
      %c0_23 = arith.constant 0 : index
      %43 = vector.load %arg9[%c0_22, %c0_23] : memref<1x128xf32, #tpu.memory_space<vmem>>, vector<1x128xf32>
      %44 = vector.broadcast %43 : vector<1x128xf32> to vector<256x128xf32>
      %45 = arith.addf %42, %44 : vector<256x128xf32>
      %cst_24 = arith.constant 0.00999999977 : f32
      %46 = vector.broadcast %cst_24 : f32 to vector<256x128xf32>
      %47 = arith.mulf %46, %45 : vector<256x128xf32>
      %48 = arith.maximumf %45, %47 : vector<256x128xf32>
      %c0_25 = arith.constant 0 : index
      %c0_26 = arith.constant 0 : index
      %49 = vector.load %arg19[%c0_25, %c0_26] : memref<2x128xf32, #tpu.memory_space<vmem>>, vector<1x128xf32>
      %50 = vector.broadcast %49 : vector<1x128xf32> to vector<256x128xf32>
      %51 = arith.subf %48, %50 : vector<256x128xf32>
      %c1_27 = arith.constant 1 : index
      %c0_28 = arith.constant 0 : index
      %52 = vector.load %arg19[%c1_27, %c0_28] : memref<2x128xf32, #tpu.memory_space<vmem>>, vector<1x128xf32>
      %53 = vector.broadcast %52 : vector<1x128xf32> to vector<256x128xf32>
      %54 = arith.mulf %51, %53 : vector<256x128xf32>
      %55 = arith.truncf %54 : vector<256x128xf32> to vector<256x128xbf16>
      %c0_29 = arith.constant 0 : index
      %c0_30 = arith.constant 0 : index
      %56 = vector.load %arg10[%c0_29, %c0_30] : memref<128x128xbf16, #tpu.memory_space<vmem>>, vector<128x128xbf16>
      %cst_31 = arith.constant dense<0.000000e+00> : vector<256x128xf32>
      %57 = tpu.matmul %55, %56, %cst_31 {dimension_numbers = #tpu.dot_dimension_numbers<[1], [0], [0], [1], [0, 0, 1, 1], [], []>} : vector<256x128xbf16>, vector<128x128xbf16>, vector<256x128xf32> -> vector<256x128xf32>
      %c0_32 = arith.constant 0 : index
      %c0_33 = arith.constant 0 : index
      %58 = vector.load %arg11[%c0_32, %c0_33] : memref<1x128xf32, #tpu.memory_space<vmem>>, vector<1x128xf32>
      %59 = vector.broadcast %58 : vector<1x128xf32> to vector<256x128xf32>
      %60 = arith.addf %57, %59 : vector<256x128xf32>
      %61 = arith.negf %60 : vector<256x128xf32>
      %62 = math.exp %61 : vector<256x128xf32>
      %cst_34 = arith.constant 1.000000e+00 : f32
      %63 = vector.broadcast %cst_34 : f32 to vector<256x128xf32>
      %64 = arith.addf %63, %62 : vector<256x128xf32>
      %65 = arith.divf %63, %64 : vector<256x128xf32>
      %c0_35 = arith.constant 0 : index
      %c0_36 = arith.constant 0 : index
      %66 = vector.load %arg12[%c0_35, %c0_36] : memref<256x128xf32, #tpu.memory_space<vmem>>, vector<256x128xf32>
      tpu.vector_store %arg12[%c0_35, %c0_36], %65 {strides = array<i32>} : memref<256x128xf32, #tpu.memory_space<vmem>>, vector<256x128xf32>,
    } else {
    }
    return
  }
  func.func @transform_0(%arg0: i32, %arg1: i32) -> (i32, i32) {
    %c0_i32 = arith.constant 0 : i32
    %0 = arith.cmpi eq, %arg0, %c0_i32 : i32
    %c0_i32_0 = arith.constant 0 : i32
    %1 = arith.select %0, %arg1, %c0_i32_0 : i32
    %c0_i32_1 = arith.constant 0 : i32
    %c0_i32_2 = arith.constant 0 : i32
    return %1, %c0_i32_1 : i32, i32
  }
  func.func @transform_1(%arg0: i32, %arg1: i32) -> (i32, i32) {
    %c0_i32 = arith.constant 0 : i32
    %0 = arith.cmpi eq, %arg0, %c0_i32 : i32
    %c0_i32_0 = arith.constant 0 : i32
    %1 = arith.select %0, %arg1, %c0_i32_0 : i32
    %c0_i32_1 = arith.constant 0 : i32
    %c0_i32_2 = arith.constant 0 : i32
    return %1, %c0_i32_1 : i32, i32
  }
  func.func @transform_2(%arg0: i32, %arg1: i32) -> (i32, i32) {
    %c0_i32 = arith.constant 0 : i32
    %c0_i32_0 = arith.constant 0 : i32
    %c0_i32_1 = arith.constant 0 : i32
    return %c0_i32, %c0_i32_0 : i32, i32
  }
  func.func @transform_3(%arg0: i32, %arg1: i32) -> (i32, i32) {
    %c0_i32 = arith.constant 0 : i32
    %c0_i32_0 = arith.constant 0 : i32
    %c0_i32_1 = arith.constant 0 : i32
    return %c0_i32, %c0_i32_0 : i32, i32
  }
  func.func @transform_4(%arg0: i32, %arg1: i32) -> (i32, i32) {
    %c0_i32 = arith.constant 0 : i32
    %c0_i32_0 = arith.constant 0 : i32
    %c0_i32_1 = arith.constant 0 : i32
    return %c0_i32, %c0_i32_0 : i32, i32
  }
  func.func @transform_5(%arg0: i32, %arg1: i32) -> (i32, i32) {
    %c0_i32 = arith.constant 0 : i32
    %c0_i32_0 = arith.constant 0 : i32
    %c0_i32_1 = arith.constant 0 : i32
    return %c0_i32, %c0_i32_0 : i32, i32
  }
  func.func @transform_6(%arg0: i32, %arg1: i32) -> (i32, i32) {
    %c0_i32 = arith.constant 0 : i32
    %c0_i32_0 = arith.constant 0 : i32
    %c0_i32_1 = arith.constant 0 : i32
    return %c0_i32, %c0_i32_0 : i32, i32
  }
  func.func @transform_7(%arg0: i32, %arg1: i32) -> (i32, i32) {
    %c0_i32 = arith.constant 0 : i32
    %c0_i32_0 = arith.constant 0 : i32
    %c0_i32_1 = arith.constant 0 : i32
    return %c0_i32, %c0_i32_0 : i32, i32
  }
  func.func @transform_8(%arg0: i32, %arg1: i32) -> (i32, i32) {
    %c0_i32 = arith.constant 0 : i32
    %c0_i32_0 = arith.constant 0 : i32
    %c0_i32_1 = arith.constant 0 : i32
    return %c0_i32, %c0_i32_0 : i32, i32
  }
  func.func @transform_9(%arg0: i32, %arg1: i32) -> (i32, i32) {
    %c0_i32 = arith.constant 0 : i32
    %c0_i32_0 = arith.constant 0 : i32
    %c0_i32_1 = arith.constant 0 : i32
    return %c0_i32, %c0_i32_0 : i32, i32
  }
  func.func @transform_10(%arg0: i32, %arg1: i32) -> (i32, i32) {
    %c3_i32 = arith.constant 3 : i32
    %0 = arith.cmpi eq, %arg0, %c3_i32 : i32
    %c0_i32 = arith.constant 0 : i32
    %1 = arith.select %0, %arg1, %c0_i32 : i32
    %c0_i32_0 = arith.constant 0 : i32
    %c0_i32_1 = arith.constant 0 : i32
    return %1, %c0_i32_0 : i32, i32
  }
}

</mosaic_0001>

<llo_original>
// kernel: tpu_custom_call.1
$region0: #{tpu_custom_call.1}
  #allocation0 [shape = 'u32[]', space=smem, size = 0x4, offset = 0x4, fixed_abs, tag = 'smem constant byte address 0x4 - core index']
  #allocation1 [shape = 'u32[144,128]{1,0:T(1,128)}', space=vmem, size = 0x12000, scoped, tag = 'internal scratch']
  #allocation2 [shape = 'bf16[2,256,256]{2,1,0:T(16,128)(2,1)}', space=vmem, size = 0x40000, scoped, tag = 'scratch operand']
  #allocation3 [shape = 'f32[2,256]{1,0:T(2,128)}', space=vmem, size = 0x800, scoped, tag = 'scratch operand']
  #allocation4 [shape = 'f32[2,128]{1,0:T(2,128)}', space=vmem, size = 0x400, scoped, tag = 'scratch operand']
  #allocation5 [shape = 'f32[2,128]{1,0:T(2,128)}', space=vmem, size = 0x400, scoped, tag = 'scratch operand']
  #allocation6 [shape = 'f32[2,256]{1,0:T(2,128)}', space=vmem, size = 0x800, scoped, tag = 'scratch operand']
  #allocation7 [shape = 'f32[2,128]{1,0:T(2,128)}', space=vmem, size = 0x400, scoped, tag = 'scratch operand']
  #allocation8 [shape = 'f32[2,128]{1,0:T(2,128)}', space=vmem, size = 0x400, scoped, tag = 'scratch operand']
  %s0 = inlined_call_operand.hbm [shape: f32[512,512], index: 0, kind: input, shape index: {}]
  %s1 = inlined_call_operand.hbm [shape: f32[512,512], index: 1, kind: input, shape index: {}]
  %s2 = inlined_call_operand.hbm [shape: bf16[512,256], index: 2, kind: input, shape index: {}]
  %s3 = inlined_call_operand.vmem [shape: f32[1,256], index: 3, kind: input, shape index: {}]
  %s4 = inlined_call_operand.hbm [shape: bf16[256,128], index: 4, kind: input, shape index: {}]
  %s5 = inlined_call_operand.vmem [shape: f32[1,128], index: 5, kind: input, shape index: {}]
  %s6 = inlined_call_operand.hbm [shape: bf16[128,128], index: 6, kind: input, shape index: {}]
  %s7 = inlined_call_operand.vmem [shape: f32[1,128], index: 7, kind: input, shape index: {}]
  %s8 = inlined_call_operand.hbm [shape: bf16[128,128], index: 8, kind: input, shape index: {}]
  %s9 = inlined_call_operand.vmem [shape: f32[1,128], index: 9, kind: input, shape index: {}]
  %s10 = inlined_call_operand.hbm [shape: f32[512,128], index: 10, kind: output, shape index: {}]
  %s11 = sld [smem:[#allocation0]]
  $region137: #{tpu_custom_call.1} parent=0
    _
  %s13 = ssub.s32 1, %s11
  %s14 = scalar_select 0, %s13, %s11
  $region1: #{tpu_custom_call.1} parent=0
    #allocation9 [shape = 'u8[1048576]{0}', space=vmem, size = 0x100000, scoped, tag = 'input window, operand 0']
    #allocation10 [shape = 's32[2]{0}', space=sflag, size = 0x8, scoped, tag = 'scoped memory for tpu_custom_call.1']
    #allocation11 [shape = 's32[2]{0}', space=sflag, size = 0x8, scoped, tag = 'scoped memory for tpu_custom_call.1']
    #allocation12 [shape = 'u8[1048576]{0}', space=vmem, size = 0x100000, scoped, tag = 'input window, operand 1']
    #allocation13 [shape = 's32[2]{0}', space=sflag, size = 0x8, scoped, tag = 'scoped memory for tpu_custom_call.1']
    #allocation14 [shape = 'u8[262144]{0}', space=vmem, size = 0x40000, scoped, tag = 'input window, operand 2, single buffered']
    #allocation15 [shape = 'u8[65536]{0}', space=vmem, size = 0x10000, scoped, tag = 'input window, operand 4, single buffered']
    #allocation16 [shape = 's32[1]{0}', space=sflag, size = 0x4, scoped, tag = 'scoped memory for tpu_custom_call.1']
    #allocation17 [shape = 'u8[32768]{0}', space=vmem, size = 0x8000, scoped, tag = 'input window, operand 6, single buffered']
    #allocation18 [shape = 'u8[32768]{0}', space=vmem, size = 0x8000, scoped, tag = 'input window, operand 8, single buffered']
    #allocation19 [shape = 's32[1]{0}', space=sflag, size = 0x4, scoped, tag = 'scoped memory for tpu_custom_call.1']
    #allocation20 [shape = 'u8[262144]{0}', space=vmem, size = 0x40000, scoped, tag = 'output window, operand 0']
    %15 = vsyncpa [#allocation10], 0
    %s16 = scalar_lea.sflag [#allocation10], 1
    %17 = vsyncpa %s16, 0
    %18 = vsyncpa [#allocation13], 0
    %s19 = scalar_lea.sflag [#allocation13], 1
    %20 = vsyncpa %s19, 0
    %21 = vsyncpa [#allocation16], 0
    %22 = vsyncpa [#allocation19], 0
    %23 = vsyncpa [#allocation11], 0
    %s24 = scalar_lea.sflag [#allocation11], 1
    %25 = vsyncpa %s24, 0
    loop: start=0, step=1, limit=10
    $region2: #{tpu_custom_call.1} parent=1 // loop_pre_header
      _
    $region3: #{tpu_custom_call.1} parent=1 // loop_header
      %s27 = sphi 0, %s31
      %p28 = scmp.ge.s32.totalorder %s27, 10
      %s34 = sphi 0, %s46
      %s35 = sphi 0, %s42
      %s36 = sphi 0, %s34
      %s37 = sphi 0, %s35
      %s38 = sphi 0, %s36
      %s39 = sphi 0, %s37
      %s53 = sphi 0, %s55
      %s56 = sphi 0, %s53
      %s57 = sphi 0, %s56
      %s73 = sphi 0, %s57
      %s83 = sphi 0, %s85
      %s86 = sphi 0, %s83
      %s87 = sphi 0, %s86
      %s103 = sphi 0, %s87
      %s107 = sphi 0, %s107
      %s109 = sphi 0, %s107
      %s110 = sphi 0, %s109
      %s124 = sphi 0, %s110
      %s128 = sphi 0, %s128
      %s130 = sphi 0, %s128
      %s131 = sphi 0, %s130
      %s145 = sphi 0, %s131
      %s149 = sphi 0, %s149
      %s151 = sphi 0, %s149
      %s152 = sphi 0, %s151
      %s166 = sphi 0, %s152
      %s170 = sphi 0, %s170
      %s172 = sphi 0, %s170
      %s173 = sphi 0, %s172
      %s187 = sphi 0, %s173
      %s191 = sphi 0, %s191
      %s193 = sphi 0, %s191
      %s194 = sphi 0, %s193
      %s208 = sphi 0, %s194
      %s212 = sphi 0, %s212
      %s214 = sphi 0, %s212
      %s215 = sphi 0, %s214
      %s229 = sphi 0, %s215
      %s233 = sphi 0, %s233
      %s235 = sphi 0, %s233
      %s236 = sphi 0, %s235
      %s250 = sphi 0, %s236
      %s254 = sphi 0, %s254
      %s256 = sphi 0, %s254
      %s257 = sphi 0, %s256
      %s271 = sphi 0, %s257
      %s281 = sphi 0, %s283
      %s284 = sphi 0, %s281
      %s285 = sphi 0, %s284
      %s301 = sphi 0, %s285
    $region4: #{tpu_custom_call.1} parent=1 // loop_header_branch
      %30 = sbr.rel (%p28) target = $region8
    $region5: #{tpu_custom_call.1} parent=1 // loop_body
      %s32 = ssub.s32 %s27, 1
      %s33 = ssub.s32 %s27, 2
      %s40 = sadd.s32 1, %s35
      %p41 = scmp.ge.s32.totalorder %s40, 2
      %s42 = scalar_select %p41, 0, %s40
      %s43 = sadd.s32 1, %s34
      %s44 = scalar_select %p41, %s43, %s34
      %p45 = scmp.ge.s32.totalorder %s44, 4
      %s46 = scalar_select %p45, 0, %s44
      %p47 = scmp.eq.s32.totalorder %s34, 0
      %s48 = scalar_select %p47, %s35, 0
      %p49 = scmp.eq.s32.totalorder %s46, 0
      %s50 = scalar_select %p49, %s42, 0
      %s51 = ssub.s32 %s48, %s50
      %p52 = scmp.eq.s32.totalorder %s51, 0
      %s54 = sadd.s32 %s53, 1
      %s55 = scalar_select %p52, %s53, %s54
      %p58 = pneg %p52
      %p59 = scmp.eq.s32.totalorder %s27, 7
      %p60 = por %p58, %p59
      %p61 = scmp.ne.s32.totalorder %s53, %s56
      %p62 = scmp.eq.s32.totalorder %s27, 0
      %p63 = por %p61, %p62
      %p64 = scmp.ne.s32.totalorder %s53, %s56
      %p65 = scmp.eq.s32.totalorder %s32, 7
      %p66 = por %p64, %p65
      %p67 = scmp.ne.s32.totalorder %s56, %s57
      %p68 = scmp.eq.s32.totalorder %s32, 0
      %p69 = por %p67, %p68
      %p70 = scmp.ne.s32.totalorder %s56, %s57
      %p71 = scmp.eq.s32.totalorder %s33, 7
      %p72 = por %p70, %p71
      %p74 = scmp.ne.s32.totalorder %s57, %s73
      %p75 = scmp.eq.s32.totalorder %s33, 0
      %p76 = por %p74, %p75
      %p77 = scmp.eq.s32.totalorder %s34, 0
      %s78 = scalar_select %p77, %s35, 0
      %p79 = scmp.eq.s32.totalorder %s46, 0
      %s80 = scalar_select %p79, %s42, 0
      %s81 = ssub.s32 %s78, %s80
      %p82 = scmp.eq.s32.totalorder %s81, 0
      %s84 = sadd.s32 %s83, 1
      %s85 = scalar_select %p82, %s83, %s84
      %p88 = pneg %p82
      %p89 = scmp.eq.s32.totalorder %s27, 7
      %p90 = por %p88, %p89
      %p91 = scmp.ne.s32.totalorder %s83, %s86
      %p92 = scmp.eq.s32.totalorder %s27, 0
      %p93 = por %p91, %p92
      %p94 = scmp.ne.s32.totalorder %s83, %s86
      %p95 = scmp.eq.s32.totalorder %s32, 7
      %p96 = por %p94, %p95
      %p97 = scmp.ne.s32.totalorder %s86, %s87
      %p98 = scmp.eq.s32.totalorder %s32, 0
      %p99 = por %p97, %p98
      %p100 = scmp.ne.s32.totalorder %s86, %s87
      %p101 = scmp.eq.s32.totalorder %s33, 7
      %p102 = por %p100, %p101
      %p104 = scmp.ne.s32.totalorder %s87, %s103
      %p105 = scmp.eq.s32.totalorder %s33, 0
      %p106 = por %p104, %p105
      %s108 = sadd.s32 %s107, 1
      %p111 = scmp.eq.s32.totalorder %s27, 7
      %p112 = scmp.ne.s32.totalorder %s107, %s109
      %p113 = scmp.eq.s32.totalorder %s27, 0
      %p114 = por %p112, %p113
      %p115 = scmp.ne.s32.totalorder %s107, %s109
      %p116 = scmp.eq.s32.totalorder %s32, 7
      %p117 = por %p115, %p116
      %p118 = scmp.ne.s32.totalorder %s109, %s110
      %p119 = scmp.eq.s32.totalorder %s32, 0
      %p120 = por %p118, %p119
      %p121 = scmp.ne.s32.totalorder %s109, %s110
      %p122 = scmp.eq.s32.totalorder %s33, 7
      %p123 = por %p121, %p122
      %p125 = scmp.ne.s32.totalorder %s110, %s124
      %p126 = scmp.eq.s32.totalorder %s33, 0
      %p127 = por %p125, %p126
      %s129 = sadd.s32 %s128, 1
      %p132 = scmp.eq.s32.totalorder %s27, 7
      %p133 = scmp.ne.s32.totalorder %s128, %s130
      %p134 = scmp.eq.s32.totalorder %s27, 0
      %p135 = por %p133, %p134
      %p136 = scmp.ne.s32.totalorder %s128, %s130
      %p137 = scmp.eq.s32.totalorder %s32, 7
      %p138 = por %p136, %p137
      %p139 = scmp.ne.s32.totalorder %s130, %s131
      %p140 = scmp.eq.s32.totalorder %s32, 0
      %p141 = por %p139, %p140
      %p142 = scmp.ne.s32.totalorder %s130, %s131
      %p143 = scmp.eq.s32.totalorder %s33, 7
      %p144 = por %p142, %p143
      %p146 = scmp.ne.s32.totalorder %s131, %s145
      %p147 = scmp.eq.s32.totalorder %s33, 0
      %p148 = por %p146, %p147
      %s150 = sadd.s32 %s149, 1
      %p153 = scmp.eq.s32.totalorder %s27, 7
      %p154 = scmp.ne.s32.totalorder %s149, %s151
      %p155 = scmp.eq.s32.totalorder %s27, 0
      %p156 = por %p154, %p155
      %p157 = scmp.ne.s32.totalorder %s149, %s151
      %p158 = scmp.eq.s32.totalorder %s32, 7
      %p159 = por %p157, %p158
      %p160 = scmp.ne.s32.totalorder %s151, %s152
      %p161 = scmp.eq.s32.totalorder %s32, 0
      %p162 = por %p160, %p161
      %p163 = scmp.ne.s32.totalorder %s151, %s152
      %p164 = scmp.eq.s32.totalorder %s33, 7
      %p165 = por %p163, %p164
      %p167 = scmp.ne.s32.totalorder %s152, %s166
      %p168 = scmp.eq.s32.totalorder %s33, 0
      %p169 = por %p167, %p168
      %s171 = sadd.s32 %s170, 1
      %p174 = scmp.eq.s32.totalorder %s27, 7
      %p175 = scmp.ne.s32.totalorder %s170, %s172
      %p176 = scmp.eq.s32.totalorder %s27, 0
      %p177 = por %p175, %p176
      %p178 = scmp.ne.s32.totalorder %s170, %s172
      %p179 = scmp.eq.s32.totalorder %s32, 7
      %p180 = por %p178, %p179
      %p181 = scmp.ne.s32.totalorder %s172, %s173
      %p182 = scmp.eq.s32.totalorder %s32, 0
      %p183 = por %p181, %p182
      %p184 = scmp.ne.s32.totalorder %s172, %s173
      %p185 = scmp.eq.s32.totalorder %s33, 7
      %p186 = por %p184, %p185
      %p188 = scmp.ne.s32.totalorder %s173, %s187
      %p189 = scmp.eq.s32.totalorder %s33, 0
      %p190 = por %p188, %p189
      %s192 = sadd.s32 %s191, 1
      %p195 = scmp.eq.s32.totalorder %s27, 7
      %p196 = scmp.ne.s32.totalorder %s191, %s193
      %p197 = scmp.eq.s32.totalorder %s27, 0
      %p198 = por %p196, %p197
      %p199 = scmp.ne.s32.totalorder %s191, %s193
      %p200 = scmp.eq.s32.totalorder %s32, 7
      %p201 = por %p199, %p200
      %p202 = scmp.ne.s32.totalorder %s193, %s194
      %p203 = scmp.eq.s32.totalorder %s32, 0
      %p204 = por %p202, %p203
      %p205 = scmp.ne.s32.totalorder %s193, %s194
      %p206 = scmp.eq.s32.totalorder %s33, 7
      %p207 = por %p205, %p206
      %p209 = scmp.ne.s32.totalorder %s194, %s208
      %p210 = scmp.eq.s32.totalorder %s33, 0
      %p211 = por %p209, %p210
      %s213 = sadd.s32 %s212, 1
      %p216 = scmp.eq.s32.totalorder %s27, 7
      %p217 = scmp.ne.s32.totalorder %s212, %s214
      %p218 = scmp.eq.s32.totalorder %s27, 0
      %p219 = por %p217, %p218
      %p220 = scmp.ne.s32.totalorder %s212, %s214
      %p221 = scmp.eq.s32.totalorder %s32, 7
      %p222 = por %p220, %p221
      %p223 = scmp.ne.s32.totalorder %s214, %s215
      %p224 = scmp.eq.s32.totalorder %s32, 0
      %p225 = por %p223, %p224
      %p226 = scmp.ne.s32.totalorder %s214, %s215
      %p227 = scmp.eq.s32.totalorder %s33, 7
      %p228 = por %p226, %p227
      %p230 = scmp.ne.s32.totalorder %s215, %s229
      %p231 = scmp.eq.s32.totalorder %s33, 0
      %p232 = por %p230, %p231
      %s234 = sadd.s32 %s233, 1
      %p237 = scmp.eq.s32.totalorder %s27, 7
      %p238 = scmp.ne.s32.totalorder %s233, %s235
      %p239 = scmp.eq.s32.totalorder %s27, 0
      %p240 = por %p238, %p239
      %p241 = scmp.ne.s32.totalorder %s233, %s235
      %p242 = scmp.eq.s32.totalorder %s32, 7
      %p243 = por %p241, %p242
      %p244 = scmp.ne.s32.totalorder %s235, %s236
      %p245 = scmp.eq.s32.totalorder %s32, 0
      %p246 = por %p244, %p245
      %p247 = scmp.ne.s32.totalorder %s235, %s236
      %p248 = scmp.eq.s32.totalorder %s33, 7
      %p249 = por %p247, %p248
      %p251 = scmp.ne.s32.totalorder %s236, %s250
      %p252 = scmp.eq.s32.totalorder %s33, 0
      %p253 = por %p251, %p252
      %s255 = sadd.s32 %s254, 1
      %p258 = scmp.eq.s32.totalorder %s27, 7
      %p259 = scmp.ne.s32.totalorder %s254, %s256
      %p260 = scmp.eq.s32.totalorder %s27, 0
      %p261 = por %p259, %p260
      %p262 = scmp.ne.s32.totalorder %s254, %s256
      %p263 = scmp.eq.s32.totalorder %s32, 7
      %p264 = por %p262, %p263
      %p265 = scmp.ne.s32.totalorder %s256, %s257
      %p266 = scmp.eq.s32.totalorder %s32, 0
      %p267 = por %p265, %p266
      %p268 = scmp.ne.s32.totalorder %s256, %s257
      %p269 = scmp.eq.s32.totalorder %s33, 7
      %p270 = por %p268, %p269
      %p272 = scmp.ne.s32.totalorder %s257, %s271
      %p273 = scmp.eq.s32.totalorder %s33, 0
      %p274 = por %p272, %p273
      %p275 = scmp.eq.s32.totalorder %s34, 3
      %s276 = scalar_select %p275, %s35, 0
      %p277 = scmp.eq.s32.totalorder %s46, 3
      %s278 = scalar_select %p277, %s42, 0
      %s279 = ssub.s32 %s276, %s278
      %p280 = scmp.eq.s32.totalorder %s279, 0
      %s282 = sadd.s32 %s281, 1
      %s283 = scalar_select %p280, %s281, %s282
      %p286 = pneg %p280
      %p287 = scmp.eq.s32.totalorder %s27, 7
      %p288 = por %p286, %p287
      %p289 = scmp.ne.s32.totalorder %s281, %s284
      %p290 = scmp.eq.s32.totalorder %s27, 0
      %p291 = por %p289, %p290
      %p292 = scmp.ne.s32.totalorder %s281, %s284
      %p293 = scmp.eq.s32.totalorder %s32, 7
      %p294 = por %p292, %p293
      %p295 = scmp.ne.s32.totalorder %s284, %s285
      %p296 = scmp.eq.s32.totalorder %s32, 0
      %p297 = por %p295, %p296
      %p298 = scmp.ne.s32.totalorder %s284, %s285
      %p299 = scmp.eq.s32.totalorder %s33, 7
      %p300 = por %p298, %p299
      %p302 = scmp.ne.s32.totalorder %s285, %s301
      %p303 = scmp.eq.s32.totalorder %s33, 0
      %p304 = por %p302, %p303
      %p305 = scmp.le.s32.totalorder 1, %s27
      %p306 = scmp.lt.s32.totalorder %s27, 9
      %p307 = pnand %p305, %p306
      %p308 = pneg %p307
      // Predicated region
      $region9: #{tpu_custom_call.1} parent=5 // pred_check
        _
      $region10: #{tpu_custom_call.1} parent=5 // pred_check_branch
        %310 = sbr.rel (%p307) target = $region12
      $region11: #{tpu_custom_call.1} parent=5 // pred_region
        %s311 = ssub.s32 %s27, 1
        // Predicated region
        $region13: #{tpu_custom_call.1} parent=11 // pred_check
          %p312 = pneg %p120
        $region14: #{tpu_custom_call.1} parent=11 // pred_check_branch
          %314 = sbr.rel (%p312) target = $region16
        $region15: #{tpu_custom_call.1} parent=11 // pred_region
          %s316 = ssub.s32 8192, 8192
          %317 = vsyncadd [#allocation13], %s316
          %s318 = sshll.u32 [#allocation14], 4
          %s319 = int_to_ptr.vmem [resolvable:$true] %s318
          %324 = dma.hbm_to_vmem [thread:$0]  %s2, 8192, %s319, [#allocation13], 128, 128, 8
        $region16: #{tpu_custom_call.1} parent=11 // pred_fallthru
          _
        // Predicated region
        $region17: #{tpu_custom_call.1} parent=11 // pred_check
          %p325 = pneg %p141
        $region18: #{tpu_custom_call.1} parent=11 // pred_check_branch
          %327 = sbr.rel (%p325) target = $region20
        $region19: #{tpu_custom_call.1} parent=11 // pred_region
          _
        $region20: #{tpu_custom_call.1} parent=11 // pred_fallthru
          _
        // Predicated region
        $region21: #{tpu_custom_call.1} parent=11 // pred_check
          %p328 = pneg %p162
        $region22: #{tpu_custom_call.1} parent=11 // pred_check_branch
          %330 = sbr.rel (%p328) target = $region24
        $region23: #{tpu_custom_call.1} parent=11 // pred_region
          %s332 = ssub.s32 2048, 2048
          %333 = vsyncadd [#allocation16], %s332
          %s334 = sshll.u32 [#allocation15], 4
          %s335 = int_to_ptr.vmem [resolvable:$true] %s334
          %340 = dma.hbm_to_vmem [thread:$0]  %s4, 2048, %s335, [#allocation16], 64, 64, 4
        $region24: #{tpu_custom_call.1} parent=11 // pred_fallthru
          _
        // Predicated region
        $region25: #{tpu_custom_call.1} parent=11 // pred_check
          %p341 = pneg %p183
        $region26: #{tpu_custom_call.1} parent=11 // pred_check_branch
          %343 = sbr.rel (%p341) target = $region28
        $region27: #{tpu_custom_call.1} parent=11 // pred_region
          _
        $region28: #{tpu_custom_call.1} parent=11 // pred_fallthru
          _
        // Predicated region
        $region29: #{tpu_custom_call.1} parent=11 // pred_check
          %p344 = pneg %p204
        $region30: #{tpu_custom_call.1} parent=11 // pred_check_branch
          %346 = sbr.rel (%p344) target = $region32
        $region31: #{tpu_custom_call.1} parent=11 // pred_region
          %s348 = ssub.s32 1024, 1024
          %349 = vsyncadd [#allocation16], %s348
          %s350 = sshll.u32 [#allocation17], 4
          %s351 = int_to_ptr.vmem [resolvable:$true] %s350
          %356 = dma.hbm_to_vmem [thread:$0]  %s6, 1024, %s351, [#allocation16], 64, 64, 4
        $region32: #{tpu_custom_call.1} parent=11 // pred_fallthru
          _
        // Predicated region
        $region33: #{tpu_custom_call.1} parent=11 // pred_check
          %p357 = pneg %p225
        $region34: #{tpu_custom_call.1} parent=11 // pred_check_branch
          %359 = sbr.rel (%p357) target = $region36
        $region35: #{tpu_custom_call.1} parent=11 // pred_region
          _
        $region36: #{tpu_custom_call.1} parent=11 // pred_fallthru
          _
        // Predicated region
        $region37: #{tpu_custom_call.1} parent=11 // pred_check
          %p360 = pneg %p246
        $region38: #{tpu_custom_call.1} parent=11 // pred_check_branch
          %362 = sbr.rel (%p360) target = $region40
        $region39: #{tpu_custom_call.1} parent=11 // pred_region
          %s364 = ssub.s32 1024, 1024
          %365 = vsyncadd [#allocation19], %s364
          %s366 = sshll.u32 [#allocation18], 4
          %s367 = int_to_ptr.vmem [resolvable:$true] %s366
          %372 = dma.hbm_to_vmem [thread:$0]  %s8, 1024, %s367, [#allocation19], 64, 64, 4
        $region40: #{tpu_custom_call.1} parent=11 // pred_fallthru
          _
        // Predicated region
        $region41: #{tpu_custom_call.1} parent=11 // pred_check
          %p373 = pneg %p267
        $region42: #{tpu_custom_call.1} parent=11 // pred_check_branch
          %375 = sbr.rel (%p373) target = $region44
        $region43: #{tpu_custom_call.1} parent=11 // pred_region
          _
        $region44: #{tpu_custom_call.1} parent=11 // pred_fallthru
          _
      $region12: #{tpu_custom_call.1} parent=5 // pred_fallthru
        _
      %p376 = scmp.lt.s32.totalorder %s27, 8
      // Predicated region
      $region45: #{tpu_custom_call.1} parent=5 // pred_check
        %p377 = pneg %p376
      $region46: #{tpu_custom_call.1} parent=5 // pred_check_branch
        %379 = sbr.rel (%p377) target = $region48
      $region47: #{tpu_custom_call.1} parent=5 // pred_region
        // Predicated region
        $region49: #{tpu_custom_call.1} parent=47 // pred_check
          %p380 = pneg %p63
        $region50: #{tpu_custom_call.1} parent=47 // pred_check_branch
          %382 = sbr.rel (%p380) target = $region52
        $region51: #{tpu_custom_call.1} parent=47 // pred_region
          %s383 = sand.u32 %s53, 1
          %s384 = scalar_lea.sflag [#allocation10], %s383
          %s385 = sand.u32 %s53, 1
          %s386 = smul.addr %s385, 1024
          %s387 = scalar_lea.vmem [#allocation9], %s386
          %p388 = scmp.eq.s32.totalorder %s34, 0
          %s389 = scalar_select %p388, %s35, 0
          %s390 = smul.u32 32, %s389
          %s392 = ssub.s32 16384, 16384
          %393 = vsyncadd %s384, %s392
          %s394 = smul.addr %s390, 4
          %s395 = smul.addr %s394, 128
          %s396 = scalar_lea.hbm %s0, %s395
          %s397 = sshll.u32 %s387, 4
          %s398 = int_to_ptr.vmem [resolvable:$true] %s397
          %403 = dma.hbm_to_vmem [thread:$0]  %s396, 16384, %s398, %s384, 512, 512, 32
        $region52: #{tpu_custom_call.1} parent=47 // pred_fallthru
          _
        // Predicated region
        $region53: #{tpu_custom_call.1} parent=47 // pred_check
          %p404 = pneg %p93
        $region54: #{tpu_custom_call.1} parent=47 // pred_check_branch
          %406 = sbr.rel (%p404) target = $region56
        $region55: #{tpu_custom_call.1} parent=47 // pred_region
          %s407 = sand.u32 %s27, 1
          %s408 = scalar_lea.sflag [#allocation13], %s407
          %s409 = sand.u32 %s83, 1
          %s410 = smul.addr %s409, 1024
          %s411 = scalar_lea.vmem [#allocation12], %s410
          %p412 = scmp.eq.s32.totalorder %s34, 0
          %s413 = scalar_select %p412, %s35, 0
          %s414 = smul.u32 32, %s413
          %s416 = ssub.s32 16384, 16384
          %417 = vsyncadd %s408, %s416
          %s418 = smul.addr %s414, 4
          %s419 = smul.addr %s418, 128
          %s420 = scalar_lea.hbm %s1, %s419
          %s421 = sshll.u32 %s411, 4
          %s422 = int_to_ptr.vmem [resolvable:$true] %s421
          %427 = dma.hbm_to_vmem [thread:$0]  %s420, 16384, %s422, %s408, 512, 512, 32
        $region56: #{tpu_custom_call.1} parent=47 // pred_fallthru
          _
      $region48: #{tpu_custom_call.1} parent=5 // pred_fallthru
        _
      %p428 = scmp.le.s32.totalorder 1, %s27
      %p429 = scmp.lt.s32.totalorder %s27, 9
      %p430 = pnand %p428, %p429
      %p431 = pneg %p430
      // Predicated region
      $region57: #{tpu_custom_call.1} parent=5 // pred_check
        _
      $region58: #{tpu_custom_call.1} parent=5 // pred_check_branch
        %433 = sbr.rel (%p430) target = $region60
      $region59: #{tpu_custom_call.1} parent=5 // pred_region
        %s434 = ssub.s32 %s27, 1
        %s435 = sand.u32 %s56, 1
        %s436 = scalar_lea.sflag [#allocation10], %s435
        %s437 = sand.u32 %s56, 1
        %s438 = smul.addr %s437, 1024
        %s439 = scalar_lea.vmem [#allocation9], %s438
        // Predicated region
        $region61: #{tpu_custom_call.1} parent=59 // pred_check
          %p440 = pneg %p69
        $region62: #{tpu_custom_call.1} parent=59 // pred_check_branch
          %442 = sbr.rel (%p440) target = $region64
        $region63: #{tpu_custom_call.1} parent=59 // pred_region
          %443 = dma.done %s436, 16384
        $region64: #{tpu_custom_call.1} parent=59 // pred_fallthru
          _
        %s444 = sand.u32 %s32, 1
        %s445 = scalar_lea.sflag [#allocation13], %s444
        %s446 = sand.u32 %s86, 1
        %s447 = smul.addr %s446, 1024
        %s448 = scalar_lea.vmem [#allocation12], %s447
        // Predicated region
        $region65: #{tpu_custom_call.1} parent=59 // pred_check
          %p449 = pneg %p99
        $region66: #{tpu_custom_call.1} parent=59 // pred_check_branch
          %451 = sbr.rel (%p449) target = $region68
        $region67: #{tpu_custom_call.1} parent=59 // pred_region
          %452 = dma.done %s445, 16384
        $region68: #{tpu_custom_call.1} parent=59 // pred_fallthru
          _
        // Predicated region
        $region69: #{tpu_custom_call.1} parent=59 // pred_check
          %p453 = pneg %p120
        $region70: #{tpu_custom_call.1} parent=59 // pred_check_branch
          %455 = sbr.rel (%p453) target = $region72
        $region71: #{tpu_custom_call.1} parent=59 // pred_region
          %456 = dma.done [#allocation13], 8192
        $region72: #{tpu_custom_call.1} parent=59 // pred_fallthru
          _
        // Predicated region
        $region73: #{tpu_custom_call.1} parent=59 // pred_check
          %p457 = pneg %p162
        $region74: #{tpu_custom_call.1} parent=59 // pred_check_branch
          %459 = sbr.rel (%p457) target = $region76
        $region75: #{tpu_custom_call.1} parent=59 // pred_region
          %460 = dma.done [#allocation16], 2048
        $region76: #{tpu_custom_call.1} parent=59 // pred_fallthru
          _
        // Predicated region
        $region77: #{tpu_custom_call.1} parent=59 // pred_check
          %p461 = pneg %p204
        $region78: #{tpu_custom_call.1} parent=59 // pred_check_branch
          %463 = sbr.rel (%p461) target = $region80
        $region79: #{tpu_custom_call.1} parent=59 // pred_region
          %464 = dma.done [#allocation16], 1024
        $region80: #{tpu_custom_call.1} parent=59 // pred_fallthru
          _
        // Predicated region
        $region81: #{tpu_custom_call.1} parent=59 // pred_check
          %p465 = pneg %p246
        $region82: #{tpu_custom_call.1} parent=59 // pred_check_branch
          %467 = sbr.rel (%p465) target = $region84
        $region83: #{tpu_custom_call.1} parent=59 // pred_region
          %468 = dma.done [#allocation19], 1024
        $region84: #{tpu_custom_call.1} parent=59 // pred_fallthru
          _
        %s469 = sand.u32 %s56, 1
        %s470 = scalar_lea.sflag [#allocation10], %s469
        %s471 = sand.u32 %s56, 1
        %s472 = smul.addr %s471, 1024
        %s473 = scalar_lea.vmem [#allocation9], %s472
        %p474 = pneg %p69
        %p475 = pneg %p66
        %s476 = sand.u32 %s32, 1
        %s477 = scalar_lea.sflag [#allocation13], %s476
        %s478 = sand.u32 %s86, 1
        %s479 = smul.addr %s478, 1024
        %s480 = scalar_lea.vmem [#allocation12], %s479
        %p481 = pneg %p99
        %p482 = pneg %p96
        %p483 = pneg %p120
        %p484 = pneg %p117
        %p485 = pneg %p141
        %p486 = pneg %p138
        %p487 = pneg %p162
        %p488 = pneg %p159
        %p489 = pneg %p183
        %p490 = pneg %p180
        %p491 = pneg %p204
        %p492 = pneg %p201
        %p493 = pneg %p225
        %p494 = pneg %p222
        %p495 = pneg %p246
        %p496 = pneg %p243
        %p497 = pneg %p267
        %p498 = pneg %p264
        %p499 = pneg %p297
        %p500 = pneg %p294
        %s501 = sand.u32 %s284, 1
        %s502 = scalar_lea.sflag [#allocation11], %s501
        %s503 = sand.u32 %s284, 1
        %s504 = smul.addr %s503, 256
        %s505 = scalar_lea.vmem [#allocation20], %s504
        %p506 = scmp.eq.s32.totalorder %s36, 0
        %s507 = scalar_select %p506, %s37, 0
        %s508 = smul.u32 32, %s507
        %p509 = scmp.eq.s32.totalorder %s36, 0
        %s510 = scalar_select %p509, %s37, 0
        %s511 = smul.u32 32, %s510
        %p512 = scmp.eq.s32.totalorder %s36, 3
        %s513 = scalar_select %p512, %s37, 0
        %s514 = smul.u32 32, %s513
        %p516 = scmp.eq.s32.totalorder %s36, 0
        // Predicated region
        $region85: #{tpu_custom_call.1} parent=59 // pred_check
          %p517 = pneg %p516
        $region86: #{tpu_custom_call.1} parent=59 // pred_check_branch
          %519 = sbr.rel (%p517) target = $region88
        $region87: #{tpu_custom_call.1} parent=59 // pred_region
          %v520 = vld [vmem:[%s448] sm:$0xff]
          %v521 = vld [vmem:[%s448 + $0x8] sm:$0xff]
          %v522 = vld [vmem:[%s448 + $0x10] sm:$0xff]
          %v523 = vld [vmem:[%s448 + $0x18] sm:$0xff]
          %v524 = vld [vmem:[%s448 + $0x20] sm:$0xff]
          %v525 = vld [vmem:[%s448 + $0x28] sm:$0xff]
          %v526 = vld [vmem:[%s448 + $0x30] sm:$0xff]
          %v527 = vld [vmem:[%s448 + $0x38] sm:$0xff]
          %v528 = vld [vmem:[%s448 + $0x40] sm:$0xff]
          %v529 = vld [vmem:[%s448 + $0x48] sm:$0xff]
          %v530 = vld [vmem:[%s448 + $0x50] sm:$0xff]
          %v531 = vld [vmem:[%s448 + $0x58] sm:$0xff]
          %v532 = vld [vmem:[%s448 + $0x60] sm:$0xff]
          %v533 = vld [vmem:[%s448 + $0x68] sm:$0xff]
          %v534 = vld [vmem:[%s448 + $0x70] sm:$0xff]
          %v535 = vld [vmem:[%s448 + $0x78] sm:$0xff]
          %v536 = vld [vmem:[%s448 + $0x80] sm:$0xff]
          %v537 = vld [vmem:[%s448 + $0x88] sm:$0xff]
          %v538 = vld [vmem:[%s448 + $0x90] sm:$0xff]
          %v539 = vld [vmem:[%s448 + $0x98] sm:$0xff]
          %v540 = vld [vmem:[%s448 + $0xa0] sm:$0xff]
          %v541 = vld [vmem:[%s448 + $0xa8] sm:$0xff]
          %v542 = vld [vmem:[%s448 + $0xb0] sm:$0xff]
          %v543 = vld [vmem:[%s448 + $0xb8] sm:$0xff]
          %v544 = vld [vmem:[%s448 + $0xc0] sm:$0xff]
          %v545 = vld [vmem:[%s448 + $0xc8] sm:$0xff]
          %v546 = vld [vmem:[%s448 + $0xd0] sm:$0xff]
          %v547 = vld [vmem:[%s448 + $0xd8] sm:$0xff]
          %v548 = vld [vmem:[%s448 + $0xe0] sm:$0xff]
          %v549 = vld [vmem:[%s448 + $0xe8] sm:$0xff]
          %v550 = vld [vmem:[%s448 + $0xf0] sm:$0xff]
          %v551 = vld [vmem:[%s448 + $0xf8] sm:$0xff]
          %v552 = vld [vmem:[%s448 + $0x100] sm:$0xff]
          %v553 = vld [vmem:[%s448 + $0x108] sm:$0xff]
          %v554 = vld [vmem:[%s448 + $0x110] sm:$0xff]
          %v555 = vld [vmem:[%s448 + $0x118] sm:$0xff]
          %v556 = vld [vmem:[%s448 + $0x120] sm:$0xff]
          %v557 = vld [vmem:[%s448 + $0x128] sm:$0xff]
          %v558 = vld [vmem:[%s448 + $0x130] sm:$0xff]
          %v559 = vld [vmem:[%s448 + $0x138] sm:$0xff]
          %v560 = vld [vmem:[%s448 + $0x140] sm:$0xff]
          %v561 = vld [vmem:[%s448 + $0x148] sm:$0xff]
          %v562 = vld [vmem:[%s448 + $0x150] sm:$0xff]
          %v563 = vld [vmem:[%s448 + $0x158] sm:$0xff]
          %v564 = vld [vmem:[%s448 + $0x160] sm:$0xff]
          %v565 = vld [vmem:[%s448 + $0x168] sm:$0xff]
          %v566 = vld [vmem:[%s448 + $0x170] sm:$0xff]
          %v567 = vld [vmem:[%s448 + $0x178] sm:$0xff]
          %v568 = vld [vmem:[%s448 + $0x180] sm:$0xff]
          %v569 = vld [vmem:[%s448 + $0x188] sm:$0xff]
          %v570 = vld [vmem:[%s448 + $0x190] sm:$0xff]
          %v571 = vld [vmem:[%s448 + $0x198] sm:$0xff]
          %v572 = vld [vmem:[%s448 + $0x1a0] sm:$0xff]
          %v573 = vld [vmem:[%s448 + $0x1a8] sm:$0xff]
          %v574 = vld [vmem:[%s448 + $0x1b0] sm:$0xff]
          %v575 = vld [vmem:[%s448 + $0x1b8] sm:$0xff]
          %v576 = vld [vmem:[%s448 + $0x1c0] sm:$0xff]
          %v577 = vld [vmem:[%s448 + $0x1c8] sm:$0xff]
          %v578 = vld [vmem:[%s448 + $0x1d0] sm:$0xff]
          %v579 = vld [vmem:[%s448 + $0x1d8] sm:$0xff]
          %v580 = vld [vmem:[%s448 + $0x1e0] sm:$0xff]
          %v581 = vld [vmem:[%s448 + $0x1e8] sm:$0xff]
          %v582 = vld [vmem:[%s448 + $0x1f0] sm:$0xff]
          %v583 = vld [vmem:[%s448 + $0x1f8] sm:$0xff]
          %v584 = vld [vmem:[%s448 + $0x200] sm:$0xff]
          %v585 = vld [vmem:[%s448 + $0x208] sm:$0xff]
          %v586 = vld [vmem:[%s448 + $0x210] sm:$0xff]
          %v587 = vld [vmem:[%s448 + $0x218] sm:$0xff]
          %v588 = vld [vmem:[%s448 + $0x220] sm:$0xff]
          %v589 = vld [vmem:[%s448 + $0x228] sm:$0xff]
          %v590 = vld [vmem:[%s448 + $0x230] sm:$0xff]
          %v591 = vld [vmem:[%s448 + $0x238] sm:$0xff]
          %v592 = vld [vmem:[%s448 + $0x240] sm:$0xff]
          %v593 = vld [vmem:[%s448 + $0x248] sm:$0xff]
          %v594 = vld [vmem:[%s448 + $0x250] sm:$0xff]
          %v595 = vld [vmem:[%s448 + $0x258] sm:$0xff]
          %v596 = vld [vmem:[%s448 + $0x260] sm:$0xff]
          %v597 = vld [vmem:[%s448 + $0x268] sm:$0xff]
          %v598 = vld [vmem:[%s448 + $0x270] sm:$0xff]
          %v599 = vld [vmem:[%s448 + $0x278] sm:$0xff]
          %v600 = vld [vmem:[%s448 + $0x280] sm:$0xff]
          %v601 = vld [vmem:[%s448 + $0x288] sm:$0xff]
          %v602 = vld [vmem:[%s448 + $0x290] sm:$0xff]
          %v603 = vld [vmem:[%s448 + $0x298] sm:$0xff]
          %v604 = vld [vmem:[%s448 + $0x2a0] sm:$0xff]
          %v605 = vld [vmem:[%s448 + $0x2a8] sm:$0xff]
          %v606 = vld [vmem:[%s448 + $0x2b0] sm:$0xff]
          %v607 = vld [vmem:[%s448 + $0x2b8] sm:$0xff]
          %v608 = vld [vmem:[%s448 + $0x2c0] sm:$0xff]
          %v609 = vld [vmem:[%s448 + $0x2c8] sm:$0xff]
          %v610 = vld [vmem:[%s448 + $0x2d0] sm:$0xff]
          %v611 = vld [vmem:[%s448 + $0x2d8] sm:$0xff]
          %v612 = vld [vmem:[%s448 + $0x2e0] sm:$0xff]
          %v613 = vld [vmem:[%s448 + $0x2e8] sm:$0xff]
          %v614 = vld [vmem:[%s448 + $0x2f0] sm:$0xff]
          %v615 = vld [vmem:[%s448 + $0x2f8] sm:$0xff]
          %v616 = vld [vmem:[%s448 + $0x300] sm:$0xff]
          %v617 = vld [vmem:[%s448 + $0x308] sm:$0xff]
          %v618 = vld [vmem:[%s448 + $0x310] sm:$0xff]
          %v619 = vld [vmem:[%s448 + $0x318] sm:$0xff]
          %v620 = vld [vmem:[%s448 + $0x320] sm:$0xff]
          %v621 = vld [vmem:[%s448 + $0x328] sm:$0xff]
          %v622 = vld [vmem:[%s448 + $0x330] sm:$0xff]
          %v623 = vld [vmem:[%s448 + $0x338] sm:$0xff]
          %v624 = vld [vmem:[%s448 + $0x340] sm:$0xff]
          %v625 = vld [vmem:[%s448 + $0x348] sm:$0xff]
          %v626 = vld [vmem:[%s448 + $0x350] sm:$0xff]
          %v627 = vld [vmem:[%s448 + $0x358] sm:$0xff]
          %v628 = vld [vmem:[%s448 + $0x360] sm:$0xff]
          %v629 = vld [vmem:[%s448 + $0x368] sm:$0xff]
          %v630 = vld [vmem:[%s448 + $0x370] sm:$0xff]
          %v631 = vld [vmem:[%s448 + $0x378] sm:$0xff]
          %v632 = vld [vmem:[%s448 + $0x380] sm:$0xff]
          %v633 = vld [vmem:[%s448 + $0x388] sm:$0xff]
          %v634 = vld [vmem:[%s448 + $0x390] sm:$0xff]
          %v635 = vld [vmem:[%s448 + $0x398] sm:$0xff]
          %v636 = vld [vmem:[%s448 + $0x3a0] sm:$0xff]
          %v637 = vld [vmem:[%s448 + $0x3a8] sm:$0xff]
          %v638 = vld [vmem:[%s448 + $0x3b0] sm:$0xff]
          %v639 = vld [vmem:[%s448 + $0x3b8] sm:$0xff]
          %v640 = vld [vmem:[%s448 + $0x3c0] sm:$0xff]
          %v641 = vld [vmem:[%s448 + $0x3c8] sm:$0xff]
          %v642 = vld [vmem:[%s448 + $0x3d0] sm:$0xff]
          %v643 = vld [vmem:[%s448 + $0x3d8] sm:$0xff]
          %v644 = vld [vmem:[%s448 + $0x3e0] sm:$0xff]
          %v645 = vld [vmem:[%s448 + $0x3e8] sm:$0xff]
          %v646 = vld [vmem:[%s448 + $0x3f0] sm:$0xff]
          %v647 = vld [vmem:[%s448 + $0x3f8] sm:$0xff]
          %v648 = vld [vmem:[%s439] sm:$0xff]
          %v649 = vld [vmem:[%s439 + $0x8] sm:$0xff]
          %v650 = vld [vmem:[%s439 + $0x10] sm:$0xff]
          %v651 = vld [vmem:[%s439 + $0x18] sm:$0xff]
          %v652 = vld [vmem:[%s439 + $0x20] sm:$0xff]
          %v653 = vld [vmem:[%s439 + $0x28] sm:$0xff]
          %v654 = vld [vmem:[%s439 + $0x30] sm:$0xff]
          %v655 = vld [vmem:[%s439 + $0x38] sm:$0xff]
          %v656 = vld [vmem:[%s439 + $0x40] sm:$0xff]
          %v657 = vld [vmem:[%s439 + $0x48] sm:$0xff]
          %v658 = vld [vmem:[%s439 + $0x50] sm:$0xff]
          %v659 = vld [vmem:[%s439 + $0x58] sm:$0xff]
          %v660 = vld [vmem:[%s439 + $0x60] sm:$0xff]
          %v661 = vld [vmem:[%s439 + $0x68] sm:$0xff]
          %v662 = vld [vmem:[%s439 + $0x70] sm:$0xff]
          %v663 = vld [vmem:[%s439 + $0x78] sm:$0xff]
          %v664 = vld [vmem:[%s439 + $0x80] sm:$0xff]
          %v665 = vld [vmem:[%s439 + $0x88] sm:$0xff]
          %v666 = vld [vmem:[%s439 + $0x90] sm:$0xff]
          %v667 = vld [vmem:[%s439 + $0x98] sm:$0xff]
          %v668 = vld [vmem:[%s439 + $0xa0] sm:$0xff]
          %v669 = vld [vmem:[%s439 + $0xa8] sm:$0xff]
          %v670 = vld [vmem:[%s439 + $0xb0] sm:$0xff]
          %v671 = vld [vmem:[%s439 + $0xb8] sm:$0xff]
          %v672 = vld [vmem:[%s439 + $0xc0] sm:$0xff]
          %v673 = vld [vmem:[%s439 + $0xc8] sm:$0xff]
          %v674 = vld [vmem:[%s439 + $0xd0] sm:$0xff]
          %v675 = vld [vmem:[%s439 + $0xd8] sm:$0xff]
          %v676 = vld [vmem:[%s439 + $0xe0] sm:$0xff]
          %v677 = vld [vmem:[%s439 + $0xe8] sm:$0xff]
          %v678 = vld [vmem:[%s439 + $0xf0] sm:$0xff]
          %v679 = vld [vmem:[%s439 + $0xf8] sm:$0xff]
          %v680 = vld [vmem:[%s439 + $0x100] sm:$0xff]
          %v681 = vld [vmem:[%s439 + $0x108] sm:$0xff]
          %v682 = vld [vmem:[%s439 + $0x110] sm:$0xff]
          %v683 = vld [vmem:[%s439 + $0x118] sm:$0xff]
          %v684 = vld [vmem:[%s439 + $0x120] sm:$0xff]
          %v685 = vld [vmem:[%s439 + $0x128] sm:$0xff]
          %v686 = vld [vmem:[%s439 + $0x130] sm:$0xff]
          %v687 = vld [vmem:[%s439 + $0x138] sm:$0xff]
          %v688 = vld [vmem:[%s439 + $0x140] sm:$0xff]
          %v689 = vld [vmem:[%s439 + $0x148] sm:$0xff]
          %v690 = vld [vmem:[%s439 + $0x150] sm:$0xff]
          %v691 = vld [vmem:[%s439 + $0x158] sm:$0xff]
          %v692 = vld [vmem:[%s439 + $0x160] sm:$0xff]
          %v693 = vld [vmem:[%s439 + $0x168] sm:$0xff]
          %v694 = vld [vmem:[%s439 + $0x170] sm:$0xff]
          %v695 = vld [vmem:[%s439 + $0x178] sm:$0xff]
          %v696 = vld [vmem:[%s439 + $0x180] sm:$0xff]
          %v697 = vld [vmem:[%s439 + $0x188] sm:$0xff]
          %v698 = vld [vmem:[%s439 + $0x190] sm:$0xff]
          %v699 = vld [vmem:[%s439 + $0x198] sm:$0xff]
          %v700 = vld [vmem:[%s439 + $0x1a0] sm:$0xff]
          %v701 = vld [vmem:[%s439 + $0x1a8] sm:$0xff]
          %v702 = vld [vmem:[%s439 + $0x1b0] sm:$0xff]
          %v703 = vld [vmem:[%s439 + $0x1b8] sm:$0xff]
          %v704 = vld [vmem:[%s439 + $0x1c0] sm:$0xff]
          %v705 = vld [vmem:[%s439 + $0x1c8] sm:$0xff]
          %v706 = vld [vmem:[%s439 + $0x1d0] sm:$0xff]
          %v707 = vld [vmem:[%s439 + $0x1d8] sm:$0xff]
          %v708 = vld [vmem:[%s439 + $0x1e0] sm:$0xff]
          %v709 = vld [vmem:[%s439 + $0x1e8] sm:$0xff]
          %v710 = vld [vmem:[%s439 + $0x1f0] sm:$0xff]
          %v711 = vld [vmem:[%s439 + $0x1f8] sm:$0xff]
          %v712 = vld [vmem:[%s439 + $0x200] sm:$0xff]
          %v713 = vld [vmem:[%s439 + $0x208] sm:$0xff]
          %v714 = vld [vmem:[%s439 + $0x210] sm:$0xff]
          %v715 = vld [vmem:[%s439 + $0x218] sm:$0xff]
          %v716 = vld [vmem:[%s439 + $0x220] sm:$0xff]
          %v717 = vld [vmem:[%s439 + $0x228] sm:$0xff]
          %v718 = vld [vmem:[%s439 + $0x230] sm:$0xff]
          %v719 = vld [vmem:[%s439 + $0x238] sm:$0xff]
          %v720 = vld [vmem:[%s439 + $0x240] sm:$0xff]
          %v721 = vld [vmem:[%s439 + $0x248] sm:$0xff]
          %v722 = vld [vmem:[%s439 + $0x250] sm:$0xff]
          %v723 = vld [vmem:[%s439 + $0x258] sm:$0xff]
          %v724 = vld [vmem:[%s439 + $0x260] sm:$0xff]
          %v725 = vld [vmem:[%s439 + $0x268] sm:$0xff]
          %v726 = vld [vmem:[%s439 + $0x270] sm:$0xff]
          %v727 = vld [vmem:[%s439 + $0x278] sm:$0xff]
          %v728 = vld [vmem:[%s439 + $0x280] sm:$0xff]
          %v729 = vld [vmem:[%s439 + $0x288] sm:$0xff]
          %v730 = vld [vmem:[%s439 + $0x290] sm:$0xff]
          %v731 = vld [vmem:[%s439 + $0x298] sm:$0xff]
          %v732 = vld [vmem:[%s439 + $0x2a0] sm:$0xff]
          %v733 = vld [vmem:[%s439 + $0x2a8] sm:$0xff]
          %v734 = vld [vmem:[%s439 + $0x2b0] sm:$0xff]
          %v735 = vld [vmem:[%s439 + $0x2b8] sm:$0xff]
          %v736 = vld [vmem:[%s439 + $0x2c0] sm:$0xff]
          %v737 = vld [vmem:[%s439 + $0x2c8] sm:$0xff]
          %v738 = vld [vmem:[%s439 + $0x2d0] sm:$0xff]
          %v739 = vld [vmem:[%s439 + $0x2d8] sm:$0xff]
          %v740 = vld [vmem:[%s439 + $0x2e0] sm:$0xff]
          %v741 = vld [vmem:[%s439 + $0x2e8] sm:$0xff]
          %v742 = vld [vmem:[%s439 + $0x2f0] sm:$0xff]
          %v743 = vld [vmem:[%s439 + $0x2f8] sm:$0xff]
          %v744 = vld [vmem:[%s439 + $0x300] sm:$0xff]
          %v745 = vld [vmem:[%s439 + $0x308] sm:$0xff]
          %v746 = vld [vmem:[%s439 + $0x310] sm:$0xff]
          %v747 = vld [vmem:[%s439 + $0x318] sm:$0xff]
          %v748 = vld [vmem:[%s439 + $0x320] sm:$0xff]
          %v749 = vld [vmem:[%s439 + $0x328] sm:$0xff]
          %v750 = vld [vmem:[%s439 + $0x330] sm:$0xff]
          %v751 = vld [vmem:[%s439 + $0x338] sm:$0xff]
          %v752 = vld [vmem:[%s439 + $0x340] sm:$0xff]
          %v753 = vld [vmem:[%s439 + $0x348] sm:$0xff]
          %v754 = vld [vmem:[%s439 + $0x350] sm:$0xff]
          %v755 = vld [vmem:[%s439 + $0x358] sm:$0xff]
          %v756 = vld [vmem:[%s439 + $0x360] sm:$0xff]
          %v757 = vld [vmem:[%s439 + $0x368] sm:$0xff]
          %v758 = vld [vmem:[%s439 + $0x370] sm:$0xff]
          %v759 = vld [vmem:[%s439 + $0x378] sm:$0xff]
          %v760 = vld [vmem:[%s439 + $0x380] sm:$0xff]
          %v761 = vld [vmem:[%s439 + $0x388] sm:$0xff]
          %v762 = vld [vmem:[%s439 + $0x390] sm:$0xff]
          %v763 = vld [vmem:[%s439 + $0x398] sm:$0xff]
          %v764 = vld [vmem:[%s439 + $0x3a0] sm:$0xff]
          %v765 = vld [vmem:[%s439 + $0x3a8] sm:$0xff]
          %v766 = vld [vmem:[%s439 + $0x3b0] sm:$0xff]
          %v767 = vld [vmem:[%s439 + $0x3b8] sm:$0xff]
          %v768 = vld [vmem:[%s439 + $0x3c0] sm:$0xff]
          %v769 = vld [vmem:[%s439 + $0x3c8] sm:$0xff]
          %v770 = vld [vmem:[%s439 + $0x3d0] sm:$0xff]
          %v771 = vld [vmem:[%s439 + $0x3d8] sm:$0xff]
          %v772 = vld [vmem:[%s439 + $0x3e0] sm:$0xff]
          %v773 = vld [vmem:[%s439 + $0x3e8] sm:$0xff]
          %v774 = vld [vmem:[%s439 + $0x3f0] sm:$0xff]
          %v775 = vld [vmem:[%s439 + $0x3f8] sm:$0xff]
          %v776 = vsub.f32 %v520, %v648
          %v777 = vsub.f32 %v521, %v649
          %v778 = vsub.f32 %v522, %v650
          %v779 = vsub.f32 %v523, %v651
          %v780 = vsub.f32 %v524, %v652
          %v781 = vsub.f32 %v525, %v653
          %v782 = vsub.f32 %v526, %v654
          %v783 = vsub.f32 %v527, %v655
          %v784 = vsub.f32 %v528, %v656
          %v785 = vsub.f32 %v529, %v657
          %v786 = vsub.f32 %v530, %v658
          %v787 = vsub.f32 %v531, %v659
          %v788 = vsub.f32 %v532, %v660
          %v789 = vsub.f32 %v533, %v661
          %v790 = vsub.f32 %v534, %v662
          %v791 = vsub.f32 %v535, %v663
          %v792 = vsub.f32 %v536, %v664
          %v793 = vsub.f32 %v537, %v665
          %v794 = vsub.f32 %v538, %v666
          %v795 = vsub.f32 %v539, %v667
          %v796 = vsub.f32 %v540, %v668
          %v797 = vsub.f32 %v541, %v669
          %v798 = vsub.f32 %v542, %v670
          %v799 = vsub.f32 %v543, %v671
          %v800 = vsub.f32 %v544, %v672
          %v801 = vsub.f32 %v545, %v673
          %v802 = vsub.f32 %v546, %v674
          %v803 = vsub.f32 %v547, %v675
          %v804 = vsub.f32 %v548, %v676
          %v805 = vsub.f32 %v549, %v677
          %v806 = vsub.f32 %v550, %v678
          %v807 = vsub.f32 %v551, %v679
          %v808 = vsub.f32 %v552, %v680
          %v809 = vsub.f32 %v553, %v681
          %v810 = vsub.f32 %v554, %v682
          %v811 = vsub.f32 %v555, %v683
          %v812 = vsub.f32 %v556, %v684
          %v813 = vsub.f32 %v557, %v685
          %v814 = vsub.f32 %v558, %v686
          %v815 = vsub.f32 %v559, %v687
          %v816 = vsub.f32 %v560, %v688
          %v817 = vsub.f32 %v561, %v689
          %v818 = vsub.f32 %v562, %v690
          %v819 = vsub.f32 %v563, %v691
          %v820 = vsub.f32 %v564, %v692
          %v821 = vsub.f32 %v565, %v693
          %v822 = vsub.f32 %v566, %v694
          %v823 = vsub.f32 %v567, %v695
          %v824 = vsub.f32 %v568, %v696
          %v825 = vsub.f32 %v569, %v697
          %v826 = vsub.f32 %v570, %v698
          %v827 = vsub.f32 %v571, %v699
          %v828 = vsub.f32 %v572, %v700
          %v829 = vsub.f32 %v573, %v701
          %v830 = vsub.f32 %v574, %v702
          %v831 = vsub.f32 %v575, %v703
          %v832 = vsub.f32 %v576, %v704
          %v833 = vsub.f32 %v577, %v705
          %v834 = vsub.f32 %v578, %v706
          %v835 = vsub.f32 %v579, %v707
          %v836 = vsub.f32 %v580, %v708
          %v837 = vsub.f32 %v581, %v709
          %v838 = vsub.f32 %v582, %v710
          %v839 = vsub.f32 %v583, %v711
          %v840 = vsub.f32 %v584, %v712
          %v841 = vsub.f32 %v585, %v713
          %v842 = vsub.f32 %v586, %v714
          %v843 = vsub.f32 %v587, %v715
          %v844 = vsub.f32 %v588, %v716
          %v845 = vsub.f32 %v589, %v717
          %v846 = vsub.f32 %v590, %v718
          %v847 = vsub.f32 %v591, %v719
          %v848 = vsub.f32 %v592, %v720
          %v849 = vsub.f32 %v593, %v721
          %v850 = vsub.f32 %v594, %v722
          %v851 = vsub.f32 %v595, %v723
          %v852 = vsub.f32 %v596, %v724
          %v853 = vsub.f32 %v597, %v725
          %v854 = vsub.f32 %v598, %v726
          %v855 = vsub.f32 %v599, %v727
          %v856 = vsub.f32 %v600, %v728
          %v857 = vsub.f32 %v601, %v729
          %v858 = vsub.f32 %v602, %v730
          %v859 = vsub.f32 %v603, %v731
          %v860 = vsub.f32 %v604, %v732
          %v861 = vsub.f32 %v605, %v733
          %v862 = vsub.f32 %v606, %v734
          %v863 = vsub.f32 %v607, %v735
          %v864 = vsub.f32 %v608, %v736
          %v865 = vsub.f32 %v609, %v737
          %v866 = vsub.f32 %v610, %v738
          %v867 = vsub.f32 %v611, %v739
          %v868 = vsub.f32 %v612, %v740
          %v869 = vsub.f32 %v613, %v741
          %v870 = vsub.f32 %v614, %v742
          %v871 = vsub.f32 %v615, %v743
          %v872 = vsub.f32 %v616, %v744
          %v873 = vsub.f32 %v617, %v745
          %v874 = vsub.f32 %v618, %v746
          %v875 = vsub.f32 %v619, %v747
          %v876 = vsub.f32 %v620, %v748
          %v877 = vsub.f32 %v621, %v749
          %v878 = vsub.f32 %v622, %v750
          %v879 = vsub.f32 %v623, %v751
          %v880 = vsub.f32 %v624, %v752
          %v881 = vsub.f32 %v625, %v753
          %v882 = vsub.f32 %v626, %v754
          %v883 = vsub.f32 %v627, %v755
          %v884 = vsub.f32 %v628, %v756
          %v885 = vsub.f32 %v629, %v757
          %v886 = vsub.f32 %v630, %v758
          %v887 = vsub.f32 %v631, %v759
          %v888 = vsub.f32 %v632, %v760
          %v889 = vsub.f32 %v633, %v761
          %v890 = vsub.f32 %v634, %v762
          %v891 = vsub.f32 %v635, %v763
          %v892 = vsub.f32 %v636, %v764
          %v893 = vsub.f32 %v637, %v765
          %v894 = vsub.f32 %v638, %v766
          %v895 = vsub.f32 %v639, %v767
          %v896 = vsub.f32 %v640, %v768
          %v897 = vsub.f32 %v641, %v769
          %v898 = vsub.f32 %v642, %v770
          %v899 = vsub.f32 %v643, %v771
          %v900 = vsub.f32 %v644, %v772
          %v901 = vsub.f32 %v645, %v773
          %v902 = vsub.f32 %v646, %v774
          %v903 = vsub.f32 %v647, %v775
          %v904 = vand.u32 2147483647, %v776
          %v905 = vand.u32 2147483647, %v777
          %v906 = vand.u32 2147483647, %v778
          %v907 = vand.u32 2147483647, %v779
          %v908 = vand.u32 2147483647, %v780
          %v909 = vand.u32 2147483647, %v781
          %v910 = vand.u32 2147483647, %v782
          %v911 = vand.u32 2147483647, %v783
          %v912 = vand.u32 2147483647, %v784
          %v913 = vand.u32 2147483647, %v785
          %v914 = vand.u32 2147483647, %v786
          %v915 = vand.u32 2147483647, %v787
          %v916 = vand.u32 2147483647, %v788
          %v917 = vand.u32 2147483647, %v789
          %v918 = vand.u32 2147483647, %v790
          %v919 = vand.u32 2147483647, %v791
          %v920 = vand.u32 2147483647, %v792
          %v921 = vand.u32 2147483647, %v793
          %v922 = vand.u32 2147483647, %v794
          %v923 = vand.u32 2147483647, %v795
          %v924 = vand.u32 2147483647, %v796
          %v925 = vand.u32 2147483647, %v797
          %v926 = vand.u32 2147483647, %v798
          %v927 = vand.u32 2147483647, %v799
          %v928 = vand.u32 2147483647, %v800
          %v929 = vand.u32 2147483647, %v801
          %v930 = vand.u32 2147483647, %v802
          %v931 = vand.u32 2147483647, %v803
          %v932 = vand.u32 2147483647, %v804
          %v933 = vand.u32 2147483647, %v805
          %v934 = vand.u32 2147483647, %v806
          %v935 = vand.u32 2147483647, %v807
          %v936 = vand.u32 2147483647, %v808
          %v937 = vand.u32 2147483647, %v809
          %v938 = vand.u32 2147483647, %v810
          %v939 = vand.u32 2147483647, %v811
          %v940 = vand.u32 2147483647, %v812
          %v941 = vand.u32 2147483647, %v813
          %v942 = vand.u32 2147483647, %v814
          %v943 = vand.u32 2147483647, %v815
          %v944 = vand.u32 2147483647, %v816
          %v945 = vand.u32 2147483647, %v817
          %v946 = vand.u32 2147483647, %v818
          %v947 = vand.u32 2147483647, %v819
          %v948 = vand.u32 2147483647, %v820
          %v949 = vand.u32 2147483647, %v821
          %v950 = vand.u32 2147483647, %v822
          %v951 = vand.u32 2147483647, %v823
          %v952 = vand.u32 2147483647, %v824
          %v953 = vand.u32 2147483647, %v825
          %v954 = vand.u32 2147483647, %v826
          %v955 = vand.u32 2147483647, %v827
          %v956 = vand.u32 2147483647, %v828
          %v957 = vand.u32 2147483647, %v829
          %v958 = vand.u32 2147483647, %v830
          %v959 = vand.u32 2147483647, %v831
          %v960 = vand.u32 2147483647, %v832
          %v961 = vand.u32 2147483647, %v833
          %v962 = vand.u32 2147483647, %v834
          %v963 = vand.u32 2147483647, %v835
          %v964 = vand.u32 2147483647, %v836
          %v965 = vand.u32 2147483647, %v837
          %v966 = vand.u32 2147483647, %v838
          %v967 = vand.u32 2147483647, %v839
          %v968 = vand.u32 2147483647, %v840
          %v969 = vand.u32 2147483647, %v841
          %v970 = vand.u32 2147483647, %v842
          %v971 = vand.u32 2147483647, %v843
          %v972 = vand.u32 2147483647, %v844
          %v973 = vand.u32 2147483647, %v845
          %v974 = vand.u32 2147483647, %v846
          %v975 = vand.u32 2147483647, %v847
          %v976 = vand.u32 2147483647, %v848
          %v977 = vand.u32 2147483647, %v849
          %v978 = vand.u32 2147483647, %v850
          %v979 = vand.u32 2147483647, %v851
          %v980 = vand.u32 2147483647, %v852
          %v981 = vand.u32 2147483647, %v853
          %v982 = vand.u32 2147483647, %v854
          %v983 = vand.u32 2147483647, %v855
          %v984 = vand.u32 2147483647, %v856
          %v985 = vand.u32 2147483647, %v857
          %v986 = vand.u32 2147483647, %v858
          %v987 = vand.u32 2147483647, %v859
          %v988 = vand.u32 2147483647, %v860
          %v989 = vand.u32 2147483647, %v861
          %v990 = vand.u32 2147483647, %v862
          %v991 = vand.u32 2147483647, %v863
          %v992 = vand.u32 2147483647, %v864
          %v993 = vand.u32 2147483647, %v865
          %v994 = vand.u32 2147483647, %v866
          %v995 = vand.u32 2147483647, %v867
          %v996 = vand.u32 2147483647, %v868
          %v997 = vand.u32 2147483647, %v869
          %v998 = vand.u32 2147483647, %v870
          %v999 = vand.u32 2147483647, %v871
          %v1000 = vand.u32 2147483647, %v872
          %v1001 = vand.u32 2147483647, %v873
          %v1002 = vand.u32 2147483647, %v874
          %v1003 = vand.u32 2147483647, %v875
          %v1004 = vand.u32 2147483647, %v876
          %v1005 = vand.u32 2147483647, %v877
          %v1006 = vand.u32 2147483647, %v878
          %v1007 = vand.u32 2147483647, %v879
          %v1008 = vand.u32 2147483647, %v880
          %v1009 = vand.u32 2147483647, %v881
          %v1010 = vand.u32 2147483647, %v882
          %v1011 = vand.u32 2147483647, %v883
          %v1012 = vand.u32 2147483647, %v884
          %v1013 = vand.u32 2147483647, %v885
          %v1014 = vand.u32 2147483647, %v886
          %v1015 = vand.u32 2147483647, %v887
          %v1016 = vand.u32 2147483647, %v888
          %v1017 = vand.u32 2147483647, %v889
          %v1018 = vand.u32 2147483647, %v890
          %v1019 = vand.u32 2147483647, %v891
          %v1020 = vand.u32 2147483647, %v892
          %v1021 = vand.u32 2147483647, %v893
          %v1022 = vand.u32 2147483647, %v894
          %v1023 = vand.u32 2147483647, %v895
          %v1024 = vand.u32 2147483647, %v896
          %v1025 = vand.u32 2147483647, %v897
          %v1026 = vand.u32 2147483647, %v898
          %v1027 = vand.u32 2147483647, %v899
          %v1028 = vand.u32 2147483647, %v900
          %v1029 = vand.u32 2147483647, %v901
          %v1030 = vand.u32 2147483647, %v902
          %v1031 = vand.u32 2147483647, %v903
          %v1032 = vpack.c.bf16 %v908, %v904
          %v1033 = vpack.c.bf16 %v909, %v905
          %v1034 = vpack.c.bf16 %v910, %v906
          %v1035 = vpack.c.bf16 %v911, %v907
          %v1036 = vpack.c.bf16 %v916, %v912
          %v1037 = vpack.c.bf16 %v917, %v913
          %v1038 = vpack.c.bf16 %v918, %v914
          %v1039 = vpack.c.bf16 %v919, %v915
          %v1040 = vpack.c.bf16 %v924, %v920
          %v1041 = vpack.c.bf16 %v925, %v921
          %v1042 = vpack.c.bf16 %v926, %v922
          %v1043 = vpack.c.bf16 %v927, %v923
          %v1044 = vpack.c.bf16 %v932, %v928
          %v1045 = vpack.c.bf16 %v933, %v929
          %v1046 = vpack.c.bf16 %v934, %v930
          %v1047 = vpack.c.bf16 %v935, %v931
          %v1048 = vpack.c.bf16 %v940, %v936
          %v1049 = vpack.c.bf16 %v941, %v937
          %v1050 = vpack.c.bf16 %v942, %v938
          %v1051 = vpack.c.bf16 %v943, %v939
          %v1052 = vpack.c.bf16 %v948, %v944
          %v1053 = vpack.c.bf16 %v949, %v945
          %v1054 = vpack.c.bf16 %v950, %v946
          %v1055 = vpack.c.bf16 %v951, %v947
          %v1056 = vpack.c.bf16 %v956, %v952
          %v1057 = vpack.c.bf16 %v957, %v953
          %v1058 = vpack.c.bf16 %v958, %v954
          %v1059 = vpack.c.bf16 %v959, %v955
          %v1060 = vpack.c.bf16 %v964, %v960
          %v1061 = vpack.c.bf16 %v965, %v961
          %v1062 = vpack.c.bf16 %v966, %v962
          %v1063 = vpack.c.bf16 %v967, %v963
          %v1064 = vpack.c.bf16 %v972, %v968
          %v1065 = vpack.c.bf16 %v973, %v969
          %v1066 = vpack.c.bf16 %v974, %v970
          %v1067 = vpack.c.bf16 %v975, %v971
          %v1068 = vpack.c.bf16 %v980, %v976
          %v1069 = vpack.c.bf16 %v981, %v977
          %v1070 = vpack.c.bf16 %v982, %v978
          %v1071 = vpack.c.bf16 %v983, %v979
          %v1072 = vpack.c.bf16 %v988, %v984
          %v1073 = vpack.c.bf16 %v989, %v985
          %v1074 = vpack.c.bf16 %v990, %v986
          %v1075 = vpack.c.bf16 %v991, %v987
          %v1076 = vpack.c.bf16 %v996, %v992
          %v1077 = vpack.c.bf16 %v997, %v993
          %v1078 = vpack.c.bf16 %v998, %v994
          %v1079 = vpack.c.bf16 %v999, %v995
          %v1080 = vpack.c.bf16 %v1004, %v1000
          %v1081 = vpack.c.bf16 %v1005, %v1001
          %v1082 = vpack.c.bf16 %v1006, %v1002
          %v1083 = vpack.c.bf16 %v1007, %v1003
          %v1084 = vpack.c.bf16 %v1012, %v1008
          %v1085 = vpack.c.bf16 %v1013, %v1009
          %v1086 = vpack.c.bf16 %v1014, %v1010
          %v1087 = vpack.c.bf16 %v1015, %v1011
          %v1088 = vpack.c.bf16 %v1020, %v1016
          %v1089 = vpack.c.bf16 %v1021, %v1017
          %v1090 = vpack.c.bf16 %v1022, %v1018
          %v1091 = vpack.c.bf16 %v1023, %v1019
          %v1092 = vpack.c.bf16 %v1028, %v1024
          %v1093 = vpack.c.bf16 %v1029, %v1025
          %v1094 = vpack.c.bf16 %v1030, %v1026
          %v1095 = vpack.c.bf16 %v1031, %v1027
          %v1096 = vld [vmem:[#allocation14] sm:$0xff]
          %v1097 = vld [vmem:[#allocation14 + $0x8] sm:$0xff]
          %v1098 = vld [vmem:[#allocation14 + $0x10] sm:$0xff]
          %v1099 = vld [vmem:[#allocation14 + $0x18] sm:$0xff]
          %v1100 = vld [vmem:[#allocation14 + $0x20] sm:$0xff]
          %v1101 = vld [vmem:[#allocation14 + $0x28] sm:$0xff]
          %v1102 = vld [vmem:[#allocation14 + $0x30] sm:$0xff]
          %v1103 = vld [vmem:[#allocation14 + $0x38] sm:$0xff]
          %v1104 = vld [vmem:[#allocation14 + $0x40] sm:$0xff]
          %v1105 = vld [vmem:[#allocation14 + $0x48] sm:$0xff]
          %v1106 = vld [vmem:[#allocation14 + $0x50] sm:$0xff]
          %v1107 = vld [vmem:[#allocation14 + $0x58] sm:$0xff]
          %v1108 = vld [vmem:[#allocation14 + $0x60] sm:$0xff]
          %v1109 = vld [vmem:[#allocation14 + $0x68] sm:$0xff]
          %v1110 = vld [vmem:[#allocation14 + $0x70] sm:$0xff]
          %v1111 = vld [vmem:[#allocation14 + $0x78] sm:$0xff]
          %v1112 = vld [vmem:[#allocation14 + $0x80] sm:$0xff]
          %v1113 = vld [vmem:[#allocation14 + $0x88] sm:$0xff]
          %v1114 = vld [vmem:[#allocation14 + $0x90] sm:$0xff]
          %v1115 = vld [vmem:[#allocation14 + $0x98] sm:$0xff]
          %v1116 = vld [vmem:[#allocation14 + $0xa0] sm:$0xff]
          %v1117 = vld [vmem:[#allocation14 + $0xa8] sm:$0xff]
          %v1118 = vld [vmem:[#allocation14 + $0xb0] sm:$0xff]
          %v1119 = vld [vmem:[#allocation14 + $0xb8] sm:$0xff]
          %v1120 = vld [vmem:[#allocation14 + $0xc0] sm:$0xff]
          %v1121 = vld [vmem:[#allocation14 + $0xc8] sm:$0xff]
          %v1122 = vld [vmem:[#allocation14 + $0xd0] sm:$0xff]
          %v1123 = vld [vmem:[#allocation14 + $0xd8] sm:$0xff]
          %v1124 = vld [vmem:[#allocation14 + $0xe0] sm:$0xff]
          %v1125 = vld [vmem:[#allocation14 + $0xe8] sm:$0xff]
          %v1126 = vld [vmem:[#allocation14 + $0xf0] sm:$0xff]
          %v1127 = vld [vmem:[#allocation14 + $0xf8] sm:$0xff]
          %v1128 = vld [vmem:[#allocation14 + $0x100] sm:$0xff]
          %v1129 = vld [vmem:[#allocation14 + $0x108] sm:$0xff]
          %v1130 = vld [vmem:[#allocation14 + $0x110] sm:$0xff]
          %v1131 = vld [vmem:[#allocation14 + $0x118] sm:$0xff]
          %v1132 = vld [vmem:[#allocation14 + $0x120] sm:$0xff]
          %v1133 = vld [vmem:[#allocation14 + $0x128] sm:$0xff]
          %v1134 = vld [vmem:[#allocation14 + $0x130] sm:$0xff]
          %v1135 = vld [vmem:[#allocation14 + $0x138] sm:$0xff]
          %v1136 = vld [vmem:[#allocation14 + $0x140] sm:$0xff]
          %v1137 = vld [vmem:[#allocation14 + $0x148] sm:$0xff]
          %v1138 = vld [vmem:[#allocation14 + $0x150] sm:$0xff]
          %v1139 = vld [vmem:[#allocation14 + $0x158] sm:$0xff]
          %v1140 = vld [vmem:[#allocation14 + $0x160] sm:$0xff]
          %v1141 = vld [vmem:[#allocation14 + $0x168] sm:$0xff]
          %v1142 = vld [vmem:[#allocation14 + $0x170] sm:$0xff]
          %v1143 = vld [vmem:[#allocation14 + $0x178] sm:$0xff]
          %v1144 = vld [vmem:[#allocation14 + $0x180] sm:$0xff]
          %v1145 = vld [vmem:[#allocation14 + $0x188] sm:$0xff]
          %v1146 = vld [vmem:[#allocation14 + $0x190] sm:$0xff]
          %v1147 = vld [vmem:[#allocation14 + $0x198] sm:$0xff]
          %v1148 = vld [vmem:[#allocation14 + $0x1a0] sm:$0xff]
          %v1149 = vld [vmem:[#allocation14 + $0x1a8] sm:$0xff]
          %v1150 = vld [vmem:[#allocation14 + $0x1b0] sm:$0xff]
          %v1151 = vld [vmem:[#allocation14 + $0x1b8] sm:$0xff]
          %v1152 = vld [vmem:[#allocation14 + $0x1c0] sm:$0xff]
          %v1153 = vld [vmem:[#allocation14 + $0x1c8] sm:$0xff]
          %v1154 = vld [vmem:[#allocation14 + $0x1d0] sm:$0xff]
          %v1155 = vld [vmem:[#allocation14 + $0x1d8] sm:$0xff]
          %v1156 = vld [vmem:[#allocation14 + $0x1e0] sm:$0xff]
          %v1157 = vld [vmem:[#allocation14 + $0x1e8] sm:$0xff]
          %v1158 = vld [vmem:[#allocation14 + $0x1f0] sm:$0xff]
          %v1159 = vld [vmem:[#allocation14 + $0x1f8] sm:$0xff]
          %v1160 = vld [vmem:[%s3] sm:$0x3]
          %v1162 = vlaneseq
          %v1163 = vshrl.u32 %v1162, 7
          %v1164 = vsub.s32 0, %v1163
          %v1165 = vrot.slane %v1160, %v1164
          %v1166 = vlaneseq
          %v1167 = vshrl.u32 %v1166, 7
          %v1168 = vsub.s32 1, %v1167
          %v1169 = vrot.slane %v1160, %v1168
          %v1236 = vunpack.c.l.b16 %v1096
          %v1237 = vunpack.c.h.b16 %v1096
          %v1238 = vunpack.c.l.b16 %v1097
          %v1239 = vunpack.c.h.b16 %v1097
          %v1240 = vunpack.c.l.b16 %v1098
          %v1241 = vunpack.c.h.b16 %v1098
          %v1242 = vunpack.c.l.b16 %v1099
          %v1243 = vunpack.c.h.b16 %v1099
          %v1244 = vunpack.c.l.b16 %v1100
          %v1245 = vunpack.c.h.b16 %v1100
          %v1246 = vunpack.c.l.b16 %v1101
          %v1247 = vunpack.c.h.b16 %v1101
          %v1248 = vunpack.c.l.b16 %v1102
          %v1249 = vunpack.c.h.b16 %v1102
          %v1250 = vunpack.c.l.b16 %v1103
          %v1251 = vunpack.c.h.b16 %v1103
          %v1252 = vunpack.c.l.b16 %v1104
          %v1253 = vunpack.c.h.b16 %v1104
          %v1254 = vunpack.c.l.b16 %v1105
          %v1255 = vunpack.c.h.b16 %v1105
          %v1256 = vunpack.c.l.b16 %v1106
          %v1257 = vunpack.c.h.b16 %v1106
          %v1258 = vunpack.c.l.b16 %v1107
          %v1259 = vunpack.c.h.b16 %v1107
          %v1260 = vunpack.c.l.b16 %v1108
          %v1261 = vunpack.c.h.b16 %v1108
          %v1262 = vunpack.c.l.b16 %v1109
          %v1263 = vunpack.c.h.b16 %v1109
          %v1264 = vunpack.c.l.b16 %v1110
          %v1265 = vunpack.c.h.b16 %v1110
          %v1266 = vunpack.c.l.b16 %v1111
          %v1267 = vunpack.c.h.b16 %v1111
          %v1268 = vunpack.c.l.b16 %v1112
          %v1269 = vunpack.c.h.b16 %v1112
          %v1270 = vunpack.c.l.b16 %v1113
          %v1271 = vunpack.c.h.b16 %v1113
          %v1272 = vunpack.c.l.b16 %v1114
          %v1273 = vunpack.c.h.b16 %v1114
          %v1274 = vunpack.c.l.b16 %v1115
          %v1275 = vunpack.c.h.b16 %v1115
          %v1276 = vunpack.c.l.b16 %v1116
          %v1277 = vunpack.c.h.b16 %v1116
          %v1278 = vunpack.c.l.b16 %v1117
          %v1279 = vunpack.c.h.b16 %v1117
          %v1280 = vunpack.c.l.b16 %v1118
          %v1281 = vunpack.c.h.b16 %v1118
          %v1282 = vunpack.c.l.b16 %v1119
          %v1283 = vunpack.c.h.b16 %v1119
          %v1284 = vunpack.c.l.b16 %v1120
          %v1285 = vunpack.c.h.b16 %v1120
          %v1286 = vunpack.c.l.b16 %v1121
          %v1287 = vunpack.c.h.b16 %v1121
          %v1288 = vunpack.c.l.b16 %v1122
          %v1289 = vunpack.c.h.b16 %v1122
          %v1290 = vunpack.c.l.b16 %v1123
          %v1291 = vunpack.c.h.b16 %v1123
          %v1292 = vunpack.c.l.b16 %v1124
          %v1293 = vunpack.c.h.b16 %v1124
          %v1294 = vunpack.c.l.b16 %v1125
          %v1295 = vunpack.c.h.b16 %v1125
          %v1296 = vunpack.c.l.b16 %v1126
          %v1297 = vunpack.c.h.b16 %v1126
          %v1298 = vunpack.c.l.b16 %v1127
          %v1299 = vunpack.c.h.b16 %v1127
          %v1300 = vunpack.c.l.b16 %v1128
          %v1301 = vunpack.c.h.b16 %v1128
          %v1302 = vunpack.c.l.b16 %v1129
          %v1303 = vunpack.c.h.b16 %v1129
          %v1304 = vunpack.c.l.b16 %v1130
          %v1305 = vunpack.c.h.b16 %v1130
          %v1306 = vunpack.c.l.b16 %v1131
          %v1307 = vunpack.c.h.b16 %v1131
          %v1308 = vunpack.c.l.b16 %v1132
          %v1309 = vunpack.c.h.b16 %v1132
          %v1310 = vunpack.c.l.b16 %v1133
          %v1311 = vunpack.c.h.b16 %v1133
          %v1312 = vunpack.c.l.b16 %v1134
          %v1313 = vunpack.c.h.b16 %v1134
          %v1314 = vunpack.c.l.b16 %v1135
          %v1315 = vunpack.c.h.b16 %v1135
          %v1316 = vunpack.c.l.b16 %v1136
          %v1317 = vunpack.c.h.b16 %v1136
          %v1318 = vunpack.c.l.b16 %v1137
          %v1319 = vunpack.c.h.b16 %v1137
          %v1320 = vunpack.c.l.b16 %v1138
          %v1321 = vunpack.c.h.b16 %v1138
          %v1322 = vunpack.c.l.b16 %v1139
          %v1323 = vunpack.c.h.b16 %v1139
          %v1324 = vunpack.c.l.b16 %v1140
          %v1325 = vunpack.c.h.b16 %v1140
          %v1326 = vunpack.c.l.b16 %v1141
          %v1327 = vunpack.c.h.b16 %v1141
          %v1328 = vunpack.c.l.b16 %v1142
          %v1329 = vunpack.c.h.b16 %v1142
          %v1330 = vunpack.c.l.b16 %v1143
          %v1331 = vunpack.c.h.b16 %v1143
          %v1332 = vunpack.c.l.b16 %v1144
          %v1333 = vunpack.c.h.b16 %v1144
          %v1334 = vunpack.c.l.b16 %v1145
          %v1335 = vunpack.c.h.b16 %v1145
          %v1336 = vunpack.c.l.b16 %v1146
          %v1337 = vunpack.c.h.b16 %v1146
          %v1338 = vunpack.c.l.b16 %v1147
          %v1339 = vunpack.c.h.b16 %v1147
          %v1340 = vunpack.c.l.b16 %v1148
          %v1341 = vunpack.c.h.b16 %v1148
          %v1342 = vunpack.c.l.b16 %v1149
          %v1343 = vunpack.c.h.b16 %v1149
          %v1344 = vunpack.c.l.b16 %v1150
          %v1345 = vunpack.c.h.b16 %v1150
          %v1346 = vunpack.c.l.b16 %v1151
          %v1347 = vunpack.c.h.b16 %v1151
          %v1348 = vunpack.c.l.b16 %v1152
          %v1349 = vunpack.c.h.b16 %v1152
          %v1350 = vunpack.c.l.b16 %v1153
          %v1351 = vunpack.c.h.b16 %v1153
          %v1352 = vunpack.c.l.b16 %v1154
          %v1353 = vunpack.c.h.b16 %v1154
          %v1354 = vunpack.c.l.b16 %v1155
          %v1355 = vunpack.c.h.b16 %v1155
          %v1356 = vunpack.c.l.b16 %v1156
          %v1357 = vunpack.c.h.b16 %v1156
          %v1358 = vunpack.c.l.b16 %v1157
          %v1359 = vunpack.c.h.b16 %v1157
          %v1360 = vunpack.c.l.b16 %v1158
          %v1361 = vunpack.c.h.b16 %v1158
          %v1362 = vunpack.c.l.b16 %v1159
          %v1363 = vunpack.c.h.b16 %v1159
          %v1364 = vpack.c.b16 %v1238, %v1236
          %v1365 = vpack.c.b16 %v1239, %v1237
          %v1366 = vpack.c.b16 %v1242, %v1240
          %v1367 = vpack.c.b16 %v1243, %v1241
          %v1368 = vpack.c.b16 %v1246, %v1244
          %v1369 = vpack.c.b16 %v1247, %v1245
          %v1370 = vpack.c.b16 %v1250, %v1248
          %v1371 = vpack.c.b16 %v1251, %v1249
          %v1372 = vpack.c.b16 %v1254, %v1252
          %v1373 = vpack.c.b16 %v1255, %v1253
          %v1374 = vpack.c.b16 %v1258, %v1256
          %v1375 = vpack.c.b16 %v1259, %v1257
          %v1376 = vpack.c.b16 %v1262, %v1260
          %v1377 = vpack.c.b16 %v1263, %v1261
          %v1378 = vpack.c.b16 %v1266, %v1264
          %v1379 = vpack.c.b16 %v1267, %v1265
          %v1380 = vpack.c.b16 %v1270, %v1268
          %v1381 = vpack.c.b16 %v1271, %v1269
          %v1382 = vpack.c.b16 %v1274, %v1272
          %v1383 = vpack.c.b16 %v1275, %v1273
          %v1384 = vpack.c.b16 %v1278, %v1276
          %v1385 = vpack.c.b16 %v1279, %v1277
          %v1386 = vpack.c.b16 %v1282, %v1280
          %v1387 = vpack.c.b16 %v1283, %v1281
          %v1388 = vpack.c.b16 %v1286, %v1284
          %v1389 = vpack.c.b16 %v1287, %v1285
          %v1390 = vpack.c.b16 %v1290, %v1288
          %v1391 = vpack.c.b16 %v1291, %v1289
          %v1392 = vpack.c.b16 %v1294, %v1292
          %v1393 = vpack.c.b16 %v1295, %v1293
          %v1394 = vpack.c.b16 %v1298, %v1296
          %v1395 = vpack.c.b16 %v1299, %v1297
          %v1396 = vpack.c.b16 %v1302, %v1300
          %v1397 = vpack.c.b16 %v1303, %v1301
          %v1398 = vpack.c.b16 %v1306, %v1304
          %v1399 = vpack.c.b16 %v1307, %v1305
          %v1400 = vpack.c.b16 %v1310, %v1308
          %v1401 = vpack.c.b16 %v1311, %v1309
          %v1402 = vpack.c.b16 %v1314, %v1312
          %v1403 = vpack.c.b16 %v1315, %v1313
          %v1404 = vpack.c.b16 %v1318, %v1316
          %v1405 = vpack.c.b16 %v1319, %v1317
          %v1406 = vpack.c.b16 %v1322, %v1320
          %v1407 = vpack.c.b16 %v1323, %v1321
          %v1408 = vpack.c.b16 %v1326, %v1324
          %v1409 = vpack.c.b16 %v1327, %v1325
          %v1410 = vpack.c.b16 %v1330, %v1328
          %v1411 = vpack.c.b16 %v1331, %v1329
          %v1412 = vpack.c.b16 %v1334, %v1332
          %v1413 = vpack.c.b16 %v1335, %v1333
          %v1414 = vpack.c.b16 %v1338, %v1336
          %v1415 = vpack.c.b16 %v1339, %v1337
          %v1416 = vpack.c.b16 %v1342, %v1340
          %v1417 = vpack.c.b16 %v1343, %v1341
          %v1418 = vpack.c.b16 %v1346, %v1344
          %v1419 = vpack.c.b16 %v1347, %v1345
          %v1420 = vpack.c.b16 %v1350, %v1348
          %v1421 = vpack.c.b16 %v1351, %v1349
          %v1422 = vpack.c.b16 %v1354, %v1352
          %v1423 = vpack.c.b16 %v1355, %v1353
          %v1424 = vpack.c.b16 %v1358, %v1356
          %v1425 = vpack.c.b16 %v1359, %v1357
          %v1426 = vpack.c.b16 %v1362, %v1360
          %v1427 = vpack.c.b16 %v1363, %v1361
          %1492 = vmatprep.subr.bf16.mxu0 %v1365
          %1493 = vmatpush1.bf16.msra.mxu0 %v1364
          %1494 = vmatprep.subr.bf16.mxu0 %v1367
          %1495 = vmatpush1.bf16.msra.mxu0 %v1366
          %1496 = vmatprep.subr.bf16.mxu0 %v1369
          %1497 = vmatpush1.bf16.msra.mxu0 %v1368
          %1498 = vmatprep.subr.bf16.mxu0 %v1371
          %1499 = vmatpush1.bf16.msra.mxu0 %v1370
          %1500 = vmatprep.subr.bf16.mxu0 %v1373
          %1501 = vmatpush1.bf16.msra.mxu0 %v1372
          %1502 = vmatprep.subr.bf16.mxu0 %v1375
          %1503 = vmatpush1.bf16.msra.mxu0 %v1374
          %1504 = vmatprep.subr.bf16.mxu0 %v1377
          %1505 = vmatpush1.bf16.msra.mxu0 %v1376
          %1506 = vmatprep.subr.bf16.mxu0 %v1379
          %1507 = vmatpush1.bf16.msra.mxu0 %v1378
          %1508 = vmatprep.subr.bf16.mxu0 %v1381
          %1509 = vmatpush1.bf16.msra.mxu0 %v1380
          %1510 = vmatprep.subr.bf16.mxu0 %v1383
          %1511 = vmatpush1.bf16.msra.mxu0 %v1382
          %1512 = vmatprep.subr.bf16.mxu0 %v1385
          %1513 = vmatpush1.bf16.msra.mxu0 %v1384
          %1514 = vmatprep.subr.bf16.mxu0 %v1387
          %1515 = vmatpush1.bf16.msra.mxu0 %v1386
          %1516 = vmatprep.subr.bf16.mxu0 %v1389
          %1517 = vmatpush1.bf16.msra.mxu0 %v1388
          %1518 = vmatprep.subr.bf16.mxu0 %v1391
          %1519 = vmatpush1.bf16.msra.mxu0 %v1390
          %1520 = vmatprep.subr.bf16.mxu0 %v1393
          %1521 = vmatpush1.bf16.msra.mxu0 %v1392
          %1522 = vmatprep.subr.bf16.mxu0 %v1395
          %1523 = vmatpush1.bf16.msra.mxu0 %v1394
          %1524 = vmatprep.mubr.bf16.mxu0 %v1033
          %1525 = vmatmul.mubr.bf16.gmra.mrb[0].mxu0 %v1032
          %v1526 = vpop.f32.mrb[0].mxu0
          %v1527 = vadd.f32 %v1165, %v1526
          %v1528 = vpop.f32.mrb[0].mxu0
          %v1529 = vadd.f32 %v1169, %v1528
          %v1530 = vpop.f32.mrb[0].mxu0
          %v1531 = vadd.f32 %v1165, %v1530
          %v1532 = vpop.f32.mrb[0].mxu0
          %v1533 = vadd.f32 %v1169, %v1532
          %1534 = vmatprep.mubr.bf16.mxu0 %v1037
          %1535 = vmatmul.mubr.bf16.gmra.mrb[0].mxu0 %v1036
          %v1536 = vpop.f32.mrb[0].mxu0
          %v1537 = vadd.f32 %v1165, %v1536
          %v1538 = vpop.f32.mrb[0].mxu0
          %v1539 = vadd.f32 %v1169, %v1538
          %v1540 = vpop.f32.mrb[0].mxu0
          %v1541 = vadd.f32 %v1165, %v1540
          %v1542 = vpop.f32.mrb[0].mxu0
          %v1543 = vadd.f32 %v1169, %v1542
          %1544 = vmatprep.mubr.bf16.mxu0 %v1041
          %1545 = vmatmul.mubr.bf16.gmra.mrb[0].mxu0 %v1040
          %v1546 = vpop.f32.mrb[0].mxu0
          %v1547 = vadd.f32 %v1165, %v1546
          %v1548 = vpop.f32.mrb[0].mxu0
          %v1549 = vadd.f32 %v1169, %v1548
          %v1550 = vpop.f32.mrb[0].mxu0
          %v1551 = vadd.f32 %v1165, %v1550
          %v1552 = vpop.f32.mrb[0].mxu0
          %v1553 = vadd.f32 %v1169, %v1552
          %1554 = vmatprep.mubr.bf16.mxu0 %v1045
          %1555 = vmatmul.mubr.bf16.gmra.mrb[0].mxu0 %v1044
          %v1556 = vpop.f32.mrb[0].mxu0
          %v1557 = vadd.f32 %v1165, %v1556
          %v1558 = vpop.f32.mrb[0].mxu0
          %v1559 = vadd.f32 %v1169, %v1558
          %v1560 = vpop.f32.mrb[0].mxu0
          %v1561 = vadd.f32 %v1165, %v1560
          %v1562 = vpop.f32.mrb[0].mxu0
          %v1563 = vadd.f32 %v1169, %v1562
          %1564 = vmatprep.mubr.bf16.mxu0 %v1049
          %1565 = vmatmul.mubr.bf16.gmra.mrb[0].mxu0 %v1048
          %v1566 = vpop.f32.mrb[0].mxu0
          %v1567 = vadd.f32 %v1165, %v1566
          %v1568 = vpop.f32.mrb[0].mxu0
          %v1569 = vadd.f32 %v1169, %v1568
          %v1570 = vpop.f32.mrb[0].mxu0
          %v1571 = vadd.f32 %v1165, %v1570
          %v1572 = vpop.f32.mrb[0].mxu0
          %v1573 = vadd.f32 %v1169, %v1572
          %1574 = vmatprep.mubr.bf16.mxu0 %v1053
          %1575 = vmatmul.mubr.bf16.gmra.mrb[0].mxu0 %v1052
          %v1576 = vpop.f32.mrb[0].mxu0
          %v1577 = vadd.f32 %v1165, %v1576
          %v1578 = vpop.f32.mrb[0].mxu0
          %v1579 = vadd.f32 %v1169, %v1578
          %v1580 = vpop.f32.mrb[0].mxu0
          %v1581 = vadd.f32 %v1165, %v1580
          %v1582 = vpop.f32.mrb[0].mxu0
          %v1583 = vadd.f32 %v1169, %v1582
          %1584 = vmatprep.mubr.bf16.mxu0 %v1057
          %1585 = vmatmul.mubr.bf16.gmra.mrb[0].mxu0 %v1056
          %v1586 = vpop.f32.mrb[0].mxu0
          %v1587 = vadd.f32 %v1165, %v1586
          %v1588 = vpop.f32.mrb[0].mxu0
          %v1589 = vadd.f32 %v1169, %v1588
          %v1590 = vpop.f32.mrb[0].mxu0
          %v1591 = vadd.f32 %v1165, %v1590
          %v1592 = vpop.f32.mrb[0].mxu0
          %v1593 = vadd.f32 %v1169, %v1592
          %1594 = vmatprep.mubr.bf16.mxu0 %v1061
          %1595 = vmatmul.mubr.bf16.gmra.mrb[0].mxu0 %v1060
          %v1596 = vpop.f32.mrb[0].mxu0
          %v1597 = vadd.f32 %v1165, %v1596
          %v1598 = vpop.f32.mrb[0].mxu0
          %v1599 = vadd.f32 %v1169, %v1598
          %v1600 = vpop.f32.mrb[0].mxu0
          %v1601 = vadd.f32 %v1165, %v1600
          %v1602 = vpop.f32.mrb[0].mxu0
          %v1603 = vadd.f32 %v1169, %v1602
          %1604 = vmatprep.mubr.bf16.mxu0 %v1065
          %1605 = vmatmul.mubr.bf16.gmra.mrb[0].mxu0 %v1064
          %v1606 = vpop.f32.mrb[0].mxu0
          %v1607 = vadd.f32 %v1165, %v1606
          %v1608 = vpop.f32.mrb[0].mxu0
          %v1609 = vadd.f32 %v1169, %v1608
          %v1610 = vpop.f32.mrb[0].mxu0
          %v1611 = vadd.f32 %v1165, %v1610
          %v1612 = vpop.f32.mrb[0].mxu0
          %v1613 = vadd.f32 %v1169, %v1612
          %1614 = vmatprep.mubr.bf16.mxu0 %v1069
          %1615 = vmatmul.mubr.bf16.gmra.mrb[0].mxu0 %v1068
          %v1616 = vpop.f32.mrb[0].mxu0
          %v1617 = vadd.f32 %v1165, %v1616
          %v1618 = vpop.f32.mrb[0].mxu0
          %v1619 = vadd.f32 %v1169, %v1618
          %v1620 = vpop.f32.mrb[0].mxu0
          %v1621 = vadd.f32 %v1165, %v1620
          %v1622 = vpop.f32.mrb[0].mxu0
          %v1623 = vadd.f32 %v1169, %v1622
          %1624 = vmatprep.mubr.bf16.mxu0 %v1073
          %1625 = vmatmul.mubr.bf16.gmra.mrb[0].mxu0 %v1072
          %v1626 = vpop.f32.mrb[0].mxu0
          %v1627 = vadd.f32 %v1165, %v1626
          %v1628 = vpop.f32.mrb[0].mxu0
          %v1629 = vadd.f32 %v1169, %v1628
          %v1630 = vpop.f32.mrb[0].mxu0
          %v1631 = vadd.f32 %v1165, %v1630
          %v1632 = vpop.f32.mrb[0].mxu0
          %v1633 = vadd.f32 %v1169, %v1632
          %1634 = vmatprep.mubr.bf16.mxu0 %v1077
          %1635 = vmatmul.mubr.bf16.gmra.mrb[0].mxu0 %v1076
          %v1636 = vpop.f32.mrb[0].mxu0
          %v1637 = vadd.f32 %v1165, %v1636
          %v1638 = vpop.f32.mrb[0].mxu0
          %v1639 = vadd.f32 %v1169, %v1638
          %v1640 = vpop.f32.mrb[0].mxu0
          %v1641 = vadd.f32 %v1165, %v1640
          %v1642 = vpop.f32.mrb[0].mxu0
          %v1643 = vadd.f32 %v1169, %v1642
          %1644 = vmatprep.mubr.bf16.mxu0 %v1081
          %1645 = vmatmul.mubr.bf16.gmra.mrb[0].mxu0 %v1080
          %v1646 = vpop.f32.mrb[0].mxu0
          %v1647 = vadd.f32 %v1165, %v1646
          %v1648 = vpop.f32.mrb[0].mxu0
          %v1649 = vadd.f32 %v1169, %v1648
          %v1650 = vpop.f32.mrb[0].mxu0
          %v1651 = vadd.f32 %v1165, %v1650
          %v1652 = vpop.f32.mrb[0].mxu0
          %v1653 = vadd.f32 %v1169, %v1652
          %1654 = vmatprep.mubr.bf16.mxu0 %v1085
          %1655 = vmatmul.mubr.bf16.gmra.mrb[0].mxu0 %v1084
          %v1656 = vpop.f32.mrb[0].mxu0
          %v1657 = vadd.f32 %v1165, %v1656
          %v1658 = vpop.f32.mrb[0].mxu0
          %v1659 = vadd.f32 %v1169, %v1658
          %v1660 = vpop.f32.mrb[0].mxu0
          %v1661 = vadd.f32 %v1165, %v1660
          %v1662 = vpop.f32.mrb[0].mxu0
          %v1663 = vadd.f32 %v1169, %v1662
          %1664 = vmatprep.mubr.bf16.mxu0 %v1089
          %1665 = vmatmul.mubr.bf16.gmra.mrb[0].mxu0 %v1088
          %v1666 = vpop.f32.mrb[0].mxu0
          %v1667 = vadd.f32 %v1165, %v1666
          %v1668 = vpop.f32.mrb[0].mxu0
          %v1669 = vadd.f32 %v1169, %v1668
          %v1670 = vpop.f32.mrb[0].mxu0
          %v1671 = vadd.f32 %v1165, %v1670
          %v1672 = vpop.f32.mrb[0].mxu0
          %v1673 = vadd.f32 %v1169, %v1672
          %1674 = vmatprep.mubr.bf16.mxu0 %v1093
          %1675 = vmatmul.mubr.bf16.gmra.mrb[0].mxu0 %v1092
          %v1676 = vpop.f32.mrb[0].mxu0
          %v1677 = vadd.f32 %v1165, %v1676
          %v1678 = vpop.f32.mrb[0].mxu0
          %v1679 = vadd.f32 %v1169, %v1678
          %v1680 = vpop.f32.mrb[0].mxu0
          %v1681 = vadd.f32 %v1165, %v1680
          %v1682 = vpop.f32.mrb[0].mxu0
          %v1683 = vadd.f32 %v1169, %v1682
          %1684 = vdwg.mxu0
          %1685 = vmatprep.subr.bf16.mxu0 %v1397
          %1686 = vmatpush1.bf16.msra.mxu0 %v1396
          %1687 = vmatprep.subr.bf16.mxu0 %v1399
          %1688 = vmatpush1.bf16.msra.mxu0 %v1398
          %1689 = vmatprep.subr.bf16.mxu0 %v1401
          %1690 = vmatpush1.bf16.msra.mxu0 %v1400
          %1691 = vmatprep.subr.bf16.mxu0 %v1403
          %1692 = vmatpush1.bf16.msra.mxu0 %v1402
          %1693 = vmatprep.subr.bf16.mxu0 %v1405
          %1694 = vmatpush1.bf16.msra.mxu0 %v1404
          %1695 = vmatprep.subr.bf16.mxu0 %v1407
          %1696 = vmatpush1.bf16.msra.mxu0 %v1406
          %1697 = vmatprep.subr.bf16.mxu0 %v1409
          %1698 = vmatpush1.bf16.msra.mxu0 %v1408
          %1699 = vmatprep.subr.bf16.mxu0 %v1411
          %1700 = vmatpush1.bf16.msra.mxu0 %v1410
          %1701 = vmatprep.subr.bf16.mxu0 %v1413
          %1702 = vmatpush1.bf16.msra.mxu0 %v1412
          %1703 = vmatprep.subr.bf16.mxu0 %v1415
          %1704 = vmatpush1.bf16.msra.mxu0 %v1414
          %1705 = vmatprep.subr.bf16.mxu0 %v1417
          %1706 = vmatpush1.bf16.msra.mxu0 %v1416
          %1707 = vmatprep.subr.bf16.mxu0 %v1419
          %1708 = vmatpush1.bf16.msra.mxu0 %v1418
          %1709 = vmatprep.subr.bf16.mxu0 %v1421
          %1710 = vmatpush1.bf16.msra.mxu0 %v1420
          %1711 = vmatprep.subr.bf16.mxu0 %v1423
          %1712 = vmatpush1.bf16.msra.mxu0 %v1422
          %1713 = vmatprep.subr.bf16.mxu0 %v1425
          %1714 = vmatpush1.bf16.msra.mxu0 %v1424
          %1715 = vmatprep.subr.bf16.mxu0 %v1427
          %1716 = vmatpush1.bf16.msra.mxu0 %v1426
          %1717 = vmatprep.mubr.bf16.mxu0 %v1035
          %1718 = vmatmul.mubr.bf16.gmra.mrb[0].mxu0 %v1034
          %v1719 = vpop.f32.mrb[0].mxu0
          %v1720 = vadd.f32 %v1527, %v1719
          %v1721 = vpop.f32.mrb[0].mxu0
          %v1722 = vadd.f32 %v1529, %v1721
          %v1723 = vpop.f32.mrb[0].mxu0
          %v1724 = vadd.f32 %v1531, %v1723
          %v1725 = vpop.f32.mrb[0].mxu0
          %v1726 = vadd.f32 %v1533, %v1725
          %1727 = vmatprep.mubr.bf16.mxu0 %v1039
          %1728 = vmatmul.mubr.bf16.gmra.mrb[0].mxu0 %v1038
          %v1729 = vpop.f32.mrb[0].mxu0
          %v1730 = vadd.f32 %v1537, %v1729
          %v1731 = vpop.f32.mrb[0].mxu0
          %v1732 = vadd.f32 %v1539, %v1731
          %v1733 = vpop.f32.mrb[0].mxu0
          %v1734 = vadd.f32 %v1541, %v1733
          %v1735 = vpop.f32.mrb[0].mxu0
          %v1736 = vadd.f32 %v1543, %v1735
          %1737 = vmatprep.mubr.bf16.mxu0 %v1043
          %1738 = vmatmul.mubr.bf16.gmra.mrb[0].mxu0 %v1042
          %v1739 = vpop.f32.mrb[0].mxu0
          %v1740 = vadd.f32 %v1547, %v1739
          %v1741 = vpop.f32.mrb[0].mxu0
          %v1742 = vadd.f32 %v1549, %v1741
          %v1743 = vpop.f32.mrb[0].mxu0
          %v1744 = vadd.f32 %v1551, %v1743
          %v1745 = vpop.f32.mrb[0].mxu0
          %v1746 = vadd.f32 %v1553, %v1745
          %1747 = vmatprep.mubr.bf16.mxu0 %v1047
          %1748 = vmatmul.mubr.bf16.gmra.mrb[0].mxu0 %v1046
          %v1749 = vpop.f32.mrb[0].mxu0
          %v1750 = vadd.f32 %v1557, %v1749
          %v1751 = vpop.f32.mrb[0].mxu0
          %v1752 = vadd.f32 %v1559, %v1751
          %v1753 = vpop.f32.mrb[0].mxu0
          %v1754 = vadd.f32 %v1561, %v1753
          %v1755 = vpop.f32.mrb[0].mxu0
          %v1756 = vadd.f32 %v1563, %v1755
          %1757 = vmatprep.mubr.bf16.mxu0 %v1051
          %1758 = vmatmul.mubr.bf16.gmra.mrb[0].mxu0 %v1050
          %v1759 = vpop.f32.mrb[0].mxu0
          %v1760 = vadd.f32 %v1567, %v1759
          %v1761 = vpop.f32.mrb[0].mxu0
          %v1762 = vadd.f32 %v1569, %v1761
          %v1763 = vpop.f32.mrb[0].mxu0
          %v1764 = vadd.f32 %v1571, %v1763
          %v1765 = vpop.f32.mrb[0].mxu0
          %v1766 = vadd.f32 %v1573, %v1765
          %1767 = vmatprep.mubr.bf16.mxu0 %v1055
          %1768 = vmatmul.mubr.bf16.gmra.mrb[0].mxu0 %v1054
          %v1769 = vpop.f32.mrb[0].mxu0
          %v1770 = vadd.f32 %v1577, %v1769
          %v1771 = vpop.f32.mrb[0].mxu0
          %v1772 = vadd.f32 %v1579, %v1771
          %v1773 = vpop.f32.mrb[0].mxu0
          %v1774 = vadd.f32 %v1581, %v1773
          %v1775 = vpop.f32.mrb[0].mxu0
          %v1776 = vadd.f32 %v1583, %v1775
          %1777 = vmatprep.mubr.bf16.mxu0 %v1059
          %1778 = vmatmul.mubr.bf16.gmra.mrb[0].mxu0 %v1058
          %v1779 = vpop.f32.mrb[0].mxu0
          %v1780 = vadd.f32 %v1587, %v1779
          %v1781 = vpop.f32.mrb[0].mxu0
          %v1782 = vadd.f32 %v1589, %v1781
          %v1783 = vpop.f32.mrb[0].mxu0
          %v1784 = vadd.f32 %v1591, %v1783
          %v1785 = vpop.f32.mrb[0].mxu0
          %v1786 = vadd.f32 %v1593, %v1785
          %1787 = vmatprep.mubr.bf16.mxu0 %v1063
          %1788 = vmatmul.mubr.bf16.gmra.mrb[0].mxu0 %v1062
          %v1789 = vpop.f32.mrb[0].mxu0
          %v1790 = vadd.f32 %v1597, %v1789
          %v1791 = vpop.f32.mrb[0].mxu0
          %v1792 = vadd.f32 %v1599, %v1791
          %v1793 = vpop.f32.mrb[0].mxu0
          %v1794 = vadd.f32 %v1601, %v1793
          %v1795 = vpop.f32.mrb[0].mxu0
          %v1796 = vadd.f32 %v1603, %v1795
          %1797 = vmatprep.mubr.bf16.mxu0 %v1067
          %1798 = vmatmul.mubr.bf16.gmra.mrb[0].mxu0 %v1066
          %v1799 = vpop.f32.mrb[0].mxu0
          %v1800 = vadd.f32 %v1607, %v1799
          %v1801 = vpop.f32.mrb[0].mxu0
          %v1802 = vadd.f32 %v1609, %v1801
          %v1803 = vpop.f32.mrb[0].mxu0
          %v1804 = vadd.f32 %v1611, %v1803
          %v1805 = vpop.f32.mrb[0].mxu0
          %v1806 = vadd.f32 %v1613, %v1805
          %1807 = vmatprep.mubr.bf16.mxu0 %v1071
          %1808 = vmatmul.mubr.bf16.gmra.mrb[0].mxu0 %v1070
          %v1809 = vpop.f32.mrb[0].mxu0
          %v1810 = vadd.f32 %v1617, %v1809
          %v1811 = vpop.f32.mrb[0].mxu0
          %v1812 = vadd.f32 %v1619, %v1811
          %v1813 = vpop.f32.mrb[0].mxu0
          %v1814 = vadd.f32 %v1621, %v1813
          %v1815 = vpop.f32.mrb[0].mxu0
          %v1816 = vadd.f32 %v1623, %v1815
          %1817 = vmatprep.mubr.bf16.mxu0 %v1075
          %1818 = vmatmul.mubr.bf16.gmra.mrb[0].mxu0 %v1074
          %v1819 = vpop.f32.mrb[0].mxu0
          %v1820 = vadd.f32 %v1627, %v1819
          %v1821 = vpop.f32.mrb[0].mxu0
          %v1822 = vadd.f32 %v1629, %v1821
          %v1823 = vpop.f32.mrb[0].mxu0
          %v1824 = vadd.f32 %v1631, %v1823
          %v1825 = vpop.f32.mrb[0].mxu0
          %v1826 = vadd.f32 %v1633, %v1825
          %1827 = vmatprep.mubr.bf16.mxu0 %v1079
          %1828 = vmatmul.mubr.bf16.gmra.mrb[0].mxu0 %v1078
          %v1829 = vpop.f32.mrb[0].mxu0
          %v1830 = vadd.f32 %v1637, %v1829
          %v1831 = vpop.f32.mrb[0].mxu0
          %v1832 = vadd.f32 %v1639, %v1831
          %v1833 = vpop.f32.mrb[0].mxu0
          %v1834 = vadd.f32 %v1641, %v1833
          %v1835 = vpop.f32.mrb[0].mxu0
          %v1836 = vadd.f32 %v1643, %v1835
          %1837 = vmatprep.mubr.bf16.mxu0 %v1083
          %1838 = vmatmul.mubr.bf16.gmra.mrb[0].mxu0 %v1082
          %v1839 = vpop.f32.mrb[0].mxu0
          %v1840 = vadd.f32 %v1647, %v1839
          %v1841 = vpop.f32.mrb[0].mxu0
          %v1842 = vadd.f32 %v1649, %v1841
          %v1843 = vpop.f32.mrb[0].mxu0
          %v1844 = vadd.f32 %v1651, %v1843
          %v1845 = vpop.f32.mrb[0].mxu0
          %v1846 = vadd.f32 %v1653, %v1845
          %1847 = vmatprep.mubr.bf16.mxu0 %v1087
          %1848 = vmatmul.mubr.bf16.gmra.mrb[0].mxu0 %v1086
          %v1849 = vpop.f32.mrb[0].mxu0
          %v1850 = vadd.f32 %v1657, %v1849
          %v1851 = vpop.f32.mrb[0].mxu0
          %v1852 = vadd.f32 %v1659, %v1851
          %v1853 = vpop.f32.mrb[0].mxu0
          %v1854 = vadd.f32 %v1661, %v1853
          %v1855 = vpop.f32.mrb[0].mxu0
          %v1856 = vadd.f32 %v1663, %v1855
          %1857 = vmatprep.mubr.bf16.mxu0 %v1091
          %1858 = vmatmul.mubr.bf16.gmra.mrb[0].mxu0 %v1090
          %v1859 = vpop.f32.mrb[0].mxu0
          %v1860 = vadd.f32 %v1667, %v1859
          %v1861 = vpop.f32.mrb[0].mxu0
          %v1862 = vadd.f32 %v1669, %v1861
          %v1863 = vpop.f32.mrb[0].mxu0
          %v1864 = vadd.f32 %v1671, %v1863
          %v1865 = vpop.f32.mrb[0].mxu0
          %v1866 = vadd.f32 %v1673, %v1865
          %1867 = vmatprep.mubr.bf16.mxu0 %v1095
          %1868 = vmatmul.mubr.bf16.gmra.mrb[0].mxu0 %v1094
          %v1869 = vpop.f32.mrb[0].mxu0
          %v1870 = vadd.f32 %v1677, %v1869
          %v1871 = vpop.f32.mrb[0].mxu0
          %v1872 = vadd.f32 %v1679, %v1871
          %v1873 = vpop.f32.mrb[0].mxu0
          %v1874 = vadd.f32 %v1681, %v1873
          %v1875 = vpop.f32.mrb[0].mxu0
          %v1876 = vadd.f32 %v1683, %v1875
          %1877 = vdwg.mxu0
          %v1878 = vmul.f32 %v1720, 0.01
          %v1879 = vmul.f32 %v1722, 0.01
          %v1880 = vmul.f32 %v1724, 0.01
          %v1881 = vmul.f32 %v1726, 0.01
          %v1882 = vmul.f32 %v1730, 0.01
          %v1883 = vmul.f32 %v1732, 0.01
          %v1884 = vmul.f32 %v1734, 0.01
          %v1885 = vmul.f32 %v1736, 0.01
          %v1886 = vmul.f32 %v1740, 0.01
          %v1887 = vmul.f32 %v1742, 0.01
          %v1888 = vmul.f32 %v1744, 0.01
          %v1889 = vmul.f32 %v1746, 0.01
          %v1890 = vmul.f32 %v1750, 0.01
          %v1891 = vmul.f32 %v1752, 0.01
          %v1892 = vmul.f32 %v1754, 0.01
          %v1893 = vmul.f32 %v1756, 0.01
          %v1894 = vmul.f32 %v1760, 0.01
          %v1895 = vmul.f32 %v1762, 0.01
          %v1896 = vmul.f32 %v1764, 0.01
          %v1897 = vmul.f32 %v1766, 0.01
          %v1898 = vmul.f32 %v1770, 0.01
          %v1899 = vmul.f32 %v1772, 0.01
          %v1900 = vmul.f32 %v1774, 0.01
          %v1901 = vmul.f32 %v1776, 0.01
          %v1902 = vmul.f32 %v1780, 0.01
          %v1903 = vmul.f32 %v1782, 0.01
          %v1904 = vmul.f32 %v1784, 0.01
          %v1905 = vmul.f32 %v1786, 0.01
          %v1906 = vmul.f32 %v1790, 0.01
          %v1907 = vmul.f32 %v1792, 0.01
          %v1908 = vmul.f32 %v1794, 0.01
          %v1909 = vmul.f32 %v1796, 0.01
          %v1910 = vmul.f32 %v1800, 0.01
          %v1911 = vmul.f32 %v1802, 0.01
          %v1912 = vmul.f32 %v1804, 0.01
          %v1913 = vmul.f32 %v1806, 0.01
          %v1914 = vmul.f32 %v1810, 0.01
          %v1915 = vmul.f32 %v1812, 0.01
          %v1916 = vmul.f32 %v1814, 0.01
          %v1917 = vmul.f32 %v1816, 0.01
          %v1918 = vmul.f32 %v1820, 0.01
          %v1919 = vmul.f32 %v1822, 0.01
          %v1920 = vmul.f32 %v1824, 0.01
          %v1921 = vmul.f32 %v1826, 0.01
          %v1922 = vmul.f32 %v1830, 0.01
          %v1923 = vmul.f32 %v1832, 0.01
          %v1924 = vmul.f32 %v1834, 0.01
          %v1925 = vmul.f32 %v1836, 0.01
          %v1926 = vmul.f32 %v1840, 0.01
          %v1927 = vmul.f32 %v1842, 0.01
          %v1928 = vmul.f32 %v1844, 0.01
          %v1929 = vmul.f32 %v1846, 0.01
          %v1930 = vmul.f32 %v1850, 0.01
          %v1931 = vmul.f32 %v1852, 0.01
          %v1932 = vmul.f32 %v1854, 0.01
          %v1933 = vmul.f32 %v1856, 0.01
          %v1934 = vmul.f32 %v1860, 0.01
          %v1935 = vmul.f32 %v1862, 0.01
          %v1936 = vmul.f32 %v1864, 0.01
          %v1937 = vmul.f32 %v1866, 0.01
          %v1938 = vmul.f32 %v1870, 0.01
          %v1939 = vmul.f32 %v1872, 0.01
          %v1940 = vmul.f32 %v1874, 0.01
          %v1941 = vmul.f32 %v1876, 0.01
          %v1942 = vmax.f32 %v1720, %v1878
          %v1943 = vmax.f32 %v1722, %v1879
          %v1944 = vmax.f32 %v1724, %v1880
          %v1945 = vmax.f32 %v1726, %v1881
          %v1946 = vmax.f32 %v1730, %v1882
          %v1947 = vmax.f32 %v1732, %v1883
          %v1948 = vmax.f32 %v1734, %v1884
          %v1949 = vmax.f32 %v1736, %v1885
          %v1950 = vmax.f32 %v1740, %v1886
          %v1951 = vmax.f32 %v1742, %v1887
          %v1952 = vmax.f32 %v1744, %v1888
          %v1953 = vmax.f32 %v1746, %v1889
          %v1954 = vmax.f32 %v1750, %v1890
          %v1955 = vmax.f32 %v1752, %v1891
          %v1956 = vmax.f32 %v1754, %v1892
          %v1957 = vmax.f32 %v1756, %v1893
          %v1958 = vmax.f32 %v1760, %v1894
          %v1959 = vmax.f32 %v1762, %v1895
          %v1960 = vmax.f32 %v1764, %v1896
          %v1961 = vmax.f32 %v1766, %v1897
          %v1962 = vmax.f32 %v1770, %v1898
          %v1963 = vmax.f32 %v1772, %v1899
          %v1964 = vmax.f32 %v1774, %v1900
          %v1965 = vmax.f32 %v1776, %v1901
          %v1966 = vmax.f32 %v1780, %v1902
          %v1967 = vmax.f32 %v1782, %v1903
          %v1968 = vmax.f32 %v1784, %v1904
          %v1969 = vmax.f32 %v1786, %v1905
          %v1970 = vmax.f32 %v1790, %v1906
          %v1971 = vmax.f32 %v1792, %v1907
          %v1972 = vmax.f32 %v1794, %v1908
          %v1973 = vmax.f32 %v1796, %v1909
          %v1974 = vmax.f32 %v1800, %v1910
          %v1975 = vmax.f32 %v1802, %v1911
          %v1976 = vmax.f32 %v1804, %v1912
          %v1977 = vmax.f32 %v1806, %v1913
          %v1978 = vmax.f32 %v1810, %v1914
          %v1979 = vmax.f32 %v1812, %v1915
          %v1980 = vmax.f32 %v1814, %v1916
          %v1981 = vmax.f32 %v1816, %v1917
          %v1982 = vmax.f32 %v1820, %v1918
          %v1983 = vmax.f32 %v1822, %v1919
          %v1984 = vmax.f32 %v1824, %v1920
          %v1985 = vmax.f32 %v1826, %v1921
          %v1986 = vmax.f32 %v1830, %v1922
          %v1987 = vmax.f32 %v1832, %v1923
          %v1988 = vmax.f32 %v1834, %v1924
          %v1989 = vmax.f32 %v1836, %v1925
          %v1990 = vmax.f32 %v1840, %v1926
          %v1991 = vmax.f32 %v1842, %v1927
          %v1992 = vmax.f32 %v1844, %v1928
          %v1993 = vmax.f32 %v1846, %v1929
          %v1994 = vmax.f32 %v1850, %v1930
          %v1995 = vmax.f32 %v1852, %v1931
          %v1996 = vmax.f32 %v1854, %v1932
          %v1997 = vmax.f32 %v1856, %v1933
          %v1998 = vmax.f32 %v1860, %v1934
          %v1999 = vmax.f32 %v1862, %v1935
          %v2000 = vmax.f32 %v1864, %v1936
          %v2001 = vmax.f32 %v1866, %v1937
          %v2002 = vmax.f32 %v1870, %v1938
          %v2003 = vmax.f32 %v1872, %v1939
          %v2004 = vmax.f32 %v1874, %v1940
          %v2005 = vmax.f32 %v1876, %v1941
          %p2006 = scmp.eq.s32.totalorder %s37, 0
          // Predicated region
          $region89: #{tpu_custom_call.1} parent=87 // pred_check
            %p2007 = pneg %p2006
          $region90: #{tpu_custom_call.1} parent=87 // pred_check_branch
            %2009 = sbr.rel (%p2007) target = $region92
          $region91: #{tpu_custom_call.1} parent=87 // pred_region
            %2010 = vst [vmem:[#allocation3] sm:$0xf] 0.0
          $region92: #{tpu_custom_call.1} parent=87 // pred_fallthru
            _
          %v2011 = vld [vmem:[#allocation3] ss:$2 sm:$0x3]
          %v2012 = vadd.f32 %v1942, %v1944
          %v2013 = vadd.f32 %v2012, %v1946
          %v2014 = vadd.f32 %v2013, %v1948
          %v2015 = vadd.f32 %v2014, %v1950
          %v2016 = vadd.f32 %v2015, %v1952
          %v2017 = vadd.f32 %v2016, %v1954
          %v2018 = vadd.f32 %v2017, %v1956
          %v2019 = vadd.f32 %v2018, %v1958
          %v2020 = vadd.f32 %v2019, %v1960
          %v2021 = vadd.f32 %v2020, %v1962
          %v2022 = vadd.f32 %v2021, %v1964
          %v2023 = vadd.f32 %v2022, %v1966
          %v2024 = vadd.f32 %v2023, %v1968
          %v2025 = vadd.f32 %v2024, %v1970
          %v2026 = vadd.f32 %v2025, %v1972
          %v2027 = vadd.f32 %v2026, %v1974
          %v2028 = vadd.f32 %v2027, %v1976
          %v2029 = vadd.f32 %v2028, %v1978
          %v2030 = vadd.f32 %v2029, %v1980
          %v2031 = vadd.f32 %v2030, %v1982
          %v2032 = vadd.f32 %v2031, %v1984
          %v2033 = vadd.f32 %v2032, %v1986
          %v2034 = vadd.f32 %v2033, %v1988
          %v2035 = vadd.f32 %v2034, %v1990
          %v2036 = vadd.f32 %v2035, %v1992
          %v2037 = vadd.f32 %v2036, %v1994
          %v2038 = vadd.f32 %v2037, %v1996
          %v2039 = vadd.f32 %v2038, %v1998
          %v2040 = vadd.f32 %v2039, %v2000
          %v2041 = vadd.f32 %v2040, %v2002
          %v2042 = vadd.f32 %v2041, %v2004
          %v2043 = vrot.slane %v2042, 4
          %v2044 = vadd.f32 %v2042, %v2043
          %v2045 = vrot.slane %v2044, 2
          %v2046 = vadd.f32 %v2044, %v2045
          %v2047 = vrot.slane %v2046, 1
          %v2048 = vadd.f32 %v2046, %v2047
          %v2049 = vadd.f32 %v1943, %v1945
          %v2050 = vadd.f32 %v2049, %v1947
          %v2051 = vadd.f32 %v2050, %v1949
          %v2052 = vadd.f32 %v2051, %v1951
          %v2053 = vadd.f32 %v2052, %v1953
          %v2054 = vadd.f32 %v2053, %v1955
          %v2055 = vadd.f32 %v2054, %v1957
          %v2056 = vadd.f32 %v2055, %v1959
          %v2057 = vadd.f32 %v2056, %v1961
          %v2058 = vadd.f32 %v2057, %v1963
          %v2059 = vadd.f32 %v2058, %v1965
          %v2060 = vadd.f32 %v2059, %v1967
          %v2061 = vadd.f32 %v2060, %v1969
          %v2062 = vadd.f32 %v2061, %v1971
          %v2063 = vadd.f32 %v2062, %v1973
          %v2064 = vadd.f32 %v2063, %v1975
          %v2065 = vadd.f32 %v2064, %v1977
          %v2066 = vadd.f32 %v2065, %v1979
          %v2067 = vadd.f32 %v2066, %v1981
          %v2068 = vadd.f32 %v2067, %v1983
          %v2069 = vadd.f32 %v2068, %v1985
          %v2070 = vadd.f32 %v2069, %v1987
          %v2071 = vadd.f32 %v2070, %v1989
          %v2072 = vadd.f32 %v2071, %v1991
          %v2073 = vadd.f32 %v2072, %v1993
          %v2074 = vadd.f32 %v2073, %v1995
          %v2075 = vadd.f32 %v2074, %v1997
          %v2076 = vadd.f32 %v2075, %v1999
          %v2077 = vadd.f32 %v2076, %v2001
          %v2078 = vadd.f32 %v2077, %v2003
          %v2079 = vadd.f32 %v2078, %v2005
          %v2080 = vrot.slane %v2079, 4
          %v2081 = vadd.f32 %v2079, %v2080
          %v2082 = vrot.slane %v2081, 2
          %v2083 = vadd.f32 %v2081, %v2082
          %v2084 = vrot.slane %v2083, 1
          %v2085 = vadd.f32 %v2083, %v2084
          %v2088 = vcombine.low %v2048, %v2085
          %v2090 = vunpack.c.l.s4 1966171168
          %v2091 = vunpack.c.0.s8 %v2090
          %v2092 = vlaneseq
          %v2093 = vshrl.u32 %v2092, 7
          %v2094 = vsub.s32 %v2091, %v2093
          %v2095 = vrot.slane %v2088, %v2094
          %v2097 = vunpack.c.l.s4 1966171168
          %v2098 = vunpack.c.0.s8 %v2097
          %v2099 = vlaneseq
          %v2100 = vshrl.u32 %v2099, 7
          %v2101 = vsub.s32 %v2098, %v2100
          %v2102 = vrot.slane %v2095, %v2101
          %v2104 = vadd.f32 %v2011, %v2102
          %v2105 = vlaneseq
          %vm2106 = vcmp.ge.s32.totalorder %v2105, 0
          %vm2107 = vcmp.lt.s32.totalorder %v2105, 256
          %vm2108 = vmand %vm2106, %vm2107
          %2109 = vst.msk [vmem:[#allocation3] ss:$2 sm:$0x3] %vm2108, %v2104
          %s2110 = scalar_lea.vmem [#allocation3], 1
          %v2111 = vld [vmem:[%s2110] ss:$2 sm:$0x3]
          %v2112 = vmul.f32 %v1942, %v1942
          %v2113 = vmul.f32 %v1943, %v1943
          %v2114 = vmul.f32 %v1944, %v1944
          %v2115 = vmul.f32 %v1945, %v1945
          %v2116 = vmul.f32 %v1946, %v1946
          %v2117 = vmul.f32 %v1947, %v1947
          %v2118 = vmul.f32 %v1948, %v1948
          %v2119 = vmul.f32 %v1949, %v1949
          %v2120 = vmul.f32 %v1950, %v1950
          %v2121 = vmul.f32 %v1951, %v1951
          %v2122 = vmul.f32 %v1952, %v1952
          %v2123 = vmul.f32 %v1953, %v1953
          %v2124 = vmul.f32 %v1954, %v1954
          %v2125 = vmul.f32 %v1955, %v1955
          %v2126 = vmul.f32 %v1956, %v1956
          %v2127 = vmul.f32 %v1957, %v1957
          %v2128 = vmul.f32 %v1958, %v1958
          %v2129 = vmul.f32 %v1959, %v1959
          %v2130 = vmul.f32 %v1960, %v1960
          %v2131 = vmul.f32 %v1961, %v1961
          %v2132 = vmul.f32 %v1962, %v1962
          %v2133 = vmul.f32 %v1963, %v1963
          %v2134 = vmul.f32 %v1964, %v1964
          %v2135 = vmul.f32 %v1965, %v1965
          %v2136 = vmul.f32 %v1966, %v1966
          %v2137 = vmul.f32 %v1967, %v1967
          %v2138 = vmul.f32 %v1968, %v1968
          %v2139 = vmul.f32 %v1969, %v1969
          %v2140 = vmul.f32 %v1970, %v1970
          %v2141 = vmul.f32 %v1971, %v1971
          %v2142 = vmul.f32 %v1972, %v1972
          %v2143 = vmul.f32 %v1973, %v1973
          %v2144 = vmul.f32 %v1974, %v1974
          %v2145 = vmul.f32 %v1975, %v1975
          %v2146 = vmul.f32 %v1976, %v1976
          %v2147 = vmul.f32 %v1977, %v1977
          %v2148 = vmul.f32 %v1978, %v1978
          %v2149 = vmul.f32 %v1979, %v1979
          %v2150 = vmul.f32 %v1980, %v1980
          %v2151 = vmul.f32 %v1981, %v1981
          %v2152 = vmul.f32 %v1982, %v1982
          %v2153 = vmul.f32 %v1983, %v1983
          %v2154 = vmul.f32 %v1984, %v1984
          %v2155 = vmul.f32 %v1985, %v1985
          %v2156 = vmul.f32 %v1986, %v1986
          %v2157 = vmul.f32 %v1987, %v1987
          %v2158 = vmul.f32 %v1988, %v1988
          %v2159 = vmul.f32 %v1989, %v1989
          %v2160 = vmul.f32 %v1990, %v1990
          %v2161 = vmul.f32 %v1991, %v1991
          %v2162 = vmul.f32 %v1992, %v1992
          %v2163 = vmul.f32 %v1993, %v1993
          %v2164 = vmul.f32 %v1994, %v1994
          %v2165 = vmul.f32 %v1995, %v1995
          %v2166 = vmul.f32 %v1996, %v1996
          %v2167 = vmul.f32 %v1997, %v1997
          %v2168 = vmul.f32 %v1998, %v1998
          %v2169 = vmul.f32 %v1999, %v1999
          %v2170 = vmul.f32 %v2000, %v2000
          %v2171 = vmul.f32 %v2001, %v2001
          %v2172 = vmul.f32 %v2002, %v2002
          %v2173 = vmul.f32 %v2003, %v2003
          %v2174 = vmul.f32 %v2004, %v2004
          %v2175 = vmul.f32 %v2005, %v2005
          %v2176 = vadd.f32 %v2112, %v2114
          %v2177 = vadd.f32 %v2176, %v2116
          %v2178 = vadd.f32 %v2177, %v2118
          %v2179 = vadd.f32 %v2178, %v2120
          %v2180 = vadd.f32 %v2179, %v2122
          %v2181 = vadd.f32 %v2180, %v2124
          %v2182 = vadd.f32 %v2181, %v2126
          %v2183 = vadd.f32 %v2182, %v2128
          %v2184 = vadd.f32 %v2183, %v2130
          %v2185 = vadd.f32 %v2184, %v2132
          %v2186 = vadd.f32 %v2185, %v2134
          %v2187 = vadd.f32 %v2186, %v2136
          %v2188 = vadd.f32 %v2187, %v2138
          %v2189 = vadd.f32 %v2188, %v2140
          %v2190 = vadd.f32 %v2189, %v2142
          %v2191 = vadd.f32 %v2190, %v2144
          %v2192 = vadd.f32 %v2191, %v2146
          %v2193 = vadd.f32 %v2192, %v2148
          %v2194 = vadd.f32 %v2193, %v2150
          %v2195 = vadd.f32 %v2194, %v2152
          %v2196 = vadd.f32 %v2195, %v2154
          %v2197 = vadd.f32 %v2196, %v2156
          %v2198 = vadd.f32 %v2197, %v2158
          %v2199 = vadd.f32 %v2198, %v2160
          %v2200 = vadd.f32 %v2199, %v2162
          %v2201 = vadd.f32 %v2200, %v2164
          %v2202 = vadd.f32 %v2201, %v2166
          %v2203 = vadd.f32 %v2202, %v2168
          %v2204 = vadd.f32 %v2203, %v2170
          %v2205 = vadd.f32 %v2204, %v2172
          %v2206 = vadd.f32 %v2205, %v2174
          %v2207 = vrot.slane %v2206, 4
          %v2208 = vadd.f32 %v2206, %v2207
          %v2209 = vrot.slane %v2208, 2
          %v2210 = vadd.f32 %v2208, %v2209
          %v2211 = vrot.slane %v2210, 1
          %v2212 = vadd.f32 %v2210, %v2211
          %v2213 = vadd.f32 %v2113, %v2115
          %v2214 = vadd.f32 %v2213, %v2117
          %v2215 = vadd.f32 %v2214, %v2119
          %v2216 = vadd.f32 %v2215, %v2121
          %v2217 = vadd.f32 %v2216, %v2123
          %v2218 = vadd.f32 %v2217, %v2125
          %v2219 = vadd.f32 %v2218, %v2127
          %v2220 = vadd.f32 %v2219, %v2129
          %v2221 = vadd.f32 %v2220, %v2131
          %v2222 = vadd.f32 %v2221, %v2133
          %v2223 = vadd.f32 %v2222, %v2135
          %v2224 = vadd.f32 %v2223, %v2137
          %v2225 = vadd.f32 %v2224, %v2139
          %v2226 = vadd.f32 %v2225, %v2141
          %v2227 = vadd.f32 %v2226, %v2143
          %v2228 = vadd.f32 %v2227, %v2145
          %v2229 = vadd.f32 %v2228, %v2147
          %v2230 = vadd.f32 %v2229, %v2149
          %v2231 = vadd.f32 %v2230, %v2151
          %v2232 = vadd.f32 %v2231, %v2153
          %v2233 = vadd.f32 %v2232, %v2155
          %v2234 = vadd.f32 %v2233, %v2157
          %v2235 = vadd.f32 %v2234, %v2159
          %v2236 = vadd.f32 %v2235, %v2161
          %v2237 = vadd.f32 %v2236, %v2163
          %v2238 = vadd.f32 %v2237, %v2165
          %v2239 = vadd.f32 %v2238, %v2167
          %v2240 = vadd.f32 %v2239, %v2169
          %v2241 = vadd.f32 %v2240, %v2171
          %v2242 = vadd.f32 %v2241, %v2173
          %v2243 = vadd.f32 %v2242, %v2175
          %v2244 = vrot.slane %v2243, 4
          %v2245 = vadd.f32 %v2243, %v2244
          %v2246 = vrot.slane %v2245, 2
          %v2247 = vadd.f32 %v2245, %v2246
          %v2248 = vrot.slane %v2247, 1
          %v2249 = vadd.f32 %v2247, %v2248
          %v2252 = vcombine.low %v2212, %v2249
          %v2254 = vunpack.c.l.s4 1966171168
          %v2255 = vunpack.c.0.s8 %v2254
          %v2256 = vlaneseq
          %v2257 = vshrl.u32 %v2256, 7
          %v2258 = vsub.s32 %v2255, %v2257
          %v2259 = vrot.slane %v2252, %v2258
          %v2261 = vunpack.c.l.s4 1966171168
          %v2262 = vunpack.c.0.s8 %v2261
          %v2263 = vlaneseq
          %v2264 = vshrl.u32 %v2263, 7
          %v2265 = vsub.s32 %v2262, %v2264
          %v2266 = vrot.slane %v2259, %v2265
          %v2268 = vadd.f32 %v2111, %v2266
          %2269 = vst.msk [vmem:[%s2110] ss:$2 sm:$0x3] %vm2108, %v2268
          %v2270 = vpack.c.bf16 %v1944, %v1942
          %v2271 = vpack.c.bf16 %v1945, %v1943
          %v2272 = vpack.c.bf16 %v1948, %v1946
          %v2273 = vpack.c.bf16 %v1949, %v1947
          %v2274 = vpack.c.bf16 %v1952, %v1950
          %v2275 = vpack.c.bf16 %v1953, %v1951
          %v2276 = vpack.c.bf16 %v1956, %v1954
          %v2277 = vpack.c.bf16 %v1957, %v1955
          %v2278 = vpack.c.bf16 %v1960, %v1958
          %v2279 = vpack.c.bf16 %v1961, %v1959
          %v2280 = vpack.c.bf16 %v1964, %v1962
          %v2281 = vpack.c.bf16 %v1965, %v1963
          %v2282 = vpack.c.bf16 %v1968, %v1966
          %v2283 = vpack.c.bf16 %v1969, %v1967
          %v2284 = vpack.c.bf16 %v1972, %v1970
          %v2285 = vpack.c.bf16 %v1973, %v1971
          %v2286 = vpack.c.bf16 %v1976, %v1974
          %v2287 = vpack.c.bf16 %v1977, %v1975
          %v2288 = vpack.c.bf16 %v1980, %v1978
          %v2289 = vpack.c.bf16 %v1981, %v1979
          %v2290 = vpack.c.bf16 %v1984, %v1982
          %v2291 = vpack.c.bf16 %v1985, %v1983
          %v2292 = vpack.c.bf16 %v1988, %v1986
          %v2293 = vpack.c.bf16 %v1989, %v1987
          %v2294 = vpack.c.bf16 %v1992, %v1990
          %v2295 = vpack.c.bf16 %v1993, %v1991
          %v2296 = vpack.c.bf16 %v1996, %v1994
          %v2297 = vpack.c.bf16 %v1997, %v1995
          %v2298 = vpack.c.bf16 %v2000, %v1998
          %v2299 = vpack.c.bf16 %v2001, %v1999
          %v2300 = vpack.c.bf16 %v2004, %v2002
          %v2301 = vpack.c.bf16 %v2005, %v2003
          %s2302 = smul.u32 %s37, 32
          %s2303 = smul.addr %s2302, 8
          %s2304 = scalar_lea.vmem [#allocation2], %s2303
          %2305 = vst [vmem:[%s2304] sm:$0xff] %v2270
          %2306 = vst [vmem:[%s2304 + $0x8] sm:$0xff] %v2271
          %2307 = vst [vmem:[%s2304 + $0x10] sm:$0xff] %v2272
          %2308 = vst [vmem:[%s2304 + $0x18] sm:$0xff] %v2273
          %2309 = vst [vmem:[%s2304 + $0x20] sm:$0xff] %v2274
          %2310 = vst [vmem:[%s2304 + $0x28] sm:$0xff] %v2275
          %2311 = vst [vmem:[%s2304 + $0x30] sm:$0xff] %v2276
          %2312 = vst [vmem:[%s2304 + $0x38] sm:$0xff] %v2277
          %2313 = vst [vmem:[%s2304 + $0x40] sm:$0xff] %v2278
          %2314 = vst [vmem:[%s2304 + $0x48] sm:$0xff] %v2279
          %2315 = vst [vmem:[%s2304 + $0x50] sm:$0xff] %v2280
          %2316 = vst [vmem:[%s2304 + $0x58] sm:$0xff] %v2281
          %2317 = vst [vmem:[%s2304 + $0x60] sm:$0xff] %v2282
          %2318 = vst [vmem:[%s2304 + $0x68] sm:$0xff] %v2283
          %2319 = vst [vmem:[%s2304 + $0x70] sm:$0xff] %v2284
          %2320 = vst [vmem:[%s2304 + $0x78] sm:$0xff] %v2285
          %2321 = vst [vmem:[%s2304 + $0x80] sm:$0xff] %v2286
          %2322 = vst [vmem:[%s2304 + $0x88] sm:$0xff] %v2287
          %2323 = vst [vmem:[%s2304 + $0x90] sm:$0xff] %v2288
          %2324 = vst [vmem:[%s2304 + $0x98] sm:$0xff] %v2289
          %2325 = vst [vmem:[%s2304 + $0xa0] sm:$0xff] %v2290
          %2326 = vst [vmem:[%s2304 + $0xa8] sm:$0xff] %v2291
          %2327 = vst [vmem:[%s2304 + $0xb0] sm:$0xff] %v2292
          %2328 = vst [vmem:[%s2304 + $0xb8] sm:$0xff] %v2293
          %2329 = vst [vmem:[%s2304 + $0xc0] sm:$0xff] %v2294
          %2330 = vst [vmem:[%s2304 + $0xc8] sm:$0xff] %v2295
          %2331 = vst [vmem:[%s2304 + $0xd0] sm:$0xff] %v2296
          %2332 = vst [vmem:[%s2304 + $0xd8] sm:$0xff] %v2297
          %2333 = vst [vmem:[%s2304 + $0xe0] sm:$0xff] %v2298
          %2334 = vst [vmem:[%s2304 + $0xe8] sm:$0xff] %v2299
          %2335 = vst [vmem:[%s2304 + $0xf0] sm:$0xff] %v2300
          %2336 = vst [vmem:[%s2304 + $0xf8] sm:$0xff] %v2301
        $region88: #{tpu_custom_call.1} parent=59 // pred_fallthru
          _
        %p2337 = scmp.eq.s32.totalorder %s36, 1
        // Predicated region
        $region93: #{tpu_custom_call.1} parent=59 // pred_check
          %p2338 = pneg %p2337
        $region94: #{tpu_custom_call.1} parent=59 // pred_check_branch
          %2340 = sbr.rel (%p2338) target = $region96
        $region95: #{tpu_custom_call.1} parent=59 // pred_region
          %p2341 = scmp.eq.s32.totalorder %s37, 0
          // Predicated region
          $region97: #{tpu_custom_call.1} parent=95 // pred_check
            %p2342 = pneg %p2341
          $region98: #{tpu_custom_call.1} parent=95 // pred_check_branch
            %2344 = sbr.rel (%p2342) target = $region100
          $region99: #{tpu_custom_call.1} parent=95 // pred_region
            %v2345 = vld [vmem:[#allocation3] ss:$2 sm:$0x3]
            %v2346 = vmul.f32 %v2345, 0.001953125
            %s2347 = scalar_lea.vmem [#allocation3], 1
            %v2348 = vld [vmem:[%s2347] ss:$2 sm:$0x3]
            %v2349 = vmul.f32 %v2348, 0.001953125
            %v2350 = vmul.f32 %v2346, %v2346
            %v2351 = vsub.f32 %v2349, %v2350
            %v2352 = vlaneseq
            %vm2353 = vcmp.ge.s32.totalorder %v2352, 0
            %vm2354 = vcmp.lt.s32.totalorder %v2352, 256
            %vm2355 = vmand %vm2353, %vm2354
            %2356 = vst.msk [vmem:[#allocation6] ss:$2 sm:$0x3] %vm2355, %v2346
            %v2357 = vadd.f32 %v2351, 1e-05
            %v2358 = vrsqrt.pop %v2357
            %s2359 = scalar_lea.vmem [#allocation6], 1
            %2360 = vst.msk [vmem:[%s2359] ss:$2 sm:$0x3] %vm2355, %v2358
          $region100: #{tpu_custom_call.1} parent=95 // pred_fallthru
            _
          %s2361 = smul.u32 %s37, 32
          %s2362 = smul.addr %s2361, 8
          %s2363 = scalar_lea.vmem [#allocation2], %s2362
          %v2364 = vld [vmem:[%s2363] sm:$0xff]
          %v2365 = vld [vmem:[%s2363 + $0x8] sm:$0xff]
          %v2366 = vld [vmem:[%s2363 + $0x10] sm:$0xff]
          %v2367 = vld [vmem:[%s2363 + $0x18] sm:$0xff]
          %v2368 = vld [vmem:[%s2363 + $0x20] sm:$0xff]
          %v2369 = vld [vmem:[%s2363 + $0x28] sm:$0xff]
          %v2370 = vld [vmem:[%s2363 + $0x30] sm:$0xff]
          %v2371 = vld [vmem:[%s2363 + $0x38] sm:$0xff]
          %v2372 = vld [vmem:[%s2363 + $0x40] sm:$0xff]
          %v2373 = vld [vmem:[%s2363 + $0x48] sm:$0xff]
          %v2374 = vld [vmem:[%s2363 + $0x50] sm:$0xff]
          %v2375 = vld [vmem:[%s2363 + $0x58] sm:$0xff]
          %v2376 = vld [vmem:[%s2363 + $0x60] sm:$0xff]
          %v2377 = vld [vmem:[%s2363 + $0x68] sm:$0xff]
          %v2378 = vld [vmem:[%s2363 + $0x70] sm:$0xff]
          %v2379 = vld [vmem:[%s2363 + $0x78] sm:$0xff]
          %v2380 = vld [vmem:[%s2363 + $0x80] sm:$0xff]
          %v2381 = vld [vmem:[%s2363 + $0x88] sm:$0xff]
          %v2382 = vld [vmem:[%s2363 + $0x90] sm:$0xff]
          %v2383 = vld [vmem:[%s2363 + $0x98] sm:$0xff]
          %v2384 = vld [vmem:[%s2363 + $0xa0] sm:$0xff]
          %v2385 = vld [vmem:[%s2363 + $0xa8] sm:$0xff]
          %v2386 = vld [vmem:[%s2363 + $0xb0] sm:$0xff]
          %v2387 = vld [vmem:[%s2363 + $0xb8] sm:$0xff]
          %v2388 = vld [vmem:[%s2363 + $0xc0] sm:$0xff]
          %v2389 = vld [vmem:[%s2363 + $0xc8] sm:$0xff]
          %v2390 = vld [vmem:[%s2363 + $0xd0] sm:$0xff]
          %v2391 = vld [vmem:[%s2363 + $0xd8] sm:$0xff]
          %v2392 = vld [vmem:[%s2363 + $0xe0] sm:$0xff]
          %v2393 = vld [vmem:[%s2363 + $0xe8] sm:$0xff]
          %v2394 = vld [vmem:[%s2363 + $0xf0] sm:$0xff]
          %v2395 = vld [vmem:[%s2363 + $0xf8] sm:$0xff]
          %v2396 = vld [vmem:[#allocation6] ss:$2 sm:$0x3]
          %v2397 = vunpack.c.l.bf16 %v2364
          %v2398 = vunpack.c.l.bf16 %v2365
          %v2399 = vunpack.c.h.bf16 %v2364
          %v2400 = vunpack.c.h.bf16 %v2365
          %v2401 = vunpack.c.l.bf16 %v2366
          %v2402 = vunpack.c.l.bf16 %v2367
          %v2403 = vunpack.c.h.bf16 %v2366
          %v2404 = vunpack.c.h.bf16 %v2367
          %v2405 = vunpack.c.l.bf16 %v2368
          %v2406 = vunpack.c.l.bf16 %v2369
          %v2407 = vunpack.c.h.bf16 %v2368
          %v2408 = vunpack.c.h.bf16 %v2369
          %v2409 = vunpack.c.l.bf16 %v2370
          %v2410 = vunpack.c.l.bf16 %v2371
          %v2411 = vunpack.c.h.bf16 %v2370
          %v2412 = vunpack.c.h.bf16 %v2371
          %v2413 = vunpack.c.l.bf16 %v2372
          %v2414 = vunpack.c.l.bf16 %v2373
          %v2415 = vunpack.c.h.bf16 %v2372
          %v2416 = vunpack.c.h.bf16 %v2373
          %v2417 = vunpack.c.l.bf16 %v2374
          %v2418 = vunpack.c.l.bf16 %v2375
          %v2419 = vunpack.c.h.bf16 %v2374
          %v2420 = vunpack.c.h.bf16 %v2375
          %v2421 = vunpack.c.l.bf16 %v2376
          %v2422 = vunpack.c.l.bf16 %v2377
          %v2423 = vunpack.c.h.bf16 %v2376
          %v2424 = vunpack.c.h.bf16 %v2377
          %v2425 = vunpack.c.l.bf16 %v2378
          %v2426 = vunpack.c.l.bf16 %v2379
          %v2427 = vunpack.c.h.bf16 %v2378
          %v2428 = vunpack.c.h.bf16 %v2379
          %v2429 = vunpack.c.l.bf16 %v2380
          %v2430 = vunpack.c.l.bf16 %v2381
          %v2431 = vunpack.c.h.bf16 %v2380
          %v2432 = vunpack.c.h.bf16 %v2381
          %v2433 = vunpack.c.l.bf16 %v2382
          %v2434 = vunpack.c.l.bf16 %v2383
          %v2435 = vunpack.c.h.bf16 %v2382
          %v2436 = vunpack.c.h.bf16 %v2383
          %v2437 = vunpack.c.l.bf16 %v2384
          %v2438 = vunpack.c.l.bf16 %v2385
          %v2439 = vunpack.c.h.bf16 %v2384
          %v2440 = vunpack.c.h.bf16 %v2385
          %v2441 = vunpack.c.l.bf16 %v2386
          %v2442 = vunpack.c.l.bf16 %v2387
          %v2443 = vunpack.c.h.bf16 %v2386
          %v2444 = vunpack.c.h.bf16 %v2387
          %v2445 = vunpack.c.l.bf16 %v2388
          %v2446 = vunpack.c.l.bf16 %v2389
          %v2447 = vunpack.c.h.bf16 %v2388
          %v2448 = vunpack.c.h.bf16 %v2389
          %v2449 = vunpack.c.l.bf16 %v2390
          %v2450 = vunpack.c.l.bf16 %v2391
          %v2451 = vunpack.c.h.bf16 %v2390
          %v2452 = vunpack.c.h.bf16 %v2391
          %v2453 = vunpack.c.l.bf16 %v2392
          %v2454 = vunpack.c.l.bf16 %v2393
          %v2455 = vunpack.c.h.bf16 %v2392
          %v2456 = vunpack.c.h.bf16 %v2393
          %v2457 = vunpack.c.l.bf16 %v2394
          %v2458 = vunpack.c.l.bf16 %v2395
          %v2459 = vunpack.c.h.bf16 %v2394
          %v2460 = vunpack.c.h.bf16 %v2395
          %v2462 = vlaneseq
          %v2463 = vshrl.u32 %v2462, 7
          %v2464 = vsub.s32 0, %v2463
          %v2465 = vrot.slane %v2396, %v2464
          %v2466 = vlaneseq
          %v2467 = vshrl.u32 %v2466, 7
          %v2468 = vsub.s32 1, %v2467
          %v2469 = vrot.slane %v2396, %v2468
          %v2472 = vsub.f32 %v2397, %v2465
          %v2473 = vsub.f32 %v2398, %v2469
          %v2474 = vsub.f32 %v2399, %v2465
          %v2475 = vsub.f32 %v2400, %v2469
          %v2476 = vsub.f32 %v2401, %v2465
          %v2477 = vsub.f32 %v2402, %v2469
          %v2478 = vsub.f32 %v2403, %v2465
          %v2479 = vsub.f32 %v2404, %v2469
          %v2480 = vsub.f32 %v2405, %v2465
          %v2481 = vsub.f32 %v2406, %v2469
          %v2482 = vsub.f32 %v2407, %v2465
          %v2483 = vsub.f32 %v2408, %v2469
          %v2484 = vsub.f32 %v2409, %v2465
          %v2485 = vsub.f32 %v2410, %v2469
          %v2486 = vsub.f32 %v2411, %v2465
          %v2487 = vsub.f32 %v2412, %v2469
          %v2488 = vsub.f32 %v2413, %v2465
          %v2489 = vsub.f32 %v2414, %v2469
          %v2490 = vsub.f32 %v2415, %v2465
          %v2491 = vsub.f32 %v2416, %v2469
          %v2492 = vsub.f32 %v2417, %v2465
          %v2493 = vsub.f32 %v2418, %v2469
          %v2494 = vsub.f32 %v2419, %v2465
          %v2495 = vsub.f32 %v2420, %v2469
          %v2496 = vsub.f32 %v2421, %v2465
          %v2497 = vsub.f32 %v2422, %v2469
          %v2498 = vsub.f32 %v2423, %v2465
          %v2499 = vsub.f32 %v2424, %v2469
          %v2500 = vsub.f32 %v2425, %v2465
          %v2501 = vsub.f32 %v2426, %v2469
          %v2502 = vsub.f32 %v2427, %v2465
          %v2503 = vsub.f32 %v2428, %v2469
          %v2504 = vsub.f32 %v2429, %v2465
          %v2505 = vsub.f32 %v2430, %v2469
          %v2506 = vsub.f32 %v2431, %v2465
          %v2507 = vsub.f32 %v2432, %v2469
          %v2508 = vsub.f32 %v2433, %v2465
          %v2509 = vsub.f32 %v2434, %v2469
          %v2510 = vsub.f32 %v2435, %v2465
          %v2511 = vsub.f32 %v2436, %v2469
          %v2512 = vsub.f32 %v2437, %v2465
          %v2513 = vsub.f32 %v2438, %v2469
          %v2514 = vsub.f32 %v2439, %v2465
          %v2515 = vsub.f32 %v2440, %v2469
          %v2516 = vsub.f32 %v2441, %v2465
          %v2517 = vsub.f32 %v2442, %v2469
          %v2518 = vsub.f32 %v2443, %v2465
          %v2519 = vsub.f32 %v2444, %v2469
          %v2520 = vsub.f32 %v2445, %v2465
          %v2521 = vsub.f32 %v2446, %v2469
          %v2522 = vsub.f32 %v2447, %v2465
          %v2523 = vsub.f32 %v2448, %v2469
          %v2524 = vsub.f32 %v2449, %v2465
          %v2525 = vsub.f32 %v2450, %v2469
          %v2526 = vsub.f32 %v2451, %v2465
          %v2527 = vsub.f32 %v2452, %v2469
          %v2528 = vsub.f32 %v2453, %v2465
          %v2529 = vsub.f32 %v2454, %v2469
          %v2530 = vsub.f32 %v2455, %v2465
          %v2531 = vsub.f32 %v2456, %v2469
          %v2532 = vsub.f32 %v2457, %v2465
          %v2533 = vsub.f32 %v2458, %v2469
          %v2534 = vsub.f32 %v2459, %v2465
          %v2535 = vsub.f32 %v2460, %v2469
          %s2536 = scalar_lea.vmem [#allocation6], 1
          %v2537 = vld [vmem:[%s2536] ss:$2 sm:$0x3]
          %v2539 = vlaneseq
          %v2540 = vshrl.u32 %v2539, 7
          %v2541 = vsub.s32 0, %v2540
          %v2542 = vrot.slane %v2537, %v2541
          %v2543 = vlaneseq
          %v2544 = vshrl.u32 %v2543, 7
          %v2545 = vsub.s32 1, %v2544
          %v2546 = vrot.slane %v2537, %v2545
          %v2549 = vmul.f32 %v2472, %v2542
          %v2550 = vmul.f32 %v2473, %v2546
          %v2551 = vmul.f32 %v2474, %v2542
          %v2552 = vmul.f32 %v2475, %v2546
          %v2553 = vmul.f32 %v2476, %v2542
          %v2554 = vmul.f32 %v2477, %v2546
          %v2555 = vmul.f32 %v2478, %v2542
          %v2556 = vmul.f32 %v2479, %v2546
          %v2557 = vmul.f32 %v2480, %v2542
          %v2558 = vmul.f32 %v2481, %v2546
          %v2559 = vmul.f32 %v2482, %v2542
          %v2560 = vmul.f32 %v2483, %v2546
          %v2561 = vmul.f32 %v2484, %v2542
          %v2562 = vmul.f32 %v2485, %v2546
          %v2563 = vmul.f32 %v2486, %v2542
          %v2564 = vmul.f32 %v2487, %v2546
          %v2565 = vmul.f32 %v2488, %v2542
          %v2566 = vmul.f32 %v2489, %v2546
          %v2567 = vmul.f32 %v2490, %v2542
          %v2568 = vmul.f32 %v2491, %v2546
          %v2569 = vmul.f32 %v2492, %v2542
          %v2570 = vmul.f32 %v2493, %v2546
          %v2571 = vmul.f32 %v2494, %v2542
          %v2572 = vmul.f32 %v2495, %v2546
          %v2573 = vmul.f32 %v2496, %v2542
          %v2574 = vmul.f32 %v2497, %v2546
          %v2575 = vmul.f32 %v2498, %v2542
          %v2576 = vmul.f32 %v2499, %v2546
          %v2577 = vmul.f32 %v2500, %v2542
          %v2578 = vmul.f32 %v2501, %v2546
          %v2579 = vmul.f32 %v2502, %v2542
          %v2580 = vmul.f32 %v2503, %v2546
          %v2581 = vmul.f32 %v2504, %v2542
          %v2582 = vmul.f32 %v2505, %v2546
          %v2583 = vmul.f32 %v2506, %v2542
          %v2584 = vmul.f32 %v2507, %v2546
          %v2585 = vmul.f32 %v2508, %v2542
          %v2586 = vmul.f32 %v2509, %v2546
          %v2587 = vmul.f32 %v2510, %v2542
          %v2588 = vmul.f32 %v2511, %v2546
          %v2589 = vmul.f32 %v2512, %v2542
          %v2590 = vmul.f32 %v2513, %v2546
          %v2591 = vmul.f32 %v2514, %v2542
          %v2592 = vmul.f32 %v2515, %v2546
          %v2593 = vmul.f32 %v2516, %v2542
          %v2594 = vmul.f32 %v2517, %v2546
          %v2595 = vmul.f32 %v2518, %v2542
          %v2596 = vmul.f32 %v2519, %v2546
          %v2597 = vmul.f32 %v2520, %v2542
          %v2598 = vmul.f32 %v2521, %v2546
          %v2599 = vmul.f32 %v2522, %v2542
          %v2600 = vmul.f32 %v2523, %v2546
          %v2601 = vmul.f32 %v2524, %v2542
          %v2602 = vmul.f32 %v2525, %v2546
          %v2603 = vmul.f32 %v2526, %v2542
          %v2604 = vmul.f32 %v2527, %v2546
          %v2605 = vmul.f32 %v2528, %v2542
          %v2606 = vmul.f32 %v2529, %v2546
          %v2607 = vmul.f32 %v2530, %v2542
          %v2608 = vmul.f32 %v2531, %v2546
          %v2609 = vmul.f32 %v2532, %v2542
          %v2610 = vmul.f32 %v2533, %v2546
          %v2611 = vmul.f32 %v2534, %v2542
          %v2612 = vmul.f32 %v2535, %v2546
          %v2613 = vpack.c.bf16 %v2551, %v2549
          %v2614 = vpack.c.bf16 %v2552, %v2550
          %v2615 = vpack.c.bf16 %v2555, %v2553
          %v2616 = vpack.c.bf16 %v2556, %v2554
          %v2617 = vpack.c.bf16 %v2559, %v2557
          %v2618 = vpack.c.bf16 %v2560, %v2558
          %v2619 = vpack.c.bf16 %v2563, %v2561
          %v2620 = vpack.c.bf16 %v2564, %v2562
          %v2621 = vpack.c.bf16 %v2567, %v2565
          %v2622 = vpack.c.bf16 %v2568, %v2566
          %v2623 = vpack.c.bf16 %v2571, %v2569
          %v2624 = vpack.c.bf16 %v2572, %v2570
          %v2625 = vpack.c.bf16 %v2575, %v2573
          %v2626 = vpack.c.bf16 %v2576, %v2574
          %v2627 = vpack.c.bf16 %v2579, %v2577
          %v2628 = vpack.c.bf16 %v2580, %v2578
          %v2629 = vpack.c.bf16 %v2583, %v2581
          %v2630 = vpack.c.bf16 %v2584, %v2582
          %v2631 = vpack.c.bf16 %v2587, %v2585
          %v2632 = vpack.c.bf16 %v2588, %v2586
          %v2633 = vpack.c.bf16 %v2591, %v2589
          %v2634 = vpack.c.bf16 %v2592, %v2590
          %v2635 = vpack.c.bf16 %v2595, %v2593
          %v2636 = vpack.c.bf16 %v2596, %v2594
          %v2637 = vpack.c.bf16 %v2599, %v2597
          %v2638 = vpack.c.bf16 %v2600, %v2598
          %v2639 = vpack.c.bf16 %v2603, %v2601
          %v2640 = vpack.c.bf16 %v2604, %v2602
          %v2641 = vpack.c.bf16 %v2607, %v2605
          %v2642 = vpack.c.bf16 %v2608, %v2606
          %v2643 = vpack.c.bf16 %v2611, %v2609
          %v2644 = vpack.c.bf16 %v2612, %v2610
          %v2645 = vld [vmem:[#allocation15] sm:$0xf]
          %v2646 = vld [vmem:[#allocation15 + $0x4] sm:$0xf]
          %v2647 = vld [vmem:[#allocation15 + $0x8] sm:$0xf]
          %v2648 = vld [vmem:[#allocation15 + $0xc] sm:$0xf]
          %v2649 = vld [vmem:[#allocation15 + $0x10] sm:$0xf]
          %v2650 = vld [vmem:[#allocation15 + $0x14] sm:$0xf]
          %v2651 = vld [vmem:[#allocation15 + $0x18] sm:$0xf]
          %v2652 = vld [vmem:[#allocation15 + $0x1c] sm:$0xf]
          %v2653 = vld [vmem:[#allocation15 + $0x20] sm:$0xf]
          %v2654 = vld [vmem:[#allocation15 + $0x24] sm:$0xf]
          %v2655 = vld [vmem:[#allocation15 + $0x28] sm:$0xf]
          %v2656 = vld [vmem:[#allocation15 + $0x2c] sm:$0xf]
          %v2657 = vld [vmem:[#allocation15 + $0x30] sm:$0xf]
          %v2658 = vld [vmem:[#allocation15 + $0x34] sm:$0xf]
          %v2659 = vld [vmem:[#allocation15 + $0x38] sm:$0xf]
          %v2660 = vld [vmem:[#allocation15 + $0x3c] sm:$0xf]
          %v2661 = vld [vmem:[#allocation15 + $0x40] sm:$0xf]
          %v2662 = vld [vmem:[#allocation15 + $0x44] sm:$0xf]
          %v2663 = vld [vmem:[#allocation15 + $0x48] sm:$0xf]
          %v2664 = vld [vmem:[#allocation15 + $0x4c] sm:$0xf]
          %v2665 = vld [vmem:[#allocation15 + $0x50] sm:$0xf]
          %v2666 = vld [vmem:[#allocation15 + $0x54] sm:$0xf]
          %v2667 = vld [vmem:[#allocation15 + $0x58] sm:$0xf]
          %v2668 = vld [vmem:[#allocation15 + $0x5c] sm:$0xf]
          %v2669 = vld [vmem:[#allocation15 + $0x60] sm:$0xf]
          %v2670 = vld [vmem:[#allocation15 + $0x64] sm:$0xf]
          %v2671 = vld [vmem:[#allocation15 + $0x68] sm:$0xf]
          %v2672 = vld [vmem:[#allocation15 + $0x6c] sm:$0xf]
          %v2673 = vld [vmem:[#allocation15 + $0x70] sm:$0xf]
          %v2674 = vld [vmem:[#allocation15 + $0x74] sm:$0xf]
          %v2675 = vld [vmem:[#allocation15 + $0x78] sm:$0xf]
          %v2676 = vld [vmem:[#allocation15 + $0x7c] sm:$0xf]
          %v2677 = vld [vmem:[%s5] sm:$0x1]
          %v2679 = vlaneseq
          %v2680 = vshrl.u32 %v2679, 7
          %v2681 = vsub.s32 0, %v2680
          %v2682 = vrot.slane %v2677, %v2681
          %v2716 = vunpack.c.l.b16 %v2645
          %v2717 = vunpack.c.l.b16 %v2646
          %v2718 = vunpack.c.l.b16 %v2647
          %v2719 = vunpack.c.l.b16 %v2648
          %v2720 = vunpack.c.l.b16 %v2649
          %v2721 = vunpack.c.l.b16 %v2650
          %v2722 = vunpack.c.l.b16 %v2651
          %v2723 = vunpack.c.l.b16 %v2652
          %v2724 = vunpack.c.l.b16 %v2653
          %v2725 = vunpack.c.l.b16 %v2654
          %v2726 = vunpack.c.l.b16 %v2655
          %v2727 = vunpack.c.l.b16 %v2656
          %v2728 = vunpack.c.l.b16 %v2657
          %v2729 = vunpack.c.l.b16 %v2658
          %v2730 = vunpack.c.l.b16 %v2659
          %v2731 = vunpack.c.l.b16 %v2660
          %v2732 = vunpack.c.l.b16 %v2661
          %v2733 = vunpack.c.l.b16 %v2662
          %v2734 = vunpack.c.l.b16 %v2663
          %v2735 = vunpack.c.l.b16 %v2664
          %v2736 = vunpack.c.l.b16 %v2665
          %v2737 = vunpack.c.l.b16 %v2666
          %v2738 = vunpack.c.l.b16 %v2667
          %v2739 = vunpack.c.l.b16 %v2668
          %v2740 = vunpack.c.l.b16 %v2669
          %v2741 = vunpack.c.l.b16 %v2670
          %v2742 = vunpack.c.l.b16 %v2671
          %v2743 = vunpack.c.l.b16 %v2672
          %v2744 = vunpack.c.l.b16 %v2673
          %v2745 = vunpack.c.l.b16 %v2674
          %v2746 = vunpack.c.l.b16 %v2675
          %v2747 = vunpack.c.l.b16 %v2676
          %v2748 = vpack.c.b16 %v2717, %v2716
          %v2749 = vpack.c.b16 %v2719, %v2718
          %v2750 = vpack.c.b16 %v2721, %v2720
          %v2751 = vpack.c.b16 %v2723, %v2722
          %v2752 = vpack.c.b16 %v2725, %v2724
          %v2753 = vpack.c.b16 %v2727, %v2726
          %v2754 = vpack.c.b16 %v2729, %v2728
          %v2755 = vpack.c.b16 %v2731, %v2730
          %v2756 = vpack.c.b16 %v2733, %v2732
          %v2757 = vpack.c.b16 %v2735, %v2734
          %v2758 = vpack.c.b16 %v2737, %v2736
          %v2759 = vpack.c.b16 %v2739, %v2738
          %v2760 = vpack.c.b16 %v2741, %v2740
          %v2761 = vpack.c.b16 %v2743, %v2742
          %v2762 = vpack.c.b16 %v2745, %v2744
          %v2763 = vpack.c.b16 %v2747, %v2746
          %2780 = vmatprep.subr.bf16.mxu0 0
          %2781 = vmatpush1.bf16.msra.mxu0 %v2748
          %2782 = vmatprep.subr.bf16.mxu0 0
          %2783 = vmatpush1.bf16.msra.mxu0 %v2749
          %2784 = vmatprep.subr.bf16.mxu0 0
          %2785 = vmatpush1.bf16.msra.mxu0 %v2750
          %2786 = vmatprep.subr.bf16.mxu0 0
          %2787 = vmatpush1.bf16.msra.mxu0 %v2751
          %2788 = vmatprep.subr.bf16.mxu0 0
          %2789 = vmatpush1.bf16.msra.mxu0 %v2752
          %2790 = vmatprep.subr.bf16.mxu0 0
          %2791 = vmatpush1.bf16.msra.mxu0 %v2753
          %2792 = vmatprep.subr.bf16.mxu0 0
          %2793 = vmatpush1.bf16.msra.mxu0 %v2754
          %2794 = vmatprep.subr.bf16.mxu0 0
          %2795 = vmatpush1.bf16.msra.mxu0 %v2755
          %2796 = vmatprep.subr.bf16.mxu0 0
          %2797 = vmatpush1.bf16.msra.mxu0 %v2756
          %2798 = vmatprep.subr.bf16.mxu0 0
          %2799 = vmatpush1.bf16.msra.mxu0 %v2757
          %2800 = vmatprep.subr.bf16.mxu0 0
          %2801 = vmatpush1.bf16.msra.mxu0 %v2758
          %2802 = vmatprep.subr.bf16.mxu0 0
          %2803 = vmatpush1.bf16.msra.mxu0 %v2759
          %2804 = vmatprep.subr.bf16.mxu0 0
          %2805 = vmatpush1.bf16.msra.mxu0 %v2760
          %2806 = vmatprep.subr.bf16.mxu0 0
          %2807 = vmatpush1.bf16.msra.mxu0 %v2761
          %2808 = vmatprep.subr.bf16.mxu0 0
          %2809 = vmatpush1.bf16.msra.mxu0 %v2762
          %2810 = vmatprep.subr.bf16.mxu0 0
          %2811 = vmatpush1.bf16.msra.mxu0 %v2763
          %2812 = vmatprep.mubr.bf16.mxu0 %v2614
          %2813 = vmatmul.mubr.bf16.gmra.mrb[0].mxu0 %v2613
          %v2814 = vpop.f32.mrb[0].mxu0
          %v2815 = vadd.f32 %v2682, %v2814
          %v2816 = vpop.f32.mrb[0].mxu0
          %v2817 = vpop.f32.mrb[0].mxu0
          %v2818 = vadd.f32 %v2682, %v2817
          %v2819 = vpop.f32.mrb[0].mxu0
          %2820 = vmatprep.mubr.bf16.mxu0 %v2616
          %2821 = vmatmul.mubr.bf16.gmra.mrb[0].mxu0 %v2615
          %v2822 = vpop.f32.mrb[0].mxu0
          %v2823 = vadd.f32 %v2682, %v2822
          %v2824 = vpop.f32.mrb[0].mxu0
          %v2825 = vpop.f32.mrb[0].mxu0
          %v2826 = vadd.f32 %v2682, %v2825
          %v2827 = vpop.f32.mrb[0].mxu0
          %2828 = vmatprep.mubr.bf16.mxu0 %v2618
          %2829 = vmatmul.mubr.bf16.gmra.mrb[0].mxu0 %v2617
          %v2830 = vpop.f32.mrb[0].mxu0
          %v2831 = vadd.f32 %v2682, %v2830
          %v2832 = vpop.f32.mrb[0].mxu0
          %v2833 = vpop.f32.mrb[0].mxu0
          %v2834 = vadd.f32 %v2682, %v2833
          %v2835 = vpop.f32.mrb[0].mxu0
          %2836 = vmatprep.mubr.bf16.mxu0 %v2620
          %2837 = vmatmul.mubr.bf16.gmra.mrb[0].mxu0 %v2619
          %v2838 = vpop.f32.mrb[0].mxu0
          %v2839 = vadd.f32 %v2682, %v2838
          %v2840 = vpop.f32.mrb[0].mxu0
          %v2841 = vpop.f32.mrb[0].mxu0
          %v2842 = vadd.f32 %v2682, %v2841
          %v2843 = vpop.f32.mrb[0].mxu0
          %2844 = vmatprep.mubr.bf16.mxu0 %v2622
          %2845 = vmatmul.mubr.bf16.gmra.mrb[0].mxu0 %v2621
          %v2846 = vpop.f32.mrb[0].mxu0
          %v2847 = vadd.f32 %v2682, %v2846
          %v2848 = vpop.f32.mrb[0].mxu0
          %v2849 = vpop.f32.mrb[0].mxu0
          %v2850 = vadd.f32 %v2682, %v2849
          %v2851 = vpop.f32.mrb[0].mxu0
          %2852 = vmatprep.mubr.bf16.mxu0 %v2624
          %2853 = vmatmul.mubr.bf16.gmra.mrb[0].mxu0 %v2623
          %v2854 = vpop.f32.mrb[0].mxu0
          %v2855 = vadd.f32 %v2682, %v2854
          %v2856 = vpop.f32.mrb[0].mxu0
          %v2857 = vpop.f32.mrb[0].mxu0
          %v2858 = vadd.f32 %v2682, %v2857
          %v2859 = vpop.f32.mrb[0].mxu0
          %2860 = vmatprep.mubr.bf16.mxu0 %v2626
          %2861 = vmatmul.mubr.bf16.gmra.mrb[0].mxu0 %v2625
          %v2862 = vpop.f32.mrb[0].mxu0
          %v2863 = vadd.f32 %v2682, %v2862
          %v2864 = vpop.f32.mrb[0].mxu0
          %v2865 = vpop.f32.mrb[0].mxu0
          %v2866 = vadd.f32 %v2682, %v2865
          %v2867 = vpop.f32.mrb[0].mxu0
          %2868 = vmatprep.mubr.bf16.mxu0 %v2628
          %2869 = vmatmul.mubr.bf16.gmra.mrb[0].mxu0 %v2627
          %v2870 = vpop.f32.mrb[0].mxu0
          %v2871 = vadd.f32 %v2682, %v2870
          %v2872 = vpop.f32.mrb[0].mxu0
          %v2873 = vpop.f32.mrb[0].mxu0
          %v2874 = vadd.f32 %v2682, %v2873
          %v2875 = vpop.f32.mrb[0].mxu0
          %2876 = vmatprep.mubr.bf16.mxu0 %v2630
          %2877 = vmatmul.mubr.bf16.gmra.mrb[0].mxu0 %v2629
          %v2878 = vpop.f32.mrb[0].mxu0
          %v2879 = vadd.f32 %v2682, %v2878
          %v2880 = vpop.f32.mrb[0].mxu0
          %v2881 = vpop.f32.mrb[0].mxu0
          %v2882 = vadd.f32 %v2682, %v2881
          %v2883 = vpop.f32.mrb[0].mxu0
          %2884 = vmatprep.mubr.bf16.mxu0 %v2632
          %2885 = vmatmul.mubr.bf16.gmra.mrb[0].mxu0 %v2631
          %v2886 = vpop.f32.mrb[0].mxu0
          %v2887 = vadd.f32 %v2682, %v2886
          %v2888 = vpop.f32.mrb[0].mxu0
          %v2889 = vpop.f32.mrb[0].mxu0
          %v2890 = vadd.f32 %v2682, %v2889
          %v2891 = vpop.f32.mrb[0].mxu0
          %2892 = vmatprep.mubr.bf16.mxu0 %v2634
          %2893 = vmatmul.mubr.bf16.gmra.mrb[0].mxu0 %v2633
          %v2894 = vpop.f32.mrb[0].mxu0
          %v2895 = vadd.f32 %v2682, %v2894
          %v2896 = vpop.f32.mrb[0].mxu0
          %v2897 = vpop.f32.mrb[0].mxu0
          %v2898 = vadd.f32 %v2682, %v2897
          %v2899 = vpop.f32.mrb[0].mxu0
          %2900 = vmatprep.mubr.bf16.mxu0 %v2636
          %2901 = vmatmul.mubr.bf16.gmra.mrb[0].mxu0 %v2635
          %v2902 = vpop.f32.mrb[0].mxu0
          %v2903 = vadd.f32 %v2682, %v2902
          %v2904 = vpop.f32.mrb[0].mxu0
          %v2905 = vpop.f32.mrb[0].mxu0
          %v2906 = vadd.f32 %v2682, %v2905
          %v2907 = vpop.f32.mrb[0].mxu0
          %2908 = vmatprep.mubr.bf16.mxu0 %v2638
          %2909 = vmatmul.mubr.bf16.gmra.mrb[0].mxu0 %v2637
          %v2910 = vpop.f32.mrb[0].mxu0
          %v2911 = vadd.f32 %v2682, %v2910
          %v2912 = vpop.f32.mrb[0].mxu0
          %v2913 = vpop.f32.mrb[0].mxu0
          %v2914 = vadd.f32 %v2682, %v2913
          %v2915 = vpop.f32.mrb[0].mxu0
          %2916 = vmatprep.mubr.bf16.mxu0 %v2640
          %2917 = vmatmul.mubr.bf16.gmra.mrb[0].mxu0 %v2639
          %v2918 = vpop.f32.mrb[0].mxu0
          %v2919 = vadd.f32 %v2682, %v2918
          %v2920 = vpop.f32.mrb[0].mxu0
          %v2921 = vpop.f32.mrb[0].mxu0
          %v2922 = vadd.f32 %v2682, %v2921
          %v2923 = vpop.f32.mrb[0].mxu0
          %2924 = vmatprep.mubr.bf16.mxu0 %v2642
          %2925 = vmatmul.mubr.bf16.gmra.mrb[0].mxu0 %v2641
          %v2926 = vpop.f32.mrb[0].mxu0
          %v2927 = vadd.f32 %v2682, %v2926
          %v2928 = vpop.f32.mrb[0].mxu0
          %v2929 = vpop.f32.mrb[0].mxu0
          %v2930 = vadd.f32 %v2682, %v2929
          %v2931 = vpop.f32.mrb[0].mxu0
          %2932 = vmatprep.mubr.bf16.mxu0 %v2644
          %2933 = vmatmul.mubr.bf16.gmra.mrb[0].mxu0 %v2643
          %v2934 = vpop.f32.mrb[0].mxu0
          %v2935 = vadd.f32 %v2682, %v2934
          %v2936 = vpop.f32.mrb[0].mxu0
          %v2937 = vpop.f32.mrb[0].mxu0
          %v2938 = vadd.f32 %v2682, %v2937
          %v2939 = vpop.f32.mrb[0].mxu0
          %2940 = vdwg.mxu0
          %v2941 = vmul.f32 %v2815, 0.01
          %v2942 = vmul.f32 %v2818, 0.01
          %v2943 = vmul.f32 %v2823, 0.01
          %v2944 = vmul.f32 %v2826, 0.01
          %v2945 = vmul.f32 %v2831, 0.01
          %v2946 = vmul.f32 %v2834, 0.01
          %v2947 = vmul.f32 %v2839, 0.01
          %v2948 = vmul.f32 %v2842, 0.01
          %v2949 = vmul.f32 %v2847, 0.01
          %v2950 = vmul.f32 %v2850, 0.01
          %v2951 = vmul.f32 %v2855, 0.01
          %v2952 = vmul.f32 %v2858, 0.01
          %v2953 = vmul.f32 %v2863, 0.01
          %v2954 = vmul.f32 %v2866, 0.01
          %v2955 = vmul.f32 %v2871, 0.01
          %v2956 = vmul.f32 %v2874, 0.01
          %v2957 = vmul.f32 %v2879, 0.01
          %v2958 = vmul.f32 %v2882, 0.01
          %v2959 = vmul.f32 %v2887, 0.01
          %v2960 = vmul.f32 %v2890, 0.01
          %v2961 = vmul.f32 %v2895, 0.01
          %v2962 = vmul.f32 %v2898, 0.01
          %v2963 = vmul.f32 %v2903, 0.01
          %v2964 = vmul.f32 %v2906, 0.01
          %v2965 = vmul.f32 %v2911, 0.01
          %v2966 = vmul.f32 %v2914, 0.01
          %v2967 = vmul.f32 %v2919, 0.01
          %v2968 = vmul.f32 %v2922, 0.01
          %v2969 = vmul.f32 %v2927, 0.01
          %v2970 = vmul.f32 %v2930, 0.01
          %v2971 = vmul.f32 %v2935, 0.01
          %v2972 = vmul.f32 %v2938, 0.01
          %v2973 = vmax.f32 %v2815, %v2941
          %v2974 = vmax.f32 %v2818, %v2942
          %v2975 = vmax.f32 %v2823, %v2943
          %v2976 = vmax.f32 %v2826, %v2944
          %v2977 = vmax.f32 %v2831, %v2945
          %v2978 = vmax.f32 %v2834, %v2946
          %v2979 = vmax.f32 %v2839, %v2947
          %v2980 = vmax.f32 %v2842, %v2948
          %v2981 = vmax.f32 %v2847, %v2949
          %v2982 = vmax.f32 %v2850, %v2950
          %v2983 = vmax.f32 %v2855, %v2951
          %v2984 = vmax.f32 %v2858, %v2952
          %v2985 = vmax.f32 %v2863, %v2953
          %v2986 = vmax.f32 %v2866, %v2954
          %v2987 = vmax.f32 %v2871, %v2955
          %v2988 = vmax.f32 %v2874, %v2956
          %v2989 = vmax.f32 %v2879, %v2957
          %v2990 = vmax.f32 %v2882, %v2958
          %v2991 = vmax.f32 %v2887, %v2959
          %v2992 = vmax.f32 %v2890, %v2960
          %v2993 = vmax.f32 %v2895, %v2961
          %v2994 = vmax.f32 %v2898, %v2962
          %v2995 = vmax.f32 %v2903, %v2963
          %v2996 = vmax.f32 %v2906, %v2964
          %v2997 = vmax.f32 %v2911, %v2965
          %v2998 = vmax.f32 %v2914, %v2966
          %v2999 = vmax.f32 %v2919, %v2967
          %v3000 = vmax.f32 %v2922, %v2968
          %v3001 = vmax.f32 %v2927, %v2969
          %v3002 = vmax.f32 %v2930, %v2970
          %v3003 = vmax.f32 %v2935, %v2971
          %v3004 = vmax.f32 %v2938, %v2972
          // Predicated region
          $region101: #{tpu_custom_call.1} parent=95 // pred_check
            %p3005 = pneg %p2341
          $region102: #{tpu_custom_call.1} parent=95 // pred_check_branch
            %3007 = sbr.rel (%p3005) target = $region104
          $region103: #{tpu_custom_call.1} parent=95 // pred_region
            %3008 = vst [vmem:[#allocation4] sm:$0x3] 0.0
          $region104: #{tpu_custom_call.1} parent=95 // pred_fallthru
            _
          %v3009 = vld [vmem:[#allocation4] sm:$0x1]
          %v3010 = vadd.f32 %v2973, %v2974
          %v3011 = vadd.f32 %v3010, %v2975
          %v3012 = vadd.f32 %v3011, %v2976
          %v3013 = vadd.f32 %v3012, %v2977
          %v3014 = vadd.f32 %v3013, %v2978
          %v3015 = vadd.f32 %v3014, %v2979
          %v3016 = vadd.f32 %v3015, %v2980
          %v3017 = vadd.f32 %v3016, %v2981
          %v3018 = vadd.f32 %v3017, %v2982
          %v3019 = vadd.f32 %v3018, %v2983
          %v3020 = vadd.f32 %v3019, %v2984
          %v3021 = vadd.f32 %v3020, %v2985
          %v3022 = vadd.f32 %v3021, %v2986
          %v3023 = vadd.f32 %v3022, %v2987
          %v3024 = vadd.f32 %v3023, %v2988
          %v3025 = vadd.f32 %v3024, %v2989
          %v3026 = vadd.f32 %v3025, %v2990
          %v3027 = vadd.f32 %v3026, %v2991
          %v3028 = vadd.f32 %v3027, %v2992
          %v3029 = vadd.f32 %v3028, %v2993
          %v3030 = vadd.f32 %v3029, %v2994
          %v3031 = vadd.f32 %v3030, %v2995
          %v3032 = vadd.f32 %v3031, %v2996
          %v3033 = vadd.f32 %v3032, %v2997
          %v3034 = vadd.f32 %v3033, %v2998
          %v3035 = vadd.f32 %v3034, %v2999
          %v3036 = vadd.f32 %v3035, %v3000
          %v3037 = vadd.f32 %v3036, %v3001
          %v3038 = vadd.f32 %v3037, %v3002
          %v3039 = vadd.f32 %v3038, %v3003
          %v3040 = vadd.f32 %v3039, %v3004
          %v3041 = vrot.slane %v3040, 4
          %v3042 = vadd.f32 %v3040, %v3041
          %v3043 = vrot.slane %v3042, 2
          %v3044 = vadd.f32 %v3042, %v3043
          %v3045 = vrot.slane %v3044, 1
          %v3046 = vadd.f32 %v3044, %v3045
          %v3047 = vadd.f32 %v3009, %v3046
          %3048 = vst [vmem:[#allocation4] sm:$0x1] %v3047
          %v3049 = vld [vmem:[#allocation4 + $0x1] sm:$0x1]
          %v3050 = vmul.f32 %v2973, %v2973
          %v3051 = vmul.f32 %v2974, %v2974
          %v3052 = vmul.f32 %v2975, %v2975
          %v3053 = vmul.f32 %v2976, %v2976
          %v3054 = vmul.f32 %v2977, %v2977
          %v3055 = vmul.f32 %v2978, %v2978
          %v3056 = vmul.f32 %v2979, %v2979
          %v3057 = vmul.f32 %v2980, %v2980
          %v3058 = vmul.f32 %v2981, %v2981
          %v3059 = vmul.f32 %v2982, %v2982
          %v3060 = vmul.f32 %v2983, %v2983
          %v3061 = vmul.f32 %v2984, %v2984
          %v3062 = vmul.f32 %v2985, %v2985
          %v3063 = vmul.f32 %v2986, %v2986
          %v3064 = vmul.f32 %v2987, %v2987
          %v3065 = vmul.f32 %v2988, %v2988
          %v3066 = vmul.f32 %v2989, %v2989
          %v3067 = vmul.f32 %v2990, %v2990
          %v3068 = vmul.f32 %v2991, %v2991
          %v3069 = vmul.f32 %v2992, %v2992
          %v3070 = vmul.f32 %v2993, %v2993
          %v3071 = vmul.f32 %v2994, %v2994
          %v3072 = vmul.f32 %v2995, %v2995
          %v3073 = vmul.f32 %v2996, %v2996
          %v3074 = vmul.f32 %v2997, %v2997
          %v3075 = vmul.f32 %v2998, %v2998
          %v3076 = vmul.f32 %v2999, %v2999
          %v3077 = vmul.f32 %v3000, %v3000
          %v3078 = vmul.f32 %v3001, %v3001
          %v3079 = vmul.f32 %v3002, %v3002
          %v3080 = vmul.f32 %v3003, %v3003
          %v3081 = vmul.f32 %v3004, %v3004
          %v3082 = vadd.f32 %v3050, %v3051
          %v3083 = vadd.f32 %v3082, %v3052
          %v3084 = vadd.f32 %v3083, %v3053
          %v3085 = vadd.f32 %v3084, %v3054
          %v3086 = vadd.f32 %v3085, %v3055
          %v3087 = vadd.f32 %v3086, %v3056
          %v3088 = vadd.f32 %v3087, %v3057
          %v3089 = vadd.f32 %v3088, %v3058
          %v3090 = vadd.f32 %v3089, %v3059
          %v3091 = vadd.f32 %v3090, %v3060
          %v3092 = vadd.f32 %v3091, %v3061
          %v3093 = vadd.f32 %v3092, %v3062
          %v3094 = vadd.f32 %v3093, %v3063
          %v3095 = vadd.f32 %v3094, %v3064
          %v3096 = vadd.f32 %v3095, %v3065
          %v3097 = vadd.f32 %v3096, %v3066
          %v3098 = vadd.f32 %v3097, %v3067
          %v3099 = vadd.f32 %v3098, %v3068
          %v3100 = vadd.f32 %v3099, %v3069
          %v3101 = vadd.f32 %v3100, %v3070
          %v3102 = vadd.f32 %v3101, %v3071
          %v3103 = vadd.f32 %v3102, %v3072
          %v3104 = vadd.f32 %v3103, %v3073
          %v3105 = vadd.f32 %v3104, %v3074
          %v3106 = vadd.f32 %v3105, %v3075
          %v3107 = vadd.f32 %v3106, %v3076
          %v3108 = vadd.f32 %v3107, %v3077
          %v3109 = vadd.f32 %v3108, %v3078
          %v3110 = vadd.f32 %v3109, %v3079
          %v3111 = vadd.f32 %v3110, %v3080
          %v3112 = vadd.f32 %v3111, %v3081
          %v3113 = vrot.slane %v3112, 4
          %v3114 = vadd.f32 %v3112, %v3113
          %v3115 = vrot.slane %v3114, 2
          %v3116 = vadd.f32 %v3114, %v3115
          %v3117 = vrot.slane %v3116, 1
          %v3118 = vadd.f32 %v3116, %v3117
          %v3119 = vadd.f32 %v3049, %v3118
          %3120 = vst [vmem:[#allocation4 + $0x1] sm:$0x1] %v3119
        $region96: #{tpu_custom_call.1} parent=59 // pred_fallthru
          _
        %p3121 = scmp.eq.s32.totalorder %s36, 2
        // Predicated region
        $region105: #{tpu_custom_call.1} parent=59 // pred_check
          %p3122 = pneg %p3121
        $region106: #{tpu_custom_call.1} parent=59 // pred_check_branch
          %3124 = sbr.rel (%p3122) target = $region108
        $region107: #{tpu_custom_call.1} parent=59 // pred_region
          %p3125 = scmp.eq.s32.totalorder %s37, 0
          // Predicated region
          $region109: #{tpu_custom_call.1} parent=107 // pred_check
            %p3126 = pneg %p3125
          $region110: #{tpu_custom_call.1} parent=107 // pred_check_branch
            %3128 = sbr.rel (%p3126) target = $region112
          $region111: #{tpu_custom_call.1} parent=107 // pred_region
            %v3129 = vld [vmem:[#allocation4] sm:$0x1]
            %v3130 = vmul.f32 %v3129, 0.001953125
            %v3131 = vld [vmem:[#allocation4 + $0x1] sm:$0x1]
            %v3132 = vmul.f32 %v3131, 0.001953125
            %v3133 = vmul.f32 %v3130, %v3130
            %v3134 = vsub.f32 %v3132, %v3133
            %3135 = vst [vmem:[#allocation7] sm:$0x1] %v3130
            %v3136 = vadd.f32 %v3134, 1e-05
            %v3137 = vrsqrt.pop %v3136
            %3138 = vst [vmem:[#allocation7 + $0x1] sm:$0x1] %v3137
          $region112: #{tpu_custom_call.1} parent=107 // pred_fallthru
            _
          %s3139 = smul.u32 %s37, 32
          %s3140 = smul.addr %s3139, 8
          %s3141 = scalar_lea.vmem [#allocation2], %s3140
          %v3142 = vld [vmem:[%s3141] sm:$0xff]
          %v3143 = vld [vmem:[%s3141 + $0x8] sm:$0xff]
          %v3144 = vld [vmem:[%s3141 + $0x10] sm:$0xff]
          %v3145 = vld [vmem:[%s3141 + $0x18] sm:$0xff]
          %v3146 = vld [vmem:[%s3141 + $0x20] sm:$0xff]
          %v3147 = vld [vmem:[%s3141 + $0x28] sm:$0xff]
          %v3148 = vld [vmem:[%s3141 + $0x30] sm:$0xff]
          %v3149 = vld [vmem:[%s3141 + $0x38] sm:$0xff]
          %v3150 = vld [vmem:[%s3141 + $0x40] sm:$0xff]
          %v3151 = vld [vmem:[%s3141 + $0x48] sm:$0xff]
          %v3152 = vld [vmem:[%s3141 + $0x50] sm:$0xff]
          %v3153 = vld [vmem:[%s3141 + $0x58] sm:$0xff]
          %v3154 = vld [vmem:[%s3141 + $0x60] sm:$0xff]
          %v3155 = vld [vmem:[%s3141 + $0x68] sm:$0xff]
          %v3156 = vld [vmem:[%s3141 + $0x70] sm:$0xff]
          %v3157 = vld [vmem:[%s3141 + $0x78] sm:$0xff]
          %v3158 = vld [vmem:[%s3141 + $0x80] sm:$0xff]
          %v3159 = vld [vmem:[%s3141 + $0x88] sm:$0xff]
          %v3160 = vld [vmem:[%s3141 + $0x90] sm:$0xff]
          %v3161 = vld [vmem:[%s3141 + $0x98] sm:$0xff]
          %v3162 = vld [vmem:[%s3141 + $0xa0] sm:$0xff]
          %v3163 = vld [vmem:[%s3141 + $0xa8] sm:$0xff]
          %v3164 = vld [vmem:[%s3141 + $0xb0] sm:$0xff]
          %v3165 = vld [vmem:[%s3141 + $0xb8] sm:$0xff]
          %v3166 = vld [vmem:[%s3141 + $0xc0] sm:$0xff]
          %v3167 = vld [vmem:[%s3141 + $0xc8] sm:$0xff]
          %v3168 = vld [vmem:[%s3141 + $0xd0] sm:$0xff]
          %v3169 = vld [vmem:[%s3141 + $0xd8] sm:$0xff]
          %v3170 = vld [vmem:[%s3141 + $0xe0] sm:$0xff]
          %v3171 = vld [vmem:[%s3141 + $0xe8] sm:$0xff]
          %v3172 = vld [vmem:[%s3141 + $0xf0] sm:$0xff]
          %v3173 = vld [vmem:[%s3141 + $0xf8] sm:$0xff]
          %v3174 = vld [vmem:[#allocation6] ss:$2 sm:$0x3]
          %v3175 = vunpack.c.l.bf16 %v3142
          %v3176 = vunpack.c.l.bf16 %v3143
          %v3177 = vunpack.c.h.bf16 %v3142
          %v3178 = vunpack.c.h.bf16 %v3143
          %v3179 = vunpack.c.l.bf16 %v3144
          %v3180 = vunpack.c.l.bf16 %v3145
          %v3181 = vunpack.c.h.bf16 %v3144
          %v3182 = vunpack.c.h.bf16 %v3145
          %v3183 = vunpack.c.l.bf16 %v3146
          %v3184 = vunpack.c.l.bf16 %v3147
          %v3185 = vunpack.c.h.bf16 %v3146
          %v3186 = vunpack.c.h.bf16 %v3147
          %v3187 = vunpack.c.l.bf16 %v3148
          %v3188 = vunpack.c.l.bf16 %v3149
          %v3189 = vunpack.c.h.bf16 %v3148
          %v3190 = vunpack.c.h.bf16 %v3149
          %v3191 = vunpack.c.l.bf16 %v3150
          %v3192 = vunpack.c.l.bf16 %v3151
          %v3193 = vunpack.c.h.bf16 %v3150
          %v3194 = vunpack.c.h.bf16 %v3151
          %v3195 = vunpack.c.l.bf16 %v3152
          %v3196 = vunpack.c.l.bf16 %v3153
          %v3197 = vunpack.c.h.bf16 %v3152
          %v3198 = vunpack.c.h.bf16 %v3153
          %v3199 = vunpack.c.l.bf16 %v3154
          %v3200 = vunpack.c.l.bf16 %v3155
          %v3201 = vunpack.c.h.bf16 %v3154
          %v3202 = vunpack.c.h.bf16 %v3155
          %v3203 = vunpack.c.l.bf16 %v3156
          %v3204 = vunpack.c.l.bf16 %v3157
          %v3205 = vunpack.c.h.bf16 %v3156
          %v3206 = vunpack.c.h.bf16 %v3157
          %v3207 = vunpack.c.l.bf16 %v3158
          %v3208 = vunpack.c.l.bf16 %v3159
          %v3209 = vunpack.c.h.bf16 %v3158
          %v3210 = vunpack.c.h.bf16 %v3159
          %v3211 = vunpack.c.l.bf16 %v3160
          %v3212 = vunpack.c.l.bf16 %v3161
          %v3213 = vunpack.c.h.bf16 %v3160
          %v3214 = vunpack.c.h.bf16 %v3161
          %v3215 = vunpack.c.l.bf16 %v3162
          %v3216 = vunpack.c.l.bf16 %v3163
          %v3217 = vunpack.c.h.bf16 %v3162
          %v3218 = vunpack.c.h.bf16 %v3163
          %v3219 = vunpack.c.l.bf16 %v3164
          %v3220 = vunpack.c.l.bf16 %v3165
          %v3221 = vunpack.c.h.bf16 %v3164
          %v3222 = vunpack.c.h.bf16 %v3165
          %v3223 = vunpack.c.l.bf16 %v3166
          %v3224 = vunpack.c.l.bf16 %v3167
          %v3225 = vunpack.c.h.bf16 %v3166
          %v3226 = vunpack.c.h.bf16 %v3167
          %v3227 = vunpack.c.l.bf16 %v3168
          %v3228 = vunpack.c.l.bf16 %v3169
          %v3229 = vunpack.c.h.bf16 %v3168
          %v3230 = vunpack.c.h.bf16 %v3169
          %v3231 = vunpack.c.l.bf16 %v3170
          %v3232 = vunpack.c.l.bf16 %v3171
          %v3233 = vunpack.c.h.bf16 %v3170
          %v3234 = vunpack.c.h.bf16 %v3171
          %v3235 = vunpack.c.l.bf16 %v3172
          %v3236 = vunpack.c.l.bf16 %v3173
          %v3237 = vunpack.c.h.bf16 %v3172
          %v3238 = vunpack.c.h.bf16 %v3173
          %v3240 = vlaneseq
          %v3241 = vshrl.u32 %v3240, 7
          %v3242 = vsub.s32 0, %v3241
          %v3243 = vrot.slane %v3174, %v3242
          %v3244 = vlaneseq
          %v3245 = vshrl.u32 %v3244, 7
          %v3246 = vsub.s32 1, %v3245
          %v3247 = vrot.slane %v3174, %v3246
          %v3250 = vsub.f32 %v3175, %v3243
          %v3251 = vsub.f32 %v3176, %v3247
          %v3252 = vsub.f32 %v3177, %v3243
          %v3253 = vsub.f32 %v3178, %v3247
          %v3254 = vsub.f32 %v3179, %v3243
          %v3255 = vsub.f32 %v3180, %v3247
          %v3256 = vsub.f32 %v3181, %v3243
          %v3257 = vsub.f32 %v3182, %v3247
          %v3258 = vsub.f32 %v3183, %v3243
          %v3259 = vsub.f32 %v3184, %v3247
          %v3260 = vsub.f32 %v3185, %v3243
          %v3261 = vsub.f32 %v3186, %v3247
          %v3262 = vsub.f32 %v3187, %v3243
          %v3263 = vsub.f32 %v3188, %v3247
          %v3264 = vsub.f32 %v3189, %v3243
          %v3265 = vsub.f32 %v3190, %v3247
          %v3266 = vsub.f32 %v3191, %v3243
          %v3267 = vsub.f32 %v3192, %v3247
          %v3268 = vsub.f32 %v3193, %v3243
          %v3269 = vsub.f32 %v3194, %v3247
          %v3270 = vsub.f32 %v3195, %v3243
          %v3271 = vsub.f32 %v3196, %v3247
          %v3272 = vsub.f32 %v3197, %v3243
          %v3273 = vsub.f32 %v3198, %v3247
          %v3274 = vsub.f32 %v3199, %v3243
          %v3275 = vsub.f32 %v3200, %v3247
          %v3276 = vsub.f32 %v3201, %v3243
          %v3277 = vsub.f32 %v3202, %v3247
          %v3278 = vsub.f32 %v3203, %v3243
          %v3279 = vsub.f32 %v3204, %v3247
          %v3280 = vsub.f32 %v3205, %v3243
          %v3281 = vsub.f32 %v3206, %v3247
          %v3282 = vsub.f32 %v3207, %v3243
          %v3283 = vsub.f32 %v3208, %v3247
          %v3284 = vsub.f32 %v3209, %v3243
          %v3285 = vsub.f32 %v3210, %v3247
          %v3286 = vsub.f32 %v3211, %v3243
          %v3287 = vsub.f32 %v3212, %v3247
          %v3288 = vsub.f32 %v3213, %v3243
          %v3289 = vsub.f32 %v3214, %v3247
          %v3290 = vsub.f32 %v3215, %v3243
          %v3291 = vsub.f32 %v3216, %v3247
          %v3292 = vsub.f32 %v3217, %v3243
          %v3293 = vsub.f32 %v3218, %v3247
          %v3294 = vsub.f32 %v3219, %v3243
          %v3295 = vsub.f32 %v3220, %v3247
          %v3296 = vsub.f32 %v3221, %v3243
          %v3297 = vsub.f32 %v3222, %v3247
          %v3298 = vsub.f32 %v3223, %v3243
          %v3299 = vsub.f32 %v3224, %v3247
          %v3300 = vsub.f32 %v3225, %v3243
          %v3301 = vsub.f32 %v3226, %v3247
          %v3302 = vsub.f32 %v3227, %v3243
          %v3303 = vsub.f32 %v3228, %v3247
          %v3304 = vsub.f32 %v3229, %v3243
          %v3305 = vsub.f32 %v3230, %v3247
          %v3306 = vsub.f32 %v3231, %v3243
          %v3307 = vsub.f32 %v3232, %v3247
          %v3308 = vsub.f32 %v3233, %v3243
          %v3309 = vsub.f32 %v3234, %v3247
          %v3310 = vsub.f32 %v3235, %v3243
          %v3311 = vsub.f32 %v3236, %v3247
          %v3312 = vsub.f32 %v3237, %v3243
          %v3313 = vsub.f32 %v3238, %v3247
          %s3314 = scalar_lea.vmem [#allocation6], 1
          %v3315 = vld [vmem:[%s3314] ss:$2 sm:$0x3]
          %v3317 = vlaneseq
          %v3318 = vshrl.u32 %v3317, 7
          %v3319 = vsub.s32 0, %v3318
          %v3320 = vrot.slane %v3315, %v3319
          %v3321 = vlaneseq
          %v3322 = vshrl.u32 %v3321, 7
          %v3323 = vsub.s32 1, %v3322
          %v3324 = vrot.slane %v3315, %v3323
          %v3327 = vmul.f32 %v3250, %v3320
          %v3328 = vmul.f32 %v3251, %v3324
          %v3329 = vmul.f32 %v3252, %v3320
          %v3330 = vmul.f32 %v3253, %v3324
          %v3331 = vmul.f32 %v3254, %v3320
          %v3332 = vmul.f32 %v3255, %v3324
          %v3333 = vmul.f32 %v3256, %v3320
          %v3334 = vmul.f32 %v3257, %v3324
          %v3335 = vmul.f32 %v3258, %v3320
          %v3336 = vmul.f32 %v3259, %v3324
          %v3337 = vmul.f32 %v3260, %v3320
          %v3338 = vmul.f32 %v3261, %v3324
          %v3339 = vmul.f32 %v3262, %v3320
          %v3340 = vmul.f32 %v3263, %v3324
          %v3341 = vmul.f32 %v3264, %v3320
          %v3342 = vmul.f32 %v3265, %v3324
          %v3343 = vmul.f32 %v3266, %v3320
          %v3344 = vmul.f32 %v3267, %v3324
          %v3345 = vmul.f32 %v3268, %v3320
          %v3346 = vmul.f32 %v3269, %v3324
          %v3347 = vmul.f32 %v3270, %v3320
          %v3348 = vmul.f32 %v3271, %v3324
          %v3349 = vmul.f32 %v3272, %v3320
          %v3350 = vmul.f32 %v3273, %v3324
          %v3351 = vmul.f32 %v3274, %v3320
          %v3352 = vmul.f32 %v3275, %v3324
          %v3353 = vmul.f32 %v3276, %v3320
          %v3354 = vmul.f32 %v3277, %v3324
          %v3355 = vmul.f32 %v3278, %v3320
          %v3356 = vmul.f32 %v3279, %v3324
          %v3357 = vmul.f32 %v3280, %v3320
          %v3358 = vmul.f32 %v3281, %v3324
          %v3359 = vmul.f32 %v3282, %v3320
          %v3360 = vmul.f32 %v3283, %v3324
          %v3361 = vmul.f32 %v3284, %v3320
          %v3362 = vmul.f32 %v3285, %v3324
          %v3363 = vmul.f32 %v3286, %v3320
          %v3364 = vmul.f32 %v3287, %v3324
          %v3365 = vmul.f32 %v3288, %v3320
          %v3366 = vmul.f32 %v3289, %v3324
          %v3367 = vmul.f32 %v3290, %v3320
          %v3368 = vmul.f32 %v3291, %v3324
          %v3369 = vmul.f32 %v3292, %v3320
          %v3370 = vmul.f32 %v3293, %v3324
          %v3371 = vmul.f32 %v3294, %v3320
          %v3372 = vmul.f32 %v3295, %v3324
          %v3373 = vmul.f32 %v3296, %v3320
          %v3374 = vmul.f32 %v3297, %v3324
          %v3375 = vmul.f32 %v3298, %v3320
          %v3376 = vmul.f32 %v3299, %v3324
          %v3377 = vmul.f32 %v3300, %v3320
          %v3378 = vmul.f32 %v3301, %v3324
          %v3379 = vmul.f32 %v3302, %v3320
          %v3380 = vmul.f32 %v3303, %v3324
          %v3381 = vmul.f32 %v3304, %v3320
          %v3382 = vmul.f32 %v3305, %v3324
          %v3383 = vmul.f32 %v3306, %v3320
          %v3384 = vmul.f32 %v3307, %v3324
          %v3385 = vmul.f32 %v3308, %v3320
          %v3386 = vmul.f32 %v3309, %v3324
          %v3387 = vmul.f32 %v3310, %v3320
          %v3388 = vmul.f32 %v3311, %v3324
          %v3389 = vmul.f32 %v3312, %v3320
          %v3390 = vmul.f32 %v3313, %v3324
          %v3391 = vpack.c.bf16 %v3329, %v3327
          %v3392 = vpack.c.bf16 %v3330, %v3328
          %v3393 = vpack.c.bf16 %v3333, %v3331
          %v3394 = vpack.c.bf16 %v3334, %v3332
          %v3395 = vpack.c.bf16 %v3337, %v3335
          %v3396 = vpack.c.bf16 %v3338, %v3336
          %v3397 = vpack.c.bf16 %v3341, %v3339
          %v3398 = vpack.c.bf16 %v3342, %v3340
          %v3399 = vpack.c.bf16 %v3345, %v3343
          %v3400 = vpack.c.bf16 %v3346, %v3344
          %v3401 = vpack.c.bf16 %v3349, %v3347
          %v3402 = vpack.c.bf16 %v3350, %v3348
          %v3403 = vpack.c.bf16 %v3353, %v3351
          %v3404 = vpack.c.bf16 %v3354, %v3352
          %v3405 = vpack.c.bf16 %v3357, %v3355
          %v3406 = vpack.c.bf16 %v3358, %v3356
          %v3407 = vpack.c.bf16 %v3361, %v3359
          %v3408 = vpack.c.bf16 %v3362, %v3360
          %v3409 = vpack.c.bf16 %v3365, %v3363
          %v3410 = vpack.c.bf16 %v3366, %v3364
          %v3411 = vpack.c.bf16 %v3369, %v3367
          %v3412 = vpack.c.bf16 %v3370, %v3368
          %v3413 = vpack.c.bf16 %v3373, %v3371
          %v3414 = vpack.c.bf16 %v3374, %v3372
          %v3415 = vpack.c.bf16 %v3377, %v3375
          %v3416 = vpack.c.bf16 %v3378, %v3376
          %v3417 = vpack.c.bf16 %v3381, %v3379
          %v3418 = vpack.c.bf16 %v3382, %v3380
          %v3419 = vpack.c.bf16 %v3385, %v3383
          %v3420 = vpack.c.bf16 %v3386, %v3384
          %v3421 = vpack.c.bf16 %v3389, %v3387
          %v3422 = vpack.c.bf16 %v3390, %v3388
          %v3423 = vld [vmem:[#allocation15] sm:$0xf]
          %v3424 = vld [vmem:[#allocation15 + $0x4] sm:$0xf]
          %v3425 = vld [vmem:[#allocation15 + $0x8] sm:$0xf]
          %v3426 = vld [vmem:[#allocation15 + $0xc] sm:$0xf]
          %v3427 = vld [vmem:[#allocation15 + $0x10] sm:$0xf]
          %v3428 = vld [vmem:[#allocation15 + $0x14] sm:$0xf]
          %v3429 = vld [vmem:[#allocation15 + $0x18] sm:$0xf]
          %v3430 = vld [vmem:[#allocation15 + $0x1c] sm:$0xf]
          %v3431 = vld [vmem:[#allocation15 + $0x20] sm:$0xf]
          %v3432 = vld [vmem:[#allocation15 + $0x24] sm:$0xf]
          %v3433 = vld [vmem:[#allocation15 + $0x28] sm:$0xf]
          %v3434 = vld [vmem:[#allocation15 + $0x2c] sm:$0xf]
          %v3435 = vld [vmem:[#allocation15 + $0x30] sm:$0xf]
          %v3436 = vld [vmem:[#allocation15 + $0x34] sm:$0xf]
          %v3437 = vld [vmem:[#allocation15 + $0x38] sm:$0xf]
          %v3438 = vld [vmem:[#allocation15 + $0x3c] sm:$0xf]
          %v3439 = vld [vmem:[#allocation15 + $0x40] sm:$0xf]
          %v3440 = vld [vmem:[#allocation15 + $0x44] sm:$0xf]
          %v3441 = vld [vmem:[#allocation15 + $0x48] sm:$0xf]
          %v3442 = vld [vmem:[#allocation15 + $0x4c] sm:$0xf]
          %v3443 = vld [vmem:[#allocation15 + $0x50] sm:$0xf]
          %v3444 = vld [vmem:[#allocation15 + $0x54] sm:$0xf]
          %v3445 = vld [vmem:[#allocation15 + $0x58] sm:$0xf]
          %v3446 = vld [vmem:[#allocation15 + $0x5c] sm:$0xf]
          %v3447 = vld [vmem:[#allocation15 + $0x60] sm:$0xf]
          %v3448 = vld [vmem:[#allocation15 + $0x64] sm:$0xf]
          %v3449 = vld [vmem:[#allocation15 + $0x68] sm:$0xf]
          %v3450 = vld [vmem:[#allocation15 + $0x6c] sm:$0xf]
          %v3451 = vld [vmem:[#allocation15 + $0x70] sm:$0xf]
          %v3452 = vld [vmem:[#allocation15 + $0x74] sm:$0xf]
          %v3453 = vld [vmem:[#allocation15 + $0x78] sm:$0xf]
          %v3454 = vld [vmem:[#allocation15 + $0x7c] sm:$0xf]
          %v3455 = vld [vmem:[%s5] sm:$0x1]
          %v3457 = vlaneseq
          %v3458 = vshrl.u32 %v3457, 7
          %v3459 = vsub.s32 0, %v3458
          %v3460 = vrot.slane %v3455, %v3459
          %v3494 = vunpack.c.l.b16 %v3423
          %v3495 = vunpack.c.l.b16 %v3424
          %v3496 = vunpack.c.l.b16 %v3425
          %v3497 = vunpack.c.l.b16 %v3426
          %v3498 = vunpack.c.l.b16 %v3427
          %v3499 = vunpack.c.l.b16 %v3428
          %v3500 = vunpack.c.l.b16 %v3429
          %v3501 = vunpack.c.l.b16 %v3430
          %v3502 = vunpack.c.l.b16 %v3431
          %v3503 = vunpack.c.l.b16 %v3432
          %v3504 = vunpack.c.l.b16 %v3433
          %v3505 = vunpack.c.l.b16 %v3434
          %v3506 = vunpack.c.l.b16 %v3435
          %v3507 = vunpack.c.l.b16 %v3436
          %v3508 = vunpack.c.l.b16 %v3437
          %v3509 = vunpack.c.l.b16 %v3438
          %v3510 = vunpack.c.l.b16 %v3439
          %v3511 = vunpack.c.l.b16 %v3440
          %v3512 = vunpack.c.l.b16 %v3441
          %v3513 = vunpack.c.l.b16 %v3442
          %v3514 = vunpack.c.l.b16 %v3443
          %v3515 = vunpack.c.l.b16 %v3444
          %v3516 = vunpack.c.l.b16 %v3445
          %v3517 = vunpack.c.l.b16 %v3446
          %v3518 = vunpack.c.l.b16 %v3447
          %v3519 = vunpack.c.l.b16 %v3448
          %v3520 = vunpack.c.l.b16 %v3449
          %v3521 = vunpack.c.l.b16 %v3450
          %v3522 = vunpack.c.l.b16 %v3451
          %v3523 = vunpack.c.l.b16 %v3452
          %v3524 = vunpack.c.l.b16 %v3453
          %v3525 = vunpack.c.l.b16 %v3454
          %v3526 = vpack.c.b16 %v3495, %v3494
          %v3527 = vpack.c.b16 %v3497, %v3496
          %v3528 = vpack.c.b16 %v3499, %v3498
          %v3529 = vpack.c.b16 %v3501, %v3500
          %v3530 = vpack.c.b16 %v3503, %v3502
          %v3531 = vpack.c.b16 %v3505, %v3504
          %v3532 = vpack.c.b16 %v3507, %v3506
          %v3533 = vpack.c.b16 %v3509, %v3508
          %v3534 = vpack.c.b16 %v3511, %v3510
          %v3535 = vpack.c.b16 %v3513, %v3512
          %v3536 = vpack.c.b16 %v3515, %v3514
          %v3537 = vpack.c.b16 %v3517, %v3516
          %v3538 = vpack.c.b16 %v3519, %v3518
          %v3539 = vpack.c.b16 %v3521, %v3520
          %v3540 = vpack.c.b16 %v3523, %v3522
          %v3541 = vpack.c.b16 %v3525, %v3524
          %3558 = vmatprep.subr.bf16.mxu0 0
          %3559 = vmatpush1.bf16.msra.mxu0 %v3526
          %3560 = vmatprep.subr.bf16.mxu0 0
          %3561 = vmatpush1.bf16.msra.mxu0 %v3527
          %3562 = vmatprep.subr.bf16.mxu0 0
          %3563 = vmatpush1.bf16.msra.mxu0 %v3528
          %3564 = vmatprep.subr.bf16.mxu0 0
          %3565 = vmatpush1.bf16.msra.mxu0 %v3529
          %3566 = vmatprep.subr.bf16.mxu0 0
          %3567 = vmatpush1.bf16.msra.mxu0 %v3530
          %3568 = vmatprep.subr.bf16.mxu0 0
          %3569 = vmatpush1.bf16.msra.mxu0 %v3531
          %3570 = vmatprep.subr.bf16.mxu0 0
          %3571 = vmatpush1.bf16.msra.mxu0 %v3532
          %3572 = vmatprep.subr.bf16.mxu0 0
          %3573 = vmatpush1.bf16.msra.mxu0 %v3533
          %3574 = vmatprep.subr.bf16.mxu0 0
          %3575 = vmatpush1.bf16.msra.mxu0 %v3534
          %3576 = vmatprep.subr.bf16.mxu0 0
          %3577 = vmatpush1.bf16.msra.mxu0 %v3535
          %3578 = vmatprep.subr.bf16.mxu0 0
          %3579 = vmatpush1.bf16.msra.mxu0 %v3536
          %3580 = vmatprep.subr.bf16.mxu0 0
          %3581 = vmatpush1.bf16.msra.mxu0 %v3537
          %3582 = vmatprep.subr.bf16.mxu0 0
          %3583 = vmatpush1.bf16.msra.mxu0 %v3538
          %3584 = vmatprep.subr.bf16.mxu0 0
          %3585 = vmatpush1.bf16.msra.mxu0 %v3539
          %3586 = vmatprep.subr.bf16.mxu0 0
          %3587 = vmatpush1.bf16.msra.mxu0 %v3540
          %3588 = vmatprep.subr.bf16.mxu0 0
          %3589 = vmatpush1.bf16.msra.mxu0 %v3541
          %3590 = vmatprep.mubr.bf16.mxu0 %v3392
          %3591 = vmatmul.mubr.bf16.gmra.mrb[0].mxu0 %v3391
          %v3592 = vpop.f32.mrb[0].mxu0
          %v3593 = vadd.f32 %v3460, %v3592
          %v3594 = vpop.f32.mrb[0].mxu0
          %v3595 = vpop.f32.mrb[0].mxu0
          %v3596 = vadd.f32 %v3460, %v3595
          %v3597 = vpop.f32.mrb[0].mxu0
          %3598 = vmatprep.mubr.bf16.mxu0 %v3394
          %3599 = vmatmul.mubr.bf16.gmra.mrb[0].mxu0 %v3393
          %v3600 = vpop.f32.mrb[0].mxu0
          %v3601 = vadd.f32 %v3460, %v3600
          %v3602 = vpop.f32.mrb[0].mxu0
          %v3603 = vpop.f32.mrb[0].mxu0
          %v3604 = vadd.f32 %v3460, %v3603
          %v3605 = vpop.f32.mrb[0].mxu0
          %3606 = vmatprep.mubr.bf16.mxu0 %v3396
          %3607 = vmatmul.mubr.bf16.gmra.mrb[0].mxu0 %v3395
          %v3608 = vpop.f32.mrb[0].mxu0
          %v3609 = vadd.f32 %v3460, %v3608
          %v3610 = vpop.f32.mrb[0].mxu0
          %v3611 = vpop.f32.mrb[0].mxu0
          %v3612 = vadd.f32 %v3460, %v3611
          %v3613 = vpop.f32.mrb[0].mxu0
          %3614 = vmatprep.mubr.bf16.mxu0 %v3398
          %3615 = vmatmul.mubr.bf16.gmra.mrb[0].mxu0 %v3397
          %v3616 = vpop.f32.mrb[0].mxu0
          %v3617 = vadd.f32 %v3460, %v3616
          %v3618 = vpop.f32.mrb[0].mxu0
          %v3619 = vpop.f32.mrb[0].mxu0
          %v3620 = vadd.f32 %v3460, %v3619
          %v3621 = vpop.f32.mrb[0].mxu0
          %3622 = vmatprep.mubr.bf16.mxu0 %v3400
          %3623 = vmatmul.mubr.bf16.gmra.mrb[0].mxu0 %v3399
          %v3624 = vpop.f32.mrb[0].mxu0
          %v3625 = vadd.f32 %v3460, %v3624
          %v3626 = vpop.f32.mrb[0].mxu0
          %v3627 = vpop.f32.mrb[0].mxu0
          %v3628 = vadd.f32 %v3460, %v3627
          %v3629 = vpop.f32.mrb[0].mxu0
          %3630 = vmatprep.mubr.bf16.mxu0 %v3402
          %3631 = vmatmul.mubr.bf16.gmra.mrb[0].mxu0 %v3401
          %v3632 = vpop.f32.mrb[0].mxu0
          %v3633 = vadd.f32 %v3460, %v3632
          %v3634 = vpop.f32.mrb[0].mxu0
          %v3635 = vpop.f32.mrb[0].mxu0
          %v3636 = vadd.f32 %v3460, %v3635
          %v3637 = vpop.f32.mrb[0].mxu0
          %3638 = vmatprep.mubr.bf16.mxu0 %v3404
          %3639 = vmatmul.mubr.bf16.gmra.mrb[0].mxu0 %v3403
          %v3640 = vpop.f32.mrb[0].mxu0
          %v3641 = vadd.f32 %v3460, %v3640
          %v3642 = vpop.f32.mrb[0].mxu0
          %v3643 = vpop.f32.mrb[0].mxu0
          %v3644 = vadd.f32 %v3460, %v3643
          %v3645 = vpop.f32.mrb[0].mxu0
          %3646 = vmatprep.mubr.bf16.mxu0 %v3406
          %3647 = vmatmul.mubr.bf16.gmra.mrb[0].mxu0 %v3405
          %v3648 = vpop.f32.mrb[0].mxu0
          %v3649 = vadd.f32 %v3460, %v3648
          %v3650 = vpop.f32.mrb[0].mxu0
          %v3651 = vpop.f32.mrb[0].mxu0
          %v3652 = vadd.f32 %v3460, %v3651
          %v3653 = vpop.f32.mrb[0].mxu0
          %3654 = vmatprep.mubr.bf16.mxu0 %v3408
          %3655 = vmatmul.mubr.bf16.gmra.mrb[0].mxu0 %v3407
          %v3656 = vpop.f32.mrb[0].mxu0
          %v3657 = vadd.f32 %v3460, %v3656
          %v3658 = vpop.f32.mrb[0].mxu0
          %v3659 = vpop.f32.mrb[0].mxu0
          %v3660 = vadd.f32 %v3460, %v3659
          %v3661 = vpop.f32.mrb[0].mxu0
          %3662 = vmatprep.mubr.bf16.mxu0 %v3410
          %3663 = vmatmul.mubr.bf16.gmra.mrb[0].mxu0 %v3409
          %v3664 = vpop.f32.mrb[0].mxu0
          %v3665 = vadd.f32 %v3460, %v3664
          %v3666 = vpop.f32.mrb[0].mxu0
          %v3667 = vpop.f32.mrb[0].mxu0
          %v3668 = vadd.f32 %v3460, %v3667
          %v3669 = vpop.f32.mrb[0].mxu0
          %3670 = vmatprep.mubr.bf16.mxu0 %v3412
          %3671 = vmatmul.mubr.bf16.gmra.mrb[0].mxu0 %v3411
          %v3672 = vpop.f32.mrb[0].mxu0
          %v3673 = vadd.f32 %v3460, %v3672
          %v3674 = vpop.f32.mrb[0].mxu0
          %v3675 = vpop.f32.mrb[0].mxu0
          %v3676 = vadd.f32 %v3460, %v3675
          %v3677 = vpop.f32.mrb[0].mxu0
          %3678 = vmatprep.mubr.bf16.mxu0 %v3414
          %3679 = vmatmul.mubr.bf16.gmra.mrb[0].mxu0 %v3413
          %v3680 = vpop.f32.mrb[0].mxu0
          %v3681 = vadd.f32 %v3460, %v3680
          %v3682 = vpop.f32.mrb[0].mxu0
          %v3683 = vpop.f32.mrb[0].mxu0
          %v3684 = vadd.f32 %v3460, %v3683
          %v3685 = vpop.f32.mrb[0].mxu0
          %3686 = vmatprep.mubr.bf16.mxu0 %v3416
          %3687 = vmatmul.mubr.bf16.gmra.mrb[0].mxu0 %v3415
          %v3688 = vpop.f32.mrb[0].mxu0
          %v3689 = vadd.f32 %v3460, %v3688
          %v3690 = vpop.f32.mrb[0].mxu0
          %v3691 = vpop.f32.mrb[0].mxu0
          %v3692 = vadd.f32 %v3460, %v3691
          %v3693 = vpop.f32.mrb[0].mxu0
          %3694 = vmatprep.mubr.bf16.mxu0 %v3418
          %3695 = vmatmul.mubr.bf16.gmra.mrb[0].mxu0 %v3417
          %v3696 = vpop.f32.mrb[0].mxu0
          %v3697 = vadd.f32 %v3460, %v3696
          %v3698 = vpop.f32.mrb[0].mxu0
          %v3699 = vpop.f32.mrb[0].mxu0
          %v3700 = vadd.f32 %v3460, %v3699
          %v3701 = vpop.f32.mrb[0].mxu0
          %3702 = vmatprep.mubr.bf16.mxu0 %v3420
          %3703 = vmatmul.mubr.bf16.gmra.mrb[0].mxu0 %v3419
          %v3704 = vpop.f32.mrb[0].mxu0
          %v3705 = vadd.f32 %v3460, %v3704
          %v3706 = vpop.f32.mrb[0].mxu0
          %v3707 = vpop.f32.mrb[0].mxu0
          %v3708 = vadd.f32 %v3460, %v3707
          %v3709 = vpop.f32.mrb[0].mxu0
          %3710 = vmatprep.mubr.bf16.mxu0 %v3422
          %3711 = vmatmul.mubr.bf16.gmra.mrb[0].mxu0 %v3421
          %v3712 = vpop.f32.mrb[0].mxu0
          %v3713 = vadd.f32 %v3460, %v3712
          %v3714 = vpop.f32.mrb[0].mxu0
          %v3715 = vpop.f32.mrb[0].mxu0
          %v3716 = vadd.f32 %v3460, %v3715
          %v3717 = vpop.f32.mrb[0].mxu0
          %3718 = vdwg.mxu0
          %v3719 = vmul.f32 %v3593, 0.01
          %v3720 = vmul.f32 %v3596, 0.01
          %v3721 = vmul.f32 %v3601, 0.01
          %v3722 = vmul.f32 %v3604, 0.01
          %v3723 = vmul.f32 %v3609, 0.01
          %v3724 = vmul.f32 %v3612, 0.01
          %v3725 = vmul.f32 %v3617, 0.01
          %v3726 = vmul.f32 %v3620, 0.01
          %v3727 = vmul.f32 %v3625, 0.01
          %v3728 = vmul.f32 %v3628, 0.01
          %v3729 = vmul.f32 %v3633, 0.01
          %v3730 = vmul.f32 %v3636, 0.01
          %v3731 = vmul.f32 %v3641, 0.01
          %v3732 = vmul.f32 %v3644, 0.01
          %v3733 = vmul.f32 %v3649, 0.01
          %v3734 = vmul.f32 %v3652, 0.01
          %v3735 = vmul.f32 %v3657, 0.01
          %v3736 = vmul.f32 %v3660, 0.01
          %v3737 = vmul.f32 %v3665, 0.01
          %v3738 = vmul.f32 %v3668, 0.01
          %v3739 = vmul.f32 %v3673, 0.01
          %v3740 = vmul.f32 %v3676, 0.01
          %v3741 = vmul.f32 %v3681, 0.01
          %v3742 = vmul.f32 %v3684, 0.01
          %v3743 = vmul.f32 %v3689, 0.01
          %v3744 = vmul.f32 %v3692, 0.01
          %v3745 = vmul.f32 %v3697, 0.01
          %v3746 = vmul.f32 %v3700, 0.01
          %v3747 = vmul.f32 %v3705, 0.01
          %v3748 = vmul.f32 %v3708, 0.01
          %v3749 = vmul.f32 %v3713, 0.01
          %v3750 = vmul.f32 %v3716, 0.01
          %v3751 = vmax.f32 %v3593, %v3719
          %v3752 = vmax.f32 %v3596, %v3720
          %v3753 = vmax.f32 %v3601, %v3721
          %v3754 = vmax.f32 %v3604, %v3722
          %v3755 = vmax.f32 %v3609, %v3723
          %v3756 = vmax.f32 %v3612, %v3724
          %v3757 = vmax.f32 %v3617, %v3725
          %v3758 = vmax.f32 %v3620, %v3726
          %v3759 = vmax.f32 %v3625, %v3727
          %v3760 = vmax.f32 %v3628, %v3728
          %v3761 = vmax.f32 %v3633, %v3729
          %v3762 = vmax.f32 %v3636, %v3730
          %v3763 = vmax.f32 %v3641, %v3731
          %v3764 = vmax.f32 %v3644, %v3732
          %v3765 = vmax.f32 %v3649, %v3733
          %v3766 = vmax.f32 %v3652, %v3734
          %v3767 = vmax.f32 %v3657, %v3735
          %v3768 = vmax.f32 %v3660, %v3736
          %v3769 = vmax.f32 %v3665, %v3737
          %v3770 = vmax.f32 %v3668, %v3738
          %v3771 = vmax.f32 %v3673, %v3739
          %v3772 = vmax.f32 %v3676, %v3740
          %v3773 = vmax.f32 %v3681, %v3741
          %v3774 = vmax.f32 %v3684, %v3742
          %v3775 = vmax.f32 %v3689, %v3743
          %v3776 = vmax.f32 %v3692, %v3744
          %v3777 = vmax.f32 %v3697, %v3745
          %v3778 = vmax.f32 %v3700, %v3746
          %v3779 = vmax.f32 %v3705, %v3747
          %v3780 = vmax.f32 %v3708, %v3748
          %v3781 = vmax.f32 %v3713, %v3749
          %v3782 = vmax.f32 %v3716, %v3750
          %v3783 = vld [vmem:[#allocation7] sm:$0x1]
          %v3784 = vlaneseq
          %v3785 = vshrl.u32 %v3784, 7
          %v3786 = vsub.s32 0, %v3785
          %v3787 = vrot.slane %v3783, %v3786
          %v3788 = vsub.f32 %v3751, %v3787
          %v3789 = vsub.f32 %v3752, %v3787
          %v3790 = vsub.f32 %v3753, %v3787
          %v3791 = vsub.f32 %v3754, %v3787
          %v3792 = vsub.f32 %v3755, %v3787
          %v3793 = vsub.f32 %v3756, %v3787
          %v3794 = vsub.f32 %v3757, %v3787
          %v3795 = vsub.f32 %v3758, %v3787
          %v3796 = vsub.f32 %v3759, %v3787
          %v3797 = vsub.f32 %v3760, %v3787
          %v3798 = vsub.f32 %v3761, %v3787
          %v3799 = vsub.f32 %v3762, %v3787
          %v3800 = vsub.f32 %v3763, %v3787
          %v3801 = vsub.f32 %v3764, %v3787
          %v3802 = vsub.f32 %v3765, %v3787
          %v3803 = vsub.f32 %v3766, %v3787
          %v3804 = vsub.f32 %v3767, %v3787
          %v3805 = vsub.f32 %v3768, %v3787
          %v3806 = vsub.f32 %v3769, %v3787
          %v3807 = vsub.f32 %v3770, %v3787
          %v3808 = vsub.f32 %v3771, %v3787
          %v3809 = vsub.f32 %v3772, %v3787
          %v3810 = vsub.f32 %v3773, %v3787
          %v3811 = vsub.f32 %v3774, %v3787
          %v3812 = vsub.f32 %v3775, %v3787
          %v3813 = vsub.f32 %v3776, %v3787
          %v3814 = vsub.f32 %v3777, %v3787
          %v3815 = vsub.f32 %v3778, %v3787
          %v3816 = vsub.f32 %v3779, %v3787
          %v3817 = vsub.f32 %v3780, %v3787
          %v3818 = vsub.f32 %v3781, %v3787
          %v3819 = vsub.f32 %v3782, %v3787
          %v3820 = vld [vmem:[#allocation7 + $0x1] sm:$0x1]
          %v3821 = vlaneseq
          %v3822 = vshrl.u32 %v3821, 7
          %v3823 = vsub.s32 0, %v3822
          %v3824 = vrot.slane %v3820, %v3823
          %v3825 = vmul.f32 %v3788, %v3824
          %v3826 = vmul.f32 %v3789, %v3824
          %v3827 = vmul.f32 %v3790, %v3824
          %v3828 = vmul.f32 %v3791, %v3824
          %v3829 = vmul.f32 %v3792, %v3824
          %v3830 = vmul.f32 %v3793, %v3824
          %v3831 = vmul.f32 %v3794, %v3824
          %v3832 = vmul.f32 %v3795, %v3824
          %v3833 = vmul.f32 %v3796, %v3824
          %v3834 = vmul.f32 %v3797, %v3824
          %v3835 = vmul.f32 %v3798, %v3824
          %v3836 = vmul.f32 %v3799, %v3824
          %v3837 = vmul.f32 %v3800, %v3824
          %v3838 = vmul.f32 %v3801, %v3824
          %v3839 = vmul.f32 %v3802, %v3824
          %v3840 = vmul.f32 %v3803, %v3824
          %v3841 = vmul.f32 %v3804, %v3824
          %v3842 = vmul.f32 %v3805, %v3824
          %v3843 = vmul.f32 %v3806, %v3824
          %v3844 = vmul.f32 %v3807, %v3824
          %v3845 = vmul.f32 %v3808, %v3824
          %v3846 = vmul.f32 %v3809, %v3824
          %v3847 = vmul.f32 %v3810, %v3824
          %v3848 = vmul.f32 %v3811, %v3824
          %v3849 = vmul.f32 %v3812, %v3824
          %v3850 = vmul.f32 %v3813, %v3824
          %v3851 = vmul.f32 %v3814, %v3824
          %v3852 = vmul.f32 %v3815, %v3824
          %v3853 = vmul.f32 %v3816, %v3824
          %v3854 = vmul.f32 %v3817, %v3824
          %v3855 = vmul.f32 %v3818, %v3824
          %v3856 = vmul.f32 %v3819, %v3824
          %v3857 = vpack.c.bf16 %v3826, %v3825
          %v3858 = vpack.c.bf16 %v3828, %v3827
          %v3859 = vpack.c.bf16 %v3830, %v3829
          %v3860 = vpack.c.bf16 %v3832, %v3831
          %v3861 = vpack.c.bf16 %v3834, %v3833
          %v3862 = vpack.c.bf16 %v3836, %v3835
          %v3863 = vpack.c.bf16 %v3838, %v3837
          %v3864 = vpack.c.bf16 %v3840, %v3839
          %v3865 = vpack.c.bf16 %v3842, %v3841
          %v3866 = vpack.c.bf16 %v3844, %v3843
          %v3867 = vpack.c.bf16 %v3846, %v3845
          %v3868 = vpack.c.bf16 %v3848, %v3847
          %v3869 = vpack.c.bf16 %v3850, %v3849
          %v3870 = vpack.c.bf16 %v3852, %v3851
          %v3871 = vpack.c.bf16 %v3854, %v3853
          %v3872 = vpack.c.bf16 %v3856, %v3855
          %v3873 = vld [vmem:[#allocation17] sm:$0xf]
          %v3874 = vld [vmem:[#allocation17 + $0x4] sm:$0xf]
          %v3875 = vld [vmem:[#allocation17 + $0x8] sm:$0xf]
          %v3876 = vld [vmem:[#allocation17 + $0xc] sm:$0xf]
          %v3877 = vld [vmem:[#allocation17 + $0x10] sm:$0xf]
          %v3878 = vld [vmem:[#allocation17 + $0x14] sm:$0xf]
          %v3879 = vld [vmem:[#allocation17 + $0x18] sm:$0xf]
          %v3880 = vld [vmem:[#allocation17 + $0x1c] sm:$0xf]
          %v3881 = vld [vmem:[#allocation17 + $0x20] sm:$0xf]
          %v3882 = vld [vmem:[#allocation17 + $0x24] sm:$0xf]
          %v3883 = vld [vmem:[#allocation17 + $0x28] sm:$0xf]
          %v3884 = vld [vmem:[#allocation17 + $0x2c] sm:$0xf]
          %v3885 = vld [vmem:[#allocation17 + $0x30] sm:$0xf]
          %v3886 = vld [vmem:[#allocation17 + $0x34] sm:$0xf]
          %v3887 = vld [vmem:[#allocation17 + $0x38] sm:$0xf]
          %v3888 = vld [vmem:[#allocation17 + $0x3c] sm:$0xf]
          %v3889 = vld [vmem:[%s7] sm:$0x1]
          %v3891 = vlaneseq
          %v3892 = vshrl.u32 %v3891, 7
          %v3893 = vsub.s32 0, %v3892
          %v3894 = vrot.slane %v3889, %v3893
          %v3912 = vunpack.c.l.b16 %v3873
          %v3913 = vunpack.c.l.b16 %v3874
          %v3914 = vunpack.c.l.b16 %v3875
          %v3915 = vunpack.c.l.b16 %v3876
          %v3916 = vunpack.c.l.b16 %v3877
          %v3917 = vunpack.c.l.b16 %v3878
          %v3918 = vunpack.c.l.b16 %v3879
          %v3919 = vunpack.c.l.b16 %v3880
          %v3920 = vunpack.c.l.b16 %v3881
          %v3921 = vunpack.c.l.b16 %v3882
          %v3922 = vunpack.c.l.b16 %v3883
          %v3923 = vunpack.c.l.b16 %v3884
          %v3924 = vunpack.c.l.b16 %v3885
          %v3925 = vunpack.c.l.b16 %v3886
          %v3926 = vunpack.c.l.b16 %v3887
          %v3927 = vunpack.c.l.b16 %v3888
          %v3928 = vpack.c.b16 %v3913, %v3912
          %v3929 = vpack.c.b16 %v3915, %v3914
          %v3930 = vpack.c.b16 %v3917, %v3916
          %v3931 = vpack.c.b16 %v3919, %v3918
          %v3932 = vpack.c.b16 %v3921, %v3920
          %v3933 = vpack.c.b16 %v3923, %v3922
          %v3934 = vpack.c.b16 %v3925, %v3924
          %v3935 = vpack.c.b16 %v3927, %v3926
          %3944 = vmatprep.subr.bf16.mxu0 0
          %3945 = vmatpush1.bf16.msra.mxu0 %v3928
          %3946 = vmatprep.subr.bf16.mxu0 0
          %3947 = vmatpush1.bf16.msra.mxu0 %v3929
          %3948 = vmatprep.subr.bf16.mxu0 0
          %3949 = vmatpush1.bf16.msra.mxu0 %v3930
          %3950 = vmatprep.subr.bf16.mxu0 0
          %3951 = vmatpush1.bf16.msra.mxu0 %v3931
          %3952 = vmatprep.subr.bf16.mxu0 0
          %3953 = vmatpush1.bf16.msra.mxu0 %v3932
          %3954 = vmatprep.subr.bf16.mxu0 0
          %3955 = vmatpush1.bf16.msra.mxu0 %v3933
          %3956 = vmatprep.subr.bf16.mxu0 0
          %3957 = vmatpush1.bf16.msra.mxu0 %v3934
          %3958 = vmatprep.subr.bf16.mxu0 0
          %3959 = vmatpush1.bf16.msra.mxu0 %v3935
          %3960 = vmatprep.subr.bf16.mxu0 0
          %3961 = vmatpush1.bf16.msra.mxu0 0
          %3962 = vmatprep.subr.bf16.mxu0 0
          %3963 = vmatpush1.bf16.msra.mxu0 0
          %3964 = vmatprep.subr.bf16.mxu0 0
          %3965 = vmatpush1.bf16.msra.mxu0 0
          %3966 = vmatprep.subr.bf16.mxu0 0
          %3967 = vmatpush1.bf16.msra.mxu0 0
          %3968 = vmatprep.subr.bf16.mxu0 0
          %3969 = vmatpush1.bf16.msra.mxu0 0
          %3970 = vmatprep.subr.bf16.mxu0 0
          %3971 = vmatpush1.bf16.msra.mxu0 0
          %3972 = vmatprep.subr.bf16.mxu0 0
          %3973 = vmatpush1.bf16.msra.mxu0 0
          %3974 = vmatprep.subr.bf16.mxu0 0
          %3975 = vmatpush1.bf16.msra.mxu0 0
          %3976 = vmatprep.mubr.bf16.mxu0 0
          %3977 = vmatmul.mubr.bf16.gmra.mrb[0].mxu0 %v3857
          %v3978 = vpop.f32.mrb[0].mxu0
          %v3979 = vadd.f32 %v3894, %v3978
          %v3980 = vpop.f32.mrb[0].mxu0
          %v3981 = vpop.f32.mrb[0].mxu0
          %v3982 = vadd.f32 %v3894, %v3981
          %v3983 = vpop.f32.mrb[0].mxu0
          %3984 = vmatprep.mubr.bf16.mxu0 0
          %3985 = vmatmul.mubr.bf16.gmra.mrb[0].mxu0 %v3858
          %v3986 = vpop.f32.mrb[0].mxu0
          %v3987 = vadd.f32 %v3894, %v3986
          %v3988 = vpop.f32.mrb[0].mxu0
          %v3989 = vpop.f32.mrb[0].mxu0
          %v3990 = vadd.f32 %v3894, %v3989
          %v3991 = vpop.f32.mrb[0].mxu0
          %3992 = vmatprep.mubr.bf16.mxu0 0
          %3993 = vmatmul.mubr.bf16.gmra.mrb[0].mxu0 %v3859
          %v3994 = vpop.f32.mrb[0].mxu0
          %v3995 = vadd.f32 %v3894, %v3994
          %v3996 = vpop.f32.mrb[0].mxu0
          %v3997 = vpop.f32.mrb[0].mxu0
          %v3998 = vadd.f32 %v3894, %v3997
          %v3999 = vpop.f32.mrb[0].mxu0
          %4000 = vmatprep.mubr.bf16.mxu0 0
          %4001 = vmatmul.mubr.bf16.gmra.mrb[0].mxu0 %v3860
          %v4002 = vpop.f32.mrb[0].mxu0
          %v4003 = vadd.f32 %v3894, %v4002
          %v4004 = vpop.f32.mrb[0].mxu0
          %v4005 = vpop.f32.mrb[0].mxu0
          %v4006 = vadd.f32 %v3894, %v4005
          %v4007 = vpop.f32.mrb[0].mxu0
          %4008 = vmatprep.mubr.bf16.mxu0 0
          %4009 = vmatmul.mubr.bf16.gmra.mrb[0].mxu0 %v3861
          %v4010 = vpop.f32.mrb[0].mxu0
          %v4011 = vadd.f32 %v3894, %v4010
          %v4012 = vpop.f32.mrb[0].mxu0
          %v4013 = vpop.f32.mrb[0].mxu0
          %v4014 = vadd.f32 %v3894, %v4013
          %v4015 = vpop.f32.mrb[0].mxu0
          %4016 = vmatprep.mubr.bf16.mxu0 0
          %4017 = vmatmul.mubr.bf16.gmra.mrb[0].mxu0 %v3862
          %v4018 = vpop.f32.mrb[0].mxu0
          %v4019 = vadd.f32 %v3894, %v4018
          %v4020 = vpop.f32.mrb[0].mxu0
          %v4021 = vpop.f32.mrb[0].mxu0
          %v4022 = vadd.f32 %v3894, %v4021
          %v4023 = vpop.f32.mrb[0].mxu0
          %4024 = vmatprep.mubr.bf16.mxu0 0
          %4025 = vmatmul.mubr.bf16.gmra.mrb[0].mxu0 %v3863
          %v4026 = vpop.f32.mrb[0].mxu0
          %v4027 = vadd.f32 %v3894, %v4026
          %v4028 = vpop.f32.mrb[0].mxu0
          %v4029 = vpop.f32.mrb[0].mxu0
          %v4030 = vadd.f32 %v3894, %v4029
          %v4031 = vpop.f32.mrb[0].mxu0
          %4032 = vmatprep.mubr.bf16.mxu0 0
          %4033 = vmatmul.mubr.bf16.gmra.mrb[0].mxu0 %v3864
          %v4034 = vpop.f32.mrb[0].mxu0
          %v4035 = vadd.f32 %v3894, %v4034
          %v4036 = vpop.f32.mrb[0].mxu0
          %v4037 = vpop.f32.mrb[0].mxu0
          %v4038 = vadd.f32 %v3894, %v4037
          %v4039 = vpop.f32.mrb[0].mxu0
          %4040 = vmatprep.mubr.bf16.mxu0 0
          %4041 = vmatmul.mubr.bf16.gmra.mrb[0].mxu0 %v3865
          %v4042 = vpop.f32.mrb[0].mxu0
          %v4043 = vadd.f32 %v3894, %v4042
          %v4044 = vpop.f32.mrb[0].mxu0
          %v4045 = vpop.f32.mrb[0].mxu0
          %v4046 = vadd.f32 %v3894, %v4045
          %v4047 = vpop.f32.mrb[0].mxu0
          %4048 = vmatprep.mubr.bf16.mxu0 0
          %4049 = vmatmul.mubr.bf16.gmra.mrb[0].mxu0 %v3866
          %v4050 = vpop.f32.mrb[0].mxu0
          %v4051 = vadd.f32 %v3894, %v4050
          %v4052 = vpop.f32.mrb[0].mxu0
          %v4053 = vpop.f32.mrb[0].mxu0
          %v4054 = vadd.f32 %v3894, %v4053
          %v4055 = vpop.f32.mrb[0].mxu0
          %4056 = vmatprep.mubr.bf16.mxu0 0
          %4057 = vmatmul.mubr.bf16.gmra.mrb[0].mxu0 %v3867
          %v4058 = vpop.f32.mrb[0].mxu0
          %v4059 = vadd.f32 %v3894, %v4058
          %v4060 = vpop.f32.mrb[0].mxu0
          %v4061 = vpop.f32.mrb[0].mxu0
          %v4062 = vadd.f32 %v3894, %v4061
          %v4063 = vpop.f32.mrb[0].mxu0
          %4064 = vmatprep.mubr.bf16.mxu0 0
          %4065 = vmatmul.mubr.bf16.gmra.mrb[0].mxu0 %v3868
          %v4066 = vpop.f32.mrb[0].mxu0
          %v4067 = vadd.f32 %v3894, %v4066
          %v4068 = vpop.f32.mrb[0].mxu0
          %v4069 = vpop.f32.mrb[0].mxu0
          %v4070 = vadd.f32 %v3894, %v4069
          %v4071 = vpop.f32.mrb[0].mxu0
          %4072 = vmatprep.mubr.bf16.mxu0 0
          %4073 = vmatmul.mubr.bf16.gmra.mrb[0].mxu0 %v3869
          %v4074 = vpop.f32.mrb[0].mxu0
          %v4075 = vadd.f32 %v3894, %v4074
          %v4076 = vpop.f32.mrb[0].mxu0
          %v4077 = vpop.f32.mrb[0].mxu0
          %v4078 = vadd.f32 %v3894, %v4077
          %v4079 = vpop.f32.mrb[0].mxu0
          %4080 = vmatprep.mubr.bf16.mxu0 0
          %4081 = vmatmul.mubr.bf16.gmra.mrb[0].mxu0 %v3870
          %v4082 = vpop.f32.mrb[0].mxu0
          %v4083 = vadd.f32 %v3894, %v4082
          %v4084 = vpop.f32.mrb[0].mxu0
          %v4085 = vpop.f32.mrb[0].mxu0
          %v4086 = vadd.f32 %v3894, %v4085
          %v4087 = vpop.f32.mrb[0].mxu0
          %4088 = vmatprep.mubr.bf16.mxu0 0
          %4089 = vmatmul.mubr.bf16.gmra.mrb[0].mxu0 %v3871
          %v4090 = vpop.f32.mrb[0].mxu0
          %v4091 = vadd.f32 %v3894, %v4090
          %v4092 = vpop.f32.mrb[0].mxu0
          %v4093 = vpop.f32.mrb[0].mxu0
          %v4094 = vadd.f32 %v3894, %v4093
          %v4095 = vpop.f32.mrb[0].mxu0
          %4096 = vmatprep.mubr.bf16.mxu0 0
          %4097 = vmatmul.mubr.bf16.gmra.mrb[0].mxu0 %v3872
          %v4098 = vpop.f32.mrb[0].mxu0
          %v4099 = vadd.f32 %v3894, %v4098
          %v4100 = vpop.f32.mrb[0].mxu0
          %v4101 = vpop.f32.mrb[0].mxu0
          %v4102 = vadd.f32 %v3894, %v4101
          %v4103 = vpop.f32.mrb[0].mxu0
          %4104 = vdwg.mxu0
          %v4105 = vmul.f32 %v3979, 0.01
          %v4106 = vmul.f32 %v3982, 0.01
          %v4107 = vmul.f32 %v3987, 0.01
          %v4108 = vmul.f32 %v3990, 0.01
          %v4109 = vmul.f32 %v3995, 0.01
          %v4110 = vmul.f32 %v3998, 0.01
          %v4111 = vmul.f32 %v4003, 0.01
          %v4112 = vmul.f32 %v4006, 0.01
          %v4113 = vmul.f32 %v4011, 0.01
          %v4114 = vmul.f32 %v4014, 0.01
          %v4115 = vmul.f32 %v4019, 0.01
          %v4116 = vmul.f32 %v4022, 0.01
          %v4117 = vmul.f32 %v4027, 0.01
          %v4118 = vmul.f32 %v4030, 0.01
          %v4119 = vmul.f32 %v4035, 0.01
          %v4120 = vmul.f32 %v4038, 0.01
          %v4121 = vmul.f32 %v4043, 0.01
          %v4122 = vmul.f32 %v4046, 0.01
          %v4123 = vmul.f32 %v4051, 0.01
          %v4124 = vmul.f32 %v4054, 0.01
          %v4125 = vmul.f32 %v4059, 0.01
          %v4126 = vmul.f32 %v4062, 0.01
          %v4127 = vmul.f32 %v4067, 0.01
          %v4128 = vmul.f32 %v4070, 0.01
          %v4129 = vmul.f32 %v4075, 0.01
          %v4130 = vmul.f32 %v4078, 0.01
          %v4131 = vmul.f32 %v4083, 0.01
          %v4132 = vmul.f32 %v4086, 0.01
          %v4133 = vmul.f32 %v4091, 0.01
          %v4134 = vmul.f32 %v4094, 0.01
          %v4135 = vmul.f32 %v4099, 0.01
          %v4136 = vmul.f32 %v4102, 0.01
          %v4137 = vmax.f32 %v3979, %v4105
          %v4138 = vmax.f32 %v3982, %v4106
          %v4139 = vmax.f32 %v3987, %v4107
          %v4140 = vmax.f32 %v3990, %v4108
          %v4141 = vmax.f32 %v3995, %v4109
          %v4142 = vmax.f32 %v3998, %v4110
          %v4143 = vmax.f32 %v4003, %v4111
          %v4144 = vmax.f32 %v4006, %v4112
          %v4145 = vmax.f32 %v4011, %v4113
          %v4146 = vmax.f32 %v4014, %v4114
          %v4147 = vmax.f32 %v4019, %v4115
          %v4148 = vmax.f32 %v4022, %v4116
          %v4149 = vmax.f32 %v4027, %v4117
          %v4150 = vmax.f32 %v4030, %v4118
          %v4151 = vmax.f32 %v4035, %v4119
          %v4152 = vmax.f32 %v4038, %v4120
          %v4153 = vmax.f32 %v4043, %v4121
          %v4154 = vmax.f32 %v4046, %v4122
          %v4155 = vmax.f32 %v4051, %v4123
          %v4156 = vmax.f32 %v4054, %v4124
          %v4157 = vmax.f32 %v4059, %v4125
          %v4158 = vmax.f32 %v4062, %v4126
          %v4159 = vmax.f32 %v4067, %v4127
          %v4160 = vmax.f32 %v4070, %v4128
          %v4161 = vmax.f32 %v4075, %v4129
          %v4162 = vmax.f32 %v4078, %v4130
          %v4163 = vmax.f32 %v4083, %v4131
          %v4164 = vmax.f32 %v4086, %v4132
          %v4165 = vmax.f32 %v4091, %v4133
          %v4166 = vmax.f32 %v4094, %v4134
          %v4167 = vmax.f32 %v4099, %v4135
          %v4168 = vmax.f32 %v4102, %v4136
          // Predicated region
          $region113: #{tpu_custom_call.1} parent=107 // pred_check
            %p4169 = pneg %p3125
          $region114: #{tpu_custom_call.1} parent=107 // pred_check_branch
            %4171 = sbr.rel (%p4169) target = $region116
          $region115: #{tpu_custom_call.1} parent=107 // pred_region
            %4172 = vst [vmem:[#allocation5] sm:$0x3] 0.0
          $region116: #{tpu_custom_call.1} parent=107 // pred_fallthru
            _
          %v4173 = vld [vmem:[#allocation5] sm:$0x1]
          %v4174 = vadd.f32 %v4137, %v4138
          %v4175 = vadd.f32 %v4174, %v4139
          %v4176 = vadd.f32 %v4175, %v4140
          %v4177 = vadd.f32 %v4176, %v4141
          %v4178 = vadd.f32 %v4177, %v4142
          %v4179 = vadd.f32 %v4178, %v4143
          %v4180 = vadd.f32 %v4179, %v4144
          %v4181 = vadd.f32 %v4180, %v4145
          %v4182 = vadd.f32 %v4181, %v4146
          %v4183 = vadd.f32 %v4182, %v4147
          %v4184 = vadd.f32 %v4183, %v4148
          %v4185 = vadd.f32 %v4184, %v4149
          %v4186 = vadd.f32 %v4185, %v4150
          %v4187 = vadd.f32 %v4186, %v4151
          %v4188 = vadd.f32 %v4187, %v4152
          %v4189 = vadd.f32 %v4188, %v4153
          %v4190 = vadd.f32 %v4189, %v4154
          %v4191 = vadd.f32 %v4190, %v4155
          %v4192 = vadd.f32 %v4191, %v4156
          %v4193 = vadd.f32 %v4192, %v4157
          %v4194 = vadd.f32 %v4193, %v4158
          %v4195 = vadd.f32 %v4194, %v4159
          %v4196 = vadd.f32 %v4195, %v4160
          %v4197 = vadd.f32 %v4196, %v4161
          %v4198 = vadd.f32 %v4197, %v4162
          %v4199 = vadd.f32 %v4198, %v4163
          %v4200 = vadd.f32 %v4199, %v4164
          %v4201 = vadd.f32 %v4200, %v4165
          %v4202 = vadd.f32 %v4201, %v4166
          %v4203 = vadd.f32 %v4202, %v4167
          %v4204 = vadd.f32 %v4203, %v4168
          %v4205 = vrot.slane %v4204, 4
          %v4206 = vadd.f32 %v4204, %v4205
          %v4207 = vrot.slane %v4206, 2
          %v4208 = vadd.f32 %v4206, %v4207
          %v4209 = vrot.slane %v4208, 1
          %v4210 = vadd.f32 %v4208, %v4209
          %v4211 = vadd.f32 %v4173, %v4210
          %4212 = vst [vmem:[#allocation5] sm:$0x1] %v4211
          %v4213 = vld [vmem:[#allocation5 + $0x1] sm:$0x1]
          %v4214 = vmul.f32 %v4137, %v4137
          %v4215 = vmul.f32 %v4138, %v4138
          %v4216 = vmul.f32 %v4139, %v4139
          %v4217 = vmul.f32 %v4140, %v4140
          %v4218 = vmul.f32 %v4141, %v4141
          %v4219 = vmul.f32 %v4142, %v4142
          %v4220 = vmul.f32 %v4143, %v4143
          %v4221 = vmul.f32 %v4144, %v4144
          %v4222 = vmul.f32 %v4145, %v4145
          %v4223 = vmul.f32 %v4146, %v4146
          %v4224 = vmul.f32 %v4147, %v4147
          %v4225 = vmul.f32 %v4148, %v4148
          %v4226 = vmul.f32 %v4149, %v4149
          %v4227 = vmul.f32 %v4150, %v4150
          %v4228 = vmul.f32 %v4151, %v4151
          %v4229 = vmul.f32 %v4152, %v4152
          %v4230 = vmul.f32 %v4153, %v4153
          %v4231 = vmul.f32 %v4154, %v4154
          %v4232 = vmul.f32 %v4155, %v4155
          %v4233 = vmul.f32 %v4156, %v4156
          %v4234 = vmul.f32 %v4157, %v4157
          %v4235 = vmul.f32 %v4158, %v4158
          %v4236 = vmul.f32 %v4159, %v4159
          %v4237 = vmul.f32 %v4160, %v4160
          %v4238 = vmul.f32 %v4161, %v4161
          %v4239 = vmul.f32 %v4162, %v4162
          %v4240 = vmul.f32 %v4163, %v4163
          %v4241 = vmul.f32 %v4164, %v4164
          %v4242 = vmul.f32 %v4165, %v4165
          %v4243 = vmul.f32 %v4166, %v4166
          %v4244 = vmul.f32 %v4167, %v4167
          %v4245 = vmul.f32 %v4168, %v4168
          %v4246 = vadd.f32 %v4214, %v4215
          %v4247 = vadd.f32 %v4246, %v4216
          %v4248 = vadd.f32 %v4247, %v4217
          %v4249 = vadd.f32 %v4248, %v4218
          %v4250 = vadd.f32 %v4249, %v4219
          %v4251 = vadd.f32 %v4250, %v4220
          %v4252 = vadd.f32 %v4251, %v4221
          %v4253 = vadd.f32 %v4252, %v4222
          %v4254 = vadd.f32 %v4253, %v4223
          %v4255 = vadd.f32 %v4254, %v4224
          %v4256 = vadd.f32 %v4255, %v4225
          %v4257 = vadd.f32 %v4256, %v4226
          %v4258 = vadd.f32 %v4257, %v4227
          %v4259 = vadd.f32 %v4258, %v4228
          %v4260 = vadd.f32 %v4259, %v4229
          %v4261 = vadd.f32 %v4260, %v4230
          %v4262 = vadd.f32 %v4261, %v4231
          %v4263 = vadd.f32 %v4262, %v4232
          %v4264 = vadd.f32 %v4263, %v4233
          %v4265 = vadd.f32 %v4264, %v4234
          %v4266 = vadd.f32 %v4265, %v4235
          %v4267 = vadd.f32 %v4266, %v4236
          %v4268 = vadd.f32 %v4267, %v4237
          %v4269 = vadd.f32 %v4268, %v4238
          %v4270 = vadd.f32 %v4269, %v4239
          %v4271 = vadd.f32 %v4270, %v4240
          %v4272 = vadd.f32 %v4271, %v4241
          %v4273 = vadd.f32 %v4272, %v4242
          %v4274 = vadd.f32 %v4273, %v4243
          %v4275 = vadd.f32 %v4274, %v4244
          %v4276 = vadd.f32 %v4275, %v4245
          %v4277 = vrot.slane %v4276, 4
          %v4278 = vadd.f32 %v4276, %v4277
          %v4279 = vrot.slane %v4278, 2
          %v4280 = vadd.f32 %v4278, %v4279
          %v4281 = vrot.slane %v4280, 1
          %v4282 = vadd.f32 %v4280, %v4281
          %v4283 = vadd.f32 %v4213, %v4282
          %4284 = vst [vmem:[#allocation5 + $0x1] sm:$0x1] %v4283
        $region108: #{tpu_custom_call.1} parent=59 // pred_fallthru
          _
        %p4285 = scmp.eq.s32.totalorder %s36, 3
        // Predicated region
        $region117: #{tpu_custom_call.1} parent=59 // pred_check
          %p4286 = pneg %p4285
        $region118: #{tpu_custom_call.1} parent=59 // pred_check_branch
          %4288 = sbr.rel (%p4286) target = $region120
        $region119: #{tpu_custom_call.1} parent=59 // pred_region
          %p4289 = scmp.eq.s32.totalorder %s37, 0
          // Predicated region
          $region121: #{tpu_custom_call.1} parent=119 // pred_check
            %p4290 = pneg %p4289
          $region122: #{tpu_custom_call.1} parent=119 // pred_check_branch
            %4292 = sbr.rel (%p4290) target = $region124
          $region123: #{tpu_custom_call.1} parent=119 // pred_region
            %v4293 = vld [vmem:[#allocation5] sm:$0x1]
            %v4294 = vmul.f32 %v4293, 0.001953125
            %v4295 = vld [vmem:[#allocation5 + $0x1] sm:$0x1]
            %v4296 = vmul.f32 %v4295, 0.001953125
            %v4297 = vmul.f32 %v4294, %v4294
            %v4298 = vsub.f32 %v4296, %v4297
            %4299 = vst [vmem:[#allocation8] sm:$0x1] %v4294
            %v4300 = vadd.f32 %v4298, 1e-05
            %v4301 = vrsqrt.pop %v4300
            %4302 = vst [vmem:[#allocation8 + $0x1] sm:$0x1] %v4301
          $region124: #{tpu_custom_call.1} parent=119 // pred_fallthru
            _
          %s4303 = smul.u32 %s37, 32
          %s4304 = smul.addr %s4303, 8
          %s4305 = scalar_lea.vmem [#allocation2], %s4304
          %v4306 = vld [vmem:[%s4305] sm:$0xff]
          %v4307 = vld [vmem:[%s4305 + $0x8] sm:$0xff]
          %v4308 = vld [vmem:[%s4305 + $0x10] sm:$0xff]
          %v4309 = vld [vmem:[%s4305 + $0x18] sm:$0xff]
          %v4310 = vld [vmem:[%s4305 + $0x20] sm:$0xff]
          %v4311 = vld [vmem:[%s4305 + $0x28] sm:$0xff]
          %v4312 = vld [vmem:[%s4305 + $0x30] sm:$0xff]
          %v4313 = vld [vmem:[%s4305 + $0x38] sm:$0xff]
          %v4314 = vld [vmem:[%s4305 + $0x40] sm:$0xff]
          %v4315 = vld [vmem:[%s4305 + $0x48] sm:$0xff]
          %v4316 = vld [vmem:[%s4305 + $0x50] sm:$0xff]
          %v4317 = vld [vmem:[%s4305 + $0x58] sm:$0xff]
          %v4318 = vld [vmem:[%s4305 + $0x60] sm:$0xff]
          %v4319 = vld [vmem:[%s4305 + $0x68] sm:$0xff]
          %v4320 = vld [vmem:[%s4305 + $0x70] sm:$0xff]
          %v4321 = vld [vmem:[%s4305 + $0x78] sm:$0xff]
          %v4322 = vld [vmem:[%s4305 + $0x80] sm:$0xff]
          %v4323 = vld [vmem:[%s4305 + $0x88] sm:$0xff]
          %v4324 = vld [vmem:[%s4305 + $0x90] sm:$0xff]
          %v4325 = vld [vmem:[%s4305 + $0x98] sm:$0xff]
          %v4326 = vld [vmem:[%s4305 + $0xa0] sm:$0xff]
          %v4327 = vld [vmem:[%s4305 + $0xa8] sm:$0xff]
          %v4328 = vld [vmem:[%s4305 + $0xb0] sm:$0xff]
          %v4329 = vld [vmem:[%s4305 + $0xb8] sm:$0xff]
          %v4330 = vld [vmem:[%s4305 + $0xc0] sm:$0xff]
          %v4331 = vld [vmem:[%s4305 + $0xc8] sm:$0xff]
          %v4332 = vld [vmem:[%s4305 + $0xd0] sm:$0xff]
          %v4333 = vld [vmem:[%s4305 + $0xd8] sm:$0xff]
          %v4334 = vld [vmem:[%s4305 + $0xe0] sm:$0xff]
          %v4335 = vld [vmem:[%s4305 + $0xe8] sm:$0xff]
          %v4336 = vld [vmem:[%s4305 + $0xf0] sm:$0xff]
          %v4337 = vld [vmem:[%s4305 + $0xf8] sm:$0xff]
          %v4338 = vld [vmem:[#allocation6] ss:$2 sm:$0x3]
          %v4339 = vunpack.c.l.bf16 %v4306
          %v4340 = vunpack.c.l.bf16 %v4307
          %v4341 = vunpack.c.h.bf16 %v4306
          %v4342 = vunpack.c.h.bf16 %v4307
          %v4343 = vunpack.c.l.bf16 %v4308
          %v4344 = vunpack.c.l.bf16 %v4309
          %v4345 = vunpack.c.h.bf16 %v4308
          %v4346 = vunpack.c.h.bf16 %v4309
          %v4347 = vunpack.c.l.bf16 %v4310
          %v4348 = vunpack.c.l.bf16 %v4311
          %v4349 = vunpack.c.h.bf16 %v4310
          %v4350 = vunpack.c.h.bf16 %v4311
          %v4351 = vunpack.c.l.bf16 %v4312
          %v4352 = vunpack.c.l.bf16 %v4313
          %v4353 = vunpack.c.h.bf16 %v4312
          %v4354 = vunpack.c.h.bf16 %v4313
          %v4355 = vunpack.c.l.bf16 %v4314
          %v4356 = vunpack.c.l.bf16 %v4315
          %v4357 = vunpack.c.h.bf16 %v4314
          %v4358 = vunpack.c.h.bf16 %v4315
          %v4359 = vunpack.c.l.bf16 %v4316
          %v4360 = vunpack.c.l.bf16 %v4317
          %v4361 = vunpack.c.h.bf16 %v4316
          %v4362 = vunpack.c.h.bf16 %v4317
          %v4363 = vunpack.c.l.bf16 %v4318
          %v4364 = vunpack.c.l.bf16 %v4319
          %v4365 = vunpack.c.h.bf16 %v4318
          %v4366 = vunpack.c.h.bf16 %v4319
          %v4367 = vunpack.c.l.bf16 %v4320
          %v4368 = vunpack.c.l.bf16 %v4321
          %v4369 = vunpack.c.h.bf16 %v4320
          %v4370 = vunpack.c.h.bf16 %v4321
          %v4371 = vunpack.c.l.bf16 %v4322
          %v4372 = vunpack.c.l.bf16 %v4323
          %v4373 = vunpack.c.h.bf16 %v4322
          %v4374 = vunpack.c.h.bf16 %v4323
          %v4375 = vunpack.c.l.bf16 %v4324
          %v4376 = vunpack.c.l.bf16 %v4325
          %v4377 = vunpack.c.h.bf16 %v4324
          %v4378 = vunpack.c.h.bf16 %v4325
          %v4379 = vunpack.c.l.bf16 %v4326
          %v4380 = vunpack.c.l.bf16 %v4327
          %v4381 = vunpack.c.h.bf16 %v4326
          %v4382 = vunpack.c.h.bf16 %v4327
          %v4383 = vunpack.c.l.bf16 %v4328
          %v4384 = vunpack.c.l.bf16 %v4329
          %v4385 = vunpack.c.h.bf16 %v4328
          %v4386 = vunpack.c.h.bf16 %v4329
          %v4387 = vunpack.c.l.bf16 %v4330
          %v4388 = vunpack.c.l.bf16 %v4331
          %v4389 = vunpack.c.h.bf16 %v4330
          %v4390 = vunpack.c.h.bf16 %v4331
          %v4391 = vunpack.c.l.bf16 %v4332
          %v4392 = vunpack.c.l.bf16 %v4333
          %v4393 = vunpack.c.h.bf16 %v4332
          %v4394 = vunpack.c.h.bf16 %v4333
          %v4395 = vunpack.c.l.bf16 %v4334
          %v4396 = vunpack.c.l.bf16 %v4335
          %v4397 = vunpack.c.h.bf16 %v4334
          %v4398 = vunpack.c.h.bf16 %v4335
          %v4399 = vunpack.c.l.bf16 %v4336
          %v4400 = vunpack.c.l.bf16 %v4337
          %v4401 = vunpack.c.h.bf16 %v4336
          %v4402 = vunpack.c.h.bf16 %v4337
          %v4404 = vlaneseq
          %v4405 = vshrl.u32 %v4404, 7
          %v4406 = vsub.s32 0, %v4405
          %v4407 = vrot.slane %v4338, %v4406
          %v4408 = vlaneseq
          %v4409 = vshrl.u32 %v4408, 7
          %v4410 = vsub.s32 1, %v4409
          %v4411 = vrot.slane %v4338, %v4410
          %v4414 = vsub.f32 %v4339, %v4407
          %v4415 = vsub.f32 %v4340, %v4411
          %v4416 = vsub.f32 %v4341, %v4407
          %v4417 = vsub.f32 %v4342, %v4411
          %v4418 = vsub.f32 %v4343, %v4407
          %v4419 = vsub.f32 %v4344, %v4411
          %v4420 = vsub.f32 %v4345, %v4407
          %v4421 = vsub.f32 %v4346, %v4411
          %v4422 = vsub.f32 %v4347, %v4407
          %v4423 = vsub.f32 %v4348, %v4411
          %v4424 = vsub.f32 %v4349, %v4407
          %v4425 = vsub.f32 %v4350, %v4411
          %v4426 = vsub.f32 %v4351, %v4407
          %v4427 = vsub.f32 %v4352, %v4411
          %v4428 = vsub.f32 %v4353, %v4407
          %v4429 = vsub.f32 %v4354, %v4411
          %v4430 = vsub.f32 %v4355, %v4407
          %v4431 = vsub.f32 %v4356, %v4411
          %v4432 = vsub.f32 %v4357, %v4407
          %v4433 = vsub.f32 %v4358, %v4411
          %v4434 = vsub.f32 %v4359, %v4407
          %v4435 = vsub.f32 %v4360, %v4411
          %v4436 = vsub.f32 %v4361, %v4407
          %v4437 = vsub.f32 %v4362, %v4411
          %v4438 = vsub.f32 %v4363, %v4407
          %v4439 = vsub.f32 %v4364, %v4411
          %v4440 = vsub.f32 %v4365, %v4407
          %v4441 = vsub.f32 %v4366, %v4411
          %v4442 = vsub.f32 %v4367, %v4407
          %v4443 = vsub.f32 %v4368, %v4411
          %v4444 = vsub.f32 %v4369, %v4407
          %v4445 = vsub.f32 %v4370, %v4411
          %v4446 = vsub.f32 %v4371, %v4407
          %v4447 = vsub.f32 %v4372, %v4411
          %v4448 = vsub.f32 %v4373, %v4407
          %v4449 = vsub.f32 %v4374, %v4411
          %v4450 = vsub.f32 %v4375, %v4407
          %v4451 = vsub.f32 %v4376, %v4411
          %v4452 = vsub.f32 %v4377, %v4407
          %v4453 = vsub.f32 %v4378, %v4411
          %v4454 = vsub.f32 %v4379, %v4407
          %v4455 = vsub.f32 %v4380, %v4411
          %v4456 = vsub.f32 %v4381, %v4407
          %v4457 = vsub.f32 %v4382, %v4411
          %v4458 = vsub.f32 %v4383, %v4407
          %v4459 = vsub.f32 %v4384, %v4411
          %v4460 = vsub.f32 %v4385, %v4407
          %v4461 = vsub.f32 %v4386, %v4411
          %v4462 = vsub.f32 %v4387, %v4407
          %v4463 = vsub.f32 %v4388, %v4411
          %v4464 = vsub.f32 %v4389, %v4407
          %v4465 = vsub.f32 %v4390, %v4411
          %v4466 = vsub.f32 %v4391, %v4407
          %v4467 = vsub.f32 %v4392, %v4411
          %v4468 = vsub.f32 %v4393, %v4407
          %v4469 = vsub.f32 %v4394, %v4411
          %v4470 = vsub.f32 %v4395, %v4407
          %v4471 = vsub.f32 %v4396, %v4411
          %v4472 = vsub.f32 %v4397, %v4407
          %v4473 = vsub.f32 %v4398, %v4411
          %v4474 = vsub.f32 %v4399, %v4407
          %v4475 = vsub.f32 %v4400, %v4411
          %v4476 = vsub.f32 %v4401, %v4407
          %v4477 = vsub.f32 %v4402, %v4411
          %s4478 = scalar_lea.vmem [#allocation6], 1
          %v4479 = vld [vmem:[%s4478] ss:$2 sm:$0x3]
          %v4481 = vlaneseq
          %v4482 = vshrl.u32 %v4481, 7
          %v4483 = vsub.s32 0, %v4482
          %v4484 = vrot.slane %v4479, %v4483
          %v4485 = vlaneseq
          %v4486 = vshrl.u32 %v4485, 7
          %v4487 = vsub.s32 1, %v4486
          %v4488 = vrot.slane %v4479, %v4487
          %v4491 = vmul.f32 %v4414, %v4484
          %v4492 = vmul.f32 %v4415, %v4488
          %v4493 = vmul.f32 %v4416, %v4484
          %v4494 = vmul.f32 %v4417, %v4488
          %v4495 = vmul.f32 %v4418, %v4484
          %v4496 = vmul.f32 %v4419, %v4488
          %v4497 = vmul.f32 %v4420, %v4484
          %v4498 = vmul.f32 %v4421, %v4488
          %v4499 = vmul.f32 %v4422, %v4484
          %v4500 = vmul.f32 %v4423, %v4488
          %v4501 = vmul.f32 %v4424, %v4484
          %v4502 = vmul.f32 %v4425, %v4488
          %v4503 = vmul.f32 %v4426, %v4484
          %v4504 = vmul.f32 %v4427, %v4488
          %v4505 = vmul.f32 %v4428, %v4484
          %v4506 = vmul.f32 %v4429, %v4488
          %v4507 = vmul.f32 %v4430, %v4484
          %v4508 = vmul.f32 %v4431, %v4488
          %v4509 = vmul.f32 %v4432, %v4484
          %v4510 = vmul.f32 %v4433, %v4488
          %v4511 = vmul.f32 %v4434, %v4484
          %v4512 = vmul.f32 %v4435, %v4488
          %v4513 = vmul.f32 %v4436, %v4484
          %v4514 = vmul.f32 %v4437, %v4488
          %v4515 = vmul.f32 %v4438, %v4484
          %v4516 = vmul.f32 %v4439, %v4488
          %v4517 = vmul.f32 %v4440, %v4484
          %v4518 = vmul.f32 %v4441, %v4488
          %v4519 = vmul.f32 %v4442, %v4484
          %v4520 = vmul.f32 %v4443, %v4488
          %v4521 = vmul.f32 %v4444, %v4484
          %v4522 = vmul.f32 %v4445, %v4488
          %v4523 = vmul.f32 %v4446, %v4484
          %v4524 = vmul.f32 %v4447, %v4488
          %v4525 = vmul.f32 %v4448, %v4484
          %v4526 = vmul.f32 %v4449, %v4488
          %v4527 = vmul.f32 %v4450, %v4484
          %v4528 = vmul.f32 %v4451, %v4488
          %v4529 = vmul.f32 %v4452, %v4484
          %v4530 = vmul.f32 %v4453, %v4488
          %v4531 = vmul.f32 %v4454, %v4484
          %v4532 = vmul.f32 %v4455, %v4488
          %v4533 = vmul.f32 %v4456, %v4484
          %v4534 = vmul.f32 %v4457, %v4488
          %v4535 = vmul.f32 %v4458, %v4484
          %v4536 = vmul.f32 %v4459, %v4488
          %v4537 = vmul.f32 %v4460, %v4484
          %v4538 = vmul.f32 %v4461, %v4488
          %v4539 = vmul.f32 %v4462, %v4484
          %v4540 = vmul.f32 %v4463, %v4488
          %v4541 = vmul.f32 %v4464, %v4484
          %v4542 = vmul.f32 %v4465, %v4488
          %v4543 = vmul.f32 %v4466, %v4484
          %v4544 = vmul.f32 %v4467, %v4488
          %v4545 = vmul.f32 %v4468, %v4484
          %v4546 = vmul.f32 %v4469, %v4488
          %v4547 = vmul.f32 %v4470, %v4484
          %v4548 = vmul.f32 %v4471, %v4488
          %v4549 = vmul.f32 %v4472, %v4484
          %v4550 = vmul.f32 %v4473, %v4488
          %v4551 = vmul.f32 %v4474, %v4484
          %v4552 = vmul.f32 %v4475, %v4488
          %v4553 = vmul.f32 %v4476, %v4484
          %v4554 = vmul.f32 %v4477, %v4488
          %v4555 = vpack.c.bf16 %v4493, %v4491
          %v4556 = vpack.c.bf16 %v4494, %v4492
          %v4557 = vpack.c.bf16 %v4497, %v4495
          %v4558 = vpack.c.bf16 %v4498, %v4496
          %v4559 = vpack.c.bf16 %v4501, %v4499
          %v4560 = vpack.c.bf16 %v4502, %v4500
          %v4561 = vpack.c.bf16 %v4505, %v4503
          %v4562 = vpack.c.bf16 %v4506, %v4504
          %v4563 = vpack.c.bf16 %v4509, %v4507
          %v4564 = vpack.c.bf16 %v4510, %v4508
          %v4565 = vpack.c.bf16 %v4513, %v4511
          %v4566 = vpack.c.bf16 %v4514, %v4512
          %v4567 = vpack.c.bf16 %v4517, %v4515
          %v4568 = vpack.c.bf16 %v4518, %v4516
          %v4569 = vpack.c.bf16 %v4521, %v4519
          %v4570 = vpack.c.bf16 %v4522, %v4520
          %v4571 = vpack.c.bf16 %v4525, %v4523
          %v4572 = vpack.c.bf16 %v4526, %v4524
          %v4573 = vpack.c.bf16 %v4529, %v4527
          %v4574 = vpack.c.bf16 %v4530, %v4528
          %v4575 = vpack.c.bf16 %v4533, %v4531
          %v4576 = vpack.c.bf16 %v4534, %v4532
          %v4577 = vpack.c.bf16 %v4537, %v4535
          %v4578 = vpack.c.bf16 %v4538, %v4536
          %v4579 = vpack.c.bf16 %v4541, %v4539
          %v4580 = vpack.c.bf16 %v4542, %v4540
          %v4581 = vpack.c.bf16 %v4545, %v4543
          %v4582 = vpack.c.bf16 %v4546, %v4544
          %v4583 = vpack.c.bf16 %v4549, %v4547
          %v4584 = vpack.c.bf16 %v4550, %v4548
          %v4585 = vpack.c.bf16 %v4553, %v4551
          %v4586 = vpack.c.bf16 %v4554, %v4552
          %v4587 = vld [vmem:[#allocation15] sm:$0xf]
          %v4588 = vld [vmem:[#allocation15 + $0x4] sm:$0xf]
          %v4589 = vld [vmem:[#allocation15 + $0x8] sm:$0xf]
          %v4590 = vld [vmem:[#allocation15 + $0xc] sm:$0xf]
          %v4591 = vld [vmem:[#allocation15 + $0x10] sm:$0xf]
          %v4592 = vld [vmem:[#allocation15 + $0x14] sm:$0xf]
          %v4593 = vld [vmem:[#allocation15 + $0x18] sm:$0xf]
          %v4594 = vld [vmem:[#allocation15 + $0x1c] sm:$0xf]
          %v4595 = vld [vmem:[#allocation15 + $0x20] sm:$0xf]
          %v4596 = vld [vmem:[#allocation15 + $0x24] sm:$0xf]
          %v4597 = vld [vmem:[#allocation15 + $0x28] sm:$0xf]
          %v4598 = vld [vmem:[#allocation15 + $0x2c] sm:$0xf]
          %v4599 = vld [vmem:[#allocation15 + $0x30] sm:$0xf]
          %v4600 = vld [vmem:[#allocation15 + $0x34] sm:$0xf]
          %v4601 = vld [vmem:[#allocation15 + $0x38] sm:$0xf]
          %v4602 = vld [vmem:[#allocation15 + $0x3c] sm:$0xf]
          %v4603 = vld [vmem:[#allocation15 + $0x40] sm:$0xf]
          %v4604 = vld [vmem:[#allocation15 + $0x44] sm:$0xf]
          %v4605 = vld [vmem:[#allocation15 + $0x48] sm:$0xf]
          %v4606 = vld [vmem:[#allocation15 + $0x4c] sm:$0xf]
          %v4607 = vld [vmem:[#allocation15 + $0x50] sm:$0xf]
          %v4608 = vld [vmem:[#allocation15 + $0x54] sm:$0xf]
          %v4609 = vld [vmem:[#allocation15 + $0x58] sm:$0xf]
          %v4610 = vld [vmem:[#allocation15 + $0x5c] sm:$0xf]
          %v4611 = vld [vmem:[#allocation15 + $0x60] sm:$0xf]
          %v4612 = vld [vmem:[#allocation15 + $0x64] sm:$0xf]
          %v4613 = vld [vmem:[#allocation15 + $0x68] sm:$0xf]
          %v4614 = vld [vmem:[#allocation15 + $0x6c] sm:$0xf]
          %v4615 = vld [vmem:[#allocation15 + $0x70] sm:$0xf]
          %v4616 = vld [vmem:[#allocation15 + $0x74] sm:$0xf]
          %v4617 = vld [vmem:[#allocation15 + $0x78] sm:$0xf]
          %v4618 = vld [vmem:[#allocation15 + $0x7c] sm:$0xf]
          %v4619 = vld [vmem:[%s5] sm:$0x1]
          %v4621 = vlaneseq
          %v4622 = vshrl.u32 %v4621, 7
          %v4623 = vsub.s32 0, %v4622
          %v4624 = vrot.slane %v4619, %v4623
          %v4658 = vunpack.c.l.b16 %v4587
          %v4659 = vunpack.c.l.b16 %v4588
          %v4660 = vunpack.c.l.b16 %v4589
          %v4661 = vunpack.c.l.b16 %v4590
          %v4662 = vunpack.c.l.b16 %v4591
          %v4663 = vunpack.c.l.b16 %v4592
          %v4664 = vunpack.c.l.b16 %v4593
          %v4665 = vunpack.c.l.b16 %v4594
          %v4666 = vunpack.c.l.b16 %v4595
          %v4667 = vunpack.c.l.b16 %v4596
          %v4668 = vunpack.c.l.b16 %v4597
          %v4669 = vunpack.c.l.b16 %v4598
          %v4670 = vunpack.c.l.b16 %v4599
          %v4671 = vunpack.c.l.b16 %v4600
          %v4672 = vunpack.c.l.b16 %v4601
          %v4673 = vunpack.c.l.b16 %v4602
          %v4674 = vunpack.c.l.b16 %v4603
          %v4675 = vunpack.c.l.b16 %v4604
          %v4676 = vunpack.c.l.b16 %v4605
          %v4677 = vunpack.c.l.b16 %v4606
          %v4678 = vunpack.c.l.b16 %v4607
          %v4679 = vunpack.c.l.b16 %v4608
          %v4680 = vunpack.c.l.b16 %v4609
          %v4681 = vunpack.c.l.b16 %v4610
          %v4682 = vunpack.c.l.b16 %v4611
          %v4683 = vunpack.c.l.b16 %v4612
          %v4684 = vunpack.c.l.b16 %v4613
          %v4685 = vunpack.c.l.b16 %v4614
          %v4686 = vunpack.c.l.b16 %v4615
          %v4687 = vunpack.c.l.b16 %v4616
          %v4688 = vunpack.c.l.b16 %v4617
          %v4689 = vunpack.c.l.b16 %v4618
          %v4690 = vpack.c.b16 %v4659, %v4658
          %v4691 = vpack.c.b16 %v4661, %v4660
          %v4692 = vpack.c.b16 %v4663, %v4662
          %v4693 = vpack.c.b16 %v4665, %v4664
          %v4694 = vpack.c.b16 %v4667, %v4666
          %v4695 = vpack.c.b16 %v4669, %v4668
          %v4696 = vpack.c.b16 %v4671, %v4670
          %v4697 = vpack.c.b16 %v4673, %v4672
          %v4698 = vpack.c.b16 %v4675, %v4674
          %v4699 = vpack.c.b16 %v4677, %v4676
          %v4700 = vpack.c.b16 %v4679, %v4678
          %v4701 = vpack.c.b16 %v4681, %v4680
          %v4702 = vpack.c.b16 %v4683, %v4682
          %v4703 = vpack.c.b16 %v4685, %v4684
          %v4704 = vpack.c.b16 %v4687, %v4686
          %v4705 = vpack.c.b16 %v4689, %v4688
          %4722 = vmatprep.subr.bf16.mxu0 0
          %4723 = vmatpush1.bf16.msra.mxu0 %v4690
          %4724 = vmatprep.subr.bf16.mxu0 0
          %4725 = vmatpush1.bf16.msra.mxu0 %v4691
          %4726 = vmatprep.subr.bf16.mxu0 0
          %4727 = vmatpush1.bf16.msra.mxu0 %v4692
          %4728 = vmatprep.subr.bf16.mxu0 0
          %4729 = vmatpush1.bf16.msra.mxu0 %v4693
          %4730 = vmatprep.subr.bf16.mxu0 0
          %4731 = vmatpush1.bf16.msra.mxu0 %v4694
          %4732 = vmatprep.subr.bf16.mxu0 0
          %4733 = vmatpush1.bf16.msra.mxu0 %v4695
          %4734 = vmatprep.subr.bf16.mxu0 0
          %4735 = vmatpush1.bf16.msra.mxu0 %v4696
          %4736 = vmatprep.subr.bf16.mxu0 0
          %4737 = vmatpush1.bf16.msra.mxu0 %v4697
          %4738 = vmatprep.subr.bf16.mxu0 0
          %4739 = vmatpush1.bf16.msra.mxu0 %v4698
          %4740 = vmatprep.subr.bf16.mxu0 0
          %4741 = vmatpush1.bf16.msra.mxu0 %v4699
          %4742 = vmatprep.subr.bf16.mxu0 0
          %4743 = vmatpush1.bf16.msra.mxu0 %v4700
          %4744 = vmatprep.subr.bf16.mxu0 0
          %4745 = vmatpush1.bf16.msra.mxu0 %v4701
          %4746 = vmatprep.subr.bf16.mxu0 0
          %4747 = vmatpush1.bf16.msra.mxu0 %v4702
          %4748 = vmatprep.subr.bf16.mxu0 0
          %4749 = vmatpush1.bf16.msra.mxu0 %v4703
          %4750 = vmatprep.subr.bf16.mxu0 0
          %4751 = vmatpush1.bf16.msra.mxu0 %v4704
          %4752 = vmatprep.subr.bf16.mxu0 0
          %4753 = vmatpush1.bf16.msra.mxu0 %v4705
          %4754 = vmatprep.mubr.bf16.mxu0 %v4556
          %4755 = vmatmul.mubr.bf16.gmra.mrb[0].mxu0 %v4555
          %v4756 = vpop.f32.mrb[0].mxu0
          %v4757 = vadd.f32 %v4624, %v4756
          %v4758 = vpop.f32.mrb[0].mxu0
          %v4759 = vpop.f32.mrb[0].mxu0
          %v4760 = vadd.f32 %v4624, %v4759
          %v4761 = vpop.f32.mrb[0].mxu0
          %4762 = vmatprep.mubr.bf16.mxu0 %v4558
          %4763 = vmatmul.mubr.bf16.gmra.mrb[0].mxu0 %v4557
          %v4764 = vpop.f32.mrb[0].mxu0
          %v4765 = vadd.f32 %v4624, %v4764
          %v4766 = vpop.f32.mrb[0].mxu0
          %v4767 = vpop.f32.mrb[0].mxu0
          %v4768 = vadd.f32 %v4624, %v4767
          %v4769 = vpop.f32.mrb[0].mxu0
          %4770 = vmatprep.mubr.bf16.mxu0 %v4560
          %4771 = vmatmul.mubr.bf16.gmra.mrb[0].mxu0 %v4559
          %v4772 = vpop.f32.mrb[0].mxu0
          %v4773 = vadd.f32 %v4624, %v4772
          %v4774 = vpop.f32.mrb[0].mxu0
          %v4775 = vpop.f32.mrb[0].mxu0
          %v4776 = vadd.f32 %v4624, %v4775
          %v4777 = vpop.f32.mrb[0].mxu0
          %4778 = vmatprep.mubr.bf16.mxu0 %v4562
          %4779 = vmatmul.mubr.bf16.gmra.mrb[0].mxu0 %v4561
          %v4780 = vpop.f32.mrb[0].mxu0
          %v4781 = vadd.f32 %v4624, %v4780
          %v4782 = vpop.f32.mrb[0].mxu0
          %v4783 = vpop.f32.mrb[0].mxu0
          %v4784 = vadd.f32 %v4624, %v4783
          %v4785 = vpop.f32.mrb[0].mxu0
          %4786 = vmatprep.mubr.bf16.mxu0 %v4564
          %4787 = vmatmul.mubr.bf16.gmra.mrb[0].mxu0 %v4563
          %v4788 = vpop.f32.mrb[0].mxu0
          %v4789 = vadd.f32 %v4624, %v4788
          %v4790 = vpop.f32.mrb[0].mxu0
          %v4791 = vpop.f32.mrb[0].mxu0
          %v4792 = vadd.f32 %v4624, %v4791
          %v4793 = vpop.f32.mrb[0].mxu0
          %4794 = vmatprep.mubr.bf16.mxu0 %v4566
          %4795 = vmatmul.mubr.bf16.gmra.mrb[0].mxu0 %v4565
          %v4796 = vpop.f32.mrb[0].mxu0
          %v4797 = vadd.f32 %v4624, %v4796
          %v4798 = vpop.f32.mrb[0].mxu0
          %v4799 = vpop.f32.mrb[0].mxu0
          %v4800 = vadd.f32 %v4624, %v4799
          %v4801 = vpop.f32.mrb[0].mxu0
          %4802 = vmatprep.mubr.bf16.mxu0 %v4568
          %4803 = vmatmul.mubr.bf16.gmra.mrb[0].mxu0 %v4567
          %v4804 = vpop.f32.mrb[0].mxu0
          %v4805 = vadd.f32 %v4624, %v4804
          %v4806 = vpop.f32.mrb[0].mxu0
          %v4807 = vpop.f32.mrb[0].mxu0
          %v4808 = vadd.f32 %v4624, %v4807
          %v4809 = vpop.f32.mrb[0].mxu0
          %4810 = vmatprep.mubr.bf16.mxu0 %v4570
          %4811 = vmatmul.mubr.bf16.gmra.mrb[0].mxu0 %v4569
          %v4812 = vpop.f32.mrb[0].mxu0
          %v4813 = vadd.f32 %v4624, %v4812
          %v4814 = vpop.f32.mrb[0].mxu0
          %v4815 = vpop.f32.mrb[0].mxu0
          %v4816 = vadd.f32 %v4624, %v4815
          %v4817 = vpop.f32.mrb[0].mxu0
          %4818 = vmatprep.mubr.bf16.mxu0 %v4572
          %4819 = vmatmul.mubr.bf16.gmra.mrb[0].mxu0 %v4571
          %v4820 = vpop.f32.mrb[0].mxu0
          %v4821 = vadd.f32 %v4624, %v4820
          %v4822 = vpop.f32.mrb[0].mxu0
          %v4823 = vpop.f32.mrb[0].mxu0
          %v4824 = vadd.f32 %v4624, %v4823
          %v4825 = vpop.f32.mrb[0].mxu0
          %4826 = vmatprep.mubr.bf16.mxu0 %v4574
          %4827 = vmatmul.mubr.bf16.gmra.mrb[0].mxu0 %v4573
          %v4828 = vpop.f32.mrb[0].mxu0
          %v4829 = vadd.f32 %v4624, %v4828
          %v4830 = vpop.f32.mrb[0].mxu0
          %v4831 = vpop.f32.mrb[0].mxu0
          %v4832 = vadd.f32 %v4624, %v4831
          %v4833 = vpop.f32.mrb[0].mxu0
          %4834 = vmatprep.mubr.bf16.mxu0 %v4576
          %4835 = vmatmul.mubr.bf16.gmra.mrb[0].mxu0 %v4575
          %v4836 = vpop.f32.mrb[0].mxu0
          %v4837 = vadd.f32 %v4624, %v4836
          %v4838 = vpop.f32.mrb[0].mxu0
          %v4839 = vpop.f32.mrb[0].mxu0
          %v4840 = vadd.f32 %v4624, %v4839
          %v4841 = vpop.f32.mrb[0].mxu0
          %4842 = vmatprep.mubr.bf16.mxu0 %v4578
          %4843 = vmatmul.mubr.bf16.gmra.mrb[0].mxu0 %v4577
          %v4844 = vpop.f32.mrb[0].mxu0
          %v4845 = vadd.f32 %v4624, %v4844
          %v4846 = vpop.f32.mrb[0].mxu0
          %v4847 = vpop.f32.mrb[0].mxu0
          %v4848 = vadd.f32 %v4624, %v4847
          %v4849 = vpop.f32.mrb[0].mxu0
          %4850 = vmatprep.mubr.bf16.mxu0 %v4580
          %4851 = vmatmul.mubr.bf16.gmra.mrb[0].mxu0 %v4579
          %v4852 = vpop.f32.mrb[0].mxu0
          %v4853 = vadd.f32 %v4624, %v4852
          %v4854 = vpop.f32.mrb[0].mxu0
          %v4855 = vpop.f32.mrb[0].mxu0
          %v4856 = vadd.f32 %v4624, %v4855
          %v4857 = vpop.f32.mrb[0].mxu0
          %4858 = vmatprep.mubr.bf16.mxu0 %v4582
          %4859 = vmatmul.mubr.bf16.gmra.mrb[0].mxu0 %v4581
          %v4860 = vpop.f32.mrb[0].mxu0
          %v4861 = vadd.f32 %v4624, %v4860
          %v4862 = vpop.f32.mrb[0].mxu0
          %v4863 = vpop.f32.mrb[0].mxu0
          %v4864 = vadd.f32 %v4624, %v4863
          %v4865 = vpop.f32.mrb[0].mxu0
          %4866 = vmatprep.mubr.bf16.mxu0 %v4584
          %4867 = vmatmul.mubr.bf16.gmra.mrb[0].mxu0 %v4583
          %v4868 = vpop.f32.mrb[0].mxu0
          %v4869 = vadd.f32 %v4624, %v4868
          %v4870 = vpop.f32.mrb[0].mxu0
          %v4871 = vpop.f32.mrb[0].mxu0
          %v4872 = vadd.f32 %v4624, %v4871
          %v4873 = vpop.f32.mrb[0].mxu0
          %4874 = vmatprep.mubr.bf16.mxu0 %v4586
          %4875 = vmatmul.mubr.bf16.gmra.mrb[0].mxu0 %v4585
          %v4876 = vpop.f32.mrb[0].mxu0
          %v4877 = vadd.f32 %v4624, %v4876
          %v4878 = vpop.f32.mrb[0].mxu0
          %v4879 = vpop.f32.mrb[0].mxu0
          %v4880 = vadd.f32 %v4624, %v4879
          %v4881 = vpop.f32.mrb[0].mxu0
          %4882 = vdwg.mxu0
          %v4883 = vmul.f32 %v4757, 0.01
          %v4884 = vmul.f32 %v4760, 0.01
          %v4885 = vmul.f32 %v4765, 0.01
          %v4886 = vmul.f32 %v4768, 0.01
          %v4887 = vmul.f32 %v4773, 0.01
          %v4888 = vmul.f32 %v4776, 0.01
          %v4889 = vmul.f32 %v4781, 0.01
          %v4890 = vmul.f32 %v4784, 0.01
          %v4891 = vmul.f32 %v4789, 0.01
          %v4892 = vmul.f32 %v4792, 0.01
          %v4893 = vmul.f32 %v4797, 0.01
          %v4894 = vmul.f32 %v4800, 0.01
          %v4895 = vmul.f32 %v4805, 0.01
          %v4896 = vmul.f32 %v4808, 0.01
          %v4897 = vmul.f32 %v4813, 0.01
          %v4898 = vmul.f32 %v4816, 0.01
          %v4899 = vmul.f32 %v4821, 0.01
          %v4900 = vmul.f32 %v4824, 0.01
          %v4901 = vmul.f32 %v4829, 0.01
          %v4902 = vmul.f32 %v4832, 0.01
          %v4903 = vmul.f32 %v4837, 0.01
          %v4904 = vmul.f32 %v4840, 0.01
          %v4905 = vmul.f32 %v4845, 0.01
          %v4906 = vmul.f32 %v4848, 0.01
          %v4907 = vmul.f32 %v4853, 0.01
          %v4908 = vmul.f32 %v4856, 0.01
          %v4909 = vmul.f32 %v4861, 0.01
          %v4910 = vmul.f32 %v4864, 0.01
          %v4911 = vmul.f32 %v4869, 0.01
          %v4912 = vmul.f32 %v4872, 0.01
          %v4913 = vmul.f32 %v4877, 0.01
          %v4914 = vmul.f32 %v4880, 0.01
          %v4915 = vmax.f32 %v4757, %v4883
          %v4916 = vmax.f32 %v4760, %v4884
          %v4917 = vmax.f32 %v4765, %v4885
          %v4918 = vmax.f32 %v4768, %v4886
          %v4919 = vmax.f32 %v4773, %v4887
          %v4920 = vmax.f32 %v4776, %v4888
          %v4921 = vmax.f32 %v4781, %v4889
          %v4922 = vmax.f32 %v4784, %v4890
          %v4923 = vmax.f32 %v4789, %v4891
          %v4924 = vmax.f32 %v4792, %v4892
          %v4925 = vmax.f32 %v4797, %v4893
          %v4926 = vmax.f32 %v4800, %v4894
          %v4927 = vmax.f32 %v4805, %v4895
          %v4928 = vmax.f32 %v4808, %v4896
          %v4929 = vmax.f32 %v4813, %v4897
          %v4930 = vmax.f32 %v4816, %v4898
          %v4931 = vmax.f32 %v4821, %v4899
          %v4932 = vmax.f32 %v4824, %v4900
          %v4933 = vmax.f32 %v4829, %v4901
          %v4934 = vmax.f32 %v4832, %v4902
          %v4935 = vmax.f32 %v4837, %v4903
          %v4936 = vmax.f32 %v4840, %v4904
          %v4937 = vmax.f32 %v4845, %v4905
          %v4938 = vmax.f32 %v4848, %v4906
          %v4939 = vmax.f32 %v4853, %v4907
          %v4940 = vmax.f32 %v4856, %v4908
          %v4941 = vmax.f32 %v4861, %v4909
          %v4942 = vmax.f32 %v4864, %v4910
          %v4943 = vmax.f32 %v4869, %v4911
          %v4944 = vmax.f32 %v4872, %v4912
          %v4945 = vmax.f32 %v4877, %v4913
          %v4946 = vmax.f32 %v4880, %v4914
          %v4947 = vld [vmem:[#allocation7] sm:$0x1]
          %v4948 = vlaneseq
          %v4949 = vshrl.u32 %v4948, 7
          %v4950 = vsub.s32 0, %v4949
          %v4951 = vrot.slane %v4947, %v4950
          %v4952 = vsub.f32 %v4915, %v4951
          %v4953 = vsub.f32 %v4916, %v4951
          %v4954 = vsub.f32 %v4917, %v4951
          %v4955 = vsub.f32 %v4918, %v4951
          %v4956 = vsub.f32 %v4919, %v4951
          %v4957 = vsub.f32 %v4920, %v4951
          %v4958 = vsub.f32 %v4921, %v4951
          %v4959 = vsub.f32 %v4922, %v4951
          %v4960 = vsub.f32 %v4923, %v4951
          %v4961 = vsub.f32 %v4924, %v4951
          %v4962 = vsub.f32 %v4925, %v4951
          %v4963 = vsub.f32 %v4926, %v4951
          %v4964 = vsub.f32 %v4927, %v4951
          %v4965 = vsub.f32 %v4928, %v4951
          %v4966 = vsub.f32 %v4929, %v4951
          %v4967 = vsub.f32 %v4930, %v4951
          %v4968 = vsub.f32 %v4931, %v4951
          %v4969 = vsub.f32 %v4932, %v4951
          %v4970 = vsub.f32 %v4933, %v4951
          %v4971 = vsub.f32 %v4934, %v4951
          %v4972 = vsub.f32 %v4935, %v4951
          %v4973 = vsub.f32 %v4936, %v4951
          %v4974 = vsub.f32 %v4937, %v4951
          %v4975 = vsub.f32 %v4938, %v4951
          %v4976 = vsub.f32 %v4939, %v4951
          %v4977 = vsub.f32 %v4940, %v4951
          %v4978 = vsub.f32 %v4941, %v4951
          %v4979 = vsub.f32 %v4942, %v4951
          %v4980 = vsub.f32 %v4943, %v4951
          %v4981 = vsub.f32 %v4944, %v4951
          %v4982 = vsub.f32 %v4945, %v4951
          %v4983 = vsub.f32 %v4946, %v4951
          %v4984 = vld [vmem:[#allocation7 + $0x1] sm:$0x1]
          %v4985 = vlaneseq
          %v4986 = vshrl.u32 %v4985, 7
          %v4987 = vsub.s32 0, %v4986
          %v4988 = vrot.slane %v4984, %v4987
          %v4989 = vmul.f32 %v4952, %v4988
          %v4990 = vmul.f32 %v4953, %v4988
          %v4991 = vmul.f32 %v4954, %v4988
          %v4992 = vmul.f32 %v4955, %v4988
          %v4993 = vmul.f32 %v4956, %v4988
          %v4994 = vmul.f32 %v4957, %v4988
          %v4995 = vmul.f32 %v4958, %v4988
          %v4996 = vmul.f32 %v4959, %v4988
          %v4997 = vmul.f32 %v4960, %v4988
          %v4998 = vmul.f32 %v4961, %v4988
          %v4999 = vmul.f32 %v4962, %v4988
          %v5000 = vmul.f32 %v4963, %v4988
          %v5001 = vmul.f32 %v4964, %v4988
          %v5002 = vmul.f32 %v4965, %v4988
          %v5003 = vmul.f32 %v4966, %v4988
          %v5004 = vmul.f32 %v4967, %v4988
          %v5005 = vmul.f32 %v4968, %v4988
          %v5006 = vmul.f32 %v4969, %v4988
          %v5007 = vmul.f32 %v4970, %v4988
          %v5008 = vmul.f32 %v4971, %v4988
          %v5009 = vmul.f32 %v4972, %v4988
          %v5010 = vmul.f32 %v4973, %v4988
          %v5011 = vmul.f32 %v4974, %v4988
          %v5012 = vmul.f32 %v4975, %v4988
          %v5013 = vmul.f32 %v4976, %v4988
          %v5014 = vmul.f32 %v4977, %v4988
          %v5015 = vmul.f32 %v4978, %v4988
          %v5016 = vmul.f32 %v4979, %v4988
          %v5017 = vmul.f32 %v4980, %v4988
          %v5018 = vmul.f32 %v4981, %v4988
          %v5019 = vmul.f32 %v4982, %v4988
          %v5020 = vmul.f32 %v4983, %v4988
          %v5021 = vpack.c.bf16 %v4990, %v4989
          %v5022 = vpack.c.bf16 %v4992, %v4991
          %v5023 = vpack.c.bf16 %v4994, %v4993
          %v5024 = vpack.c.bf16 %v4996, %v4995
          %v5025 = vpack.c.bf16 %v4998, %v4997
          %v5026 = vpack.c.bf16 %v5000, %v4999
          %v5027 = vpack.c.bf16 %v5002, %v5001
          %v5028 = vpack.c.bf16 %v5004, %v5003
          %v5029 = vpack.c.bf16 %v5006, %v5005
          %v5030 = vpack.c.bf16 %v5008, %v5007
          %v5031 = vpack.c.bf16 %v5010, %v5009
          %v5032 = vpack.c.bf16 %v5012, %v5011
          %v5033 = vpack.c.bf16 %v5014, %v5013
          %v5034 = vpack.c.bf16 %v5016, %v5015
          %v5035 = vpack.c.bf16 %v5018, %v5017
          %v5036 = vpack.c.bf16 %v5020, %v5019
          %v5037 = vld [vmem:[#allocation17] sm:$0xf]
          %v5038 = vld [vmem:[#allocation17 + $0x4] sm:$0xf]
          %v5039 = vld [vmem:[#allocation17 + $0x8] sm:$0xf]
          %v5040 = vld [vmem:[#allocation17 + $0xc] sm:$0xf]
          %v5041 = vld [vmem:[#allocation17 + $0x10] sm:$0xf]
          %v5042 = vld [vmem:[#allocation17 + $0x14] sm:$0xf]
          %v5043 = vld [vmem:[#allocation17 + $0x18] sm:$0xf]
          %v5044 = vld [vmem:[#allocation17 + $0x1c] sm:$0xf]
          %v5045 = vld [vmem:[#allocation17 + $0x20] sm:$0xf]
          %v5046 = vld [vmem:[#allocation17 + $0x24] sm:$0xf]
          %v5047 = vld [vmem:[#allocation17 + $0x28] sm:$0xf]
          %v5048 = vld [vmem:[#allocation17 + $0x2c] sm:$0xf]
          %v5049 = vld [vmem:[#allocation17 + $0x30] sm:$0xf]
          %v5050 = vld [vmem:[#allocation17 + $0x34] sm:$0xf]
          %v5051 = vld [vmem:[#allocation17 + $0x38] sm:$0xf]
          %v5052 = vld [vmem:[#allocation17 + $0x3c] sm:$0xf]
          %v5053 = vld [vmem:[%s7] sm:$0x1]
          %v5055 = vlaneseq
          %v5056 = vshrl.u32 %v5055, 7
          %v5057 = vsub.s32 0, %v5056
          %v5058 = vrot.slane %v5053, %v5057
          %v5076 = vunpack.c.l.b16 %v5037
          %v5077 = vunpack.c.l.b16 %v5038
          %v5078 = vunpack.c.l.b16 %v5039
          %v5079 = vunpack.c.l.b16 %v5040
          %v5080 = vunpack.c.l.b16 %v5041
          %v5081 = vunpack.c.l.b16 %v5042
          %v5082 = vunpack.c.l.b16 %v5043
          %v5083 = vunpack.c.l.b16 %v5044
          %v5084 = vunpack.c.l.b16 %v5045
          %v5085 = vunpack.c.l.b16 %v5046
          %v5086 = vunpack.c.l.b16 %v5047
          %v5087 = vunpack.c.l.b16 %v5048
          %v5088 = vunpack.c.l.b16 %v5049
          %v5089 = vunpack.c.l.b16 %v5050
          %v5090 = vunpack.c.l.b16 %v5051
          %v5091 = vunpack.c.l.b16 %v5052
          %v5092 = vpack.c.b16 %v5077, %v5076
          %v5093 = vpack.c.b16 %v5079, %v5078
          %v5094 = vpack.c.b16 %v5081, %v5080
          %v5095 = vpack.c.b16 %v5083, %v5082
          %v5096 = vpack.c.b16 %v5085, %v5084
          %v5097 = vpack.c.b16 %v5087, %v5086
          %v5098 = vpack.c.b16 %v5089, %v5088
          %v5099 = vpack.c.b16 %v5091, %v5090
          %5108 = vmatprep.subr.bf16.mxu0 0
          %5109 = vmatpush1.bf16.msra.mxu0 %v5092
          %5110 = vmatprep.subr.bf16.mxu0 0
          %5111 = vmatpush1.bf16.msra.mxu0 %v5093
          %5112 = vmatprep.subr.bf16.mxu0 0
          %5113 = vmatpush1.bf16.msra.mxu0 %v5094
          %5114 = vmatprep.subr.bf16.mxu0 0
          %5115 = vmatpush1.bf16.msra.mxu0 %v5095
          %5116 = vmatprep.subr.bf16.mxu0 0
          %5117 = vmatpush1.bf16.msra.mxu0 %v5096
          %5118 = vmatprep.subr.bf16.mxu0 0
          %5119 = vmatpush1.bf16.msra.mxu0 %v5097
          %5120 = vmatprep.subr.bf16.mxu0 0
          %5121 = vmatpush1.bf16.msra.mxu0 %v5098
          %5122 = vmatprep.subr.bf16.mxu0 0
          %5123 = vmatpush1.bf16.msra.mxu0 %v5099
          %5124 = vmatprep.subr.bf16.mxu0 0
          %5125 = vmatpush1.bf16.msra.mxu0 0
          %5126 = vmatprep.subr.bf16.mxu0 0
          %5127 = vmatpush1.bf16.msra.mxu0 0
          %5128 = vmatprep.subr.bf16.mxu0 0
          %5129 = vmatpush1.bf16.msra.mxu0 0
          %5130 = vmatprep.subr.bf16.mxu0 0
          %5131 = vmatpush1.bf16.msra.mxu0 0
          %5132 = vmatprep.subr.bf16.mxu0 0
          %5133 = vmatpush1.bf16.msra.mxu0 0
          %5134 = vmatprep.subr.bf16.mxu0 0
          %5135 = vmatpush1.bf16.msra.mxu0 0
          %5136 = vmatprep.subr.bf16.mxu0 0
          %5137 = vmatpush1.bf16.msra.mxu0 0
          %5138 = vmatprep.subr.bf16.mxu0 0
          %5139 = vmatpush1.bf16.msra.mxu0 0
          %5140 = vmatprep.mubr.bf16.mxu0 0
          %5141 = vmatmul.mubr.bf16.gmra.mrb[0].mxu0 %v5021
          %v5142 = vpop.f32.mrb[0].mxu0
          %v5143 = vadd.f32 %v5058, %v5142
          %v5144 = vpop.f32.mrb[0].mxu0
          %v5145 = vpop.f32.mrb[0].mxu0
          %v5146 = vadd.f32 %v5058, %v5145
          %v5147 = vpop.f32.mrb[0].mxu0
          %5148 = vmatprep.mubr.bf16.mxu0 0
          %5149 = vmatmul.mubr.bf16.gmra.mrb[0].mxu0 %v5022
          %v5150 = vpop.f32.mrb[0].mxu0
          %v5151 = vadd.f32 %v5058, %v5150
          %v5152 = vpop.f32.mrb[0].mxu0
          %v5153 = vpop.f32.mrb[0].mxu0
          %v5154 = vadd.f32 %v5058, %v5153
          %v5155 = vpop.f32.mrb[0].mxu0
          %5156 = vmatprep.mubr.bf16.mxu0 0
          %5157 = vmatmul.mubr.bf16.gmra.mrb[0].mxu0 %v5023
          %v5158 = vpop.f32.mrb[0].mxu0
          %v5159 = vadd.f32 %v5058, %v5158
          %v5160 = vpop.f32.mrb[0].mxu0
          %v5161 = vpop.f32.mrb[0].mxu0
          %v5162 = vadd.f32 %v5058, %v5161
          %v5163 = vpop.f32.mrb[0].mxu0
          %5164 = vmatprep.mubr.bf16.mxu0 0
          %5165 = vmatmul.mubr.bf16.gmra.mrb[0].mxu0 %v5024
          %v5166 = vpop.f32.mrb[0].mxu0
          %v5167 = vadd.f32 %v5058, %v5166
          %v5168 = vpop.f32.mrb[0].mxu0
          %v5169 = vpop.f32.mrb[0].mxu0
          %v5170 = vadd.f32 %v5058, %v5169
          %v5171 = vpop.f32.mrb[0].mxu0
          %5172 = vmatprep.mubr.bf16.mxu0 0
          %5173 = vmatmul.mubr.bf16.gmra.mrb[0].mxu0 %v5025
          %v5174 = vpop.f32.mrb[0].mxu0
          %v5175 = vadd.f32 %v5058, %v5174
          %v5176 = vpop.f32.mrb[0].mxu0
          %v5177 = vpop.f32.mrb[0].mxu0
          %v5178 = vadd.f32 %v5058, %v5177
          %v5179 = vpop.f32.mrb[0].mxu0
          %5180 = vmatprep.mubr.bf16.mxu0 0
          %5181 = vmatmul.mubr.bf16.gmra.mrb[0].mxu0 %v5026
          %v5182 = vpop.f32.mrb[0].mxu0
          %v5183 = vadd.f32 %v5058, %v5182
          %v5184 = vpop.f32.mrb[0].mxu0
          %v5185 = vpop.f32.mrb[0].mxu0
          %v5186 = vadd.f32 %v5058, %v5185
          %v5187 = vpop.f32.mrb[0].mxu0
          %5188 = vmatprep.mubr.bf16.mxu0 0
          %5189 = vmatmul.mubr.bf16.gmra.mrb[0].mxu0 %v5027
          %v5190 = vpop.f32.mrb[0].mxu0
          %v5191 = vadd.f32 %v5058, %v5190
          %v5192 = vpop.f32.mrb[0].mxu0
          %v5193 = vpop.f32.mrb[0].mxu0
          %v5194 = vadd.f32 %v5058, %v5193
          %v5195 = vpop.f32.mrb[0].mxu0
          %5196 = vmatprep.mubr.bf16.mxu0 0
          %5197 = vmatmul.mubr.bf16.gmra.mrb[0].mxu0 %v5028
          %v5198 = vpop.f32.mrb[0].mxu0
          %v5199 = vadd.f32 %v5058, %v5198
          %v5200 = vpop.f32.mrb[0].mxu0
          %v5201 = vpop.f32.mrb[0].mxu0
          %v5202 = vadd.f32 %v5058, %v5201
          %v5203 = vpop.f32.mrb[0].mxu0
          %5204 = vmatprep.mubr.bf16.mxu0 0
          %5205 = vmatmul.mubr.bf16.gmra.mrb[0].mxu0 %v5029
          %v5206 = vpop.f32.mrb[0].mxu0
          %v5207 = vadd.f32 %v5058, %v5206
          %v5208 = vpop.f32.mrb[0].mxu0
          %v5209 = vpop.f32.mrb[0].mxu0
          %v5210 = vadd.f32 %v5058, %v5209
          %v5211 = vpop.f32.mrb[0].mxu0
          %5212 = vmatprep.mubr.bf16.mxu0 0
          %5213 = vmatmul.mubr.bf16.gmra.mrb[0].mxu0 %v5030
          %v5214 = vpop.f32.mrb[0].mxu0
          %v5215 = vadd.f32 %v5058, %v5214
          %v5216 = vpop.f32.mrb[0].mxu0
          %v5217 = vpop.f32.mrb[0].mxu0
          %v5218 = vadd.f32 %v5058, %v5217
          %v5219 = vpop.f32.mrb[0].mxu0
          %5220 = vmatprep.mubr.bf16.mxu0 0
          %5221 = vmatmul.mubr.bf16.gmra.mrb[0].mxu0 %v5031
          %v5222 = vpop.f32.mrb[0].mxu0
          %v5223 = vadd.f32 %v5058, %v5222
          %v5224 = vpop.f32.mrb[0].mxu0
          %v5225 = vpop.f32.mrb[0].mxu0
          %v5226 = vadd.f32 %v5058, %v5225
          %v5227 = vpop.f32.mrb[0].mxu0
          %5228 = vmatprep.mubr.bf16.mxu0 0
          %5229 = vmatmul.mubr.bf16.gmra.mrb[0].mxu0 %v5032
          %v5230 = vpop.f32.mrb[0].mxu0
          %v5231 = vadd.f32 %v5058, %v5230
          %v5232 = vpop.f32.mrb[0].mxu0
          %v5233 = vpop.f32.mrb[0].mxu0
          %v5234 = vadd.f32 %v5058, %v5233
          %v5235 = vpop.f32.mrb[0].mxu0
          %5236 = vmatprep.mubr.bf16.mxu0 0
          %5237 = vmatmul.mubr.bf16.gmra.mrb[0].mxu0 %v5033
          %v5238 = vpop.f32.mrb[0].mxu0
          %v5239 = vadd.f32 %v5058, %v5238
          %v5240 = vpop.f32.mrb[0].mxu0
          %v5241 = vpop.f32.mrb[0].mxu0
          %v5242 = vadd.f32 %v5058, %v5241
          %v5243 = vpop.f32.mrb[0].mxu0
          %5244 = vmatprep.mubr.bf16.mxu0 0
          %5245 = vmatmul.mubr.bf16.gmra.mrb[0].mxu0 %v5034
          %v5246 = vpop.f32.mrb[0].mxu0
          %v5247 = vadd.f32 %v5058, %v5246
          %v5248 = vpop.f32.mrb[0].mxu0
          %v5249 = vpop.f32.mrb[0].mxu0
          %v5250 = vadd.f32 %v5058, %v5249
          %v5251 = vpop.f32.mrb[0].mxu0
          %5252 = vmatprep.mubr.bf16.mxu0 0
          %5253 = vmatmul.mubr.bf16.gmra.mrb[0].mxu0 %v5035
          %v5254 = vpop.f32.mrb[0].mxu0
          %v5255 = vadd.f32 %v5058, %v5254
          %v5256 = vpop.f32.mrb[0].mxu0
          %v5257 = vpop.f32.mrb[0].mxu0
          %v5258 = vadd.f32 %v5058, %v5257
          %v5259 = vpop.f32.mrb[0].mxu0
          %5260 = vmatprep.mubr.bf16.mxu0 0
          %5261 = vmatmul.mubr.bf16.gmra.mrb[0].mxu0 %v5036
          %v5262 = vpop.f32.mrb[0].mxu0
          %v5263 = vadd.f32 %v5058, %v5262
          %v5264 = vpop.f32.mrb[0].mxu0
          %v5265 = vpop.f32.mrb[0].mxu0
          %v5266 = vadd.f32 %v5058, %v5265
          %v5267 = vpop.f32.mrb[0].mxu0
          %5268 = vdwg.mxu0
          %v5269 = vmul.f32 %v5143, 0.01
          %v5270 = vmul.f32 %v5146, 0.01
          %v5271 = vmul.f32 %v5151, 0.01
          %v5272 = vmul.f32 %v5154, 0.01
          %v5273 = vmul.f32 %v5159, 0.01
          %v5274 = vmul.f32 %v5162, 0.01
          %v5275 = vmul.f32 %v5167, 0.01
          %v5276 = vmul.f32 %v5170, 0.01
          %v5277 = vmul.f32 %v5175, 0.01
          %v5278 = vmul.f32 %v5178, 0.01
          %v5279 = vmul.f32 %v5183, 0.01
          %v5280 = vmul.f32 %v5186, 0.01
          %v5281 = vmul.f32 %v5191, 0.01
          %v5282 = vmul.f32 %v5194, 0.01
          %v5283 = vmul.f32 %v5199, 0.01
          %v5284 = vmul.f32 %v5202, 0.01
          %v5285 = vmul.f32 %v5207, 0.01
          %v5286 = vmul.f32 %v5210, 0.01
          %v5287 = vmul.f32 %v5215, 0.01
          %v5288 = vmul.f32 %v5218, 0.01
          %v5289 = vmul.f32 %v5223, 0.01
          %v5290 = vmul.f32 %v5226, 0.01
          %v5291 = vmul.f32 %v5231, 0.01
          %v5292 = vmul.f32 %v5234, 0.01
          %v5293 = vmul.f32 %v5239, 0.01
          %v5294 = vmul.f32 %v5242, 0.01
          %v5295 = vmul.f32 %v5247, 0.01
          %v5296 = vmul.f32 %v5250, 0.01
          %v5297 = vmul.f32 %v5255, 0.01
          %v5298 = vmul.f32 %v5258, 0.01
          %v5299 = vmul.f32 %v5263, 0.01
          %v5300 = vmul.f32 %v5266, 0.01
          %v5301 = vmax.f32 %v5143, %v5269
          %v5302 = vmax.f32 %v5146, %v5270
          %v5303 = vmax.f32 %v5151, %v5271
          %v5304 = vmax.f32 %v5154, %v5272
          %v5305 = vmax.f32 %v5159, %v5273
          %v5306 = vmax.f32 %v5162, %v5274
          %v5307 = vmax.f32 %v5167, %v5275
          %v5308 = vmax.f32 %v5170, %v5276
          %v5309 = vmax.f32 %v5175, %v5277
          %v5310 = vmax.f32 %v5178, %v5278
          %v5311 = vmax.f32 %v5183, %v5279
          %v5312 = vmax.f32 %v5186, %v5280
          %v5313 = vmax.f32 %v5191, %v5281
          %v5314 = vmax.f32 %v5194, %v5282
          %v5315 = vmax.f32 %v5199, %v5283
          %v5316 = vmax.f32 %v5202, %v5284
          %v5317 = vmax.f32 %v5207, %v5285
          %v5318 = vmax.f32 %v5210, %v5286
          %v5319 = vmax.f32 %v5215, %v5287
          %v5320 = vmax.f32 %v5218, %v5288
          %v5321 = vmax.f32 %v5223, %v5289
          %v5322 = vmax.f32 %v5226, %v5290
          %v5323 = vmax.f32 %v5231, %v5291
          %v5324 = vmax.f32 %v5234, %v5292
          %v5325 = vmax.f32 %v5239, %v5293
          %v5326 = vmax.f32 %v5242, %v5294
          %v5327 = vmax.f32 %v5247, %v5295
          %v5328 = vmax.f32 %v5250, %v5296
          %v5329 = vmax.f32 %v5255, %v5297
          %v5330 = vmax.f32 %v5258, %v5298
          %v5331 = vmax.f32 %v5263, %v5299
          %v5332 = vmax.f32 %v5266, %v5300
          %v5333 = vld [vmem:[#allocation8] sm:$0x1]
          %v5334 = vlaneseq
          %v5335 = vshrl.u32 %v5334, 7
          %v5336 = vsub.s32 0, %v5335
          %v5337 = vrot.slane %v5333, %v5336
          %v5338 = vsub.f32 %v5301, %v5337
          %v5339 = vsub.f32 %v5302, %v5337
          %v5340 = vsub.f32 %v5303, %v5337
          %v5341 = vsub.f32 %v5304, %v5337
          %v5342 = vsub.f32 %v5305, %v5337
          %v5343 = vsub.f32 %v5306, %v5337
          %v5344 = vsub.f32 %v5307, %v5337
          %v5345 = vsub.f32 %v5308, %v5337
          %v5346 = vsub.f32 %v5309, %v5337
          %v5347 = vsub.f32 %v5310, %v5337
          %v5348 = vsub.f32 %v5311, %v5337
          %v5349 = vsub.f32 %v5312, %v5337
          %v5350 = vsub.f32 %v5313, %v5337
          %v5351 = vsub.f32 %v5314, %v5337
          %v5352 = vsub.f32 %v5315, %v5337
          %v5353 = vsub.f32 %v5316, %v5337
          %v5354 = vsub.f32 %v5317, %v5337
          %v5355 = vsub.f32 %v5318, %v5337
          %v5356 = vsub.f32 %v5319, %v5337
          %v5357 = vsub.f32 %v5320, %v5337
          %v5358 = vsub.f32 %v5321, %v5337
          %v5359 = vsub.f32 %v5322, %v5337
          %v5360 = vsub.f32 %v5323, %v5337
          %v5361 = vsub.f32 %v5324, %v5337
          %v5362 = vsub.f32 %v5325, %v5337
          %v5363 = vsub.f32 %v5326, %v5337
          %v5364 = vsub.f32 %v5327, %v5337
          %v5365 = vsub.f32 %v5328, %v5337
          %v5366 = vsub.f32 %v5329, %v5337
          %v5367 = vsub.f32 %v5330, %v5337
          %v5368 = vsub.f32 %v5331, %v5337
          %v5369 = vsub.f32 %v5332, %v5337
          %v5370 = vld [vmem:[#allocation8 + $0x1] sm:$0x1]
          %v5371 = vlaneseq
          %v5372 = vshrl.u32 %v5371, 7
          %v5373 = vsub.s32 0, %v5372
          %v5374 = vrot.slane %v5370, %v5373
          %v5375 = vmul.f32 %v5338, %v5374
          %v5376 = vmul.f32 %v5339, %v5374
          %v5377 = vmul.f32 %v5340, %v5374
          %v5378 = vmul.f32 %v5341, %v5374
          %v5379 = vmul.f32 %v5342, %v5374
          %v5380 = vmul.f32 %v5343, %v5374
          %v5381 = vmul.f32 %v5344, %v5374
          %v5382 = vmul.f32 %v5345, %v5374
          %v5383 = vmul.f32 %v5346, %v5374
          %v5384 = vmul.f32 %v5347, %v5374
          %v5385 = vmul.f32 %v5348, %v5374
          %v5386 = vmul.f32 %v5349, %v5374
          %v5387 = vmul.f32 %v5350, %v5374
          %v5388 = vmul.f32 %v5351, %v5374
          %v5389 = vmul.f32 %v5352, %v5374
          %v5390 = vmul.f32 %v5353, %v5374
          %v5391 = vmul.f32 %v5354, %v5374
          %v5392 = vmul.f32 %v5355, %v5374
          %v5393 = vmul.f32 %v5356, %v5374
          %v5394 = vmul.f32 %v5357, %v5374
          %v5395 = vmul.f32 %v5358, %v5374
          %v5396 = vmul.f32 %v5359, %v5374
          %v5397 = vmul.f32 %v5360, %v5374
          %v5398 = vmul.f32 %v5361, %v5374
          %v5399 = vmul.f32 %v5362, %v5374
          %v5400 = vmul.f32 %v5363, %v5374
          %v5401 = vmul.f32 %v5364, %v5374
          %v5402 = vmul.f32 %v5365, %v5374
          %v5403 = vmul.f32 %v5366, %v5374
          %v5404 = vmul.f32 %v5367, %v5374
          %v5405 = vmul.f32 %v5368, %v5374
          %v5406 = vmul.f32 %v5369, %v5374
          %v5407 = vpack.c.bf16 %v5376, %v5375
          %v5408 = vpack.c.bf16 %v5378, %v5377
          %v5409 = vpack.c.bf16 %v5380, %v5379
          %v5410 = vpack.c.bf16 %v5382, %v5381
          %v5411 = vpack.c.bf16 %v5384, %v5383
          %v5412 = vpack.c.bf16 %v5386, %v5385
          %v5413 = vpack.c.bf16 %v5388, %v5387
          %v5414 = vpack.c.bf16 %v5390, %v5389
          %v5415 = vpack.c.bf16 %v5392, %v5391
          %v5416 = vpack.c.bf16 %v5394, %v5393
          %v5417 = vpack.c.bf16 %v5396, %v5395
          %v5418 = vpack.c.bf16 %v5398, %v5397
          %v5419 = vpack.c.bf16 %v5400, %v5399
          %v5420 = vpack.c.bf16 %v5402, %v5401
          %v5421 = vpack.c.bf16 %v5404, %v5403
          %v5422 = vpack.c.bf16 %v5406, %v5405
          %v5423 = vld [vmem:[#allocation18] sm:$0xf]
          %v5424 = vld [vmem:[#allocation18 + $0x4] sm:$0xf]
          %v5425 = vld [vmem:[#allocation18 + $0x8] sm:$0xf]
          %v5426 = vld [vmem:[#allocation18 + $0xc] sm:$0xf]
          %v5427 = vld [vmem:[#allocation18 + $0x10] sm:$0xf]
          %v5428 = vld [vmem:[#allocation18 + $0x14] sm:$0xf]
          %v5429 = vld [vmem:[#allocation18 + $0x18] sm:$0xf]
          %v5430 = vld [vmem:[#allocation18 + $0x1c] sm:$0xf]
          %v5431 = vld [vmem:[#allocation18 + $0x20] sm:$0xf]
          %v5432 = vld [vmem:[#allocation18 + $0x24] sm:$0xf]
          %v5433 = vld [vmem:[#allocation18 + $0x28] sm:$0xf]
          %v5434 = vld [vmem:[#allocation18 + $0x2c] sm:$0xf]
          %v5435 = vld [vmem:[#allocation18 + $0x30] sm:$0xf]
          %v5436 = vld [vmem:[#allocation18 + $0x34] sm:$0xf]
          %v5437 = vld [vmem:[#allocation18 + $0x38] sm:$0xf]
          %v5438 = vld [vmem:[#allocation18 + $0x3c] sm:$0xf]
          %v5439 = vld [vmem:[%s9] sm:$0x1]
          %v5441 = vlaneseq
          %v5442 = vshrl.u32 %v5441, 7
          %v5443 = vsub.s32 0, %v5442
          %v5444 = vrot.slane %v5439, %v5443
          %v5462 = vunpack.c.l.b16 %v5423
          %v5463 = vunpack.c.l.b16 %v5424
          %v5464 = vunpack.c.l.b16 %v5425
          %v5465 = vunpack.c.l.b16 %v5426
          %v5466 = vunpack.c.l.b16 %v5427
          %v5467 = vunpack.c.l.b16 %v5428
          %v5468 = vunpack.c.l.b16 %v5429
          %v5469 = vunpack.c.l.b16 %v5430
          %v5470 = vunpack.c.l.b16 %v5431
          %v5471 = vunpack.c.l.b16 %v5432
          %v5472 = vunpack.c.l.b16 %v5433
          %v5473 = vunpack.c.l.b16 %v5434
          %v5474 = vunpack.c.l.b16 %v5435
          %v5475 = vunpack.c.l.b16 %v5436
          %v5476 = vunpack.c.l.b16 %v5437
          %v5477 = vunpack.c.l.b16 %v5438
          %v5478 = vpack.c.b16 %v5463, %v5462
          %v5479 = vpack.c.b16 %v5465, %v5464
          %v5480 = vpack.c.b16 %v5467, %v5466
          %v5481 = vpack.c.b16 %v5469, %v5468
          %v5482 = vpack.c.b16 %v5471, %v5470
          %v5483 = vpack.c.b16 %v5473, %v5472
          %v5484 = vpack.c.b16 %v5475, %v5474
          %v5485 = vpack.c.b16 %v5477, %v5476
          %5494 = vmatprep.subr.bf16.mxu0 0
          %5495 = vmatpush1.bf16.msra.mxu0 %v5478
          %5496 = vmatprep.subr.bf16.mxu0 0
          %5497 = vmatpush1.bf16.msra.mxu0 %v5479
          %5498 = vmatprep.subr.bf16.mxu0 0
          %5499 = vmatpush1.bf16.msra.mxu0 %v5480
          %5500 = vmatprep.subr.bf16.mxu0 0
          %5501 = vmatpush1.bf16.msra.mxu0 %v5481
          %5502 = vmatprep.subr.bf16.mxu0 0
          %5503 = vmatpush1.bf16.msra.mxu0 %v5482
          %5504 = vmatprep.subr.bf16.mxu0 0
          %5505 = vmatpush1.bf16.msra.mxu0 %v5483
          %5506 = vmatprep.subr.bf16.mxu0 0
          %5507 = vmatpush1.bf16.msra.mxu0 %v5484
          %5508 = vmatprep.subr.bf16.mxu0 0
          %5509 = vmatpush1.bf16.msra.mxu0 %v5485
          %5510 = vmatprep.subr.bf16.mxu0 0
          %5511 = vmatpush1.bf16.msra.mxu0 0
          %5512 = vmatprep.subr.bf16.mxu0 0
          %5513 = vmatpush1.bf16.msra.mxu0 0
          %5514 = vmatprep.subr.bf16.mxu0 0
          %5515 = vmatpush1.bf16.msra.mxu0 0
          %5516 = vmatprep.subr.bf16.mxu0 0
          %5517 = vmatpush1.bf16.msra.mxu0 0
          %5518 = vmatprep.subr.bf16.mxu0 0
          %5519 = vmatpush1.bf16.msra.mxu0 0
          %5520 = vmatprep.subr.bf16.mxu0 0
          %5521 = vmatpush1.bf16.msra.mxu0 0
          %5522 = vmatprep.subr.bf16.mxu0 0
          %5523 = vmatpush1.bf16.msra.mxu0 0
          %5524 = vmatprep.subr.bf16.mxu0 0
          %5525 = vmatpush1.bf16.msra.mxu0 0
          %5526 = vmatprep.mubr.bf16.mxu0 0
          %5527 = vmatmul.mubr.bf16.gmra.mrb[0].mxu0 %v5407
          %v5528 = vpop.f32.mrb[0].mxu0
          %v5529 = vadd.f32 %v5444, %v5528
          %v5530 = vpop.f32.mrb[0].mxu0
          %v5531 = vpop.f32.mrb[0].mxu0
          %v5532 = vadd.f32 %v5444, %v5531
          %v5533 = vpop.f32.mrb[0].mxu0
          %5534 = vmatprep.mubr.bf16.mxu0 0
          %5535 = vmatmul.mubr.bf16.gmra.mrb[0].mxu0 %v5408
          %v5536 = vpop.f32.mrb[0].mxu0
          %v5537 = vadd.f32 %v5444, %v5536
          %v5538 = vpop.f32.mrb[0].mxu0
          %v5539 = vpop.f32.mrb[0].mxu0
          %v5540 = vadd.f32 %v5444, %v5539
          %v5541 = vpop.f32.mrb[0].mxu0
          %5542 = vmatprep.mubr.bf16.mxu0 0
          %5543 = vmatmul.mubr.bf16.gmra.mrb[0].mxu0 %v5409
          %v5544 = vpop.f32.mrb[0].mxu0
          %v5545 = vadd.f32 %v5444, %v5544
          %v5546 = vpop.f32.mrb[0].mxu0
          %v5547 = vpop.f32.mrb[0].mxu0
          %v5548 = vadd.f32 %v5444, %v5547
          %v5549 = vpop.f32.mrb[0].mxu0
          %5550 = vmatprep.mubr.bf16.mxu0 0
          %5551 = vmatmul.mubr.bf16.gmra.mrb[0].mxu0 %v5410
          %v5552 = vpop.f32.mrb[0].mxu0
          %v5553 = vadd.f32 %v5444, %v5552
          %v5554 = vpop.f32.mrb[0].mxu0
          %v5555 = vpop.f32.mrb[0].mxu0
          %v5556 = vadd.f32 %v5444, %v5555
          %v5557 = vpop.f32.mrb[0].mxu0
          %5558 = vmatprep.mubr.bf16.mxu0 0
          %5559 = vmatmul.mubr.bf16.gmra.mrb[0].mxu0 %v5411
          %v5560 = vpop.f32.mrb[0].mxu0
          %v5561 = vadd.f32 %v5444, %v5560
          %v5562 = vpop.f32.mrb[0].mxu0
          %v5563 = vpop.f32.mrb[0].mxu0
          %v5564 = vadd.f32 %v5444, %v5563
          %v5565 = vpop.f32.mrb[0].mxu0
          %5566 = vmatprep.mubr.bf16.mxu0 0
          %5567 = vmatmul.mubr.bf16.gmra.mrb[0].mxu0 %v5412
          %v5568 = vpop.f32.mrb[0].mxu0
          %v5569 = vadd.f32 %v5444, %v5568
          %v5570 = vpop.f32.mrb[0].mxu0
          %v5571 = vpop.f32.mrb[0].mxu0
          %v5572 = vadd.f32 %v5444, %v5571
          %v5573 = vpop.f32.mrb[0].mxu0
          %5574 = vmatprep.mubr.bf16.mxu0 0
          %5575 = vmatmul.mubr.bf16.gmra.mrb[0].mxu0 %v5413
          %v5576 = vpop.f32.mrb[0].mxu0
          %v5577 = vadd.f32 %v5444, %v5576
          %v5578 = vpop.f32.mrb[0].mxu0
          %v5579 = vpop.f32.mrb[0].mxu0
          %v5580 = vadd.f32 %v5444, %v5579
          %v5581 = vpop.f32.mrb[0].mxu0
          %5582 = vmatprep.mubr.bf16.mxu0 0
          %5583 = vmatmul.mubr.bf16.gmra.mrb[0].mxu0 %v5414
          %v5584 = vpop.f32.mrb[0].mxu0
          %v5585 = vadd.f32 %v5444, %v5584
          %v5586 = vpop.f32.mrb[0].mxu0
          %v5587 = vpop.f32.mrb[0].mxu0
          %v5588 = vadd.f32 %v5444, %v5587
          %v5589 = vpop.f32.mrb[0].mxu0
          %5590 = vmatprep.mubr.bf16.mxu0 0
          %5591 = vmatmul.mubr.bf16.gmra.mrb[0].mxu0 %v5415
          %v5592 = vpop.f32.mrb[0].mxu0
          %v5593 = vadd.f32 %v5444, %v5592
          %v5594 = vpop.f32.mrb[0].mxu0
          %v5595 = vpop.f32.mrb[0].mxu0
          %v5596 = vadd.f32 %v5444, %v5595
          %v5597 = vpop.f32.mrb[0].mxu0
          %5598 = vmatprep.mubr.bf16.mxu0 0
          %5599 = vmatmul.mubr.bf16.gmra.mrb[0].mxu0 %v5416
          %v5600 = vpop.f32.mrb[0].mxu0
          %v5601 = vadd.f32 %v5444, %v5600
          %v5602 = vpop.f32.mrb[0].mxu0
          %v5603 = vpop.f32.mrb[0].mxu0
          %v5604 = vadd.f32 %v5444, %v5603
          %v5605 = vpop.f32.mrb[0].mxu0
          %5606 = vmatprep.mubr.bf16.mxu0 0
          %5607 = vmatmul.mubr.bf16.gmra.mrb[0].mxu0 %v5417
          %v5608 = vpop.f32.mrb[0].mxu0
          %v5609 = vadd.f32 %v5444, %v5608
          %v5610 = vpop.f32.mrb[0].mxu0
          %v5611 = vpop.f32.mrb[0].mxu0
          %v5612 = vadd.f32 %v5444, %v5611
          %v5613 = vpop.f32.mrb[0].mxu0
          %5614 = vmatprep.mubr.bf16.mxu0 0
          %5615 = vmatmul.mubr.bf16.gmra.mrb[0].mxu0 %v5418
          %v5616 = vpop.f32.mrb[0].mxu0
          %v5617 = vadd.f32 %v5444, %v5616
          %v5618 = vpop.f32.mrb[0].mxu0
          %v5619 = vpop.f32.mrb[0].mxu0
          %v5620 = vadd.f32 %v5444, %v5619
          %v5621 = vpop.f32.mrb[0].mxu0
          %5622 = vmatprep.mubr.bf16.mxu0 0
          %5623 = vmatmul.mubr.bf16.gmra.mrb[0].mxu0 %v5419
          %v5624 = vpop.f32.mrb[0].mxu0
          %v5625 = vadd.f32 %v5444, %v5624
          %v5626 = vpop.f32.mrb[0].mxu0
          %v5627 = vpop.f32.mrb[0].mxu0
          %v5628 = vadd.f32 %v5444, %v5627
          %v5629 = vpop.f32.mrb[0].mxu0
          %5630 = vmatprep.mubr.bf16.mxu0 0
          %5631 = vmatmul.mubr.bf16.gmra.mrb[0].mxu0 %v5420
          %v5632 = vpop.f32.mrb[0].mxu0
          %v5633 = vadd.f32 %v5444, %v5632
          %v5634 = vpop.f32.mrb[0].mxu0
          %v5635 = vpop.f32.mrb[0].mxu0
          %v5636 = vadd.f32 %v5444, %v5635
          %v5637 = vpop.f32.mrb[0].mxu0
          %5638 = vmatprep.mubr.bf16.mxu0 0
          %5639 = vmatmul.mubr.bf16.gmra.mrb[0].mxu0 %v5421
          %v5640 = vpop.f32.mrb[0].mxu0
          %v5641 = vadd.f32 %v5444, %v5640
          %v5642 = vpop.f32.mrb[0].mxu0
          %v5643 = vpop.f32.mrb[0].mxu0
          %v5644 = vadd.f32 %v5444, %v5643
          %v5645 = vpop.f32.mrb[0].mxu0
          %5646 = vmatprep.mubr.bf16.mxu0 0
          %5647 = vmatmul.mubr.bf16.gmra.mrb[0].mxu0 %v5422
          %v5648 = vpop.f32.mrb[0].mxu0
          %v5649 = vadd.f32 %v5444, %v5648
          %v5650 = vpop.f32.mrb[0].mxu0
          %v5651 = vpop.f32.mrb[0].mxu0
          %v5652 = vadd.f32 %v5444, %v5651
          %v5653 = vpop.f32.mrb[0].mxu0
          %5654 = vdwg.mxu0
          %v5655 = vxor.u32 %v5529, 2147483648
          %v5656 = vxor.u32 %v5532, 2147483648
          %v5657 = vxor.u32 %v5537, 2147483648
          %v5658 = vxor.u32 %v5540, 2147483648
          %v5659 = vxor.u32 %v5545, 2147483648
          %v5660 = vxor.u32 %v5548, 2147483648
          %v5661 = vxor.u32 %v5553, 2147483648
          %v5662 = vxor.u32 %v5556, 2147483648
          %v5663 = vxor.u32 %v5561, 2147483648
          %v5664 = vxor.u32 %v5564, 2147483648
          %v5665 = vxor.u32 %v5569, 2147483648
          %v5666 = vxor.u32 %v5572, 2147483648
          %v5667 = vxor.u32 %v5577, 2147483648
          %v5668 = vxor.u32 %v5580, 2147483648
          %v5669 = vxor.u32 %v5585, 2147483648
          %v5670 = vxor.u32 %v5588, 2147483648
          %v5671 = vxor.u32 %v5593, 2147483648
          %v5672 = vxor.u32 %v5596, 2147483648
          %v5673 = vxor.u32 %v5601, 2147483648
          %v5674 = vxor.u32 %v5604, 2147483648
          %v5675 = vxor.u32 %v5609, 2147483648
          %v5676 = vxor.u32 %v5612, 2147483648
          %v5677 = vxor.u32 %v5617, 2147483648
          %v5678 = vxor.u32 %v5620, 2147483648
          %v5679 = vxor.u32 %v5625, 2147483648
          %v5680 = vxor.u32 %v5628, 2147483648
          %v5681 = vxor.u32 %v5633, 2147483648
          %v5682 = vxor.u32 %v5636, 2147483648
          %v5683 = vxor.u32 %v5641, 2147483648
          %v5684 = vxor.u32 %v5644, 2147483648
          %v5685 = vxor.u32 %v5649, 2147483648
          %v5686 = vxor.u32 %v5652, 2147483648
          %v5687 = vmul.f32 %v5655, 1.442695
          %v5688 = vpow.pop %v5687
          %v5689 = vmul.f32 %v5656, 1.442695
          %v5690 = vpow.pop %v5689
          %v5691 = vmul.f32 %v5657, 1.442695
          %v5692 = vpow.pop %v5691
          %v5693 = vmul.f32 %v5658, 1.442695
          %v5694 = vpow.pop %v5693
          %v5695 = vmul.f32 %v5659, 1.442695
          %v5696 = vpow.pop %v5695
          %v5697 = vmul.f32 %v5660, 1.442695
          %v5698 = vpow.pop %v5697
          %v5699 = vmul.f32 %v5661, 1.442695
          %v5700 = vpow.pop %v5699
          %v5701 = vmul.f32 %v5662, 1.442695
          %v5702 = vpow.pop %v5701
          %v5703 = vmul.f32 %v5663, 1.442695
          %v5704 = vpow.pop %v5703
          %v5705 = vmul.f32 %v5664, 1.442695
          %v5706 = vpow.pop %v5705
          %v5707 = vmul.f32 %v5665, 1.442695
          %v5708 = vpow.pop %v5707
          %v5709 = vmul.f32 %v5666, 1.442695
          %v5710 = vpow.pop %v5709
          %v5711 = vmul.f32 %v5667, 1.442695
          %v5712 = vpow.pop %v5711
          %v5713 = vmul.f32 %v5668, 1.442695
          %v5714 = vpow.pop %v5713
          %v5715 = vmul.f32 %v5669, 1.442695
          %v5716 = vpow.pop %v5715
          %v5717 = vmul.f32 %v5670, 1.442695
          %v5718 = vpow.pop %v5717
          %v5719 = vmul.f32 %v5671, 1.442695
          %v5720 = vpow.pop %v5719
          %v5721 = vmul.f32 %v5672, 1.442695
          %v5722 = vpow.pop %v5721
          %v5723 = vmul.f32 %v5673, 1.442695
          %v5724 = vpow.pop %v5723
          %v5725 = vmul.f32 %v5674, 1.442695
          %v5726 = vpow.pop %v5725
          %v5727 = vmul.f32 %v5675, 1.442695
          %v5728 = vpow.pop %v5727
          %v5729 = vmul.f32 %v5676, 1.442695
          %v5730 = vpow.pop %v5729
          %v5731 = vmul.f32 %v5677, 1.442695
          %v5732 = vpow.pop %v5731
          %v5733 = vmul.f32 %v5678, 1.442695
          %v5734 = vpow.pop %v5733
          %v5735 = vmul.f32 %v5679, 1.442695
          %v5736 = vpow.pop %v5735
          %v5737 = vmul.f32 %v5680, 1.442695
          %v5738 = vpow.pop %v5737
          %v5739 = vmul.f32 %v5681, 1.442695
          %v5740 = vpow.pop %v5739
          %v5741 = vmul.f32 %v5682, 1.442695
          %v5742 = vpow.pop %v5741
          %v5743 = vmul.f32 %v5683, 1.442695
          %v5744 = vpow.pop %v5743
          %v5745 = vmul.f32 %v5684, 1.442695
          %v5746 = vpow.pop %v5745
          %v5747 = vmul.f32 %v5685, 1.442695
          %v5748 = vpow.pop %v5747
          %v5749 = vmul.f32 %v5686, 1.442695
          %v5750 = vpow.pop %v5749
          %v5751 = vadd.f32 %v5688, 1.0
          %v5752 = vadd.f32 %v5690, 1.0
          %v5753 = vadd.f32 %v5692, 1.0
          %v5754 = vadd.f32 %v5694, 1.0
          %v5755 = vadd.f32 %v5696, 1.0
          %v5756 = vadd.f32 %v5698, 1.0
          %v5757 = vadd.f32 %v5700, 1.0
          %v5758 = vadd.f32 %v5702, 1.0
          %v5759 = vadd.f32 %v5704, 1.0
          %v5760 = vadd.f32 %v5706, 1.0
          %v5761 = vadd.f32 %v5708, 1.0
          %v5762 = vadd.f32 %v5710, 1.0
          %v5763 = vadd.f32 %v5712, 1.0
          %v5764 = vadd.f32 %v5714, 1.0
          %v5765 = vadd.f32 %v5716, 1.0
          %v5766 = vadd.f32 %v5718, 1.0
          %v5767 = vadd.f32 %v5720, 1.0
          %v5768 = vadd.f32 %v5722, 1.0
          %v5769 = vadd.f32 %v5724, 1.0
          %v5770 = vadd.f32 %v5726, 1.0
          %v5771 = vadd.f32 %v5728, 1.0
          %v5772 = vadd.f32 %v5730, 1.0
          %v5773 = vadd.f32 %v5732, 1.0
          %v5774 = vadd.f32 %v5734, 1.0
          %v5775 = vadd.f32 %v5736, 1.0
          %v5776 = vadd.f32 %v5738, 1.0
          %v5777 = vadd.f32 %v5740, 1.0
          %v5778 = vadd.f32 %v5742, 1.0
          %v5779 = vadd.f32 %v5744, 1.0
          %v5780 = vadd.f32 %v5746, 1.0
          %v5781 = vadd.f32 %v5748, 1.0
          %v5782 = vadd.f32 %v5750, 1.0
          %v5783 = vrcp.pop %v5751
          %v5784 = vmul.f32 1.0, %v5783
          %v5785 = vrcp.pop %v5752
          %v5786 = vmul.f32 1.0, %v5785
          %v5787 = vrcp.pop %v5753
          %v5788 = vmul.f32 1.0, %v5787
          %v5789 = vrcp.pop %v5754
          %v5790 = vmul.f32 1.0, %v5789
          %v5791 = vrcp.pop %v5755
          %v5792 = vmul.f32 1.0, %v5791
          %v5793 = vrcp.pop %v5756
          %v5794 = vmul.f32 1.0, %v5793
          %v5795 = vrcp.pop %v5757
          %v5796 = vmul.f32 1.0, %v5795
          %v5797 = vrcp.pop %v5758
          %v5798 = vmul.f32 1.0, %v5797
          %v5799 = vrcp.pop %v5759
          %v5800 = vmul.f32 1.0, %v5799
          %v5801 = vrcp.pop %v5760
          %v5802 = vmul.f32 1.0, %v5801
          %v5803 = vrcp.pop %v5761
          %v5804 = vmul.f32 1.0, %v5803
          %v5805 = vrcp.pop %v5762
          %v5806 = vmul.f32 1.0, %v5805
          %v5807 = vrcp.pop %v5763
          %v5808 = vmul.f32 1.0, %v5807
          %v5809 = vrcp.pop %v5764
          %v5810 = vmul.f32 1.0, %v5809
          %v5811 = vrcp.pop %v5765
          %v5812 = vmul.f32 1.0, %v5811
          %v5813 = vrcp.pop %v5766
          %v5814 = vmul.f32 1.0, %v5813
          %v5815 = vrcp.pop %v5767
          %v5816 = vmul.f32 1.0, %v5815
          %v5817 = vrcp.pop %v5768
          %v5818 = vmul.f32 1.0, %v5817
          %v5819 = vrcp.pop %v5769
          %v5820 = vmul.f32 1.0, %v5819
          %v5821 = vrcp.pop %v5770
          %v5822 = vmul.f32 1.0, %v5821
          %v5823 = vrcp.pop %v5771
          %v5824 = vmul.f32 1.0, %v5823
          %v5825 = vrcp.pop %v5772
          %v5826 = vmul.f32 1.0, %v5825
          %v5827 = vrcp.pop %v5773
          %v5828 = vmul.f32 1.0, %v5827
          %v5829 = vrcp.pop %v5774
          %v5830 = vmul.f32 1.0, %v5829
          %v5831 = vrcp.pop %v5775
          %v5832 = vmul.f32 1.0, %v5831
          %v5833 = vrcp.pop %v5776
          %v5834 = vmul.f32 1.0, %v5833
          %v5835 = vrcp.pop %v5777
          %v5836 = vmul.f32 1.0, %v5835
          %v5837 = vrcp.pop %v5778
          %v5838 = vmul.f32 1.0, %v5837
          %v5839 = vrcp.pop %v5779
          %v5840 = vmul.f32 1.0, %v5839
          %v5841 = vrcp.pop %v5780
          %v5842 = vmul.f32 1.0, %v5841
          %v5843 = vrcp.pop %v5781
          %v5844 = vmul.f32 1.0, %v5843
          %v5845 = vrcp.pop %v5782
          %v5846 = vmul.f32 1.0, %v5845
          %5847 = vst [vmem:[%s505] sm:$0xff] %v5784
          %5848 = vst [vmem:[%s505 + $0x8] sm:$0xff] %v5786
          %5849 = vst [vmem:[%s505 + $0x10] sm:$0xff] %v5788
          %5850 = vst [vmem:[%s505 + $0x18] sm:$0xff] %v5790
          %5851 = vst [vmem:[%s505 + $0x20] sm:$0xff] %v5792
          %5852 = vst [vmem:[%s505 + $0x28] sm:$0xff] %v5794
          %5853 = vst [vmem:[%s505 + $0x30] sm:$0xff] %v5796
          %5854 = vst [vmem:[%s505 + $0x38] sm:$0xff] %v5798
          %5855 = vst [vmem:[%s505 + $0x40] sm:$0xff] %v5800
          %5856 = vst [vmem:[%s505 + $0x48] sm:$0xff] %v5802
          %5857 = vst [vmem:[%s505 + $0x50] sm:$0xff] %v5804
          %5858 = vst [vmem:[%s505 + $0x58] sm:$0xff] %v5806
          %5859 = vst [vmem:[%s505 + $0x60] sm:$0xff] %v5808
          %5860 = vst [vmem:[%s505 + $0x68] sm:$0xff] %v5810
          %5861 = vst [vmem:[%s505 + $0x70] sm:$0xff] %v5812
          %5862 = vst [vmem:[%s505 + $0x78] sm:$0xff] %v5814
          %5863 = vst [vmem:[%s505 + $0x80] sm:$0xff] %v5816
          %5864 = vst [vmem:[%s505 + $0x88] sm:$0xff] %v5818
          %5865 = vst [vmem:[%s505 + $0x90] sm:$0xff] %v5820
          %5866 = vst [vmem:[%s505 + $0x98] sm:$0xff] %v5822
          %5867 = vst [vmem:[%s505 + $0xa0] sm:$0xff] %v5824
          %5868 = vst [vmem:[%s505 + $0xa8] sm:$0xff] %v5826
          %5869 = vst [vmem:[%s505 + $0xb0] sm:$0xff] %v5828
          %5870 = vst [vmem:[%s505 + $0xb8] sm:$0xff] %v5830
          %5871 = vst [vmem:[%s505 + $0xc0] sm:$0xff] %v5832
          %5872 = vst [vmem:[%s505 + $0xc8] sm:$0xff] %v5834
          %5873 = vst [vmem:[%s505 + $0xd0] sm:$0xff] %v5836
          %5874 = vst [vmem:[%s505 + $0xd8] sm:$0xff] %v5838
          %5875 = vst [vmem:[%s505 + $0xe0] sm:$0xff] %v5840
          %5876 = vst [vmem:[%s505 + $0xe8] sm:$0xff] %v5842
          %5877 = vst [vmem:[%s505 + $0xf0] sm:$0xff] %v5844
          %5878 = vst [vmem:[%s505 + $0xf8] sm:$0xff] %v5846
        $region120: #{tpu_custom_call.1} parent=59 // pred_fallthru
          _
        %s5879 = sand.u32 %s284, 1
        %s5880 = scalar_lea.sflag [#allocation11], %s5879
        %s5881 = sand.u32 %s284, 1
        %s5882 = smul.addr %s5881, 256
        %s5883 = scalar_lea.vmem [#allocation20], %s5882
        // Predicated region
        $region125: #{tpu_custom_call.1} parent=59 // pred_check
          %p5884 = pneg %p294
        $region126: #{tpu_custom_call.1} parent=59 // pred_check_branch
          %5886 = sbr.rel (%p5884) target = $region128
        $region127: #{tpu_custom_call.1} parent=59 // pred_region
          %p5887 = scmp.eq.s32.totalorder %s36, 3
          %s5888 = scalar_select %p5887, %s37, 0
          %s5889 = smul.u32 32, %s5888
          %s5891 = ssub.s32 4096, 4096
          %5892 = vsyncadd %s5880, %s5891
          %s5893 = smul.addr %s5889, 128
          %s5894 = scalar_lea.hbm %s10, %s5893
          %s5895 = sshll.u32 %s5883, 4
          %s5896 = int_to_ptr.vmem [resolvable:$true] %s5895
          %5901 = dma.vmem_to_hbm [thread:$0]  %s5896, 4096, %s5894, %s5880, 128, 128, 8
        $region128: #{tpu_custom_call.1} parent=59 // pred_fallthru
          _
      $region60: #{tpu_custom_call.1} parent=5 // pred_fallthru
        _
      %p5902 = scmp.le.s32.totalorder 2, %s27
      // Predicated region
      $region129: #{tpu_custom_call.1} parent=5 // pred_check
        %p5903 = pneg %p5902
      $region130: #{tpu_custom_call.1} parent=5 // pred_check_branch
        %5905 = sbr.rel (%p5903) target = $region132
      $region131: #{tpu_custom_call.1} parent=5 // pred_region
        %s5906 = ssub.s32 %s27, 2
        // Predicated region
        $region133: #{tpu_custom_call.1} parent=131 // pred_check
          %p5907 = pneg %p300
        $region134: #{tpu_custom_call.1} parent=131 // pred_check_branch
          %5909 = sbr.rel (%p5907) target = $region136
        $region135: #{tpu_custom_call.1} parent=131 // pred_region
          %s5910 = sand.u32 %s285, 1
          %s5911 = scalar_lea.sflag [#allocation11], %s5910
          %s5912 = sand.u32 %s285, 1
          %s5913 = smul.addr %s5912, 256
          %s5914 = scalar_lea.vmem [#allocation20], %s5913
          %5915 = dma.done %s5911, 4096
        $region136: #{tpu_custom_call.1} parent=131 // pred_fallthru
          _
      $region132: #{tpu_custom_call.1} parent=5 // pred_fallthru
        _
    $region6: #{tpu_custom_call.1} parent=1 // loop_footer
      %s31 = sadd.s32 1, %s27
    $region7: #{tpu_custom_call.1} parent=1 // loop_footer_branch
      %26 = sbr.rel target = $region3
    $region8: #{tpu_custom_call.1} parent=1 // loop_exit
      _
    %5916 = vsyncpa [#allocation10], 1
    %s5917 = scalar_lea.sflag [#allocation10], 1
    %5918 = vsyncpa %s5917, 1
    %5919 = vsyncpa [#allocation13], 1
    %s5920 = scalar_lea.sflag [#allocation13], 1
    %5921 = vsyncpa %s5920, 1
    %5922 = vsyncpa [#allocation16], 1
    %5923 = vsyncpa [#allocation19], 1
    %5924 = vsyncpa [#allocation11], 1
    %s5925 = scalar_lea.sflag [#allocation11], 1
    %5926 = vsyncpa %s5925, 1

</llo_original>
